<compile_context>
chip_gen: v6e
topology: v6e:2x2x1
jax: 0.10.0
libtpu: 0.0.40
codegen_flags: <defaults>
</compile_context>

<pallas_src>
import functools

import jax
import jax.numpy as jnp
from jax import lax
from jax.experimental import pallas as pl
from jax.experimental.pallas import tpu as pltpu

_EPS = 1e-5
_CPAD = 128  # lane-dense channel padding (>= total dense-block channels)


def _pick_tile_h(H, W):
    """Largest divisor of H with TH*W ~<= 512 (fills a 256-wide MXU, amortizes per-step
    overhead), always an exact divisor of H so the grid covers the image."""
    target = max(1, 512 // max(W, 1))
    divisors = [d for d in range(1, H + 1) if H % d == 0]
    under = [d for d in divisors if d <= target]
    return max(under) if under else 1


def _vmem_limit_bytes(block_bytes):
    """Scoped-VMEM request sized from the actual blocks, capped per chip generation."""
    cap = 128 * 1024 * 1024
    try:
        cap = int(getattr(pltpu.get_tpu_info(), "vmem_capacity_bytes", cap))
    except Exception:
        pass
    want = max(block_bytes + (4 << 20), 32 << 20)
    return int(min(want, int(cap * 0.75)))


def _dense_layer_kernel(x_ref, aff_ref, w_ref, o_ref, stat_ref, pad_ref):
    """One (batch, row-tile) step:
         slab_out = slab_in + conv3x3(relu(bn_fold(slab_in)))   (dense concat fused)
       plus this tile's BN partial statistics (sum + centered second moment) so the
       wrapper never re-reads the slab from HBM just to compute the next layer's stats."""
    _, H, W, C = x_ref.shape
    TH = o_ref.shape[1]
    t = pl.program_id(1)
    nt = pl.num_programs(1)
    r0 = pl.multiple_of(t * TH, TH)          # first output row of this tile

    scale = aff_ref[0:1, :]                  # (1, C) folded BN scale  (gamma * inv_std)
    shift = aff_ref[1:2, :]                  # (1, C) folded BN shift  (beta - mean*scale)
    bias = aff_ref[2:3, :]                   # (1, C) conv bias, scattered to slab slice

    def act(v_bf16):                         # BN(folded) + ReLU; f32 math, one bf16 cast
        v = v_bf16.astype(jnp.float32)
        return jnp.maximum(v * scale + shift, 0.0).astype(jnp.bfloat16)

    x_tile = x_ref[0, pl.ds(r0, TH)]                                   # (TH, W, C) bf16

    # Padded activation scratch (bf16): zero-fill, then interior + conditional halo rows.
    pad_ref[...] = jnp.zeros(pad_ref.shape, pad_ref.dtype)
    pad_ref[1:TH + 1, 1:W + 1, :] = act(x_tile)

    @pl.when(t > 0)
    def _():
        pad_ref[0:1, 1:W + 1, :] = act(x_ref[0, pl.ds(jnp.maximum(r0 - 1, 0), 1)])

    @pl.when(t + 1 < nt)
    def _():
        pad_ref[TH + 1:TH + 2, 1:W + 1, :] = act(
            x_ref[0, pl.ds(jnp.minimum(r0 + TH, H - 1), 1)])

    # 3x3 conv as 9 accumulating MXU matmuls over bf16 taps (no materialized im2col).
    acc = jnp.zeros((TH * W, C), jnp.float32)
    for k in range(9):
        dy, dx = divmod(k, 3)
        tap = pad_ref[dy:dy + TH, dx:dx + W, :].reshape(TH * W, C)     # bf16
        acc = acc + jnp.dot(tap, w_ref[k], preferred_element_type=jnp.float32)

    # Dense concat fused: conv weight columns land directly in the layer's slab slice.
    out = x_tile.astype(jnp.float32) + acc.reshape(TH, W, C) + bias
    o_ref[0] = out.astype(jnp.bfloat16)

    # Fused per-tile BN stats for the next layer (Chan-combinable in the wrapper).
    s1 = jnp.sum(out, axis=(0, 1))                                     # (C,)
    d = out - s1 * (1.0 / (TH * W))
    m2 = jnp.sum(d * d, axis=(0, 1))
    stat_ref[0, 0, 0:1, :] = s1.reshape(1, C)
    stat_ref[0, 0, 1:2, :] = m2.reshape(1, C)


def _dense_layer(x_slab, aff, w9, tile_h):
    """Fused BN(fold) + ReLU + Conv3x3(pad=1) + dense concat + next-layer partial stats."""
    N, H, W, C = x_slab.shape
    nt = H // tile_h
    block_bytes = (
        2 * (H * W * C * 2)                 # full-image input block (bf16), double-buffered
        + 2 * (tile_h * W * C * 2)          # output tile (bf16), double-buffered
        + 2 * (9 * C * C * 2)               # conv weights (bf16)
        + (tile_h + 2) * (W + 2) * C * 2    # bf16 activation scratch
        + 2 * (8 * C * 4) + 2 * (2 * C * 4)  # affine params + stats tile
    )
    return pl.pallas_call(
        _dense_layer_kernel,
        out_shape=(
            jax.ShapeDtypeStruct((N, H, W, C), jnp.bfloat16),
            jax.ShapeDtypeStruct((N, nt, 2, C), jnp.float32),
        ),
        grid_spec=pltpu.PrefetchScalarGridSpec(
            num_scalar_prefetch=0,
            grid=(N, nt),
            in_specs=[
                # TODO(synk): per-tile halo blocks (manual DMA) for very large H*W on v7x.
                pl.BlockSpec((1, H, W, C), lambda n, t: (n, 0, 0, 0)),
                pl.BlockSpec((8, C), lambda n, t: (0, 0)),
                pl.BlockSpec((9, C, C), lambda n, t: (0, 0, 0)),
            ],
            out_specs=[
                pl.BlockSpec((1, tile_h, W, C), lambda n, t: (n, t, 0, 0)),
                pl.BlockSpec((1, 1, 2, C), lambda n, t: (n, t, 0, 0)),
            ],
            scratch_shapes=[pltpu.VMEM((tile_h + 2, W + 2, C), jnp.bfloat16)],
        ),
        compiler_params=pltpu.CompilerParams(
            dimension_semantics=("parallel", "parallel"),
            vmem_limit_bytes=_vmem_limit_bytes(block_bytes),
        ),
    )(x_slab, aff, w9)


def init_dense_block_params(key, num_convs, input_channels, num_channels, cpad=_CPAD):
    """Synthetic parameters matching the PyTorch module's shapes, pre-packed for the
    lane-dense slab: BN gamma/beta padded to `cpad`, conv weight scattered into a
    (9, cpad, cpad) matrix whose output columns are the layer's slab slice, bias likewise."""
    assert input_channels + num_convs * num_channels <= cpad
    params = []
    for i in range(num_convs):
        cin = num_channels * i + input_channels
        cout = num_channels
        key, kw, kb = jax.random.split(key, 3)
        gamma_pad = jnp.zeros((cpad,), jnp.float32).at[:cin].set(1.0)   # BN weight init
        beta_pad = jnp.zeros((cpad,), jnp.float32)                      # BN bias init
        w_oihw = 0.1 * jax.random.normal(kw, (cout, cin, 3, 3), jnp.float32)
        bias = 0.1 * jax.random.normal(kb, (cout,), jnp.float32)
        w_hwio = jnp.transpose(w_oihw, (2, 3, 1, 0))                    # (3,3,cin,cout)
        w_big = jnp.zeros((3, 3, cpad, cpad), jnp.float32)
        w_big = w_big.at[:, :, :cin, cin:cin + cout].set(w_hwio)
        w9 = w_big.reshape(9, cpad, cpad).astype(jnp.bfloat16)          # MXU operand
        b_pad = jnp.zeros((cpad,), jnp.float32).at[cin:cin + cout].set(bias)
        params.append((gamma_pad, beta_pad, w9, b_pad))
    return params


@functools.partial(jax.jit, static_argnames=("c_total",))
def dense_block_forward(x_nchw, params, *, c_total):
    """Matches DenseBlock.forward on NCHW input, returns NCHW output."""
    N, C0, H, W = x_nchw.shape
    tile_h = _pick_tile_h(H, W)
    total = N * H * W

    x = jnp.transpose(x_nchw, (0, 2, 3, 1)).astype(jnp.float32)          # NHWC
    slab = jnp.pad(x, ((0, 0), (0, 0), (0, 0), (0, _CPAD - C0)))
    slab = slab.astype(jnp.bfloat16)                                     # bf16 HBM slab

    # First layer's BatchNorm stats: single two-pass reduction over the initial slab.
    xf = slab.astype(jnp.float32)
    mean = jnp.mean(xf, axis=(0, 1, 2))
    var = jnp.mean(jnp.square(xf - mean), axis=(0, 1, 2))

    n_layers = len(params)
    for li, (gamma_pad, beta_pad, w9, b_pad) in enumerate(params):
        inv_std = lax.rsqrt(var + _EPS)
        scale = gamma_pad * inv_std
        shift = beta_pad - mean * scale
        aff = jnp.zeros((8, _CPAD), jnp.float32)
        aff = aff.at[0].set(scale).at[1].set(shift).at[2].set(b_pad)

        slab, stats = _dense_layer(slab, aff, w9, tile_h)

        if li + 1 < n_layers:
            # Chan-combine per-tile partial stats -> next layer's mean / biased variance.
            s1 = stats[..., 0, :]                      # (N, nt, C) per-tile sums
            m2 = stats[..., 1, :]                      # per-tile centered 2nd moments
            cnt = tile_h * W
            mean = jnp.sum(s1, axis=(0, 1)) / total
            tmean = s1 / cnt
            var = (jnp.sum(m2, axis=(0, 1))
                   + cnt * jnp.sum(jnp.square(tmean - mean), axis=(0, 1))) / total

    out_nhwc = slab[..., :c_total].astype(jnp.float32)
    return jnp.transpose(out_nhwc, (0, 3, 1, 2))                          # NHWC -> NCHW


def _reference_forward(x_nchw, params, input_channels, num_channels):
    """Pure-JAX reference of the PyTorch DenseBlock forward (for self-check only)."""
    x = jnp.transpose(x_nchw, (0, 2, 3, 1)).astype(jnp.float32)
    for gamma_pad, beta_pad, w9, b_pad in params:
        cin = x.shape[-1]
        cout = num_channels
        mean = jnp.mean(x, axis=(0, 1, 2))
        var = jnp.var(x, axis=(0, 1, 2))
        a = jnp.maximum((x - mean) * lax.rsqrt(var + _EPS) * gamma_pad[:cin]
                        + beta_pad[:cin], 0.0)
        w = w9.astype(jnp.float32).reshape(3, 3, _CPAD, _CPAD)[:, :, :cin,
                                                               cin:cin + cout]
        b = b_pad[cin:cin + cout]
        y = lax.conv_general_dilated(
            a, w, window_strides=(1, 1), padding=((1, 1), (1, 1)),
            dimension_numbers=("NHWC", "HWIO", "NHWC")) + b
        x = jnp.concatenate([x, y], axis=-1)
    return jnp.transpose(x, (0, 3, 1, 2))


if __name__ == "__main__":
    num_convs, input_channels, num_channels = 2, 4, 4
    N, H, W = 2, 16, 16
    c_total = input_channels + num_convs * num_channels

    key = jax.random.PRNGKey(0)
    key_x, key_p = jax.random.split(key)
    x = jax.random.normal(key_x, (N, input_channels, H, W), jnp.float32)   # NCHW
    params = init_dense_block_params(key_p, num_convs, input_channels, num_channels)

    out = dense_block_forward(x, params, c_total=c_total)
    jax.block_until_ready(out)

    assert out.shape == (N, c_total, H, W), out.shape
    assert bool(jnp.isfinite(out).all())

    # Self-check against a pure-JAX reference (bf16 slab + bf16 MXU operands => loose tol).
    ref = _reference_forward(x, params, input_channels, num_channels)
    max_err = float(jnp.max(jnp.abs(out - ref)))
    assert jnp.allclose(out, ref, atol=7e-2, rtol=7e-2), max_err

    print("KERNEL_OK")
</pallas_src>

<mosaic_0001>
module attributes {stable_mosaic.version = 11 : i64} {
  func.func @_dense_layer_kernel(%arg0: i32, %arg1: i32, %arg2: memref<1x16x16x128xbf16, #tpu.memory_space<vmem>>, %arg3: memref<8x128xf32, #tpu.memory_space<vmem>>, %arg4: memref<9x128x128xbf16, #tpu.memory_space<vmem>>, %arg5: memref<1x16x16x128xbf16, #tpu.memory_space<vmem>>, %arg6: memref<1x1x2x128xf32, #tpu.memory_space<vmem>>, %arg7: memref<18x18x128xbf16, #tpu.memory_space<vmem>>) attributes {dimension_semantics = [#tpu.dimension_semantics<parallel>, #tpu.dimension_semantics<parallel>], iteration_bounds = array<i64: 2, 1>, scalar_prefetch = 0 : i64, scratch_operands = 1 : i64, tpu.core_type = #tpu.core_type<tc>, window_params = [{transform_indices = @transform_0, window_bounds = array<i64: 1, 16, 16, 128>}, {pipeline_mode = #tpu.pipeline_mode<synchronous>, transform_indices = @transform_1, window_bounds = array<i64: 8, 128>}, {pipeline_mode = #tpu.pipeline_mode<synchronous>, transform_indices = @transform_2, window_bounds = array<i64: 9, 128, 128>}, {transform_indices = @transform_3, window_bounds = array<i64: 1, 16, 16, 128>}, {transform_indices = @transform_4, window_bounds = array<i64: 1, 1, 2, 128>}]} {
    %c16_i32 = arith.constant 16 : i32
    %0 = arith.muli %arg1, %c16_i32 : i32
    %1 = tpu.assume_multiple %0, 16 : i32
    %c0 = arith.constant 0 : index
    %c0_0 = arith.constant 0 : index
    %2 = vector.load %arg3[%c0, %c0_0] : memref<8x128xf32, #tpu.memory_space<vmem>>, vector<1x128xf32>
    %c1 = arith.constant 1 : index
    %c0_1 = arith.constant 0 : index
    %3 = vector.load %arg3[%c1, %c0_1] : memref<8x128xf32, #tpu.memory_space<vmem>>, vector<1x128xf32>
    %c2 = arith.constant 2 : index
    %c0_2 = arith.constant 0 : index
    %4 = vector.load %arg3[%c2, %c0_2] : memref<8x128xf32, #tpu.memory_space<vmem>>, vector<1x128xf32>
    %c0_3 = arith.constant 0 : index
    %5 = arith.index_cast %1 : i32 to index
    %c0_4 = arith.constant 0 : index
    %c0_5 = arith.constant 0 : index
    %6 = vector.load %arg2[%c0_3, %5, %c0_4, %c0_5] : memref<1x16x16x128xbf16, #tpu.memory_space<vmem>>, vector<1x16x16x128xbf16>
    %7 = vector.shape_cast %6 : vector<1x16x16x128xbf16> to vector<16x16x128xbf16>
    %cst = arith.constant 0.000000e+00 : bf16
    %8 = vector.broadcast %cst : bf16 to vector<18x18x128xbf16>
    %c0_6 = arith.constant 0 : index
    %c0_7 = arith.constant 0 : index
    %c0_8 = arith.constant 0 : index
    %9 = vector.load %arg7[%c0_6, %c0_7, %c0_8] : memref<18x18x128xbf16, #tpu.memory_space<vmem>>, vector<18x18x128xbf16>
    tpu.vector_store %arg7[%c0_6, %c0_7, %c0_8], %8 {strides = array<i32>} : memref<18x18x128xbf16, #tpu.memory_space<vmem>>, vector<18x18x128xbf16>,
    %10 = arith.extf %7 : vector<16x16x128xbf16> to vector<16x16x128xf32>
    %11 = vector.shape_cast %2 : vector<1x128xf32> to vector<1x1x128xf32>
    %12 = vector.broadcast %11 : vector<1x1x128xf32> to vector<16x16x128xf32>
    %13 = arith.mulf %10, %12 : vector<16x16x128xf32>
    %14 = vector.shape_cast %3 : vector<1x128xf32> to vector<1x1x128xf32>
    %15 = vector.broadcast %14 : vector<1x1x128xf32> to vector<16x16x128xf32>
    %16 = arith.addf %13, %15 : vector<16x16x128xf32>
    %cst_9 = arith.constant 0.000000e+00 : f32
    %17 = vector.broadcast %cst_9 : f32 to vector<16x16x128xf32>
    %18 = arith.maximumf %16, %17 : vector<16x16x128xf32>
    %19 = arith.truncf %18 : vector<16x16x128xf32> to vector<16x16x128xbf16>
    %c1_10 = arith.constant 1 : index
    %c1_11 = arith.constant 1 : index
    %c0_12 = arith.constant 0 : index
    %20 = vector.load %arg7[%c1_10, %c1_11, %c0_12] : memref<18x18x128xbf16, #tpu.memory_space<vmem>>, vector<16x16x128xbf16>
    tpu.vector_store %arg7[%c1_10, %c1_11, %c0_12], %19 {strides = array<i32>} : memref<18x18x128xbf16, #tpu.memory_space<vmem>>, vector<16x16x128xbf16>,
    %c0_i32 = arith.constant 0 : i32
    %21 = arith.cmpi sgt, %arg1, %c0_i32 : i32
    %22 = arith.extui %21 : i1 to i32
    %c0_i32_13 = arith.constant 0 : i32
    %23 = arith.cmpi ne, %22, %c0_i32_13 : i32
    scf.if %23 {
      %c1_i32_89 = arith.constant 1 : i32
      %109 = arith.subi %1, %c1_i32_89 : i32
      %c0_i32_90 = arith.constant 0 : i32
      %110 = arith.maxsi %109, %c0_i32_90 : i32
      %c0_91 = arith.constant 0 : index
      %111 = arith.index_cast %110 : i32 to index
      %c0_92 = arith.constant 0 : index
      %c0_93 = arith.constant 0 : index
      %112 = vector.load %arg2[%c0_91, %111, %c0_92, %c0_93] : memref<1x16x16x128xbf16, #tpu.memory_space<vmem>>, vector<1x1x16x128xbf16>
      %113 = vector.shape_cast %112 : vector<1x1x16x128xbf16> to vector<1x16x128xbf16>
      %114 = arith.extf %113 : vector<1x16x128xbf16> to vector<1x16x128xf32>
      %115 = vector.shape_cast %2 : vector<1x128xf32> to vector<1x1x128xf32>
      %116 = vector.broadcast %115 : vector<1x1x128xf32> to vector<1x16x128xf32>
      %117 = arith.mulf %114, %116 : vector<1x16x128xf32>
      %118 = vector.shape_cast %3 : vector<1x128xf32> to vector<1x1x128xf32>
      %119 = vector.broadcast %118 : vector<1x1x128xf32> to vector<1x16x128xf32>
      %120 = arith.addf %117, %119 : vector<1x16x128xf32>
      %cst_94 = arith.constant 0.000000e+00 : f32
      %121 = vector.broadcast %cst_94 : f32 to vector<1x16x128xf32>
      %122 = arith.maximumf %120, %121 : vector<1x16x128xf32>
      %123 = arith.truncf %122 : vector<1x16x128xf32> to vector<1x16x128xbf16>
      %c0_95 = arith.constant 0 : index
      %c1_96 = arith.constant 1 : index
      %c0_97 = arith.constant 0 : index
      %124 = vector.load %arg7[%c0_95, %c1_96, %c0_97] : memref<18x18x128xbf16, #tpu.memory_space<vmem>>, vector<1x16x128xbf16>
      tpu.vector_store %arg7[%c0_95, %c1_96, %c0_97], %123 {strides = array<i32>} : memref<18x18x128xbf16, #tpu.memory_space<vmem>>, vector<1x16x128xbf16>,
    } else {
    }
    %c1_i32 = arith.constant 1 : i32
    %24 = arith.addi %arg1, %c1_i32 : i32
    %c1_i32_14 = arith.constant 1 : i32
    %25 = arith.cmpi slt, %24, %c1_i32_14 : i32
    %26 = arith.extui %25 : i1 to i32
    %c0_i32_15 = arith.constant 0 : i32
    %27 = arith.cmpi ne, %26, %c0_i32_15 : i32
    scf.if %27 {
      %c16_i32_89 = arith.constant 16 : i32
      %109 = arith.addi %1, %c16_i32_89 : i32
      %c15_i32 = arith.constant 15 : i32
      %110 = arith.minsi %109, %c15_i32 : i32
      %c0_90 = arith.constant 0 : index
      %111 = arith.index_cast %110 : i32 to index
      %c0_91 = arith.constant 0 : index
      %c0_92 = arith.constant 0 : index
      %112 = vector.load %arg2[%c0_90, %111, %c0_91, %c0_92] : memref<1x16x16x128xbf16, #tpu.memory_space<vmem>>, vector<1x1x16x128xbf16>
      %113 = vector.shape_cast %112 : vector<1x1x16x128xbf16> to vector<1x16x128xbf16>
      %114 = arith.extf %113 : vector<1x16x128xbf16> to vector<1x16x128xf32>
      %115 = vector.shape_cast %2 : vector<1x128xf32> to vector<1x1x128xf32>
      %116 = vector.broadcast %115 : vector<1x1x128xf32> to vector<1x16x128xf32>
      %117 = arith.mulf %114, %116 : vector<1x16x128xf32>
      %118 = vector.shape_cast %3 : vector<1x128xf32> to vector<1x1x128xf32>
      %119 = vector.broadcast %118 : vector<1x1x128xf32> to vector<1x16x128xf32>
      %120 = arith.addf %117, %119 : vector<1x16x128xf32>
      %cst_93 = arith.constant 0.000000e+00 : f32
      %121 = vector.broadcast %cst_93 : f32 to vector<1x16x128xf32>
      %122 = arith.maximumf %120, %121 : vector<1x16x128xf32>
      %123 = arith.truncf %122 : vector<1x16x128xf32> to vector<1x16x128xbf16>
      %c17 = arith.constant 17 : index
      %c1_94 = arith.constant 1 : index
      %c0_95 = arith.constant 0 : index
      %124 = vector.load %arg7[%c17, %c1_94, %c0_95] : memref<18x18x128xbf16, #tpu.memory_space<vmem>>, vector<1x16x128xbf16>
      tpu.vector_store %arg7[%c17, %c1_94, %c0_95], %123 {strides = array<i32>} : memref<18x18x128xbf16, #tpu.memory_space<vmem>>, vector<1x16x128xbf16>,
    } else {
    }
    %cst_16 = arith.constant 0.000000e+00 : f32
    %28 = vector.broadcast %cst_16 : f32 to vector<256x128xf32>
    %c0_17 = arith.constant 0 : index
    %c0_18 = arith.constant 0 : index
    %c0_19 = arith.constant 0 : index
    %29 = vector.load %arg7[%c0_17, %c0_18, %c0_19] : memref<18x18x128xbf16, #tpu.memory_space<vmem>>, vector<16x16x128xbf16>
    %30 = vector.shape_cast %29 : vector<16x16x128xbf16> to vector<256x128xbf16>
    %c0_20 = arith.constant 0 : index
    %c0_21 = arith.constant 0 : index
    %c0_22 = arith.constant 0 : index
    %31 = vector.load %arg4[%c0_20, %c0_21, %c0_22] : memref<9x128x128xbf16, #tpu.memory_space<vmem>>, vector<1x128x128xbf16>
    %32 = vector.shape_cast %31 : vector<1x128x128xbf16> to vector<128x128xbf16>
    %cst_23 = arith.constant dense<0.000000e+00> : vector<256x128xf32>
    %33 = tpu.matmul %30, %32, %cst_23 {dimension_numbers = #tpu.dot_dimension_numbers<[1], [0], [0], [1], [0, 0, 1, 1], [], []>} : vector<256x128xbf16>, vector<128x128xbf16>, vector<256x128xf32> -> vector<256x128xf32>
    %34 = arith.addf %28, %33 : vector<256x128xf32>
    %c0_24 = arith.constant 0 : index
    %c1_25 = arith.constant 1 : index
    %c0_26 = arith.constant 0 : index
    %35 = vector.load %arg7[%c0_24, %c1_25, %c0_26] : memref<18x18x128xbf16, #tpu.memory_space<vmem>>, vector<16x16x128xbf16>
    %36 = vector.shape_cast %35 : vector<16x16x128xbf16> to vector<256x128xbf16>
    %c1_27 = arith.constant 1 : index
    %c0_28 = arith.constant 0 : index
    %c0_29 = arith.constant 0 : index
    %37 = vector.load %arg4[%c1_27, %c0_28, %c0_29] : memref<9x128x128xbf16, #tpu.memory_space<vmem>>, vector<1x128x128xbf16>
    %38 = vector.shape_cast %37 : vector<1x128x128xbf16> to vector<128x128xbf16>
    %cst_30 = arith.constant dense<0.000000e+00> : vector<256x128xf32>
    %39 = tpu.matmul %36, %38, %cst_30 {dimension_numbers = #tpu.dot_dimension_numbers<[1], [0], [0], [1], [0, 0, 1, 1], [], []>} : vector<256x128xbf16>, vector<128x128xbf16>, vector<256x128xf32> -> vector<256x128xf32>
    %40 = arith.addf %34, %39 : vector<256x128xf32>
    %c0_31 = arith.constant 0 : index
    %c2_32 = arith.constant 2 : index
    %c0_33 = arith.constant 0 : index
    %41 = vector.load %arg7[%c0_31, %c2_32, %c0_33] : memref<18x18x128xbf16, #tpu.memory_space<vmem>>, vector<16x16x128xbf16>
    %42 = vector.shape_cast %41 : vector<16x16x128xbf16> to vector<256x128xbf16>
    %c2_34 = arith.constant 2 : index
    %c0_35 = arith.constant 0 : index
    %c0_36 = arith.constant 0 : index
    %43 = vector.load %arg4[%c2_34, %c0_35, %c0_36] : memref<9x128x128xbf16, #tpu.memory_space<vmem>>, vector<1x128x128xbf16>
    %44 = vector.shape_cast %43 : vector<1x128x128xbf16> to vector<128x128xbf16>
    %cst_37 = arith.constant dense<0.000000e+00> : vector<256x128xf32>
    %45 = tpu.matmul %42, %44, %cst_37 {dimension_numbers = #tpu.dot_dimension_numbers<[1], [0], [0], [1], [0, 0, 1, 1], [], []>} : vector<256x128xbf16>, vector<128x128xbf16>, vector<256x128xf32> -> vector<256x128xf32>
    %46 = arith.addf %40, %45 : vector<256x128xf32>
    %c1_38 = arith.constant 1 : index
    %c0_39 = arith.constant 0 : index
    %c0_40 = arith.constant 0 : index
    %47 = vector.load %arg7[%c1_38, %c0_39, %c0_40] : memref<18x18x128xbf16, #tpu.memory_space<vmem>>, vector<16x16x128xbf16>
    %48 = vector.shape_cast %47 : vector<16x16x128xbf16> to vector<256x128xbf16>
    %c3 = arith.constant 3 : index
    %c0_41 = arith.constant 0 : index
    %c0_42 = arith.constant 0 : index
    %49 = vector.load %arg4[%c3, %c0_41, %c0_42] : memref<9x128x128xbf16, #tpu.memory_space<vmem>>, vector<1x128x128xbf16>
    %50 = vector.shape_cast %49 : vector<1x128x128xbf16> to vector<128x128xbf16>
    %cst_43 = arith.constant dense<0.000000e+00> : vector<256x128xf32>
    %51 = tpu.matmul %48, %50, %cst_43 {dimension_numbers = #tpu.dot_dimension_numbers<[1], [0], [0], [1], [0, 0, 1, 1], [], []>} : vector<256x128xbf16>, vector<128x128xbf16>, vector<256x128xf32> -> vector<256x128xf32>
    %52 = arith.addf %46, %51 : vector<256x128xf32>
    %c1_44 = arith.constant 1 : index
    %c1_45 = arith.constant 1 : index
    %c0_46 = arith.constant 0 : index
    %53 = vector.load %arg7[%c1_44, %c1_45, %c0_46] : memref<18x18x128xbf16, #tpu.memory_space<vmem>>, vector<16x16x128xbf16>
    %54 = vector.shape_cast %53 : vector<16x16x128xbf16> to vector<256x128xbf16>
    %c4 = arith.constant 4 : index
    %c0_47 = arith.constant 0 : index
    %c0_48 = arith.constant 0 : index
    %55 = vector.load %arg4[%c4, %c0_47, %c0_48] : memref<9x128x128xbf16, #tpu.memory_space<vmem>>, vector<1x128x128xbf16>
    %56 = vector.shape_cast %55 : vector<1x128x128xbf16> to vector<128x128xbf16>
    %cst_49 = arith.constant dense<0.000000e+00> : vector<256x128xf32>
    %57 = tpu.matmul %54, %56, %cst_49 {dimension_numbers = #tpu.dot_dimension_numbers<[1], [0], [0], [1], [0, 0, 1, 1], [], []>} : vector<256x128xbf16>, vector<128x128xbf16>, vector<256x128xf32> -> vector<256x128xf32>
    %58 = arith.addf %52, %57 : vector<256x128xf32>
    %c1_50 = arith.constant 1 : index
    %c2_51 = arith.constant 2 : index
    %c0_52 = arith.constant 0 : index
    %59 = vector.load %arg7[%c1_50, %c2_51, %c0_52] : memref<18x18x128xbf16, #tpu.memory_space<vmem>>, vector<16x16x128xbf16>
    %60 = vector.shape_cast %59 : vector<16x16x128xbf16> to vector<256x128xbf16>
    %c5 = arith.constant 5 : index
    %c0_53 = arith.constant 0 : index
    %c0_54 = arith.constant 0 : index
    %61 = vector.load %arg4[%c5, %c0_53, %c0_54] : memref<9x128x128xbf16, #tpu.memory_space<vmem>>, vector<1x128x128xbf16>
    %62 = vector.shape_cast %61 : vector<1x128x128xbf16> to vector<128x128xbf16>
    %cst_55 = arith.constant dense<0.000000e+00> : vector<256x128xf32>
    %63 = tpu.matmul %60, %62, %cst_55 {dimension_numbers = #tpu.dot_dimension_numbers<[1], [0], [0], [1], [0, 0, 1, 1], [], []>} : vector<256x128xbf16>, vector<128x128xbf16>, vector<256x128xf32> -> vector<256x128xf32>
    %64 = arith.addf %58, %63 : vector<256x128xf32>
    %c2_56 = arith.constant 2 : index
    %c0_57 = arith.constant 0 : index
    %c0_58 = arith.constant 0 : index
    %65 = vector.load %arg7[%c2_56, %c0_57, %c0_58] : memref<18x18x128xbf16, #tpu.memory_space<vmem>>, vector<16x16x128xbf16>
    %66 = vector.shape_cast %65 : vector<16x16x128xbf16> to vector<256x128xbf16>
    %c6 = arith.constant 6 : index
    %c0_59 = arith.constant 0 : index
    %c0_60 = arith.constant 0 : index
    %67 = vector.load %arg4[%c6, %c0_59, %c0_60] : memref<9x128x128xbf16, #tpu.memory_space<vmem>>, vector<1x128x128xbf16>
    %68 = vector.shape_cast %67 : vector<1x128x128xbf16> to vector<128x128xbf16>
    %cst_61 = arith.constant dense<0.000000e+00> : vector<256x128xf32>
    %69 = tpu.matmul %66, %68, %cst_61 {dimension_numbers = #tpu.dot_dimension_numbers<[1], [0], [0], [1], [0, 0, 1, 1], [], []>} : vector<256x128xbf16>, vector<128x128xbf16>, vector<256x128xf32> -> vector<256x128xf32>
    %70 = arith.addf %64, %69 : vector<256x128xf32>
    %c2_62 = arith.constant 2 : index
    %c1_63 = arith.constant 1 : index
    %c0_64 = arith.constant 0 : index
    %71 = vector.load %arg7[%c2_62, %c1_63, %c0_64] : memref<18x18x128xbf16, #tpu.memory_space<vmem>>, vector<16x16x128xbf16>
    %72 = vector.shape_cast %71 : vector<16x16x128xbf16> to vector<256x128xbf16>
    %c7 = arith.constant 7 : index
    %c0_65 = arith.constant 0 : index
    %c0_66 = arith.constant 0 : index
    %73 = vector.load %arg4[%c7, %c0_65, %c0_66] : memref<9x128x128xbf16, #tpu.memory_space<vmem>>, vector<1x128x128xbf16>
    %74 = vector.shape_cast %73 : vector<1x128x128xbf16> to vector<128x128xbf16>
    %cst_67 = arith.constant dense<0.000000e+00> : vector<256x128xf32>
    %75 = tpu.matmul %72, %74, %cst_67 {dimension_numbers = #tpu.dot_dimension_numbers<[1], [0], [0], [1], [0, 0, 1, 1], [], []>} : vector<256x128xbf16>, vector<128x128xbf16>, vector<256x128xf32> -> vector<256x128xf32>
    %76 = arith.addf %70, %75 : vector<256x128xf32>
    %c2_68 = arith.constant 2 : index
    %c2_69 = arith.constant 2 : index
    %c0_70 = arith.constant 0 : index
    %77 = vector.load %arg7[%c2_68, %c2_69, %c0_70] : memref<18x18x128xbf16, #tpu.memory_space<vmem>>, vector<16x16x128xbf16>
    %78 = vector.shape_cast %77 : vector<16x16x128xbf16> to vector<256x128xbf16>
    %c8 = arith.constant 8 : index
    %c0_71 = arith.constant 0 : index
    %c0_72 = arith.constant 0 : index
    %79 = vector.load %arg4[%c8, %c0_71, %c0_72] : memref<9x128x128xbf16, #tpu.memory_space<vmem>>, vector<1x128x128xbf16>
    %80 = vector.shape_cast %79 : vector<1x128x128xbf16> to vector<128x128xbf16>
    %cst_73 = arith.constant dense<0.000000e+00> : vector<256x128xf32>
    %81 = tpu.matmul %78, %80, %cst_73 {dimension_numbers = #tpu.dot_dimension_numbers<[1], [0], [0], [1], [0, 0, 1, 1], [], []>} : vector<256x128xbf16>, vector<128x128xbf16>, vector<256x128xf32> -> vector<256x128xf32>
    %82 = arith.addf %76, %81 : vector<256x128xf32>
    %83 = arith.extf %7 : vector<16x16x128xbf16> to vector<16x16x128xf32>
    %84 = vector.shape_cast %82 : vector<256x128xf32> to vector<16x16x128xf32>
    %85 = arith.addf %83, %84 : vector<16x16x128xf32>
    %86 = vector.shape_cast %4 : vector<1x128xf32> to vector<1x1x128xf32>
    %87 = vector.broadcast %86 : vector<1x1x128xf32> to vector<16x16x128xf32>
    %88 = arith.addf %85, %87 : vector<16x16x128xf32>
    %89 = arith.truncf %88 : vector<16x16x128xf32> to vector<16x16x128xbf16>
    %c0_74 = arith.constant 0 : index
    %c0_75 = arith.constant 0 : index
    %c0_76 = arith.constant 0 : index
    %c0_77 = arith.constant 0 : index
    %90 = vector.load %arg5[%c0_74, %c0_75, %c0_76, %c0_77] : memref<1x16x16x128xbf16, #tpu.memory_space<vmem>>, vector<1x16x16x128xbf16>
    %91 = vector.shape_cast %90 : vector<1x16x16x128xbf16> to vector<16x16x128xbf16>
    %92 = vector.shape_cast %89 : vector<16x16x128xbf16> to vector<1x16x16x128xbf16>
    tpu.vector_store %arg5[%c0_74, %c0_75, %c0_76, %c0_77], %92 {strides = array<i32>} : memref<1x16x16x128xbf16, #tpu.memory_space<vmem>>, vector<1x16x16x128xbf16>,
    %cst_78 = arith.constant dense<0.000000e+00> : vector<128xf32>
    %93 = vector.multi_reduction <add>, %88, %cst_78 [0, 1] : vector<16x16x128xf32> to vector<128xf32>
    %cst_79 = arith.constant 3.906250e-03 : f32
    %94 = vector.broadcast %cst_79 : f32 to vector<128xf32>
    %95 = arith.mulf %93, %94 : vector<128xf32>
    %96 = vector.shape_cast %95 : vector<128xf32> to vector<1x1x128xf32>
    %97 = vector.broadcast %96 : vector<1x1x128xf32> to vector<16x16x128xf32>
    %98 = arith.subf %88, %97 : vector<16x16x128xf32>
    %99 = arith.mulf %98, %98 : vector<16x16x128xf32>
    %cst_80 = arith.constant dense<0.000000e+00> : vector<128xf32>
    %100 = vector.multi_reduction <add>, %99, %cst_80 [0, 1] : vector<16x16x128xf32> to vector<128xf32>
    %101 = vector.shape_cast %93 : vector<128xf32> to vector<1x128xf32>
    %c0_81 = arith.constant 0 : index
    %c0_82 = arith.constant 0 : index
    %c0_83 = arith.constant 0 : index
    %c0_84 = arith.constant 0 : index
    %102 = vector.load %arg6[%c0_81, %c0_82, %c0_83, %c0_84] : memref<1x1x2x128xf32, #tpu.memory_space<vmem>>, vector<1x1x1x128xf32>
    %103 = vector.shape_cast %102 : vector<1x1x1x128xf32> to vector<1x128xf32>
    %104 = vector.shape_cast %101 : vector<1x128xf32> to vector<1x1x1x128xf32>
    tpu.vector_store %arg6[%c0_81, %c0_82, %c0_83, %c0_84], %104 {strides = array<i32>} : memref<1x1x2x128xf32, #tpu.memory_space<vmem>>, vector<1x1x1x128xf32>,
    %105 = vector.shape_cast %100 : vector<128xf32> to vector<1x128xf32>
    %c0_85 = arith.constant 0 : index
    %c0_86 = arith.constant 0 : index
    %c1_87 = arith.constant 1 : index
    %c0_88 = arith.constant 0 : index
    %106 = vector.load %arg6[%c0_85, %c0_86, %c1_87, %c0_88] : memref<1x1x2x128xf32, #tpu.memory_space<vmem>>, vector<1x1x1x128xf32>
    %107 = vector.shape_cast %106 : vector<1x1x1x128xf32> to vector<1x128xf32>
    %108 = vector.shape_cast %105 : vector<1x128xf32> to vector<1x1x1x128xf32>
    tpu.vector_store %arg6[%c0_85, %c0_86, %c1_87, %c0_88], %108 {strides = array<i32>} : memref<1x1x2x128xf32, #tpu.memory_space<vmem>>, vector<1x1x1x128xf32>,
    return
  }
  func.func @transform_0(%arg0: i32, %arg1: i32) -> (i32, i32, i32, i32) {
    %c0_i32 = arith.constant 0 : i32
    %c0_i32_0 = arith.constant 0 : i32
    %c0_i32_1 = arith.constant 0 : i32
    %c0_i32_2 = arith.constant 0 : i32
    return %arg0, %c0_i32, %c0_i32_0, %c0_i32_1 : i32, i32, i32, i32
  }
  func.func @transform_1(%arg0: i32, %arg1: i32) -> (i32, i32) {
    %c0_i32 = arith.constant 0 : i32
    %c0_i32_0 = arith.constant 0 : i32
    %c0_i32_1 = arith.constant 0 : i32
    return %c0_i32, %c0_i32_0 : i32, i32
  }
  func.func @transform_2(%arg0: i32, %arg1: i32) -> (i32, i32, i32) {
    %c0_i32 = arith.constant 0 : i32
    %c0_i32_0 = arith.constant 0 : i32
    %c0_i32_1 = arith.constant 0 : i32
    %c0_i32_2 = arith.constant 0 : i32
    return %c0_i32, %c0_i32_0, %c0_i32_1 : i32, i32, i32
  }
  func.func @transform_3(%arg0: i32, %arg1: i32) -> (i32, i32, i32, i32) {
    %c0_i32 = arith.constant 0 : i32
    %c0_i32_0 = arith.constant 0 : i32
    %c0_i32_1 = arith.constant 0 : i32
    return %arg0, %arg1, %c0_i32, %c0_i32_0 : i32, i32, i32, i32
  }
  func.func @transform_4(%arg0: i32, %arg1: i32) -> (i32, i32, i32, i32) {
    %c0_i32 = arith.constant 0 : i32
    %c0_i32_0 = arith.constant 0 : i32
    %c0_i32_1 = arith.constant 0 : i32
    return %arg0, %arg1, %c0_i32, %c0_i32_0 : i32, i32, i32, i32
  }
}

module attributes {stable_mosaic.version = 11 : i64} {
  func.func @_dense_layer_kernel(%arg0: i32, %arg1: i32, %arg2: memref<1x16x16x128xbf16, #tpu.memory_space<vmem>>, %arg3: memref<8x128xf32, #tpu.memory_space<vmem>>, %arg4: memref<9x128x128xbf16, #tpu.memory_space<vmem>>, %arg5: memref<1x16x16x128xbf16, #tpu.memory_space<vmem>>, %arg6: memref<1x1x2x128xf32, #tpu.memory_space<vmem>>, %arg7: memref<18x18x128xbf16, #tpu.memory_space<vmem>>) attributes {dimension_semantics = [#tpu.dimension_semantics<parallel>, #tpu.dimension_semantics<parallel>], iteration_bounds = array<i64: 2, 1>, scalar_prefetch = 0 : i64, scratch_operands = 1 : i64, tpu.core_type = #tpu.core_type<tc>, window_params = [{transform_indices = @transform_0, window_bounds = array<i64: 1, 16, 16, 128>}, {pipeline_mode = #tpu.pipeline_mode<synchronous>, transform_indices = @transform_1, window_bounds = array<i64: 8, 128>}, {pipeline_mode = #tpu.pipeline_mode<synchronous>, transform_indices = @transform_2, window_bounds = array<i64: 9, 128, 128>}, {transform_indices = @transform_3, window_bounds = array<i64: 1, 16, 16, 128>}, {transform_indices = @transform_4, window_bounds = array<i64: 1, 1, 2, 128>}]} {
    %c16_i32 = arith.constant 16 : i32
    %0 = arith.muli %arg1, %c16_i32 : i32
    %1 = tpu.assume_multiple %0, 16 : i32
    %c0 = arith.constant 0 : index
    %c0_0 = arith.constant 0 : index
    %2 = vector.load %arg3[%c0, %c0_0] : memref<8x128xf32, #tpu.memory_space<vmem>>, vector<1x128xf32>
    %c1 = arith.constant 1 : index
    %c0_1 = arith.constant 0 : index
    %3 = vector.load %arg3[%c1, %c0_1] : memref<8x128xf32, #tpu.memory_space<vmem>>, vector<1x128xf32>
    %c2 = arith.constant 2 : index
    %c0_2 = arith.constant 0 : index
    %4 = vector.load %arg3[%c2, %c0_2] : memref<8x128xf32, #tpu.memory_space<vmem>>, vector<1x128xf32>
    %c0_3 = arith.constant 0 : index
    %5 = arith.index_cast %1 : i32 to index
    %c0_4 = arith.constant 0 : index
    %c0_5 = arith.constant 0 : index
    %6 = vector.load %arg2[%c0_3, %5, %c0_4, %c0_5] : memref<1x16x16x128xbf16, #tpu.memory_space<vmem>>, vector<1x16x16x128xbf16>
    %7 = vector.shape_cast %6 : vector<1x16x16x128xbf16> to vector<16x16x128xbf16>
    %cst = arith.constant 0.000000e+00 : bf16
    %8 = vector.broadcast %cst : bf16 to vector<18x18x128xbf16>
    %c0_6 = arith.constant 0 : index
    %c0_7 = arith.constant 0 : index
    %c0_8 = arith.constant 0 : index
    %9 = vector.load %arg7[%c0_6, %c0_7, %c0_8] : memref<18x18x128xbf16, #tpu.memory_space<vmem>>, vector<18x18x128xbf16>
    tpu.vector_store %arg7[%c0_6, %c0_7, %c0_8], %8 {strides = array<i32>} : memref<18x18x128xbf16, #tpu.memory_space<vmem>>, vector<18x18x128xbf16>,
    %10 = arith.extf %7 : vector<16x16x128xbf16> to vector<16x16x128xf32>
    %11 = vector.shape_cast %2 : vector<1x128xf32> to vector<1x1x128xf32>
    %12 = vector.broadcast %11 : vector<1x1x128xf32> to vector<16x16x128xf32>
    %13 = arith.mulf %10, %12 : vector<16x16x128xf32>
    %14 = vector.shape_cast %3 : vector<1x128xf32> to vector<1x1x128xf32>
    %15 = vector.broadcast %14 : vector<1x1x128xf32> to vector<16x16x128xf32>
    %16 = arith.addf %13, %15 : vector<16x16x128xf32>
    %cst_9 = arith.constant 0.000000e+00 : f32
    %17 = vector.broadcast %cst_9 : f32 to vector<16x16x128xf32>
    %18 = arith.maximumf %16, %17 : vector<16x16x128xf32>
    %19 = arith.truncf %18 : vector<16x16x128xf32> to vector<16x16x128xbf16>
    %c1_10 = arith.constant 1 : index
    %c1_11 = arith.constant 1 : index
    %c0_12 = arith.constant 0 : index
    %20 = vector.load %arg7[%c1_10, %c1_11, %c0_12] : memref<18x18x128xbf16, #tpu.memory_space<vmem>>, vector<16x16x128xbf16>
    tpu.vector_store %arg7[%c1_10, %c1_11, %c0_12], %19 {strides = array<i32>} : memref<18x18x128xbf16, #tpu.memory_space<vmem>>, vector<16x16x128xbf16>,
    %c0_i32 = arith.constant 0 : i32
    %21 = arith.cmpi sgt, %arg1, %c0_i32 : i32
    %22 = arith.extui %21 : i1 to i32
    %c0_i32_13 = arith.constant 0 : i32
    %23 = arith.cmpi ne, %22, %c0_i32_13 : i32
    scf.if %23 {
      %c1_i32_89 = arith.constant 1 : i32
      %109 = arith.subi %1, %c1_i32_89 : i32
      %c0_i32_90 = arith.constant 0 : i32
      %110 = arith.maxsi %109, %c0_i32_90 : i32
      %c0_91 = arith.constant 0 : index
      %111 = arith.index_cast %110 : i32 to index
      %c0_92 = arith.constant 0 : index
      %c0_93 = arith.constant 0 : index
      %112 = vector.load %arg2[%c0_91, %111, %c0_92, %c0_93] : memref<1x16x16x128xbf16, #tpu.memory_space<vmem>>, vector<1x1x16x128xbf16>
      %113 = vector.shape_cast %112 : vector<1x1x16x128xbf16> to vector<1x16x128xbf16>
      %114 = arith.extf %113 : vector<1x16x128xbf16> to vector<1x16x128xf32>
      %115 = vector.shape_cast %2 : vector<1x128xf32> to vector<1x1x128xf32>
      %116 = vector.broadcast %115 : vector<1x1x128xf32> to vector<1x16x128xf32>
      %117 = arith.mulf %114, %116 : vector<1x16x128xf32>
      %118 = vector.shape_cast %3 : vector<1x128xf32> to vector<1x1x128xf32>
      %119 = vector.broadcast %118 : vector<1x1x128xf32> to vector<1x16x128xf32>
      %120 = arith.addf %117, %119 : vector<1x16x128xf32>
      %cst_94 = arith.constant 0.000000e+00 : f32
      %121 = vector.broadcast %cst_94 : f32 to vector<1x16x128xf32>
      %122 = arith.maximumf %120, %121 : vector<1x16x128xf32>
      %123 = arith.truncf %122 : vector<1x16x128xf32> to vector<1x16x128xbf16>
      %c0_95 = arith.constant 0 : index
      %c1_96 = arith.constant 1 : index
      %c0_97 = arith.constant 0 : index
      %124 = vector.load %arg7[%c0_95, %c1_96, %c0_97] : memref<18x18x128xbf16, #tpu.memory_space<vmem>>, vector<1x16x128xbf16>
      tpu.vector_store %arg7[%c0_95, %c1_96, %c0_97], %123 {strides = array<i32>} : memref<18x18x128xbf16, #tpu.memory_space<vmem>>, vector<1x16x128xbf16>,
    } else {
    }
    %c1_i32 = arith.constant 1 : i32
    %24 = arith.addi %arg1, %c1_i32 : i32
    %c1_i32_14 = arith.constant 1 : i32
    %25 = arith.cmpi slt, %24, %c1_i32_14 : i32
    %26 = arith.extui %25 : i1 to i32
    %c0_i32_15 = arith.constant 0 : i32
    %27 = arith.cmpi ne, %26, %c0_i32_15 : i32
    scf.if %27 {
      %c16_i32_89 = arith.constant 16 : i32
      %109 = arith.addi %1, %c16_i32_89 : i32
      %c15_i32 = arith.constant 15 : i32
      %110 = arith.minsi %109, %c15_i32 : i32
      %c0_90 = arith.constant 0 : index
      %111 = arith.index_cast %110 : i32 to index
      %c0_91 = arith.constant 0 : index
      %c0_92 = arith.constant 0 : index
      %112 = vector.load %arg2[%c0_90, %111, %c0_91, %c0_92] : memref<1x16x16x128xbf16, #tpu.memory_space<vmem>>, vector<1x1x16x128xbf16>
      %113 = vector.shape_cast %112 : vector<1x1x16x128xbf16> to vector<1x16x128xbf16>
      %114 = arith.extf %113 : vector<1x16x128xbf16> to vector<1x16x128xf32>
      %115 = vector.shape_cast %2 : vector<1x128xf32> to vector<1x1x128xf32>
      %116 = vector.broadcast %115 : vector<1x1x128xf32> to vector<1x16x128xf32>
      %117 = arith.mulf %114, %116 : vector<1x16x128xf32>
      %118 = vector.shape_cast %3 : vector<1x128xf32> to vector<1x1x128xf32>
      %119 = vector.broadcast %118 : vector<1x1x128xf32> to vector<1x16x128xf32>
      %120 = arith.addf %117, %119 : vector<1x16x128xf32>
      %cst_93 = arith.constant 0.000000e+00 : f32
      %121 = vector.broadcast %cst_93 : f32 to vector<1x16x128xf32>
      %122 = arith.maximumf %120, %121 : vector<1x16x128xf32>
      %123 = arith.truncf %122 : vector<1x16x128xf32> to vector<1x16x128xbf16>
      %c17 = arith.constant 17 : index
      %c1_94 = arith.constant 1 : index
      %c0_95 = arith.constant 0 : index
      %124 = vector.load %arg7[%c17, %c1_94, %c0_95] : memref<18x18x128xbf16, #tpu.memory_space<vmem>>, vector<1x16x128xbf16>
      tpu.vector_store %arg7[%c17, %c1_94, %c0_95], %123 {strides = array<i32>} : memref<18x18x128xbf16, #tpu.memory_space<vmem>>, vector<1x16x128xbf16>,
    } else {
    }
    %cst_16 = arith.constant 0.000000e+00 : f32
    %28 = vector.broadcast %cst_16 : f32 to vector<256x128xf32>
    %c0_17 = arith.constant 0 : index
    %c0_18 = arith.constant 0 : index
    %c0_19 = arith.constant 0 : index
    %29 = vector.load %arg7[%c0_17, %c0_18, %c0_19] : memref<18x18x128xbf16, #tpu.memory_space<vmem>>, vector<16x16x128xbf16>
    %30 = vector.shape_cast %29 : vector<16x16x128xbf16> to vector<256x128xbf16>
    %c0_20 = arith.constant 0 : index
    %c0_21 = arith.constant 0 : index
    %c0_22 = arith.constant 0 : index
    %31 = vector.load %arg4[%c0_20, %c0_21, %c0_22] : memref<9x128x128xbf16, #tpu.memory_space<vmem>>, vector<1x128x128xbf16>
    %32 = vector.shape_cast %31 : vector<1x128x128xbf16> to vector<128x128xbf16>
    %cst_23 = arith.constant dense<0.000000e+00> : vector<256x128xf32>
    %33 = tpu.matmul %30, %32, %cst_23 {dimension_numbers = #tpu.dot_dimension_numbers<[1], [0], [0], [1], [0, 0, 1, 1], [], []>} : vector<256x128xbf16>, vector<128x128xbf16>, vector<256x128xf32> -> vector<256x128xf32>
    %34 = arith.addf %28, %33 : vector<256x128xf32>
    %c0_24 = arith.constant 0 : index
    %c1_25 = arith.constant 1 : index
    %c0_26 = arith.constant 0 : index
    %35 = vector.load %arg7[%c0_24, %c1_25, %c0_26] : memref<18x18x128xbf16, #tpu.memory_space<vmem>>, vector<16x16x128xbf16>
    %36 = vector.shape_cast %35 : vector<16x16x128xbf16> to vector<256x128xbf16>
    %c1_27 = arith.constant 1 : index
    %c0_28 = arith.constant 0 : index
    %c0_29 = arith.constant 0 : index
    %37 = vector.load %arg4[%c1_27, %c0_28, %c0_29] : memref<9x128x128xbf16, #tpu.memory_space<vmem>>, vector<1x128x128xbf16>
    %38 = vector.shape_cast %37 : vector<1x128x128xbf16> to vector<128x128xbf16>
    %cst_30 = arith.constant dense<0.000000e+00> : vector<256x128xf32>
    %39 = tpu.matmul %36, %38, %cst_30 {dimension_numbers = #tpu.dot_dimension_numbers<[1], [0], [0], [1], [0, 0, 1, 1], [], []>} : vector<256x128xbf16>, vector<128x128xbf16>, vector<256x128xf32> -> vector<256x128xf32>
    %40 = arith.addf %34, %39 : vector<256x128xf32>
    %c0_31 = arith.constant 0 : index
    %c2_32 = arith.constant 2 : index
    %c0_33 = arith.constant 0 : index
    %41 = vector.load %arg7[%c0_31, %c2_32, %c0_33] : memref<18x18x128xbf16, #tpu.memory_space<vmem>>, vector<16x16x128xbf16>
    %42 = vector.shape_cast %41 : vector<16x16x128xbf16> to vector<256x128xbf16>
    %c2_34 = arith.constant 2 : index
    %c0_35 = arith.constant 0 : index
    %c0_36 = arith.constant 0 : index
    %43 = vector.load %arg4[%c2_34, %c0_35, %c0_36] : memref<9x128x128xbf16, #tpu.memory_space<vmem>>, vector<1x128x128xbf16>
    %44 = vector.shape_cast %43 : vector<1x128x128xbf16> to vector<128x128xbf16>
    %cst_37 = arith.constant dense<0.000000e+00> : vector<256x128xf32>
    %45 = tpu.matmul %42, %44, %cst_37 {dimension_numbers = #tpu.dot_dimension_numbers<[1], [0], [0], [1], [0, 0, 1, 1], [], []>} : vector<256x128xbf16>, vector<128x128xbf16>, vector<256x128xf32> -> vector<256x128xf32>
    %46 = arith.addf %40, %45 : vector<256x128xf32>
    %c1_38 = arith.constant 1 : index
    %c0_39 = arith.constant 0 : index
    %c0_40 = arith.constant 0 : index
    %47 = vector.load %arg7[%c1_38, %c0_39, %c0_40] : memref<18x18x128xbf16, #tpu.memory_space<vmem>>, vector<16x16x128xbf16>
    %48 = vector.shape_cast %47 : vector<16x16x128xbf16> to vector<256x128xbf16>
    %c3 = arith.constant 3 : index
    %c0_41 = arith.constant 0 : index
    %c0_42 = arith.constant 0 : index
    %49 = vector.load %arg4[%c3, %c0_41, %c0_42] : memref<9x128x128xbf16, #tpu.memory_space<vmem>>, vector<1x128x128xbf16>
    %50 = vector.shape_cast %49 : vector<1x128x128xbf16> to vector<128x128xbf16>
    %cst_43 = arith.constant dense<0.000000e+00> : vector<256x128xf32>
    %51 = tpu.matmul %48, %50, %cst_43 {dimension_numbers = #tpu.dot_dimension_numbers<[1], [0], [0], [1], [0, 0, 1, 1], [], []>} : vector<256x128xbf16>, vector<128x128xbf16>, vector<256x128xf32> -> vector<256x128xf32>
    %52 = arith.addf %46, %51 : vector<256x128xf32>
    %c1_44 = arith.constant 1 : index
    %c1_45 = arith.constant 1 : index
    %c0_46 = arith.constant 0 : index
    %53 = vector.load %arg7[%c1_44, %c1_45, %c0_46] : memref<18x18x128xbf16, #tpu.memory_space<vmem>>, vector<16x16x128xbf16>
    %54 = vector.shape_cast %53 : vector<16x16x128xbf16> to vector<256x128xbf16>
    %c4 = arith.constant 4 : index
    %c0_47 = arith.constant 0 : index
    %c0_48 = arith.constant 0 : index
    %55 = vector.load %arg4[%c4, %c0_47, %c0_48] : memref<9x128x128xbf16, #tpu.memory_space<vmem>>, vector<1x128x128xbf16>
    %56 = vector.shape_cast %55 : vector<1x128x128xbf16> to vector<128x128xbf16>
    %cst_49 = arith.constant dense<0.000000e+00> : vector<256x128xf32>
    %57 = tpu.matmul %54, %56, %cst_49 {dimension_numbers = #tpu.dot_dimension_numbers<[1], [0], [0], [1], [0, 0, 1, 1], [], []>} : vector<256x128xbf16>, vector<128x128xbf16>, vector<256x128xf32> -> vector<256x128xf32>
    %58 = arith.addf %52, %57 : vector<256x128xf32>
    %c1_50 = arith.constant 1 : index
    %c2_51 = arith.constant 2 : index
    %c0_52 = arith.constant 0 : index
    %59 = vector.load %arg7[%c1_50, %c2_51, %c0_52] : memref<18x18x128xbf16, #tpu.memory_space<vmem>>, vector<16x16x128xbf16>
    %60 = vector.shape_cast %59 : vector<16x16x128xbf16> to vector<256x128xbf16>
    %c5 = arith.constant 5 : index
    %c0_53 = arith.constant 0 : index
    %c0_54 = arith.constant 0 : index
    %61 = vector.load %arg4[%c5, %c0_53, %c0_54] : memref<9x128x128xbf16, #tpu.memory_space<vmem>>, vector<1x128x128xbf16>
    %62 = vector.shape_cast %61 : vector<1x128x128xbf16> to vector<128x128xbf16>
    %cst_55 = arith.constant dense<0.000000e+00> : vector<256x128xf32>
    %63 = tpu.matmul %60, %62, %cst_55 {dimension_numbers = #tpu.dot_dimension_numbers<[1], [0], [0], [1], [0, 0, 1, 1], [], []>} : vector<256x128xbf16>, vector<128x128xbf16>, vector<256x128xf32> -> vector<256x128xf32>
    %64 = arith.addf %58, %63 : vector<256x128xf32>
    %c2_56 = arith.constant 2 : index
    %c0_57 = arith.constant 0 : index
    %c0_58 = arith.constant 0 : index
    %65 = vector.load %arg7[%c2_56, %c0_57, %c0_58] : memref<18x18x128xbf16, #tpu.memory_space<vmem>>, vector<16x16x128xbf16>
    %66 = vector.shape_cast %65 : vector<16x16x128xbf16> to vector<256x128xbf16>
    %c6 = arith.constant 6 : index
    %c0_59 = arith.constant 0 : index
    %c0_60 = arith.constant 0 : index
    %67 = vector.load %arg4[%c6, %c0_59, %c0_60] : memref<9x128x128xbf16, #tpu.memory_space<vmem>>, vector<1x128x128xbf16>
    %68 = vector.shape_cast %67 : vector<1x128x128xbf16> to vector<128x128xbf16>
    %cst_61 = arith.constant dense<0.000000e+00> : vector<256x128xf32>
    %69 = tpu.matmul %66, %68, %cst_61 {dimension_numbers = #tpu.dot_dimension_numbers<[1], [0], [0], [1], [0, 0, 1, 1], [], []>} : vector<256x128xbf16>, vector<128x128xbf16>, vector<256x128xf32> -> vector<256x128xf32>
    %70 = arith.addf %64, %69 : vector<256x128xf32>
    %c2_62 = arith.constant 2 : index
    %c1_63 = arith.constant 1 : index
    %c0_64 = arith.constant 0 : index
    %71 = vector.load %arg7[%c2_62, %c1_63, %c0_64] : memref<18x18x128xbf16, #tpu.memory_space<vmem>>, vector<16x16x128xbf16>
    %72 = vector.shape_cast %71 : vector<16x16x128xbf16> to vector<256x128xbf16>
    %c7 = arith.constant 7 : index
    %c0_65 = arith.constant 0 : index
    %c0_66 = arith.constant 0 : index
    %73 = vector.load %arg4[%c7, %c0_65, %c0_66] : memref<9x128x128xbf16, #tpu.memory_space<vmem>>, vector<1x128x128xbf16>
    %74 = vector.shape_cast %73 : vector<1x128x128xbf16> to vector<128x128xbf16>
    %cst_67 = arith.constant dense<0.000000e+00> : vector<256x128xf32>
    %75 = tpu.matmul %72, %74, %cst_67 {dimension_numbers = #tpu.dot_dimension_numbers<[1], [0], [0], [1], [0, 0, 1, 1], [], []>} : vector<256x128xbf16>, vector<128x128xbf16>, vector<256x128xf32> -> vector<256x128xf32>
    %76 = arith.addf %70, %75 : vector<256x128xf32>
    %c2_68 = arith.constant 2 : index
    %c2_69 = arith.constant 2 : index
    %c0_70 = arith.constant 0 : index
    %77 = vector.load %arg7[%c2_68, %c2_69, %c0_70] : memref<18x18x128xbf16, #tpu.memory_space<vmem>>, vector<16x16x128xbf16>
    %78 = vector.shape_cast %77 : vector<16x16x128xbf16> to vector<256x128xbf16>
    %c8 = arith.constant 8 : index
    %c0_71 = arith.constant 0 : index
    %c0_72 = arith.constant 0 : index
    %79 = vector.load %arg4[%c8, %c0_71, %c0_72] : memref<9x128x128xbf16, #tpu.memory_space<vmem>>, vector<1x128x128xbf16>
    %80 = vector.shape_cast %79 : vector<1x128x128xbf16> to vector<128x128xbf16>
    %cst_73 = arith.constant dense<0.000000e+00> : vector<256x128xf32>
    %81 = tpu.matmul %78, %80, %cst_73 {dimension_numbers = #tpu.dot_dimension_numbers<[1], [0], [0], [1], [0, 0, 1, 1], [], []>} : vector<256x128xbf16>, vector<128x128xbf16>, vector<256x128xf32> -> vector<256x128xf32>
    %82 = arith.addf %76, %81 : vector<256x128xf32>
    %83 = arith.extf %7 : vector<16x16x128xbf16> to vector<16x16x128xf32>
    %84 = vector.shape_cast %82 : vector<256x128xf32> to vector<16x16x128xf32>
    %85 = arith.addf %83, %84 : vector<16x16x128xf32>
    %86 = vector.shape_cast %4 : vector<1x128xf32> to vector<1x1x128xf32>
    %87 = vector.broadcast %86 : vector<1x1x128xf32> to vector<16x16x128xf32>
    %88 = arith.addf %85, %87 : vector<16x16x128xf32>
    %89 = arith.truncf %88 : vector<16x16x128xf32> to vector<16x16x128xbf16>
    %c0_74 = arith.constant 0 : index
    %c0_75 = arith.constant 0 : index
    %c0_76 = arith.constant 0 : index
    %c0_77 = arith.constant 0 : index
    %90 = vector.load %arg5[%c0_74, %c0_75, %c0_76, %c0_77] : memref<1x16x16x128xbf16, #tpu.memory_space<vmem>>, vector<1x16x16x128xbf16>
    %91 = vector.shape_cast %90 : vector<1x16x16x128xbf16> to vector<16x16x128xbf16>
    %92 = vector.shape_cast %89 : vector<16x16x128xbf16> to vector<1x16x16x128xbf16>
    tpu.vector_store %arg5[%c0_74, %c0_75, %c0_76, %c0_77], %92 {strides = array<i32>} : memref<1x16x16x128xbf16, #tpu.memory_space<vmem>>, vector<1x16x16x128xbf16>,
    %cst_78 = arith.constant dense<0.000000e+00> : vector<128xf32>
    %93 = vector.multi_reduction <add>, %88, %cst_78 [0, 1] : vector<16x16x128xf32> to vector<128xf32>
    %cst_79 = arith.constant 3.906250e-03 : f32
    %94 = vector.broadcast %cst_79 : f32 to vector<128xf32>
    %95 = arith.mulf %93, %94 : vector<128xf32>
    %96 = vector.shape_cast %95 : vector<128xf32> to vector<1x1x128xf32>
    %97 = vector.broadcast %96 : vector<1x1x128xf32> to vector<16x16x128xf32>
    %98 = arith.subf %88, %97 : vector<16x16x128xf32>
    %99 = arith.mulf %98, %98 : vector<16x16x128xf32>
    %cst_80 = arith.constant dense<0.000000e+00> : vector<128xf32>
    %100 = vector.multi_reduction <add>, %99, %cst_80 [0, 1] : vector<16x16x128xf32> to vector<128xf32>
    %101 = vector.shape_cast %93 : vector<128xf32> to vector<1x128xf32>
    %c0_81 = arith.constant 0 : index
    %c0_82 = arith.constant 0 : index
    %c0_83 = arith.constant 0 : index
    %c0_84 = arith.constant 0 : index
    %102 = vector.load %arg6[%c0_81, %c0_82, %c0_83, %c0_84] : memref<1x1x2x128xf32, #tpu.memory_space<vmem>>, vector<1x1x1x128xf32>
    %103 = vector.shape_cast %102 : vector<1x1x1x128xf32> to vector<1x128xf32>
    %104 = vector.shape_cast %101 : vector<1x128xf32> to vector<1x1x1x128xf32>
    tpu.vector_store %arg6[%c0_81, %c0_82, %c0_83, %c0_84], %104 {strides = array<i32>} : memref<1x1x2x128xf32, #tpu.memory_space<vmem>>, vector<1x1x1x128xf32>,
    %105 = vector.shape_cast %100 : vector<128xf32> to vector<1x128xf32>
    %c0_85 = arith.constant 0 : index
    %c0_86 = arith.constant 0 : index
    %c1_87 = arith.constant 1 : index
    %c0_88 = arith.constant 0 : index
    %106 = vector.load %arg6[%c0_85, %c0_86, %c1_87, %c0_88] : memref<1x1x2x128xf32, #tpu.memory_space<vmem>>, vector<1x1x1x128xf32>
    %107 = vector.shape_cast %106 : vector<1x1x1x128xf32> to vector<1x128xf32>
    %108 = vector.shape_cast %105 : vector<1x128xf32> to vector<1x1x1x128xf32>
    tpu.vector_store %arg6[%c0_85, %c0_86, %c1_87, %c0_88], %108 {strides = array<i32>} : memref<1x1x2x128xf32, #tpu.memory_space<vmem>>, vector<1x1x1x128xf32>,
    return
  }
  func.func @transform_0(%arg0: i32, %arg1: i32) -> (i32, i32, i32, i32) {
    %c0_i32 = arith.constant 0 : i32
    %c0_i32_0 = arith.constant 0 : i32
    %c0_i32_1 = arith.constant 0 : i32
    %c0_i32_2 = arith.constant 0 : i32
    return %arg0, %c0_i32, %c0_i32_0, %c0_i32_1 : i32, i32, i32, i32
  }
  func.func @transform_1(%arg0: i32, %arg1: i32) -> (i32, i32) {
    %c0_i32 = arith.constant 0 : i32
    %c0_i32_0 = arith.constant 0 : i32
    %c0_i32_1 = arith.constant 0 : i32
    return %c0_i32, %c0_i32_0 : i32, i32
  }
  func.func @transform_2(%arg0: i32, %arg1: i32) -> (i32, i32, i32) {
    %c0_i32 = arith.constant 0 : i32
    %c0_i32_0 = arith.constant 0 : i32
    %c0_i32_1 = arith.constant 0 : i32
    %c0_i32_2 = arith.constant 0 : i32
    return %c0_i32, %c0_i32_0, %c0_i32_1 : i32, i32, i32
  }
  func.func @transform_3(%arg0: i32, %arg1: i32) -> (i32, i32, i32, i32) {
    %c0_i32 = arith.constant 0 : i32
    %c0_i32_0 = arith.constant 0 : i32
    %c0_i32_1 = arith.constant 0 : i32
    return %arg0, %arg1, %c0_i32, %c0_i32_0 : i32, i32, i32, i32
  }
  func.func @transform_4(%arg0: i32, %arg1: i32) -> (i32, i32, i32, i32) {
    %c0_i32 = arith.constant 0 : i32
    %c0_i32_0 = arith.constant 0 : i32
    %c0_i32_1 = arith.constant 0 : i32
    return %arg0, %arg1, %c0_i32, %c0_i32_0 : i32, i32, i32, i32
  }
}

</mosaic_0001>

<llo_original>
// kernel: dense_block_forward.3
$region0: #{dense_block_forward.3}
  #allocation0 [shape = 'u32[]', space=smem, size = 0x4, offset = 0x4, fixed_abs, tag = 'smem constant byte address 0x4 - core index']
  #allocation1 [shape = 'u32[144,128]{1,0:T(1,128)}', space=vmem, size = 0x12000, scoped, tag = 'internal scratch']
  #allocation2 [shape = 'bf16[18,18,128]{2,1,0:T(8,128)(2,1)}', space=vmem, size = 0x1b000, scoped, tag = 'scratch operand']
  %s0 = inlined_call_operand.vmem [shape: bf16[2,16,16,128], index: 0, kind: input, shape index: {}]
  %s1 = inlined_call_operand.vmem [shape: f32[8,128], index: 1, kind: input, shape index: {}]
  %s2 = inlined_call_operand.vmem [shape: bf16[9,128,128], index: 2, kind: input, shape index: {}]
  %s3 = inlined_call_operand.vmem [shape: bf16[2,16,16,128], index: 3, kind: output, shape index: {0}]
  %s4 = inlined_call_operand.hbm [shape: f32[2,1,2,128], index: 4, kind: output, shape index: {1}]
  %5 = xla_tuple %s3, %s4
  %s6 = sld [smem:[#allocation0]]
  $region61: #{dense_block_forward.3} parent=0
    _
  %s8 = ssub.s32 1, %s6
  %s9 = scalar_select 0, %s8, %s6
  $region1: #{dense_block_forward.3} parent=0
    #allocation3 [shape = 'u8[2048]{0}', space=vmem, size = 0x800, scoped, tag = 'output window, operand 1']
    #allocation4 [shape = 's32[2]{0}', space=sflag, size = 0x8, scoped, tag = 'scoped memory for dense_block_forward.3']
    %10 = vsyncpa [#allocation4], 0
    %s11 = scalar_lea.sflag [#allocation4], 1
    %12 = vsyncpa %s11, 0
    loop: start=0, step=1, limit=4
    $region2: #{dense_block_forward.3} parent=1 // loop_pre_header
      _
    $region3: #{dense_block_forward.3} parent=1 // loop_header
      %s14 = sphi 0, %s18
      %p15 = scmp.ge.s32.totalorder %s14, 4
      %s21 = sphi 0, %s33
      %s22 = sphi 0, %s29
      %s23 = sphi 0, %s21
      %s24 = sphi 0, %s22
      %s25 = sphi 0, %s23
      %s26 = sphi 0, %s24
      %s36 = sphi 0, %s38
      %s39 = sphi 0, %s36
      %s40 = sphi 0, %s39
      %s56 = sphi 0, %s40
      %s60 = sphi 0, %s60
      %s62 = sphi 0, %s60
      %s63 = sphi 0, %s62
      %s77 = sphi 0, %s63
      %s81 = sphi 0, %s81
      %s83 = sphi 0, %s81
      %s84 = sphi 0, %s83
      %s98 = sphi 0, %s84
      %s106 = sphi 0, %s108
      %s109 = sphi 0, %s106
      %s110 = sphi 0, %s109
      %s126 = sphi 0, %s110
      %s134 = sphi 0, %s136
      %s137 = sphi 0, %s134
      %s138 = sphi 0, %s137
      %s154 = sphi 0, %s138
    $region4: #{dense_block_forward.3} parent=1 // loop_header_branch
      %17 = sbr.rel (%p15) target = $region8
    $region5: #{dense_block_forward.3} parent=1 // loop_body
      %s19 = ssub.s32 %s14, 1
      %s20 = ssub.s32 %s14, 2
      %s27 = sadd.s32 1, %s22
      %p28 = scmp.ge.s32.totalorder %s27, 1
      %s29 = scalar_select %p28, 0, %s27
      %s30 = sadd.s32 1, %s21
      %s31 = scalar_select %p28, %s30, %s21
      %p32 = scmp.ge.s32.totalorder %s31, 2
      %s33 = scalar_select %p32, 0, %s31
      %s34 = ssub.s32 %s21, %s33
      %p35 = scmp.eq.s32.totalorder %s34, 0
      %s37 = sadd.s32 %s36, 1
      %s38 = scalar_select %p35, %s36, %s37
      %p41 = pneg %p35
      %p42 = scmp.eq.s32.totalorder %s14, 1
      %p43 = por %p41, %p42
      %p44 = scmp.ne.s32.totalorder %s36, %s39
      %p45 = scmp.eq.s32.totalorder %s14, 0
      %p46 = por %p44, %p45
      %p47 = scmp.ne.s32.totalorder %s36, %s39
      %p48 = scmp.eq.s32.totalorder %s19, 1
      %p49 = por %p47, %p48
      %p50 = scmp.ne.s32.totalorder %s39, %s40
      %p51 = scmp.eq.s32.totalorder %s19, 0
      %p52 = por %p50, %p51
      %p53 = scmp.ne.s32.totalorder %s39, %s40
      %p54 = scmp.eq.s32.totalorder %s20, 1
      %p55 = por %p53, %p54
      %p57 = scmp.ne.s32.totalorder %s40, %s56
      %p58 = scmp.eq.s32.totalorder %s20, 0
      %p59 = por %p57, %p58
      %s61 = sadd.s32 %s60, 1
      %p64 = scmp.eq.s32.totalorder %s14, 1
      %p65 = scmp.ne.s32.totalorder %s60, %s62
      %p66 = scmp.eq.s32.totalorder %s14, 0
      %p67 = por %p65, %p66
      %p68 = scmp.ne.s32.totalorder %s60, %s62
      %p69 = scmp.eq.s32.totalorder %s19, 1
      %p70 = por %p68, %p69
      %p71 = scmp.ne.s32.totalorder %s62, %s63
      %p72 = scmp.eq.s32.totalorder %s19, 0
      %p73 = por %p71, %p72
      %p74 = scmp.ne.s32.totalorder %s62, %s63
      %p75 = scmp.eq.s32.totalorder %s20, 1
      %p76 = por %p74, %p75
      %p78 = scmp.ne.s32.totalorder %s63, %s77
      %p79 = scmp.eq.s32.totalorder %s20, 0
      %p80 = por %p78, %p79
      %s82 = sadd.s32 %s81, 1
      %p85 = scmp.eq.s32.totalorder %s14, 1
      %p86 = scmp.ne.s32.totalorder %s81, %s83
      %p87 = scmp.eq.s32.totalorder %s14, 0
      %p88 = por %p86, %p87
      %p89 = scmp.ne.s32.totalorder %s81, %s83
      %p90 = scmp.eq.s32.totalorder %s19, 1
      %p91 = por %p89, %p90
      %p92 = scmp.ne.s32.totalorder %s83, %s84
      %p93 = scmp.eq.s32.totalorder %s19, 0
      %p94 = por %p92, %p93
      %p95 = scmp.ne.s32.totalorder %s83, %s84
      %p96 = scmp.eq.s32.totalorder %s20, 1
      %p97 = por %p95, %p96
      %p99 = scmp.ne.s32.totalorder %s84, %s98
      %p100 = scmp.eq.s32.totalorder %s20, 0
      %p101 = por %p99, %p100
      %s102 = ssub.s32 %s21, %s33
      %s103 = ssub.s32 %s22, %s29
      %s104 = sor.u32 %s102, %s103
      %p105 = scmp.eq.s32.totalorder %s104, 0
      %s107 = sadd.s32 %s106, 1
      %s108 = scalar_select %p105, %s106, %s107
      %p111 = pneg %p105
      %p112 = scmp.eq.s32.totalorder %s14, 1
      %p113 = por %p111, %p112
      %p114 = scmp.ne.s32.totalorder %s106, %s109
      %p115 = scmp.eq.s32.totalorder %s14, 0
      %p116 = por %p114, %p115
      %p117 = scmp.ne.s32.totalorder %s106, %s109
      %p118 = scmp.eq.s32.totalorder %s19, 1
      %p119 = por %p117, %p118
      %p120 = scmp.ne.s32.totalorder %s109, %s110
      %p121 = scmp.eq.s32.totalorder %s19, 0
      %p122 = por %p120, %p121
      %p123 = scmp.ne.s32.totalorder %s109, %s110
      %p124 = scmp.eq.s32.totalorder %s20, 1
      %p125 = por %p123, %p124
      %p127 = scmp.ne.s32.totalorder %s110, %s126
      %p128 = scmp.eq.s32.totalorder %s20, 0
      %p129 = por %p127, %p128
      %s130 = ssub.s32 %s21, %s33
      %s131 = ssub.s32 %s22, %s29
      %s132 = sor.u32 %s130, %s131
      %p133 = scmp.eq.s32.totalorder %s132, 0
      %s135 = sadd.s32 %s134, 1
      %s136 = scalar_select %p133, %s134, %s135
      %p139 = pneg %p133
      %p140 = scmp.eq.s32.totalorder %s14, 1
      %p141 = por %p139, %p140
      %p142 = scmp.ne.s32.totalorder %s134, %s137
      %p143 = scmp.eq.s32.totalorder %s14, 0
      %p144 = por %p142, %p143
      %p145 = scmp.ne.s32.totalorder %s134, %s137
      %p146 = scmp.eq.s32.totalorder %s19, 1
      %p147 = por %p145, %p146
      %p148 = scmp.ne.s32.totalorder %s137, %s138
      %p149 = scmp.eq.s32.totalorder %s19, 0
      %p150 = por %p148, %p149
      %p151 = scmp.ne.s32.totalorder %s137, %s138
      %p152 = scmp.eq.s32.totalorder %s20, 1
      %p153 = por %p151, %p152
      %p155 = scmp.ne.s32.totalorder %s138, %s154
      %p156 = scmp.eq.s32.totalorder %s20, 0
      %p157 = por %p155, %p156
      %p158 = scmp.le.s32.totalorder 1, %s14
      %p159 = scmp.lt.s32.totalorder %s14, 3
      %p160 = pnand %p158, %p159
      %p161 = pneg %p160
      // Predicated region
      $region9: #{dense_block_forward.3} parent=5 // pred_check
        _
      $region10: #{dense_block_forward.3} parent=5 // pred_check_branch
        %163 = sbr.rel (%p160) target = $region12
      $region11: #{dense_block_forward.3} parent=5 // pred_region
        %s164 = ssub.s32 %s14, 1
        // Predicated region
        $region13: #{dense_block_forward.3} parent=11 // pred_check
          %p165 = pneg %p73
        $region14: #{dense_block_forward.3} parent=11 // pred_check_branch
          %167 = sbr.rel (%p165) target = $region16
        $region15: #{dense_block_forward.3} parent=11 // pred_region
          _
        $region16: #{dense_block_forward.3} parent=11 // pred_fallthru
          _
        // Predicated region
        $region17: #{dense_block_forward.3} parent=11 // pred_check
          %p168 = pneg %p94
        $region18: #{dense_block_forward.3} parent=11 // pred_check_branch
          %170 = sbr.rel (%p168) target = $region20
        $region19: #{dense_block_forward.3} parent=11 // pred_region
          _
        $region20: #{dense_block_forward.3} parent=11 // pred_fallthru
          _
      $region12: #{dense_block_forward.3} parent=5 // pred_fallthru
        _
      %p171 = scmp.lt.s32.totalorder %s14, 2
      // Predicated region
      $region21: #{dense_block_forward.3} parent=5 // pred_check
        %p172 = pneg %p171
      $region22: #{dense_block_forward.3} parent=5 // pred_check_branch
        %174 = sbr.rel (%p172) target = $region24
      $region23: #{dense_block_forward.3} parent=5 // pred_region
        // Predicated region
        $region25: #{dense_block_forward.3} parent=23 // pred_check
          %p175 = pneg %p46
        $region26: #{dense_block_forward.3} parent=23 // pred_check_branch
          %177 = sbr.rel (%p175) target = $region28
        $region27: #{dense_block_forward.3} parent=23 // pred_region
          %p178 = scmp.lt.s32.totalorder %s21, 1
          %s179 = scalar_select %p178, %s21, 1
          %s180 = smul.addr %s179, 32
          %s181 = smul.addr %s180, 4
          %s182 = scalar_lea.vmem %s0, %s181
        $region28: #{dense_block_forward.3} parent=23 // pred_fallthru
          _
      $region24: #{dense_block_forward.3} parent=5 // pred_fallthru
        _
      %p183 = scmp.le.s32.totalorder 1, %s14
      %p184 = scmp.lt.s32.totalorder %s14, 3
      %p185 = pnand %p183, %p184
      %p186 = pneg %p185
      // Predicated region
      $region29: #{dense_block_forward.3} parent=5 // pred_check
        _
      $region30: #{dense_block_forward.3} parent=5 // pred_check_branch
        %188 = sbr.rel (%p185) target = $region32
      $region31: #{dense_block_forward.3} parent=5 // pred_region
        %s189 = ssub.s32 %s14, 1
        %p190 = scmp.lt.s32.totalorder %s23, 1
        %s191 = scalar_select %p190, %s23, 1
        %s192 = smul.addr %s191, 32
        %s193 = smul.addr %s192, 4
        %s194 = scalar_lea.vmem %s0, %s193
        %p195 = pneg %p52
        %p196 = pneg %p49
        %p197 = pneg %p73
        %p198 = pneg %p70
        %p199 = pneg %p94
        %p200 = pneg %p91
        %p201 = pneg %p122
        %p202 = pneg %p119
        %s203 = smul.u32 16, %s24
        %p204 = scmp.lt.s32.totalorder %s23, 1
        %s205 = scalar_select %p204, %s23, 1
        %p206 = scmp.lt.s32.totalorder %s203, 15
        %s207 = scalar_select %p206, %s203, 15
        %s208 = smul.addr %s207, 2
        %s209 = smul.addr %s205, 32
        %s210 = sadd.s32 %s208, %s209
        %s211 = smul.addr %s210, 4
        %s212 = scalar_lea.vmem %s3, %s211
        %p213 = pneg %p150
        %p214 = pneg %p147
        %s215 = sand.u32 %s137, 1
        %s216 = scalar_lea.sflag [#allocation4], %s215
        %s217 = sand.u32 %s137, 1
        %s218 = smul.addr %s217, 2
        %s219 = scalar_lea.vmem [#allocation3], %s218
        %p220 = scmp.lt.s32.totalorder %s23, 1
        %s221 = scalar_select %p220, %s23, 1
        %s222 = smul.addr %s221, 32
        %s223 = smul.addr %s222, 4
        %s224 = scalar_lea.vmem %s0, %s223
        %s225 = smul.u32 16, %s24
        %p226 = scmp.lt.s32.totalorder %s23, 1
        %s227 = scalar_select %p226, %s23, 1
        %p228 = scmp.lt.s32.totalorder %s225, 15
        %s229 = scalar_select %p228, %s225, 15
        %s230 = smul.addr %s229, 2
        %s231 = smul.addr %s227, 32
        %s232 = sadd.s32 %s230, %s231
        %s233 = smul.addr %s232, 4
        %s234 = scalar_lea.vmem %s3, %s233
        %s235 = smul.u32 16, %s24
        %s237 = smul.u32 %s24, 16
        %v238 = vld [vmem:[%s1] sm:$0x1]
        %v239 = vld [vmem:[%s1 + $0x1] sm:$0x1]
        %v240 = vld [vmem:[%s1 + $0x2] sm:$0x1]
        %s241 = smul.u32 %s237, 2
        %s242 = smul.addr %s241, 4
        %s243 = scalar_lea.vmem %s224, %s242
        %v244 = vld [vmem:[%s243] sm:$0xf]
        %v245 = vld [vmem:[%s243 + $0x4] sm:$0xf]
        %v246 = vld [vmem:[%s243 + $0x8] sm:$0xf]
        %v247 = vld [vmem:[%s243 + $0xc] sm:$0xf]
        %v248 = vld [vmem:[%s243 + $0x10] sm:$0xf]
        %v249 = vld [vmem:[%s243 + $0x14] sm:$0xf]
        %v250 = vld [vmem:[%s243 + $0x18] sm:$0xf]
        %v251 = vld [vmem:[%s243 + $0x1c] sm:$0xf]
        %v252 = vld [vmem:[%s243 + $0x20] sm:$0xf]
        %v253 = vld [vmem:[%s243 + $0x24] sm:$0xf]
        %v254 = vld [vmem:[%s243 + $0x28] sm:$0xf]
        %v255 = vld [vmem:[%s243 + $0x2c] sm:$0xf]
        %v256 = vld [vmem:[%s243 + $0x30] sm:$0xf]
        %v257 = vld [vmem:[%s243 + $0x34] sm:$0xf]
        %v258 = vld [vmem:[%s243 + $0x38] sm:$0xf]
        %v259 = vld [vmem:[%s243 + $0x3c] sm:$0xf]
        %v260 = vld [vmem:[%s243 + $0x40] sm:$0xf]
        %v261 = vld [vmem:[%s243 + $0x44] sm:$0xf]
        %v262 = vld [vmem:[%s243 + $0x48] sm:$0xf]
        %v263 = vld [vmem:[%s243 + $0x4c] sm:$0xf]
        %v264 = vld [vmem:[%s243 + $0x50] sm:$0xf]
        %v265 = vld [vmem:[%s243 + $0x54] sm:$0xf]
        %v266 = vld [vmem:[%s243 + $0x58] sm:$0xf]
        %v267 = vld [vmem:[%s243 + $0x5c] sm:$0xf]
        %v268 = vld [vmem:[%s243 + $0x60] sm:$0xf]
        %v269 = vld [vmem:[%s243 + $0x64] sm:$0xf]
        %v270 = vld [vmem:[%s243 + $0x68] sm:$0xf]
        %v271 = vld [vmem:[%s243 + $0x6c] sm:$0xf]
        %v272 = vld [vmem:[%s243 + $0x70] sm:$0xf]
        %v273 = vld [vmem:[%s243 + $0x74] sm:$0xf]
        %v274 = vld [vmem:[%s243 + $0x78] sm:$0xf]
        %v275 = vld [vmem:[%s243 + $0x7c] sm:$0xf]
        %276 = vst [vmem:[#allocation2] sm:$0xf] 0
        %277 = vst [vmem:[#allocation2 + $0x4] sm:$0xf] 0
        %278 = vst [vmem:[#allocation2 + $0x8] sm:$0x1] 0
        %279 = vst [vmem:[#allocation2 + $0xc] sm:$0xf] 0
        %280 = vst [vmem:[#allocation2 + $0x10] sm:$0xf] 0
        %281 = vst [vmem:[#allocation2 + $0x14] sm:$0x1] 0
        %282 = vst [vmem:[#allocation2 + $0x18] sm:$0xf] 0
        %283 = vst [vmem:[#allocation2 + $0x1c] sm:$0xf] 0
        %284 = vst [vmem:[#allocation2 + $0x20] sm:$0x1] 0
        %285 = vst [vmem:[#allocation2 + $0x24] sm:$0xf] 0
        %286 = vst [vmem:[#allocation2 + $0x28] sm:$0xf] 0
        %287 = vst [vmem:[#allocation2 + $0x2c] sm:$0x1] 0
        %288 = vst [vmem:[#allocation2 + $0x30] sm:$0xf] 0
        %289 = vst [vmem:[#allocation2 + $0x34] sm:$0xf] 0
        %290 = vst [vmem:[#allocation2 + $0x38] sm:$0x1] 0
        %291 = vst [vmem:[#allocation2 + $0x3c] sm:$0xf] 0
        %292 = vst [vmem:[#allocation2 + $0x40] sm:$0xf] 0
        %293 = vst [vmem:[#allocation2 + $0x44] sm:$0x1] 0
        %294 = vst [vmem:[#allocation2 + $0x48] sm:$0xf] 0
        %295 = vst [vmem:[#allocation2 + $0x4c] sm:$0xf] 0
        %296 = vst [vmem:[#allocation2 + $0x50] sm:$0x1] 0
        %297 = vst [vmem:[#allocation2 + $0x54] sm:$0xf] 0
        %298 = vst [vmem:[#allocation2 + $0x58] sm:$0xf] 0
        %299 = vst [vmem:[#allocation2 + $0x5c] sm:$0x1] 0
        %300 = vst [vmem:[#allocation2 + $0x60] sm:$0xf] 0
        %301 = vst [vmem:[#allocation2 + $0x64] sm:$0xf] 0
        %302 = vst [vmem:[#allocation2 + $0x68] sm:$0x1] 0
        %303 = vst [vmem:[#allocation2 + $0x6c] sm:$0xf] 0
        %304 = vst [vmem:[#allocation2 + $0x70] sm:$0xf] 0
        %305 = vst [vmem:[#allocation2 + $0x74] sm:$0x1] 0
        %306 = vst [vmem:[#allocation2 + $0x78] sm:$0xf] 0
        %307 = vst [vmem:[#allocation2 + $0x7c] sm:$0xf] 0
        %308 = vst [vmem:[#allocation2 + $0x80] sm:$0x1] 0
        %309 = vst [vmem:[#allocation2 + $0x84] sm:$0xf] 0
        %310 = vst [vmem:[#allocation2 + $0x88] sm:$0xf] 0
        %311 = vst [vmem:[#allocation2 + $0x8c] sm:$0x1] 0
        %312 = vst [vmem:[#allocation2 + $0x90] sm:$0xf] 0
        %313 = vst [vmem:[#allocation2 + $0x94] sm:$0xf] 0
        %314 = vst [vmem:[#allocation2 + $0x98] sm:$0x1] 0
        %315 = vst [vmem:[#allocation2 + $0x9c] sm:$0xf] 0
        %316 = vst [vmem:[#allocation2 + $0xa0] sm:$0xf] 0
        %317 = vst [vmem:[#allocation2 + $0xa4] sm:$0x1] 0
        %318 = vst [vmem:[#allocation2 + $0xa8] sm:$0xf] 0
        %319 = vst [vmem:[#allocation2 + $0xac] sm:$0xf] 0
        %320 = vst [vmem:[#allocation2 + $0xb0] sm:$0x1] 0
        %321 = vst [vmem:[#allocation2 + $0xb4] sm:$0xf] 0
        %322 = vst [vmem:[#allocation2 + $0xb8] sm:$0xf] 0
        %323 = vst [vmem:[#allocation2 + $0xbc] sm:$0x1] 0
        %324 = vst [vmem:[#allocation2 + $0xc0] sm:$0xf] 0
        %325 = vst [vmem:[#allocation2 + $0xc4] sm:$0xf] 0
        %326 = vst [vmem:[#allocation2 + $0xc8] sm:$0x1] 0
        %327 = vst [vmem:[#allocation2 + $0xcc] sm:$0xf] 0
        %328 = vst [vmem:[#allocation2 + $0xd0] sm:$0xf] 0
        %329 = vst [vmem:[#allocation2 + $0xd4] sm:$0x1] 0
        %v330 = vunpack.c.l.bf16 %v244
        %v331 = vunpack.c.l.bf16 %v245
        %v332 = vunpack.c.l.bf16 %v246
        %v333 = vunpack.c.l.bf16 %v247
        %v334 = vunpack.c.l.bf16 %v248
        %v335 = vunpack.c.l.bf16 %v249
        %v336 = vunpack.c.l.bf16 %v250
        %v337 = vunpack.c.l.bf16 %v251
        %v338 = vunpack.c.l.bf16 %v252
        %v339 = vunpack.c.l.bf16 %v253
        %v340 = vunpack.c.l.bf16 %v254
        %v341 = vunpack.c.l.bf16 %v255
        %v342 = vunpack.c.l.bf16 %v256
        %v343 = vunpack.c.l.bf16 %v257
        %v344 = vunpack.c.l.bf16 %v258
        %v345 = vunpack.c.l.bf16 %v259
        %v346 = vunpack.c.l.bf16 %v260
        %v347 = vunpack.c.l.bf16 %v261
        %v348 = vunpack.c.l.bf16 %v262
        %v349 = vunpack.c.l.bf16 %v263
        %v350 = vunpack.c.l.bf16 %v264
        %v351 = vunpack.c.l.bf16 %v265
        %v352 = vunpack.c.l.bf16 %v266
        %v353 = vunpack.c.l.bf16 %v267
        %v354 = vunpack.c.l.bf16 %v268
        %v355 = vunpack.c.l.bf16 %v269
        %v356 = vunpack.c.l.bf16 %v270
        %v357 = vunpack.c.l.bf16 %v271
        %v358 = vunpack.c.l.bf16 %v272
        %v359 = vunpack.c.l.bf16 %v273
        %v360 = vunpack.c.l.bf16 %v274
        %v361 = vunpack.c.l.bf16 %v275
        %v362 = vlaneseq
        %v363 = vshrl.u32 %v362, 7
        %v364 = vsub.s32 0, %v363
        %v365 = vrot.slane %v238, %v364
        %v366 = vmul.f32 %v330, %v365
        %v367 = vmul.f32 %v331, %v365
        %v368 = vmul.f32 %v332, %v365
        %v369 = vmul.f32 %v333, %v365
        %v370 = vmul.f32 %v334, %v365
        %v371 = vmul.f32 %v335, %v365
        %v372 = vmul.f32 %v336, %v365
        %v373 = vmul.f32 %v337, %v365
        %v374 = vmul.f32 %v338, %v365
        %v375 = vmul.f32 %v339, %v365
        %v376 = vmul.f32 %v340, %v365
        %v377 = vmul.f32 %v341, %v365
        %v378 = vmul.f32 %v342, %v365
        %v379 = vmul.f32 %v343, %v365
        %v380 = vmul.f32 %v344, %v365
        %v381 = vmul.f32 %v345, %v365
        %v382 = vmul.f32 %v346, %v365
        %v383 = vmul.f32 %v347, %v365
        %v384 = vmul.f32 %v348, %v365
        %v385 = vmul.f32 %v349, %v365
        %v386 = vmul.f32 %v350, %v365
        %v387 = vmul.f32 %v351, %v365
        %v388 = vmul.f32 %v352, %v365
        %v389 = vmul.f32 %v353, %v365
        %v390 = vmul.f32 %v354, %v365
        %v391 = vmul.f32 %v355, %v365
        %v392 = vmul.f32 %v356, %v365
        %v393 = vmul.f32 %v357, %v365
        %v394 = vmul.f32 %v358, %v365
        %v395 = vmul.f32 %v359, %v365
        %v396 = vmul.f32 %v360, %v365
        %v397 = vmul.f32 %v361, %v365
        %v398 = vlaneseq
        %v399 = vshrl.u32 %v398, 7
        %v400 = vsub.s32 0, %v399
        %v401 = vrot.slane %v239, %v400
        %v402 = vadd.f32 %v366, %v401
        %v403 = vadd.f32 %v367, %v401
        %v404 = vadd.f32 %v368, %v401
        %v405 = vadd.f32 %v369, %v401
        %v406 = vadd.f32 %v370, %v401
        %v407 = vadd.f32 %v371, %v401
        %v408 = vadd.f32 %v372, %v401
        %v409 = vadd.f32 %v373, %v401
        %v410 = vadd.f32 %v374, %v401
        %v411 = vadd.f32 %v375, %v401
        %v412 = vadd.f32 %v376, %v401
        %v413 = vadd.f32 %v377, %v401
        %v414 = vadd.f32 %v378, %v401
        %v415 = vadd.f32 %v379, %v401
        %v416 = vadd.f32 %v380, %v401
        %v417 = vadd.f32 %v381, %v401
        %v418 = vadd.f32 %v382, %v401
        %v419 = vadd.f32 %v383, %v401
        %v420 = vadd.f32 %v384, %v401
        %v421 = vadd.f32 %v385, %v401
        %v422 = vadd.f32 %v386, %v401
        %v423 = vadd.f32 %v387, %v401
        %v424 = vadd.f32 %v388, %v401
        %v425 = vadd.f32 %v389, %v401
        %v426 = vadd.f32 %v390, %v401
        %v427 = vadd.f32 %v391, %v401
        %v428 = vadd.f32 %v392, %v401
        %v429 = vadd.f32 %v393, %v401
        %v430 = vadd.f32 %v394, %v401
        %v431 = vadd.f32 %v395, %v401
        %v432 = vadd.f32 %v396, %v401
        %v433 = vadd.f32 %v397, %v401
        %v434 = vmax.f32 %v402, 0.0
        %v435 = vmax.f32 %v403, 0.0
        %v436 = vmax.f32 %v404, 0.0
        %v437 = vmax.f32 %v405, 0.0
        %v438 = vmax.f32 %v406, 0.0
        %v439 = vmax.f32 %v407, 0.0
        %v440 = vmax.f32 %v408, 0.0
        %v441 = vmax.f32 %v409, 0.0
        %v442 = vmax.f32 %v410, 0.0
        %v443 = vmax.f32 %v411, 0.0
        %v444 = vmax.f32 %v412, 0.0
        %v445 = vmax.f32 %v413, 0.0
        %v446 = vmax.f32 %v414, 0.0
        %v447 = vmax.f32 %v415, 0.0
        %v448 = vmax.f32 %v416, 0.0
        %v449 = vmax.f32 %v417, 0.0
        %v450 = vmax.f32 %v418, 0.0
        %v451 = vmax.f32 %v419, 0.0
        %v452 = vmax.f32 %v420, 0.0
        %v453 = vmax.f32 %v421, 0.0
        %v454 = vmax.f32 %v422, 0.0
        %v455 = vmax.f32 %v423, 0.0
        %v456 = vmax.f32 %v424, 0.0
        %v457 = vmax.f32 %v425, 0.0
        %v458 = vmax.f32 %v426, 0.0
        %v459 = vmax.f32 %v427, 0.0
        %v460 = vmax.f32 %v428, 0.0
        %v461 = vmax.f32 %v429, 0.0
        %v462 = vmax.f32 %v430, 0.0
        %v463 = vmax.f32 %v431, 0.0
        %v464 = vmax.f32 %v432, 0.0
        %v465 = vmax.f32 %v433, 0.0
        %v466 = vpack.c.bf16 %v435, %v434
        %v467 = vpack.c.bf16 %v437, %v436
        %v468 = vpack.c.bf16 %v439, %v438
        %v469 = vpack.c.bf16 %v441, %v440
        %v470 = vpack.c.bf16 %v443, %v442
        %v471 = vpack.c.bf16 %v445, %v444
        %v472 = vpack.c.bf16 %v447, %v446
        %v473 = vpack.c.bf16 %v449, %v448
        %v474 = vpack.c.bf16 %v451, %v450
        %v475 = vpack.c.bf16 %v453, %v452
        %v476 = vpack.c.bf16 %v455, %v454
        %v477 = vpack.c.bf16 %v457, %v456
        %v478 = vpack.c.bf16 %v459, %v458
        %v479 = vpack.c.bf16 %v461, %v460
        %v480 = vpack.c.bf16 %v463, %v462
        %v481 = vpack.c.bf16 %v465, %v464
        %v498 = vunpack.c.l.b16 %v466
        %v499 = vunpack.c.h.b16 %v466
        %v500 = vunpack.c.l.b16 %v467
        %v501 = vunpack.c.h.b16 %v467
        %v502 = vunpack.c.l.b16 %v468
        %v503 = vunpack.c.h.b16 %v468
        %v504 = vunpack.c.l.b16 %v469
        %v505 = vunpack.c.h.b16 %v469
        %v506 = vunpack.c.l.b16 %v470
        %v507 = vunpack.c.h.b16 %v470
        %v508 = vunpack.c.l.b16 %v471
        %v509 = vunpack.c.h.b16 %v471
        %v510 = vunpack.c.l.b16 %v472
        %v511 = vunpack.c.h.b16 %v472
        %v512 = vunpack.c.l.b16 %v473
        %v513 = vunpack.c.h.b16 %v473
        %v514 = vunpack.c.l.b16 %v474
        %v515 = vunpack.c.h.b16 %v474
        %v516 = vunpack.c.l.b16 %v475
        %v517 = vunpack.c.h.b16 %v475
        %v518 = vunpack.c.l.b16 %v476
        %v519 = vunpack.c.h.b16 %v476
        %v520 = vunpack.c.l.b16 %v477
        %v521 = vunpack.c.h.b16 %v477
        %v522 = vunpack.c.l.b16 %v478
        %v523 = vunpack.c.h.b16 %v478
        %v524 = vunpack.c.l.b16 %v479
        %v525 = vunpack.c.h.b16 %v479
        %v526 = vunpack.c.l.b16 %v480
        %v527 = vunpack.c.h.b16 %v480
        %v528 = vunpack.c.l.b16 %v481
        %v529 = vunpack.c.h.b16 %v481
        %v530 = vpack.c.b16 %v498, %v498
        %v531 = vpack.c.b16 %v499, %v499
        %v532 = vpack.c.b16 %v500, %v500
        %v533 = vpack.c.b16 %v501, %v501
        %v534 = vpack.c.b16 %v502, %v502
        %v535 = vpack.c.b16 %v503, %v503
        %v536 = vpack.c.b16 %v504, %v504
        %v537 = vpack.c.b16 %v505, %v505
        %v538 = vpack.c.b16 %v506, %v506
        %v539 = vpack.c.b16 %v507, %v507
        %v540 = vpack.c.b16 %v508, %v508
        %v541 = vpack.c.b16 %v509, %v509
        %v542 = vpack.c.b16 %v510, %v510
        %v543 = vpack.c.b16 %v511, %v511
        %v544 = vpack.c.b16 %v512, %v512
        %v545 = vpack.c.b16 %v513, %v513
        %v546 = vpack.c.b16 %v514, %v514
        %v547 = vpack.c.b16 %v515, %v515
        %v548 = vpack.c.b16 %v516, %v516
        %v549 = vpack.c.b16 %v517, %v517
        %v550 = vpack.c.b16 %v518, %v518
        %v551 = vpack.c.b16 %v519, %v519
        %v552 = vpack.c.b16 %v520, %v520
        %v553 = vpack.c.b16 %v521, %v521
        %v554 = vpack.c.b16 %v522, %v522
        %v555 = vpack.c.b16 %v523, %v523
        %v556 = vpack.c.b16 %v524, %v524
        %v557 = vpack.c.b16 %v525, %v525
        %v558 = vpack.c.b16 %v526, %v526
        %v559 = vpack.c.b16 %v527, %v527
        %v560 = vpack.c.b16 %v528, %v528
        %v561 = vpack.c.b16 %v529, %v529
        %vm562 = vsmask.f32 256
        %vm563 = vsmask.f32 4368
        %vm564 = vmor %vm562, %vm563
        %v566 = vshrl.u32 %v530, 16
        %v568 = vrot.slane %v566, 7
        %v569 = vshll.u32 %v530, 16
        %v571 = vor.u32 %v568, %v569
        %v572 = vrot.slane %v568, 4
        %v574 = vshrl.u32 %v531, 16
        %v576 = vrot.slane %v574, 7
        %v577 = vshll.u32 %v531, 16
        %v579 = vor.u32 %v576, %v577
        %v580 = vsel %vm564, %v572, %v579
        %v581 = vrot.slane %v576, 4
        %v583 = vshrl.u32 %v532, 16
        %v585 = vrot.slane %v583, 7
        %v586 = vshll.u32 %v532, 16
        %v588 = vor.u32 %v585, %v586
        %v589 = vrot.slane %v585, 4
        %v591 = vshrl.u32 %v533, 16
        %v593 = vrot.slane %v591, 7
        %v594 = vshll.u32 %v533, 16
        %v596 = vor.u32 %v593, %v594
        %v597 = vsel %vm564, %v589, %v596
        %v598 = vrot.slane %v593, 4
        %v600 = vshrl.u32 %v534, 16
        %v602 = vrot.slane %v600, 7
        %v603 = vshll.u32 %v534, 16
        %v605 = vor.u32 %v602, %v603
        %v606 = vrot.slane %v602, 4
        %v608 = vshrl.u32 %v535, 16
        %v610 = vrot.slane %v608, 7
        %v611 = vshll.u32 %v535, 16
        %v613 = vor.u32 %v610, %v611
        %v614 = vsel %vm564, %v606, %v613
        %v615 = vrot.slane %v610, 4
        %v617 = vshrl.u32 %v536, 16
        %v619 = vrot.slane %v617, 7
        %v620 = vshll.u32 %v536, 16
        %v622 = vor.u32 %v619, %v620
        %v623 = vrot.slane %v619, 4
        %v625 = vshrl.u32 %v537, 16
        %v627 = vrot.slane %v625, 7
        %v628 = vshll.u32 %v537, 16
        %v630 = vor.u32 %v627, %v628
        %v631 = vsel %vm564, %v623, %v630
        %v632 = vrot.slane %v627, 4
        %v634 = vshrl.u32 %v538, 16
        %v636 = vrot.slane %v634, 7
        %v637 = vshll.u32 %v538, 16
        %v639 = vor.u32 %v636, %v637
        %v640 = vrot.slane %v636, 4
        %v642 = vshrl.u32 %v539, 16
        %v644 = vrot.slane %v642, 7
        %v645 = vshll.u32 %v539, 16
        %v647 = vor.u32 %v644, %v645
        %v648 = vsel %vm564, %v640, %v647
        %v649 = vrot.slane %v644, 4
        %v651 = vshrl.u32 %v540, 16
        %v653 = vrot.slane %v651, 7
        %v654 = vshll.u32 %v540, 16
        %v656 = vor.u32 %v653, %v654
        %v657 = vrot.slane %v653, 4
        %v659 = vshrl.u32 %v541, 16
        %v661 = vrot.slane %v659, 7
        %v662 = vshll.u32 %v541, 16
        %v664 = vor.u32 %v661, %v662
        %v665 = vsel %vm564, %v657, %v664
        %v666 = vrot.slane %v661, 4
        %v668 = vshrl.u32 %v542, 16
        %v670 = vrot.slane %v668, 7
        %v671 = vshll.u32 %v542, 16
        %v673 = vor.u32 %v670, %v671
        %v674 = vrot.slane %v670, 4
        %v676 = vshrl.u32 %v543, 16
        %v678 = vrot.slane %v676, 7
        %v679 = vshll.u32 %v543, 16
        %v681 = vor.u32 %v678, %v679
        %v682 = vsel %vm564, %v674, %v681
        %v683 = vrot.slane %v678, 4
        %v685 = vshrl.u32 %v544, 16
        %v687 = vrot.slane %v685, 7
        %v688 = vshll.u32 %v544, 16
        %v690 = vor.u32 %v687, %v688
        %v691 = vrot.slane %v687, 4
        %v693 = vshrl.u32 %v545, 16
        %v695 = vrot.slane %v693, 7
        %v696 = vshll.u32 %v545, 16
        %v698 = vor.u32 %v695, %v696
        %v699 = vsel %vm564, %v691, %v698
        %v700 = vrot.slane %v695, 4
        %v702 = vshrl.u32 %v546, 16
        %v704 = vrot.slane %v702, 7
        %v705 = vshll.u32 %v546, 16
        %v707 = vor.u32 %v704, %v705
        %v708 = vrot.slane %v704, 4
        %v710 = vshrl.u32 %v547, 16
        %v712 = vrot.slane %v710, 7
        %v713 = vshll.u32 %v547, 16
        %v715 = vor.u32 %v712, %v713
        %v716 = vsel %vm564, %v708, %v715
        %v717 = vrot.slane %v712, 4
        %v719 = vshrl.u32 %v548, 16
        %v721 = vrot.slane %v719, 7
        %v722 = vshll.u32 %v548, 16
        %v724 = vor.u32 %v721, %v722
        %v725 = vrot.slane %v721, 4
        %v727 = vshrl.u32 %v549, 16
        %v729 = vrot.slane %v727, 7
        %v730 = vshll.u32 %v549, 16
        %v732 = vor.u32 %v729, %v730
        %v733 = vsel %vm564, %v725, %v732
        %v734 = vrot.slane %v729, 4
        %v736 = vshrl.u32 %v550, 16
        %v738 = vrot.slane %v736, 7
        %v739 = vshll.u32 %v550, 16
        %v741 = vor.u32 %v738, %v739
        %v742 = vrot.slane %v738, 4
        %v744 = vshrl.u32 %v551, 16
        %v746 = vrot.slane %v744, 7
        %v747 = vshll.u32 %v551, 16
        %v749 = vor.u32 %v746, %v747
        %v750 = vsel %vm564, %v742, %v749
        %v751 = vrot.slane %v746, 4
        %v753 = vshrl.u32 %v552, 16
        %v755 = vrot.slane %v753, 7
        %v756 = vshll.u32 %v552, 16
        %v758 = vor.u32 %v755, %v756
        %v759 = vrot.slane %v755, 4
        %v761 = vshrl.u32 %v553, 16
        %v763 = vrot.slane %v761, 7
        %v764 = vshll.u32 %v553, 16
        %v766 = vor.u32 %v763, %v764
        %v767 = vsel %vm564, %v759, %v766
        %v768 = vrot.slane %v763, 4
        %v770 = vshrl.u32 %v554, 16
        %v772 = vrot.slane %v770, 7
        %v773 = vshll.u32 %v554, 16
        %v775 = vor.u32 %v772, %v773
        %v776 = vrot.slane %v772, 4
        %v778 = vshrl.u32 %v555, 16
        %v780 = vrot.slane %v778, 7
        %v781 = vshll.u32 %v555, 16
        %v783 = vor.u32 %v780, %v781
        %v784 = vsel %vm564, %v776, %v783
        %v785 = vrot.slane %v780, 4
        %v787 = vshrl.u32 %v556, 16
        %v789 = vrot.slane %v787, 7
        %v790 = vshll.u32 %v556, 16
        %v792 = vor.u32 %v789, %v790
        %v793 = vrot.slane %v789, 4
        %v795 = vshrl.u32 %v557, 16
        %v797 = vrot.slane %v795, 7
        %v798 = vshll.u32 %v557, 16
        %v800 = vor.u32 %v797, %v798
        %v801 = vsel %vm564, %v793, %v800
        %v802 = vrot.slane %v797, 4
        %v804 = vshrl.u32 %v558, 16
        %v806 = vrot.slane %v804, 7
        %v807 = vshll.u32 %v558, 16
        %v809 = vor.u32 %v806, %v807
        %v810 = vrot.slane %v806, 4
        %v812 = vshrl.u32 %v559, 16
        %v814 = vrot.slane %v812, 7
        %v815 = vshll.u32 %v559, 16
        %v817 = vor.u32 %v814, %v815
        %v818 = vsel %vm564, %v810, %v817
        %v819 = vrot.slane %v814, 4
        %v821 = vshrl.u32 %v560, 16
        %v823 = vrot.slane %v821, 7
        %v824 = vshll.u32 %v560, 16
        %v826 = vor.u32 %v823, %v824
        %v827 = vrot.slane %v823, 4
        %v829 = vshrl.u32 %v561, 16
        %v831 = vrot.slane %v829, 7
        %v832 = vshll.u32 %v561, 16
        %v834 = vor.u32 %v831, %v832
        %v835 = vsel %vm564, %v827, %v834
        %v836 = vrot.slane %v831, 4
        %s885 = scalar_lea.vmem [#allocation2], 12
        %vm886 = vcmask 1043456
        %vm887 = vsmask.f32 7938
        %vm888 = vmand %vm886, %vm887
        %v889 = vld [vmem:[%s885] sm:$0xf]
        %v890 = vsel %vm888, %v571, %v889
        %891 = vst [vmem:[%s885] sm:$0xf] %v890
        %892 = vst [vmem:[%s885 + $0x4] sm:$0xf] %v580
        %vm893 = vcmask 1040384
        %vm894 = vmand %vm893, %vm562
        %v895 = vld [vmem:[%s885 + $0x8] sm:$0x1]
        %v896 = vsel %vm894, %v581, %v895
        %897 = vst [vmem:[%s885 + $0x8] sm:$0x1] %v896
        %v898 = vld [vmem:[%s885 + $0xc] sm:$0xf]
        %v899 = vsel %vm888, %v588, %v898
        %900 = vst [vmem:[%s885 + $0xc] sm:$0xf] %v899
        %901 = vst [vmem:[%s885 + $0x10] sm:$0xf] %v597
        %v902 = vld [vmem:[%s885 + $0x14] sm:$0x1]
        %v903 = vsel %vm894, %v598, %v902
        %904 = vst [vmem:[%s885 + $0x14] sm:$0x1] %v903
        %v905 = vld [vmem:[%s885 + $0x18] sm:$0xf]
        %v906 = vsel %vm888, %v605, %v905
        %907 = vst [vmem:[%s885 + $0x18] sm:$0xf] %v906
        %908 = vst [vmem:[%s885 + $0x1c] sm:$0xf] %v614
        %v909 = vld [vmem:[%s885 + $0x20] sm:$0x1]
        %v910 = vsel %vm894, %v615, %v909
        %911 = vst [vmem:[%s885 + $0x20] sm:$0x1] %v910
        %v912 = vld [vmem:[%s885 + $0x24] sm:$0xf]
        %v913 = vsel %vm888, %v622, %v912
        %914 = vst [vmem:[%s885 + $0x24] sm:$0xf] %v913
        %915 = vst [vmem:[%s885 + $0x28] sm:$0xf] %v631
        %v916 = vld [vmem:[%s885 + $0x2c] sm:$0x1]
        %v917 = vsel %vm894, %v632, %v916
        %918 = vst [vmem:[%s885 + $0x2c] sm:$0x1] %v917
        %v919 = vld [vmem:[%s885 + $0x30] sm:$0xf]
        %v920 = vsel %vm888, %v639, %v919
        %921 = vst [vmem:[%s885 + $0x30] sm:$0xf] %v920
        %922 = vst [vmem:[%s885 + $0x34] sm:$0xf] %v648
        %v923 = vld [vmem:[%s885 + $0x38] sm:$0x1]
        %v924 = vsel %vm894, %v649, %v923
        %925 = vst [vmem:[%s885 + $0x38] sm:$0x1] %v924
        %v926 = vld [vmem:[%s885 + $0x3c] sm:$0xf]
        %v927 = vsel %vm888, %v656, %v926
        %928 = vst [vmem:[%s885 + $0x3c] sm:$0xf] %v927
        %929 = vst [vmem:[%s885 + $0x40] sm:$0xf] %v665
        %v930 = vld [vmem:[%s885 + $0x44] sm:$0x1]
        %v931 = vsel %vm894, %v666, %v930
        %932 = vst [vmem:[%s885 + $0x44] sm:$0x1] %v931
        %v933 = vld [vmem:[%s885 + $0x48] sm:$0xf]
        %v934 = vsel %vm888, %v673, %v933
        %935 = vst [vmem:[%s885 + $0x48] sm:$0xf] %v934
        %936 = vst [vmem:[%s885 + $0x4c] sm:$0xf] %v682
        %v937 = vld [vmem:[%s885 + $0x50] sm:$0x1]
        %v938 = vsel %vm894, %v683, %v937
        %939 = vst [vmem:[%s885 + $0x50] sm:$0x1] %v938
        %v940 = vld [vmem:[%s885 + $0x54] sm:$0xf]
        %v941 = vsel %vm888, %v690, %v940
        %942 = vst [vmem:[%s885 + $0x54] sm:$0xf] %v941
        %943 = vst [vmem:[%s885 + $0x58] sm:$0xf] %v699
        %v944 = vld [vmem:[%s885 + $0x5c] sm:$0x1]
        %v945 = vsel %vm894, %v700, %v944
        %946 = vst [vmem:[%s885 + $0x5c] sm:$0x1] %v945
        %v947 = vld [vmem:[%s885 + $0x60] sm:$0xf]
        %v948 = vsel %vm888, %v707, %v947
        %949 = vst [vmem:[%s885 + $0x60] sm:$0xf] %v948
        %950 = vst [vmem:[%s885 + $0x64] sm:$0xf] %v716
        %v951 = vld [vmem:[%s885 + $0x68] sm:$0x1]
        %v952 = vsel %vm894, %v717, %v951
        %953 = vst [vmem:[%s885 + $0x68] sm:$0x1] %v952
        %v954 = vld [vmem:[%s885 + $0x6c] sm:$0xf]
        %v955 = vsel %vm888, %v724, %v954
        %956 = vst [vmem:[%s885 + $0x6c] sm:$0xf] %v955
        %957 = vst [vmem:[%s885 + $0x70] sm:$0xf] %v733
        %v958 = vld [vmem:[%s885 + $0x74] sm:$0x1]
        %v959 = vsel %vm894, %v734, %v958
        %960 = vst [vmem:[%s885 + $0x74] sm:$0x1] %v959
        %v961 = vld [vmem:[%s885 + $0x78] sm:$0xf]
        %v962 = vsel %vm888, %v741, %v961
        %963 = vst [vmem:[%s885 + $0x78] sm:$0xf] %v962
        %964 = vst [vmem:[%s885 + $0x7c] sm:$0xf] %v750
        %v965 = vld [vmem:[%s885 + $0x80] sm:$0x1]
        %v966 = vsel %vm894, %v751, %v965
        %967 = vst [vmem:[%s885 + $0x80] sm:$0x1] %v966
        %v968 = vld [vmem:[%s885 + $0x84] sm:$0xf]
        %v969 = vsel %vm888, %v758, %v968
        %970 = vst [vmem:[%s885 + $0x84] sm:$0xf] %v969
        %971 = vst [vmem:[%s885 + $0x88] sm:$0xf] %v767
        %v972 = vld [vmem:[%s885 + $0x8c] sm:$0x1]
        %v973 = vsel %vm894, %v768, %v972
        %974 = vst [vmem:[%s885 + $0x8c] sm:$0x1] %v973
        %v975 = vld [vmem:[%s885 + $0x90] sm:$0xf]
        %v976 = vsel %vm888, %v775, %v975
        %977 = vst [vmem:[%s885 + $0x90] sm:$0xf] %v976
        %978 = vst [vmem:[%s885 + $0x94] sm:$0xf] %v784
        %v979 = vld [vmem:[%s885 + $0x98] sm:$0x1]
        %v980 = vsel %vm894, %v785, %v979
        %981 = vst [vmem:[%s885 + $0x98] sm:$0x1] %v980
        %v982 = vld [vmem:[%s885 + $0x9c] sm:$0xf]
        %v983 = vsel %vm888, %v792, %v982
        %984 = vst [vmem:[%s885 + $0x9c] sm:$0xf] %v983
        %985 = vst [vmem:[%s885 + $0xa0] sm:$0xf] %v801
        %v986 = vld [vmem:[%s885 + $0xa4] sm:$0x1]
        %v987 = vsel %vm894, %v802, %v986
        %988 = vst [vmem:[%s885 + $0xa4] sm:$0x1] %v987
        %v989 = vld [vmem:[%s885 + $0xa8] sm:$0xf]
        %v990 = vsel %vm888, %v809, %v989
        %991 = vst [vmem:[%s885 + $0xa8] sm:$0xf] %v990
        %992 = vst [vmem:[%s885 + $0xac] sm:$0xf] %v818
        %v993 = vld [vmem:[%s885 + $0xb0] sm:$0x1]
        %v994 = vsel %vm894, %v819, %v993
        %995 = vst [vmem:[%s885 + $0xb0] sm:$0x1] %v994
        %v996 = vld [vmem:[%s885 + $0xb4] sm:$0xf]
        %v997 = vsel %vm888, %v826, %v996
        %998 = vst [vmem:[%s885 + $0xb4] sm:$0xf] %v997
        %999 = vst [vmem:[%s885 + $0xb8] sm:$0xf] %v835
        %v1000 = vld [vmem:[%s885 + $0xbc] sm:$0x1]
        %v1001 = vsel %vm894, %v836, %v1000
        %1002 = vst [vmem:[%s885 + $0xbc] sm:$0x1] %v1001
        %p1003 = scmp.gt.s32.totalorder %s24, 0
        // Predicated region
        $region33: #{dense_block_forward.3} parent=31 // pred_check
          %p1004 = pneg %p1003
        $region34: #{dense_block_forward.3} parent=31 // pred_check_branch
          %1006 = sbr.rel (%p1004) target = $region36
        $region35: #{dense_block_forward.3} parent=31 // pred_region
          %s1007 = ssub.s32 %s237, 1
          %p1008 = scmp.gt.s32.totalorder %s1007, 0
          %s1009 = scalar_select %p1008, %s1007, 0
          %s1010 = smul.u32 %s1009, 2
          %s1011 = smul.addr %s1010, 4
          %s1012 = scalar_lea.vmem %s224, %s1011
          %v1013 = vld [vmem:[%s1012] sm:$0xf]
          %v1014 = vld [vmem:[%s1012 + $0x4] sm:$0xf]
          %v1015 = vunpack.c.l.bf16 %v1013
          %v1016 = vunpack.c.l.bf16 %v1014
          %v1017 = vmul.f32 %v1015, %v365
          %v1018 = vmul.f32 %v1016, %v365
          %v1019 = vadd.f32 %v1017, %v401
          %v1020 = vadd.f32 %v1018, %v401
          %v1021 = vmax.f32 %v1019, 0.0
          %v1022 = vmax.f32 %v1020, 0.0
          %v1023 = vpack.c.bf16 %v1022, %v1021
          %v1025 = vunpack.c.l.b16 %v1023
          %v1026 = vunpack.c.h.b16 %v1023
          %v1027 = vpack.c.b16 %v1025, %v1025
          %v1028 = vpack.c.b16 %v1026, %v1026
          %v1030 = vshrl.u32 %v1027, 16
          %v1032 = vrot.slane %v1030, 7
          %v1033 = vshll.u32 %v1027, 16
          %v1035 = vor.u32 %v1032, %v1033
          %v1036 = vrot.slane %v1032, 4
          %v1038 = vshrl.u32 %v1028, 16
          %v1040 = vrot.slane %v1038, 7
          %v1041 = vshll.u32 %v1028, 16
          %v1043 = vor.u32 %v1040, %v1041
          %v1044 = vsel %vm564, %v1036, %v1043
          %v1045 = vrot.slane %v1040, 4
          %v1049 = vld [vmem:[#allocation2] sm:$0xf]
          %v1050 = vsel %vm888, %v1035, %v1049
          %1051 = vst [vmem:[#allocation2] sm:$0xf] %v1050
          %1052 = vst [vmem:[#allocation2 + $0x4] sm:$0xf] %v1044
          %v1053 = vld [vmem:[#allocation2 + $0x8] sm:$0x1]
          %v1054 = vsel %vm894, %v1045, %v1053
          %1055 = vst [vmem:[#allocation2 + $0x8] sm:$0x1] %v1054
        $region36: #{dense_block_forward.3} parent=31 // pred_fallthru
          _
        %s1056 = sadd.s32 %s24, 1
        %p1057 = scmp.lt.s32.totalorder %s1056, 1
        // Predicated region
        $region37: #{dense_block_forward.3} parent=31 // pred_check
          %p1058 = pneg %p1057
        $region38: #{dense_block_forward.3} parent=31 // pred_check_branch
          %1060 = sbr.rel (%p1058) target = $region40
        $region39: #{dense_block_forward.3} parent=31 // pred_region
          %s1061 = sadd.s32 %s237, 16
          %p1062 = scmp.lt.s32.totalorder %s1061, 15
          %s1063 = scalar_select %p1062, %s1061, 15
          %s1064 = smul.u32 %s1063, 2
          %s1065 = smul.addr %s1064, 4
          %s1066 = scalar_lea.vmem %s224, %s1065
          %v1067 = vld [vmem:[%s1066] sm:$0xf]
          %v1068 = vld [vmem:[%s1066 + $0x4] sm:$0xf]
          %v1069 = vunpack.c.l.bf16 %v1067
          %v1070 = vunpack.c.l.bf16 %v1068
          %v1071 = vmul.f32 %v1069, %v365
          %v1072 = vmul.f32 %v1070, %v365
          %v1073 = vadd.f32 %v1071, %v401
          %v1074 = vadd.f32 %v1072, %v401
          %v1075 = vmax.f32 %v1073, 0.0
          %v1076 = vmax.f32 %v1074, 0.0
          %v1077 = vpack.c.bf16 %v1076, %v1075
          %v1079 = vunpack.c.l.b16 %v1077
          %v1080 = vunpack.c.h.b16 %v1077
          %v1081 = vpack.c.b16 %v1079, %v1079
          %v1082 = vpack.c.b16 %v1080, %v1080
          %v1084 = vshrl.u32 %v1081, 16
          %v1086 = vrot.slane %v1084, 7
          %v1087 = vshll.u32 %v1081, 16
          %v1089 = vor.u32 %v1086, %v1087
          %v1090 = vrot.slane %v1086, 4
          %v1092 = vshrl.u32 %v1082, 16
          %v1094 = vrot.slane %v1092, 7
          %v1095 = vshll.u32 %v1082, 16
          %v1097 = vor.u32 %v1094, %v1095
          %v1098 = vsel %vm564, %v1090, %v1097
          %v1099 = vrot.slane %v1094, 4
          %s1103 = scalar_lea.vmem [#allocation2], 204
          %v1104 = vld [vmem:[%s1103] sm:$0xf]
          %v1105 = vsel %vm888, %v1089, %v1104
          %1106 = vst [vmem:[%s1103] sm:$0xf] %v1105
          %1107 = vst [vmem:[%s1103 + $0x4] sm:$0xf] %v1098
          %v1108 = vld [vmem:[%s1103 + $0x8] sm:$0x1]
          %v1109 = vsel %vm894, %v1099, %v1108
          %1110 = vst [vmem:[%s1103 + $0x8] sm:$0x1] %v1109
        $region40: #{dense_block_forward.3} parent=31 // pred_fallthru
          _
        %v1111 = vld [vmem:[#allocation2] sm:$0xf]
        %v1112 = vld [vmem:[#allocation2 + $0x4] sm:$0xf]
        %v1113 = vld [vmem:[#allocation2 + $0xc] sm:$0xf]
        %v1114 = vld [vmem:[#allocation2 + $0x10] sm:$0xf]
        %v1115 = vld [vmem:[#allocation2 + $0x18] sm:$0xf]
        %v1116 = vld [vmem:[#allocation2 + $0x1c] sm:$0xf]
        %v1117 = vld [vmem:[#allocation2 + $0x24] sm:$0xf]
        %v1118 = vld [vmem:[#allocation2 + $0x28] sm:$0xf]
        %v1119 = vld [vmem:[#allocation2 + $0x30] sm:$0xf]
        %v1120 = vld [vmem:[#allocation2 + $0x34] sm:$0xf]
        %v1121 = vld [vmem:[#allocation2 + $0x3c] sm:$0xf]
        %v1122 = vld [vmem:[#allocation2 + $0x40] sm:$0xf]
        %v1123 = vld [vmem:[#allocation2 + $0x48] sm:$0xf]
        %v1124 = vld [vmem:[#allocation2 + $0x4c] sm:$0xf]
        %v1125 = vld [vmem:[#allocation2 + $0x54] sm:$0xf]
        %v1126 = vld [vmem:[#allocation2 + $0x58] sm:$0xf]
        %v1127 = vld [vmem:[#allocation2 + $0x60] sm:$0xf]
        %v1128 = vld [vmem:[#allocation2 + $0x64] sm:$0xf]
        %v1129 = vld [vmem:[#allocation2 + $0x6c] sm:$0xf]
        %v1130 = vld [vmem:[#allocation2 + $0x70] sm:$0xf]
        %v1131 = vld [vmem:[#allocation2 + $0x78] sm:$0xf]
        %v1132 = vld [vmem:[#allocation2 + $0x7c] sm:$0xf]
        %v1133 = vld [vmem:[#allocation2 + $0x84] sm:$0xf]
        %v1134 = vld [vmem:[#allocation2 + $0x88] sm:$0xf]
        %v1135 = vld [vmem:[#allocation2 + $0x90] sm:$0xf]
        %v1136 = vld [vmem:[#allocation2 + $0x94] sm:$0xf]
        %v1137 = vld [vmem:[#allocation2 + $0x9c] sm:$0xf]
        %v1138 = vld [vmem:[#allocation2 + $0xa0] sm:$0xf]
        %v1139 = vld [vmem:[#allocation2 + $0xa8] sm:$0xf]
        %v1140 = vld [vmem:[#allocation2 + $0xac] sm:$0xf]
        %v1141 = vld [vmem:[#allocation2 + $0xb4] sm:$0xf]
        %v1142 = vld [vmem:[#allocation2 + $0xb8] sm:$0xf]
        %v1143 = vld [vmem:[%s2] sm:$0xf]
        %v1144 = vld [vmem:[%s2 + $0x4] sm:$0xf]
        %v1145 = vld [vmem:[%s2 + $0x8] sm:$0xf]
        %v1146 = vld [vmem:[%s2 + $0xc] sm:$0xf]
        %v1147 = vld [vmem:[%s2 + $0x10] sm:$0xf]
        %v1148 = vld [vmem:[%s2 + $0x14] sm:$0xf]
        %v1149 = vld [vmem:[%s2 + $0x18] sm:$0xf]
        %v1150 = vld [vmem:[%s2 + $0x1c] sm:$0xf]
        %v1151 = vld [vmem:[%s2 + $0x20] sm:$0xf]
        %v1152 = vld [vmem:[%s2 + $0x24] sm:$0xf]
        %v1153 = vld [vmem:[%s2 + $0x28] sm:$0xf]
        %v1154 = vld [vmem:[%s2 + $0x2c] sm:$0xf]
        %v1155 = vld [vmem:[%s2 + $0x30] sm:$0xf]
        %v1156 = vld [vmem:[%s2 + $0x34] sm:$0xf]
        %v1157 = vld [vmem:[%s2 + $0x38] sm:$0xf]
        %v1158 = vld [vmem:[%s2 + $0x3c] sm:$0xf]
        %v1159 = vld [vmem:[#allocation2 + $0x8] sm:$0x1]
        %v1160 = vld [vmem:[#allocation2 + $0x14] sm:$0x1]
        %v1161 = vld [vmem:[#allocation2 + $0x20] sm:$0x1]
        %v1162 = vld [vmem:[#allocation2 + $0x2c] sm:$0x1]
        %v1163 = vld [vmem:[#allocation2 + $0x38] sm:$0x1]
        %v1164 = vld [vmem:[#allocation2 + $0x44] sm:$0x1]
        %v1165 = vld [vmem:[#allocation2 + $0x50] sm:$0x1]
        %v1166 = vld [vmem:[#allocation2 + $0x5c] sm:$0x1]
        %v1167 = vld [vmem:[#allocation2 + $0x68] sm:$0x1]
        %v1168 = vld [vmem:[#allocation2 + $0x74] sm:$0x1]
        %v1169 = vld [vmem:[#allocation2 + $0x80] sm:$0x1]
        %v1170 = vld [vmem:[#allocation2 + $0x8c] sm:$0x1]
        %v1171 = vld [vmem:[#allocation2 + $0x98] sm:$0x1]
        %v1172 = vld [vmem:[#allocation2 + $0xa4] sm:$0x1]
        %v1173 = vld [vmem:[#allocation2 + $0xb0] sm:$0x1]
        %v1174 = vld [vmem:[#allocation2 + $0xbc] sm:$0x1]
        %vm1175 = vsmask.f32 3328
        %vm1176 = vsmask.f32 7440
        %vm1177 = vmor %vm1175, %vm1176
        %v1179 = vshrl.u32 %v1111, 16
        %v1181 = vrot.slane %v1179, 4
        %v1182 = vshll.u32 %v1111, 16
        %v1184 = vrot.slane %v1182, 5
        %v1185 = vor.u32 %v1181, %v1184
        %v1186 = vrot.slane %v1185, 4
        %v1188 = vshll.u32 %v1112, 16
        %v1190 = vrot.slane %v1188, 5
        %v1191 = vsel %vm1177, %v1186, %v1190
        %v1192 = vshrl.u32 %v1112, 16
        %v1194 = vrot.slane %v1192, 4
        %v1195 = vor.u32 %v1194, %v1190
        %v1196 = vrot.slane %v1195, 4
        %v1198 = vshll.u32 %v1159, 16
        %v1200 = vrot.slane %v1198, 5
        %v1201 = vsel %vm1177, %v1196, %v1200
        %v1203 = vshrl.u32 %v1113, 16
        %v1205 = vrot.slane %v1203, 4
        %v1206 = vshll.u32 %v1113, 16
        %v1208 = vrot.slane %v1206, 5
        %v1209 = vor.u32 %v1205, %v1208
        %v1210 = vrot.slane %v1209, 4
        %v1212 = vshll.u32 %v1114, 16
        %v1214 = vrot.slane %v1212, 5
        %v1215 = vsel %vm1177, %v1210, %v1214
        %v1216 = vshrl.u32 %v1114, 16
        %v1218 = vrot.slane %v1216, 4
        %v1219 = vor.u32 %v1218, %v1214
        %v1220 = vrot.slane %v1219, 4
        %v1222 = vshll.u32 %v1160, 16
        %v1224 = vrot.slane %v1222, 5
        %v1225 = vsel %vm1177, %v1220, %v1224
        %v1227 = vshrl.u32 %v1115, 16
        %v1229 = vrot.slane %v1227, 4
        %v1230 = vshll.u32 %v1115, 16
        %v1232 = vrot.slane %v1230, 5
        %v1233 = vor.u32 %v1229, %v1232
        %v1234 = vrot.slane %v1233, 4
        %v1236 = vshll.u32 %v1116, 16
        %v1238 = vrot.slane %v1236, 5
        %v1239 = vsel %vm1177, %v1234, %v1238
        %v1240 = vshrl.u32 %v1116, 16
        %v1242 = vrot.slane %v1240, 4
        %v1243 = vor.u32 %v1242, %v1238
        %v1244 = vrot.slane %v1243, 4
        %v1246 = vshll.u32 %v1161, 16
        %v1248 = vrot.slane %v1246, 5
        %v1249 = vsel %vm1177, %v1244, %v1248
        %v1251 = vshrl.u32 %v1117, 16
        %v1253 = vrot.slane %v1251, 4
        %v1254 = vshll.u32 %v1117, 16
        %v1256 = vrot.slane %v1254, 5
        %v1257 = vor.u32 %v1253, %v1256
        %v1258 = vrot.slane %v1257, 4
        %v1260 = vshll.u32 %v1118, 16
        %v1262 = vrot.slane %v1260, 5
        %v1263 = vsel %vm1177, %v1258, %v1262
        %v1264 = vshrl.u32 %v1118, 16
        %v1266 = vrot.slane %v1264, 4
        %v1267 = vor.u32 %v1266, %v1262
        %v1268 = vrot.slane %v1267, 4
        %v1270 = vshll.u32 %v1162, 16
        %v1272 = vrot.slane %v1270, 5
        %v1273 = vsel %vm1177, %v1268, %v1272
        %v1275 = vshrl.u32 %v1119, 16
        %v1277 = vrot.slane %v1275, 4
        %v1278 = vshll.u32 %v1119, 16
        %v1280 = vrot.slane %v1278, 5
        %v1281 = vor.u32 %v1277, %v1280
        %v1282 = vrot.slane %v1281, 4
        %v1284 = vshll.u32 %v1120, 16
        %v1286 = vrot.slane %v1284, 5
        %v1287 = vsel %vm1177, %v1282, %v1286
        %v1288 = vshrl.u32 %v1120, 16
        %v1290 = vrot.slane %v1288, 4
        %v1291 = vor.u32 %v1290, %v1286
        %v1292 = vrot.slane %v1291, 4
        %v1294 = vshll.u32 %v1163, 16
        %v1296 = vrot.slane %v1294, 5
        %v1297 = vsel %vm1177, %v1292, %v1296
        %v1299 = vshrl.u32 %v1121, 16
        %v1301 = vrot.slane %v1299, 4
        %v1302 = vshll.u32 %v1121, 16
        %v1304 = vrot.slane %v1302, 5
        %v1305 = vor.u32 %v1301, %v1304
        %v1306 = vrot.slane %v1305, 4
        %v1308 = vshll.u32 %v1122, 16
        %v1310 = vrot.slane %v1308, 5
        %v1311 = vsel %vm1177, %v1306, %v1310
        %v1312 = vshrl.u32 %v1122, 16
        %v1314 = vrot.slane %v1312, 4
        %v1315 = vor.u32 %v1314, %v1310
        %v1316 = vrot.slane %v1315, 4
        %v1318 = vshll.u32 %v1164, 16
        %v1320 = vrot.slane %v1318, 5
        %v1321 = vsel %vm1177, %v1316, %v1320
        %v1323 = vshrl.u32 %v1123, 16
        %v1325 = vrot.slane %v1323, 4
        %v1326 = vshll.u32 %v1123, 16
        %v1328 = vrot.slane %v1326, 5
        %v1329 = vor.u32 %v1325, %v1328
        %v1330 = vrot.slane %v1329, 4
        %v1332 = vshll.u32 %v1124, 16
        %v1334 = vrot.slane %v1332, 5
        %v1335 = vsel %vm1177, %v1330, %v1334
        %v1336 = vshrl.u32 %v1124, 16
        %v1338 = vrot.slane %v1336, 4
        %v1339 = vor.u32 %v1338, %v1334
        %v1340 = vrot.slane %v1339, 4
        %v1342 = vshll.u32 %v1165, 16
        %v1344 = vrot.slane %v1342, 5
        %v1345 = vsel %vm1177, %v1340, %v1344
        %v1347 = vshrl.u32 %v1125, 16
        %v1349 = vrot.slane %v1347, 4
        %v1350 = vshll.u32 %v1125, 16
        %v1352 = vrot.slane %v1350, 5
        %v1353 = vor.u32 %v1349, %v1352
        %v1354 = vrot.slane %v1353, 4
        %v1356 = vshll.u32 %v1126, 16
        %v1358 = vrot.slane %v1356, 5
        %v1359 = vsel %vm1177, %v1354, %v1358
        %v1360 = vshrl.u32 %v1126, 16
        %v1362 = vrot.slane %v1360, 4
        %v1363 = vor.u32 %v1362, %v1358
        %v1364 = vrot.slane %v1363, 4
        %v1366 = vshll.u32 %v1166, 16
        %v1368 = vrot.slane %v1366, 5
        %v1369 = vsel %vm1177, %v1364, %v1368
        %v1371 = vshrl.u32 %v1127, 16
        %v1373 = vrot.slane %v1371, 4
        %v1374 = vshll.u32 %v1127, 16
        %v1376 = vrot.slane %v1374, 5
        %v1377 = vor.u32 %v1373, %v1376
        %v1378 = vrot.slane %v1377, 4
        %v1380 = vshll.u32 %v1128, 16
        %v1382 = vrot.slane %v1380, 5
        %v1383 = vsel %vm1177, %v1378, %v1382
        %v1384 = vshrl.u32 %v1128, 16
        %v1386 = vrot.slane %v1384, 4
        %v1387 = vor.u32 %v1386, %v1382
        %v1388 = vrot.slane %v1387, 4
        %v1390 = vshll.u32 %v1167, 16
        %v1392 = vrot.slane %v1390, 5
        %v1393 = vsel %vm1177, %v1388, %v1392
        %v1395 = vshrl.u32 %v1129, 16
        %v1397 = vrot.slane %v1395, 4
        %v1398 = vshll.u32 %v1129, 16
        %v1400 = vrot.slane %v1398, 5
        %v1401 = vor.u32 %v1397, %v1400
        %v1402 = vrot.slane %v1401, 4
        %v1404 = vshll.u32 %v1130, 16
        %v1406 = vrot.slane %v1404, 5
        %v1407 = vsel %vm1177, %v1402, %v1406
        %v1408 = vshrl.u32 %v1130, 16
        %v1410 = vrot.slane %v1408, 4
        %v1411 = vor.u32 %v1410, %v1406
        %v1412 = vrot.slane %v1411, 4
        %v1414 = vshll.u32 %v1168, 16
        %v1416 = vrot.slane %v1414, 5
        %v1417 = vsel %vm1177, %v1412, %v1416
        %v1419 = vshrl.u32 %v1131, 16
        %v1421 = vrot.slane %v1419, 4
        %v1422 = vshll.u32 %v1131, 16
        %v1424 = vrot.slane %v1422, 5
        %v1425 = vor.u32 %v1421, %v1424
        %v1426 = vrot.slane %v1425, 4
        %v1428 = vshll.u32 %v1132, 16
        %v1430 = vrot.slane %v1428, 5
        %v1431 = vsel %vm1177, %v1426, %v1430
        %v1432 = vshrl.u32 %v1132, 16
        %v1434 = vrot.slane %v1432, 4
        %v1435 = vor.u32 %v1434, %v1430
        %v1436 = vrot.slane %v1435, 4
        %v1438 = vshll.u32 %v1169, 16
        %v1440 = vrot.slane %v1438, 5
        %v1441 = vsel %vm1177, %v1436, %v1440
        %v1443 = vshrl.u32 %v1133, 16
        %v1445 = vrot.slane %v1443, 4
        %v1446 = vshll.u32 %v1133, 16
        %v1448 = vrot.slane %v1446, 5
        %v1449 = vor.u32 %v1445, %v1448
        %v1450 = vrot.slane %v1449, 4
        %v1452 = vshll.u32 %v1134, 16
        %v1454 = vrot.slane %v1452, 5
        %v1455 = vsel %vm1177, %v1450, %v1454
        %v1456 = vshrl.u32 %v1134, 16
        %v1458 = vrot.slane %v1456, 4
        %v1459 = vor.u32 %v1458, %v1454
        %v1460 = vrot.slane %v1459, 4
        %v1462 = vshll.u32 %v1170, 16
        %v1464 = vrot.slane %v1462, 5
        %v1465 = vsel %vm1177, %v1460, %v1464
        %v1467 = vshrl.u32 %v1135, 16
        %v1469 = vrot.slane %v1467, 4
        %v1470 = vshll.u32 %v1135, 16
        %v1472 = vrot.slane %v1470, 5
        %v1473 = vor.u32 %v1469, %v1472
        %v1474 = vrot.slane %v1473, 4
        %v1476 = vshll.u32 %v1136, 16
        %v1478 = vrot.slane %v1476, 5
        %v1479 = vsel %vm1177, %v1474, %v1478
        %v1480 = vshrl.u32 %v1136, 16
        %v1482 = vrot.slane %v1480, 4
        %v1483 = vor.u32 %v1482, %v1478
        %v1484 = vrot.slane %v1483, 4
        %v1486 = vshll.u32 %v1171, 16
        %v1488 = vrot.slane %v1486, 5
        %v1489 = vsel %vm1177, %v1484, %v1488
        %v1491 = vshrl.u32 %v1137, 16
        %v1493 = vrot.slane %v1491, 4
        %v1494 = vshll.u32 %v1137, 16
        %v1496 = vrot.slane %v1494, 5
        %v1497 = vor.u32 %v1493, %v1496
        %v1498 = vrot.slane %v1497, 4
        %v1500 = vshll.u32 %v1138, 16
        %v1502 = vrot.slane %v1500, 5
        %v1503 = vsel %vm1177, %v1498, %v1502
        %v1504 = vshrl.u32 %v1138, 16
        %v1506 = vrot.slane %v1504, 4
        %v1507 = vor.u32 %v1506, %v1502
        %v1508 = vrot.slane %v1507, 4
        %v1510 = vshll.u32 %v1172, 16
        %v1512 = vrot.slane %v1510, 5
        %v1513 = vsel %vm1177, %v1508, %v1512
        %v1515 = vshrl.u32 %v1139, 16
        %v1517 = vrot.slane %v1515, 4
        %v1518 = vshll.u32 %v1139, 16
        %v1520 = vrot.slane %v1518, 5
        %v1521 = vor.u32 %v1517, %v1520
        %v1522 = vrot.slane %v1521, 4
        %v1524 = vshll.u32 %v1140, 16
        %v1526 = vrot.slane %v1524, 5
        %v1527 = vsel %vm1177, %v1522, %v1526
        %v1528 = vshrl.u32 %v1140, 16
        %v1530 = vrot.slane %v1528, 4
        %v1531 = vor.u32 %v1530, %v1526
        %v1532 = vrot.slane %v1531, 4
        %v1534 = vshll.u32 %v1173, 16
        %v1536 = vrot.slane %v1534, 5
        %v1537 = vsel %vm1177, %v1532, %v1536
        %v1539 = vshrl.u32 %v1141, 16
        %v1541 = vrot.slane %v1539, 4
        %v1542 = vshll.u32 %v1141, 16
        %v1544 = vrot.slane %v1542, 5
        %v1545 = vor.u32 %v1541, %v1544
        %v1546 = vrot.slane %v1545, 4
        %v1548 = vshll.u32 %v1142, 16
        %v1550 = vrot.slane %v1548, 5
        %v1551 = vsel %vm1177, %v1546, %v1550
        %v1552 = vshrl.u32 %v1142, 16
        %v1554 = vrot.slane %v1552, 4
        %v1555 = vor.u32 %v1554, %v1550
        %v1556 = vrot.slane %v1555, 4
        %v1558 = vshll.u32 %v1174, 16
        %v1560 = vrot.slane %v1558, 5
        %v1561 = vsel %vm1177, %v1556, %v1560
        %s1562 = scalar_lea.vmem %s2, 64
        %v1563 = vld [vmem:[%s1562] sm:$0xf]
        %v1564 = vld [vmem:[%s1562 + $0x4] sm:$0xf]
        %v1565 = vld [vmem:[%s1562 + $0x8] sm:$0xf]
        %v1566 = vld [vmem:[%s1562 + $0xc] sm:$0xf]
        %v1567 = vld [vmem:[%s1562 + $0x10] sm:$0xf]
        %v1568 = vld [vmem:[%s1562 + $0x14] sm:$0xf]
        %v1569 = vld [vmem:[%s1562 + $0x18] sm:$0xf]
        %v1570 = vld [vmem:[%s1562 + $0x1c] sm:$0xf]
        %v1571 = vld [vmem:[%s1562 + $0x20] sm:$0xf]
        %v1572 = vld [vmem:[%s1562 + $0x24] sm:$0xf]
        %v1573 = vld [vmem:[%s1562 + $0x28] sm:$0xf]
        %v1574 = vld [vmem:[%s1562 + $0x2c] sm:$0xf]
        %v1575 = vld [vmem:[%s1562 + $0x30] sm:$0xf]
        %v1576 = vld [vmem:[%s1562 + $0x34] sm:$0xf]
        %v1577 = vld [vmem:[%s1562 + $0x38] sm:$0xf]
        %v1578 = vld [vmem:[%s1562 + $0x3c] sm:$0xf]
        %v1579 = vunpack.c.l.b16 %v1191
        %v1580 = vunpack.c.l.b16 %v1201
        %v1581 = vunpack.c.l.b16 %v1215
        %v1582 = vunpack.c.l.b16 %v1225
        %v1583 = vunpack.c.l.b16 %v1239
        %v1584 = vunpack.c.l.b16 %v1249
        %v1585 = vunpack.c.l.b16 %v1263
        %v1586 = vunpack.c.l.b16 %v1273
        %v1587 = vunpack.c.l.b16 %v1287
        %v1588 = vunpack.c.l.b16 %v1297
        %v1589 = vunpack.c.l.b16 %v1311
        %v1590 = vunpack.c.l.b16 %v1321
        %v1591 = vunpack.c.l.b16 %v1335
        %v1592 = vunpack.c.l.b16 %v1345
        %v1593 = vunpack.c.l.b16 %v1359
        %v1594 = vunpack.c.l.b16 %v1369
        %v1595 = vunpack.c.l.b16 %v1383
        %v1596 = vunpack.c.l.b16 %v1393
        %v1597 = vunpack.c.l.b16 %v1407
        %v1598 = vunpack.c.l.b16 %v1417
        %v1599 = vunpack.c.l.b16 %v1431
        %v1600 = vunpack.c.l.b16 %v1441
        %v1601 = vunpack.c.l.b16 %v1455
        %v1602 = vunpack.c.l.b16 %v1465
        %v1603 = vunpack.c.l.b16 %v1479
        %v1604 = vunpack.c.l.b16 %v1489
        %v1605 = vunpack.c.l.b16 %v1503
        %v1606 = vunpack.c.l.b16 %v1513
        %v1607 = vunpack.c.l.b16 %v1527
        %v1608 = vunpack.c.l.b16 %v1537
        %v1609 = vunpack.c.l.b16 %v1551
        %v1610 = vunpack.c.l.b16 %v1561
        %v1611 = vpack.c.b16 %v1580, %v1579
        %v1612 = vpack.c.b16 %v1582, %v1581
        %v1613 = vpack.c.b16 %v1584, %v1583
        %v1614 = vpack.c.b16 %v1586, %v1585
        %v1615 = vpack.c.b16 %v1588, %v1587
        %v1616 = vpack.c.b16 %v1590, %v1589
        %v1617 = vpack.c.b16 %v1592, %v1591
        %v1618 = vpack.c.b16 %v1594, %v1593
        %v1619 = vpack.c.b16 %v1596, %v1595
        %v1620 = vpack.c.b16 %v1598, %v1597
        %v1621 = vpack.c.b16 %v1600, %v1599
        %v1622 = vpack.c.b16 %v1602, %v1601
        %v1623 = vpack.c.b16 %v1604, %v1603
        %v1624 = vpack.c.b16 %v1606, %v1605
        %v1625 = vpack.c.b16 %v1608, %v1607
        %v1626 = vpack.c.b16 %v1610, %v1609
        %v1659 = vunpack.c.l.b16 %v1563
        %v1660 = vunpack.c.l.b16 %v1564
        %v1661 = vunpack.c.l.b16 %v1565
        %v1662 = vunpack.c.l.b16 %v1566
        %v1663 = vunpack.c.l.b16 %v1567
        %v1664 = vunpack.c.l.b16 %v1568
        %v1665 = vunpack.c.l.b16 %v1569
        %v1666 = vunpack.c.l.b16 %v1570
        %v1667 = vunpack.c.l.b16 %v1571
        %v1668 = vunpack.c.l.b16 %v1572
        %v1669 = vunpack.c.l.b16 %v1573
        %v1670 = vunpack.c.l.b16 %v1574
        %v1671 = vunpack.c.l.b16 %v1575
        %v1672 = vunpack.c.l.b16 %v1576
        %v1673 = vunpack.c.l.b16 %v1577
        %v1674 = vunpack.c.l.b16 %v1578
        %v1675 = vpack.c.b16 %v1660, %v1659
        %v1676 = vpack.c.b16 %v1662, %v1661
        %v1677 = vpack.c.b16 %v1664, %v1663
        %v1678 = vpack.c.b16 %v1666, %v1665
        %v1679 = vpack.c.b16 %v1668, %v1667
        %v1680 = vpack.c.b16 %v1670, %v1669
        %v1681 = vpack.c.b16 %v1672, %v1671
        %v1682 = vpack.c.b16 %v1674, %v1673
        %1691 = vmatprep.subr.bf16.mxu0 0
        %1692 = vmatpush1.bf16.msra.mxu0 %v1682
        %1693 = vmatprep.subr.bf16.mxu0 0
        %1694 = vmatpush1.bf16.msra.mxu0 %v1681
        %1695 = vmatprep.subr.bf16.mxu0 0
        %1696 = vmatpush1.bf16.msra.mxu0 %v1680
        %1697 = vmatprep.subr.bf16.mxu0 0
        %1698 = vmatpush1.bf16.msra.mxu0 %v1679
        %1699 = vmatprep.subr.bf16.mxu0 0
        %1700 = vmatpush1.bf16.msra.mxu0 %v1678
        %1701 = vmatprep.subr.bf16.mxu0 0
        %1702 = vmatpush1.bf16.msra.mxu0 %v1677
        %1703 = vmatprep.subr.bf16.mxu0 0
        %1704 = vmatpush1.bf16.msra.mxu0 %v1676
        %1705 = vmatprep.subr.bf16.mxu0 0
        %1706 = vmatpush1.bf16.msra.mxu0 %v1675
        %1707 = vmatprep.subr.bf16.mxu0 0
        %1708 = vmatpush2.bf16.msra.mxu0 0
        %1709 = vmatprep.subr.bf16.mxu0 0
        %1710 = vmatpush2.bf16.msra.mxu0 0
        %1711 = vmatprep.subr.bf16.mxu0 0
        %1712 = vmatpush2.bf16.msra.mxu0 0
        %1713 = vmatprep.subr.bf16.mxu0 0
        %1714 = vmatpush2.bf16.msra.mxu0 0
        %1715 = vmatprep.subr.bf16.mxu0 0
        %1716 = vmatpush2.bf16.msra.mxu0 0
        %1717 = vmatprep.subr.bf16.mxu0 0
        %1718 = vmatpush2.bf16.msra.mxu0 0
        %1719 = vmatprep.subr.bf16.mxu0 0
        %1720 = vmatpush2.bf16.msra.mxu0 0
        %1721 = vmatprep.subr.bf16.mxu0 0
        %1722 = vmatpush2.bf16.msra.mxu0 0
        %1723 = vmatprep.mubr.bf16.mxu0 0
        %1724 = vmatmul.mubr.bf16.gmra.mxu0 %v1611
        %v1725 = vpop.f32.mrf.mxu0
        %v1726 = vadd.f32 0.0, %v1725
        %v1727 = vpop.f32.mrf.mxu0
        %v1728 = vpop.f32.mrf.mxu0
        %v1729 = vadd.f32 0.0, %v1728
        %v1730 = vpop.f32.mrf.mxu0
        %1731 = vmatprep.mubr.bf16.mxu0 0
        %1732 = vmatmul.mubr.bf16.gmra.mxu0 %v1612
        %v1733 = vpop.f32.mrf.mxu0
        %v1734 = vadd.f32 0.0, %v1733
        %v1735 = vpop.f32.mrf.mxu0
        %v1736 = vpop.f32.mrf.mxu0
        %v1737 = vadd.f32 0.0, %v1736
        %v1738 = vpop.f32.mrf.mxu0
        %1739 = vmatprep.mubr.bf16.mxu0 0
        %1740 = vmatmul.mubr.bf16.gmra.mxu0 %v1613
        %v1741 = vpop.f32.mrf.mxu0
        %v1742 = vadd.f32 0.0, %v1741
        %v1743 = vpop.f32.mrf.mxu0
        %v1744 = vpop.f32.mrf.mxu0
        %v1745 = vadd.f32 0.0, %v1744
        %v1746 = vpop.f32.mrf.mxu0
        %1747 = vmatprep.mubr.bf16.mxu0 0
        %1748 = vmatmul.mubr.bf16.gmra.mxu0 %v1614
        %v1749 = vpop.f32.mrf.mxu0
        %v1750 = vadd.f32 0.0, %v1749
        %v1751 = vpop.f32.mrf.mxu0
        %v1752 = vpop.f32.mrf.mxu0
        %v1753 = vadd.f32 0.0, %v1752
        %v1754 = vpop.f32.mrf.mxu0
        %1755 = vmatprep.mubr.bf16.mxu0 0
        %1756 = vmatmul.mubr.bf16.gmra.mxu0 %v1615
        %v1757 = vpop.f32.mrf.mxu0
        %v1758 = vadd.f32 0.0, %v1757
        %v1759 = vpop.f32.mrf.mxu0
        %v1760 = vpop.f32.mrf.mxu0
        %v1761 = vadd.f32 0.0, %v1760
        %v1762 = vpop.f32.mrf.mxu0
        %1763 = vmatprep.mubr.bf16.mxu0 0
        %1764 = vmatmul.mubr.bf16.gmra.mxu0 %v1616
        %v1765 = vpop.f32.mrf.mxu0
        %v1766 = vadd.f32 0.0, %v1765
        %v1767 = vpop.f32.mrf.mxu0
        %v1768 = vpop.f32.mrf.mxu0
        %v1769 = vadd.f32 0.0, %v1768
        %v1770 = vpop.f32.mrf.mxu0
        %1771 = vmatprep.mubr.bf16.mxu0 0
        %1772 = vmatmul.mubr.bf16.gmra.mxu0 %v1617
        %v1773 = vpop.f32.mrf.mxu0
        %v1774 = vadd.f32 0.0, %v1773
        %v1775 = vpop.f32.mrf.mxu0
        %v1776 = vpop.f32.mrf.mxu0
        %v1777 = vadd.f32 0.0, %v1776
        %v1778 = vpop.f32.mrf.mxu0
        %1779 = vmatprep.mubr.bf16.mxu0 0
        %1780 = vmatmul.mubr.bf16.gmra.mxu0 %v1618
        %v1781 = vpop.f32.mrf.mxu0
        %v1782 = vadd.f32 0.0, %v1781
        %v1783 = vpop.f32.mrf.mxu0
        %v1784 = vpop.f32.mrf.mxu0
        %v1785 = vadd.f32 0.0, %v1784
        %v1786 = vpop.f32.mrf.mxu0
        %1787 = vmatprep.mubr.bf16.mxu0 0
        %1788 = vmatmul.mubr.bf16.gmra.mxu0 %v1619
        %v1789 = vpop.f32.mrf.mxu0
        %v1790 = vadd.f32 0.0, %v1789
        %v1791 = vpop.f32.mrf.mxu0
        %v1792 = vpop.f32.mrf.mxu0
        %v1793 = vadd.f32 0.0, %v1792
        %v1794 = vpop.f32.mrf.mxu0
        %1795 = vmatprep.mubr.bf16.mxu0 0
        %1796 = vmatmul.mubr.bf16.gmra.mxu0 %v1620
        %v1797 = vpop.f32.mrf.mxu0
        %v1798 = vadd.f32 0.0, %v1797
        %v1799 = vpop.f32.mrf.mxu0
        %v1800 = vpop.f32.mrf.mxu0
        %v1801 = vadd.f32 0.0, %v1800
        %v1802 = vpop.f32.mrf.mxu0
        %1803 = vmatprep.mubr.bf16.mxu0 0
        %1804 = vmatmul.mubr.bf16.gmra.mxu0 %v1621
        %v1805 = vpop.f32.mrf.mxu0
        %v1806 = vadd.f32 0.0, %v1805
        %v1807 = vpop.f32.mrf.mxu0
        %v1808 = vpop.f32.mrf.mxu0
        %v1809 = vadd.f32 0.0, %v1808
        %v1810 = vpop.f32.mrf.mxu0
        %1811 = vmatprep.mubr.bf16.mxu0 0
        %1812 = vmatmul.mubr.bf16.gmra.mxu0 %v1622
        %v1813 = vpop.f32.mrf.mxu0
        %v1814 = vadd.f32 0.0, %v1813
        %v1815 = vpop.f32.mrf.mxu0
        %v1816 = vpop.f32.mrf.mxu0
        %v1817 = vadd.f32 0.0, %v1816
        %v1818 = vpop.f32.mrf.mxu0
        %1819 = vmatprep.mubr.bf16.mxu0 0
        %1820 = vmatmul.mubr.bf16.gmra.mxu0 %v1623
        %v1821 = vpop.f32.mrf.mxu0
        %v1822 = vadd.f32 0.0, %v1821
        %v1823 = vpop.f32.mrf.mxu0
        %v1824 = vpop.f32.mrf.mxu0
        %v1825 = vadd.f32 0.0, %v1824
        %v1826 = vpop.f32.mrf.mxu0
        %1827 = vmatprep.mubr.bf16.mxu0 0
        %1828 = vmatmul.mubr.bf16.gmra.mxu0 %v1624
        %v1829 = vpop.f32.mrf.mxu0
        %v1830 = vadd.f32 0.0, %v1829
        %v1831 = vpop.f32.mrf.mxu0
        %v1832 = vpop.f32.mrf.mxu0
        %v1833 = vadd.f32 0.0, %v1832
        %v1834 = vpop.f32.mrf.mxu0
        %1835 = vmatprep.mubr.bf16.mxu0 0
        %1836 = vmatmul.mubr.bf16.gmra.mxu0 %v1625
        %v1837 = vpop.f32.mrf.mxu0
        %v1838 = vadd.f32 0.0, %v1837
        %v1839 = vpop.f32.mrf.mxu0
        %v1840 = vpop.f32.mrf.mxu0
        %v1841 = vadd.f32 0.0, %v1840
        %v1842 = vpop.f32.mrf.mxu0
        %1843 = vmatprep.mubr.bf16.mxu0 0
        %1844 = vmatmul.mubr.bf16.gmra.mxu0 %v1626
        %v1845 = vpop.f32.mrf.mxu0
        %v1846 = vadd.f32 0.0, %v1845
        %v1847 = vpop.f32.mrf.mxu0
        %v1848 = vpop.f32.mrf.mxu0
        %v1849 = vadd.f32 0.0, %v1848
        %v1850 = vpop.f32.mrf.mxu0
        %1851 = vdwg.mxu0
        %v1884 = vunpack.c.l.b16 %v1111
        %v1885 = vunpack.c.l.b16 %v1112
        %v1886 = vunpack.c.l.b16 %v1113
        %v1887 = vunpack.c.l.b16 %v1114
        %v1888 = vunpack.c.l.b16 %v1115
        %v1889 = vunpack.c.l.b16 %v1116
        %v1890 = vunpack.c.l.b16 %v1117
        %v1891 = vunpack.c.l.b16 %v1118
        %v1892 = vunpack.c.l.b16 %v1119
        %v1893 = vunpack.c.l.b16 %v1120
        %v1894 = vunpack.c.l.b16 %v1121
        %v1895 = vunpack.c.l.b16 %v1122
        %v1896 = vunpack.c.l.b16 %v1123
        %v1897 = vunpack.c.l.b16 %v1124
        %v1898 = vunpack.c.l.b16 %v1125
        %v1899 = vunpack.c.l.b16 %v1126
        %v1900 = vunpack.c.l.b16 %v1127
        %v1901 = vunpack.c.l.b16 %v1128
        %v1902 = vunpack.c.l.b16 %v1129
        %v1903 = vunpack.c.l.b16 %v1130
        %v1904 = vunpack.c.l.b16 %v1131
        %v1905 = vunpack.c.l.b16 %v1132
        %v1906 = vunpack.c.l.b16 %v1133
        %v1907 = vunpack.c.l.b16 %v1134
        %v1908 = vunpack.c.l.b16 %v1135
        %v1909 = vunpack.c.l.b16 %v1136
        %v1910 = vunpack.c.l.b16 %v1137
        %v1911 = vunpack.c.l.b16 %v1138
        %v1912 = vunpack.c.l.b16 %v1139
        %v1913 = vunpack.c.l.b16 %v1140
        %v1914 = vunpack.c.l.b16 %v1141
        %v1915 = vunpack.c.l.b16 %v1142
        %v1916 = vpack.c.b16 %v1885, %v1884
        %v1917 = vpack.c.b16 %v1887, %v1886
        %v1918 = vpack.c.b16 %v1889, %v1888
        %v1919 = vpack.c.b16 %v1891, %v1890
        %v1920 = vpack.c.b16 %v1893, %v1892
        %v1921 = vpack.c.b16 %v1895, %v1894
        %v1922 = vpack.c.b16 %v1897, %v1896
        %v1923 = vpack.c.b16 %v1899, %v1898
        %v1924 = vpack.c.b16 %v1901, %v1900
        %v1925 = vpack.c.b16 %v1903, %v1902
        %v1926 = vpack.c.b16 %v1905, %v1904
        %v1927 = vpack.c.b16 %v1907, %v1906
        %v1928 = vpack.c.b16 %v1909, %v1908
        %v1929 = vpack.c.b16 %v1911, %v1910
        %v1930 = vpack.c.b16 %v1913, %v1912
        %v1931 = vpack.c.b16 %v1915, %v1914
        %v1964 = vunpack.c.l.b16 %v1143
        %v1965 = vunpack.c.l.b16 %v1144
        %v1966 = vunpack.c.l.b16 %v1145
        %v1967 = vunpack.c.l.b16 %v1146
        %v1968 = vunpack.c.l.b16 %v1147
        %v1969 = vunpack.c.l.b16 %v1148
        %v1970 = vunpack.c.l.b16 %v1149
        %v1971 = vunpack.c.l.b16 %v1150
        %v1972 = vunpack.c.l.b16 %v1151
        %v1973 = vunpack.c.l.b16 %v1152
        %v1974 = vunpack.c.l.b16 %v1153
        %v1975 = vunpack.c.l.b16 %v1154
        %v1976 = vunpack.c.l.b16 %v1155
        %v1977 = vunpack.c.l.b16 %v1156
        %v1978 = vunpack.c.l.b16 %v1157
        %v1979 = vunpack.c.l.b16 %v1158
        %v1980 = vpack.c.b16 %v1965, %v1964
        %v1981 = vpack.c.b16 %v1967, %v1966
        %v1982 = vpack.c.b16 %v1969, %v1968
        %v1983 = vpack.c.b16 %v1971, %v1970
        %v1984 = vpack.c.b16 %v1973, %v1972
        %v1985 = vpack.c.b16 %v1975, %v1974
        %v1986 = vpack.c.b16 %v1977, %v1976
        %v1987 = vpack.c.b16 %v1979, %v1978
        %1996 = vmatprep.subr.bf16.mxu0 0
        %1997 = vmatpush1.bf16.msra.mxu0 %v1987
        %1998 = vmatprep.subr.bf16.mxu0 0
        %1999 = vmatpush1.bf16.msra.mxu0 %v1986
        %2000 = vmatprep.subr.bf16.mxu0 0
        %2001 = vmatpush1.bf16.msra.mxu0 %v1985
        %2002 = vmatprep.subr.bf16.mxu0 0
        %2003 = vmatpush1.bf16.msra.mxu0 %v1984
        %2004 = vmatprep.subr.bf16.mxu0 0
        %2005 = vmatpush1.bf16.msra.mxu0 %v1983
        %2006 = vmatprep.subr.bf16.mxu0 0
        %2007 = vmatpush1.bf16.msra.mxu0 %v1982
        %2008 = vmatprep.subr.bf16.mxu0 0
        %2009 = vmatpush1.bf16.msra.mxu0 %v1981
        %2010 = vmatprep.subr.bf16.mxu0 0
        %2011 = vmatpush1.bf16.msra.mxu0 %v1980
        %2012 = vmatprep.subr.bf16.mxu0 0
        %2013 = vmatpush2.bf16.msra.mxu0 0
        %2014 = vmatprep.subr.bf16.mxu0 0
        %2015 = vmatpush2.bf16.msra.mxu0 0
        %2016 = vmatprep.subr.bf16.mxu0 0
        %2017 = vmatpush2.bf16.msra.mxu0 0
        %2018 = vmatprep.subr.bf16.mxu0 0
        %2019 = vmatpush2.bf16.msra.mxu0 0
        %2020 = vmatprep.subr.bf16.mxu0 0
        %2021 = vmatpush2.bf16.msra.mxu0 0
        %2022 = vmatprep.subr.bf16.mxu0 0
        %2023 = vmatpush2.bf16.msra.mxu0 0
        %2024 = vmatprep.subr.bf16.mxu0 0
        %2025 = vmatpush2.bf16.msra.mxu0 0
        %2026 = vmatprep.subr.bf16.mxu0 0
        %2027 = vmatpush2.bf16.msra.mxu0 0
        %2028 = vmatprep.mubr.bf16.mxu0 0
        %2029 = vmatmul.mubr.bf16.gmra.mxu0 %v1916
        %v2030 = vpop.f32.mrf.mxu0
        %v2031 = vadd.f32 %v1726, %v2030
        %v2032 = vpop.f32.mrf.mxu0
        %v2033 = vpop.f32.mrf.mxu0
        %v2034 = vadd.f32 %v1729, %v2033
        %v2035 = vpop.f32.mrf.mxu0
        %2036 = vmatprep.mubr.bf16.mxu0 0
        %2037 = vmatmul.mubr.bf16.gmra.mxu0 %v1917
        %v2038 = vpop.f32.mrf.mxu0
        %v2039 = vadd.f32 %v1734, %v2038
        %v2040 = vpop.f32.mrf.mxu0
        %v2041 = vpop.f32.mrf.mxu0
        %v2042 = vadd.f32 %v1737, %v2041
        %v2043 = vpop.f32.mrf.mxu0
        %2044 = vmatprep.mubr.bf16.mxu0 0
        %2045 = vmatmul.mubr.bf16.gmra.mxu0 %v1918
        %v2046 = vpop.f32.mrf.mxu0
        %v2047 = vadd.f32 %v1742, %v2046
        %v2048 = vpop.f32.mrf.mxu0
        %v2049 = vpop.f32.mrf.mxu0
        %v2050 = vadd.f32 %v1745, %v2049
        %v2051 = vpop.f32.mrf.mxu0
        %2052 = vmatprep.mubr.bf16.mxu0 0
        %2053 = vmatmul.mubr.bf16.gmra.mxu0 %v1919
        %v2054 = vpop.f32.mrf.mxu0
        %v2055 = vadd.f32 %v1750, %v2054
        %v2056 = vpop.f32.mrf.mxu0
        %v2057 = vpop.f32.mrf.mxu0
        %v2058 = vadd.f32 %v1753, %v2057
        %v2059 = vpop.f32.mrf.mxu0
        %2060 = vmatprep.mubr.bf16.mxu0 0
        %2061 = vmatmul.mubr.bf16.gmra.mxu0 %v1920
        %v2062 = vpop.f32.mrf.mxu0
        %v2063 = vadd.f32 %v1758, %v2062
        %v2064 = vpop.f32.mrf.mxu0
        %v2065 = vpop.f32.mrf.mxu0
        %v2066 = vadd.f32 %v1761, %v2065
        %v2067 = vpop.f32.mrf.mxu0
        %2068 = vmatprep.mubr.bf16.mxu0 0
        %2069 = vmatmul.mubr.bf16.gmra.mxu0 %v1921
        %v2070 = vpop.f32.mrf.mxu0
        %v2071 = vadd.f32 %v1766, %v2070
        %v2072 = vpop.f32.mrf.mxu0
        %v2073 = vpop.f32.mrf.mxu0
        %v2074 = vadd.f32 %v1769, %v2073
        %v2075 = vpop.f32.mrf.mxu0
        %2076 = vmatprep.mubr.bf16.mxu0 0
        %2077 = vmatmul.mubr.bf16.gmra.mxu0 %v1922
        %v2078 = vpop.f32.mrf.mxu0
        %v2079 = vadd.f32 %v1774, %v2078
        %v2080 = vpop.f32.mrf.mxu0
        %v2081 = vpop.f32.mrf.mxu0
        %v2082 = vadd.f32 %v1777, %v2081
        %v2083 = vpop.f32.mrf.mxu0
        %2084 = vmatprep.mubr.bf16.mxu0 0
        %2085 = vmatmul.mubr.bf16.gmra.mxu0 %v1923
        %v2086 = vpop.f32.mrf.mxu0
        %v2087 = vadd.f32 %v1782, %v2086
        %v2088 = vpop.f32.mrf.mxu0
        %v2089 = vpop.f32.mrf.mxu0
        %v2090 = vadd.f32 %v1785, %v2089
        %v2091 = vpop.f32.mrf.mxu0
        %2092 = vmatprep.mubr.bf16.mxu0 0
        %2093 = vmatmul.mubr.bf16.gmra.mxu0 %v1924
        %v2094 = vpop.f32.mrf.mxu0
        %v2095 = vadd.f32 %v1790, %v2094
        %v2096 = vpop.f32.mrf.mxu0
        %v2097 = vpop.f32.mrf.mxu0
        %v2098 = vadd.f32 %v1793, %v2097
        %v2099 = vpop.f32.mrf.mxu0
        %2100 = vmatprep.mubr.bf16.mxu0 0
        %2101 = vmatmul.mubr.bf16.gmra.mxu0 %v1925
        %v2102 = vpop.f32.mrf.mxu0
        %v2103 = vadd.f32 %v1798, %v2102
        %v2104 = vpop.f32.mrf.mxu0
        %v2105 = vpop.f32.mrf.mxu0
        %v2106 = vadd.f32 %v1801, %v2105
        %v2107 = vpop.f32.mrf.mxu0
        %2108 = vmatprep.mubr.bf16.mxu0 0
        %2109 = vmatmul.mubr.bf16.gmra.mxu0 %v1926
        %v2110 = vpop.f32.mrf.mxu0
        %v2111 = vadd.f32 %v1806, %v2110
        %v2112 = vpop.f32.mrf.mxu0
        %v2113 = vpop.f32.mrf.mxu0
        %v2114 = vadd.f32 %v1809, %v2113
        %v2115 = vpop.f32.mrf.mxu0
        %2116 = vmatprep.mubr.bf16.mxu0 0
        %2117 = vmatmul.mubr.bf16.gmra.mxu0 %v1927
        %v2118 = vpop.f32.mrf.mxu0
        %v2119 = vadd.f32 %v1814, %v2118
        %v2120 = vpop.f32.mrf.mxu0
        %v2121 = vpop.f32.mrf.mxu0
        %v2122 = vadd.f32 %v1817, %v2121
        %v2123 = vpop.f32.mrf.mxu0
        %2124 = vmatprep.mubr.bf16.mxu0 0
        %2125 = vmatmul.mubr.bf16.gmra.mxu0 %v1928
        %v2126 = vpop.f32.mrf.mxu0
        %v2127 = vadd.f32 %v1822, %v2126
        %v2128 = vpop.f32.mrf.mxu0
        %v2129 = vpop.f32.mrf.mxu0
        %v2130 = vadd.f32 %v1825, %v2129
        %v2131 = vpop.f32.mrf.mxu0
        %2132 = vmatprep.mubr.bf16.mxu0 0
        %2133 = vmatmul.mubr.bf16.gmra.mxu0 %v1929
        %v2134 = vpop.f32.mrf.mxu0
        %v2135 = vadd.f32 %v1830, %v2134
        %v2136 = vpop.f32.mrf.mxu0
        %v2137 = vpop.f32.mrf.mxu0
        %v2138 = vadd.f32 %v1833, %v2137
        %v2139 = vpop.f32.mrf.mxu0
        %2140 = vmatprep.mubr.bf16.mxu0 0
        %2141 = vmatmul.mubr.bf16.gmra.mxu0 %v1930
        %v2142 = vpop.f32.mrf.mxu0
        %v2143 = vadd.f32 %v1838, %v2142
        %v2144 = vpop.f32.mrf.mxu0
        %v2145 = vpop.f32.mrf.mxu0
        %v2146 = vadd.f32 %v1841, %v2145
        %v2147 = vpop.f32.mrf.mxu0
        %2148 = vmatprep.mubr.bf16.mxu0 0
        %2149 = vmatmul.mubr.bf16.gmra.mxu0 %v1931
        %v2150 = vpop.f32.mrf.mxu0
        %v2151 = vadd.f32 %v1846, %v2150
        %v2152 = vpop.f32.mrf.mxu0
        %v2153 = vpop.f32.mrf.mxu0
        %v2154 = vadd.f32 %v1849, %v2153
        %v2155 = vpop.f32.mrf.mxu0
        %2156 = vdwg.mxu0
        %v2157 = vld [vmem:[#allocation2] sm:$0xe]
        %v2158 = vld [vmem:[#allocation2 + $0xc] sm:$0xe]
        %v2159 = vld [vmem:[#allocation2 + $0x18] sm:$0xe]
        %v2160 = vld [vmem:[#allocation2 + $0x24] sm:$0xe]
        %v2161 = vld [vmem:[#allocation2 + $0x30] sm:$0xe]
        %v2162 = vld [vmem:[#allocation2 + $0x3c] sm:$0xe]
        %v2163 = vld [vmem:[#allocation2 + $0x48] sm:$0xe]
        %v2164 = vld [vmem:[#allocation2 + $0x54] sm:$0xe]
        %v2165 = vld [vmem:[#allocation2 + $0x60] sm:$0xe]
        %v2166 = vld [vmem:[#allocation2 + $0x6c] sm:$0xe]
        %v2167 = vld [vmem:[#allocation2 + $0x78] sm:$0xe]
        %v2168 = vld [vmem:[#allocation2 + $0x84] sm:$0xe]
        %v2169 = vld [vmem:[#allocation2 + $0x90] sm:$0xe]
        %v2170 = vld [vmem:[#allocation2 + $0x9c] sm:$0xe]
        %v2171 = vld [vmem:[#allocation2 + $0xa8] sm:$0xe]
        %v2172 = vld [vmem:[#allocation2 + $0xb4] sm:$0xe]
        %vm2205 = vcmask 1042432
        %vm2206 = vcmask 1046532
        %vm2207 = vmor %vm2205, %vm2206
        %v2208 = vrot.slane %v2157, 5
        %v2209 = vrot.slane %v2208, 4
        %v2210 = vrot.slane %v1112, 5
        %v2211 = vsel %vm2207, %v2209, %v2210
        %v2212 = vrot.slane %v2210, 4
        %v2213 = vrot.slane %v1159, 5
        %v2214 = vsel %vm2207, %v2212, %v2213
        %v2215 = vrot.slane %v2158, 5
        %v2216 = vrot.slane %v2215, 4
        %v2217 = vrot.slane %v1114, 5
        %v2218 = vsel %vm2207, %v2216, %v2217
        %v2219 = vrot.slane %v2217, 4
        %v2220 = vrot.slane %v1160, 5
        %v2221 = vsel %vm2207, %v2219, %v2220
        %v2222 = vrot.slane %v2159, 5
        %v2223 = vrot.slane %v2222, 4
        %v2224 = vrot.slane %v1116, 5
        %v2225 = vsel %vm2207, %v2223, %v2224
        %v2226 = vrot.slane %v2224, 4
        %v2227 = vrot.slane %v1161, 5
        %v2228 = vsel %vm2207, %v2226, %v2227
        %v2229 = vrot.slane %v2160, 5
        %v2230 = vrot.slane %v2229, 4
        %v2231 = vrot.slane %v1118, 5
        %v2232 = vsel %vm2207, %v2230, %v2231
        %v2233 = vrot.slane %v2231, 4
        %v2234 = vrot.slane %v1162, 5
        %v2235 = vsel %vm2207, %v2233, %v2234
        %v2236 = vrot.slane %v2161, 5
        %v2237 = vrot.slane %v2236, 4
        %v2238 = vrot.slane %v1120, 5
        %v2239 = vsel %vm2207, %v2237, %v2238
        %v2240 = vrot.slane %v2238, 4
        %v2241 = vrot.slane %v1163, 5
        %v2242 = vsel %vm2207, %v2240, %v2241
        %v2243 = vrot.slane %v2162, 5
        %v2244 = vrot.slane %v2243, 4
        %v2245 = vrot.slane %v1122, 5
        %v2246 = vsel %vm2207, %v2244, %v2245
        %v2247 = vrot.slane %v2245, 4
        %v2248 = vrot.slane %v1164, 5
        %v2249 = vsel %vm2207, %v2247, %v2248
        %v2250 = vrot.slane %v2163, 5
        %v2251 = vrot.slane %v2250, 4
        %v2252 = vrot.slane %v1124, 5
        %v2253 = vsel %vm2207, %v2251, %v2252
        %v2254 = vrot.slane %v2252, 4
        %v2255 = vrot.slane %v1165, 5
        %v2256 = vsel %vm2207, %v2254, %v2255
        %v2257 = vrot.slane %v2164, 5
        %v2258 = vrot.slane %v2257, 4
        %v2259 = vrot.slane %v1126, 5
        %v2260 = vsel %vm2207, %v2258, %v2259
        %v2261 = vrot.slane %v2259, 4
        %v2262 = vrot.slane %v1166, 5
        %v2263 = vsel %vm2207, %v2261, %v2262
        %v2264 = vrot.slane %v2165, 5
        %v2265 = vrot.slane %v2264, 4
        %v2266 = vrot.slane %v1128, 5
        %v2267 = vsel %vm2207, %v2265, %v2266
        %v2268 = vrot.slane %v2266, 4
        %v2269 = vrot.slane %v1167, 5
        %v2270 = vsel %vm2207, %v2268, %v2269
        %v2271 = vrot.slane %v2166, 5
        %v2272 = vrot.slane %v2271, 4
        %v2273 = vrot.slane %v1130, 5
        %v2274 = vsel %vm2207, %v2272, %v2273
        %v2275 = vrot.slane %v2273, 4
        %v2276 = vrot.slane %v1168, 5
        %v2277 = vsel %vm2207, %v2275, %v2276
        %v2278 = vrot.slane %v2167, 5
        %v2279 = vrot.slane %v2278, 4
        %v2280 = vrot.slane %v1132, 5
        %v2281 = vsel %vm2207, %v2279, %v2280
        %v2282 = vrot.slane %v2280, 4
        %v2283 = vrot.slane %v1169, 5
        %v2284 = vsel %vm2207, %v2282, %v2283
        %v2285 = vrot.slane %v2168, 5
        %v2286 = vrot.slane %v2285, 4
        %v2287 = vrot.slane %v1134, 5
        %v2288 = vsel %vm2207, %v2286, %v2287
        %v2289 = vrot.slane %v2287, 4
        %v2290 = vrot.slane %v1170, 5
        %v2291 = vsel %vm2207, %v2289, %v2290
        %v2292 = vrot.slane %v2169, 5
        %v2293 = vrot.slane %v2292, 4
        %v2294 = vrot.slane %v1136, 5
        %v2295 = vsel %vm2207, %v2293, %v2294
        %v2296 = vrot.slane %v2294, 4
        %v2297 = vrot.slane %v1171, 5
        %v2298 = vsel %vm2207, %v2296, %v2297
        %v2299 = vrot.slane %v2170, 5
        %v2300 = vrot.slane %v2299, 4
        %v2301 = vrot.slane %v1138, 5
        %v2302 = vsel %vm2207, %v2300, %v2301
        %v2303 = vrot.slane %v2301, 4
        %v2304 = vrot.slane %v1172, 5
        %v2305 = vsel %vm2207, %v2303, %v2304
        %v2306 = vrot.slane %v2171, 5
        %v2307 = vrot.slane %v2306, 4
        %v2308 = vrot.slane %v1140, 5
        %v2309 = vsel %vm2207, %v2307, %v2308
        %v2310 = vrot.slane %v2308, 4
        %v2311 = vrot.slane %v1173, 5
        %v2312 = vsel %vm2207, %v2310, %v2311
        %v2313 = vrot.slane %v2172, 5
        %v2314 = vrot.slane %v2313, 4
        %v2315 = vrot.slane %v1142, 5
        %v2316 = vsel %vm2207, %v2314, %v2315
        %v2317 = vrot.slane %v2315, 4
        %v2318 = vrot.slane %v1174, 5
        %v2319 = vsel %vm2207, %v2317, %v2318
        %s2320 = scalar_lea.vmem %s2, 128
        %v2321 = vld [vmem:[%s2320] sm:$0xf]
        %v2322 = vld [vmem:[%s2320 + $0x4] sm:$0xf]
        %v2323 = vld [vmem:[%s2320 + $0x8] sm:$0xf]
        %v2324 = vld [vmem:[%s2320 + $0xc] sm:$0xf]
        %v2325 = vld [vmem:[%s2320 + $0x10] sm:$0xf]
        %v2326 = vld [vmem:[%s2320 + $0x14] sm:$0xf]
        %v2327 = vld [vmem:[%s2320 + $0x18] sm:$0xf]
        %v2328 = vld [vmem:[%s2320 + $0x1c] sm:$0xf]
        %v2329 = vld [vmem:[%s2320 + $0x20] sm:$0xf]
        %v2330 = vld [vmem:[%s2320 + $0x24] sm:$0xf]
        %v2331 = vld [vmem:[%s2320 + $0x28] sm:$0xf]
        %v2332 = vld [vmem:[%s2320 + $0x2c] sm:$0xf]
        %v2333 = vld [vmem:[%s2320 + $0x30] sm:$0xf]
        %v2334 = vld [vmem:[%s2320 + $0x34] sm:$0xf]
        %v2335 = vld [vmem:[%s2320 + $0x38] sm:$0xf]
        %v2336 = vld [vmem:[%s2320 + $0x3c] sm:$0xf]
        %v2337 = vunpack.c.l.b16 %v2211
        %v2338 = vunpack.c.l.b16 %v2214
        %v2339 = vunpack.c.l.b16 %v2218
        %v2340 = vunpack.c.l.b16 %v2221
        %v2341 = vunpack.c.l.b16 %v2225
        %v2342 = vunpack.c.l.b16 %v2228
        %v2343 = vunpack.c.l.b16 %v2232
        %v2344 = vunpack.c.l.b16 %v2235
        %v2345 = vunpack.c.l.b16 %v2239
        %v2346 = vunpack.c.l.b16 %v2242
        %v2347 = vunpack.c.l.b16 %v2246
        %v2348 = vunpack.c.l.b16 %v2249
        %v2349 = vunpack.c.l.b16 %v2253
        %v2350 = vunpack.c.l.b16 %v2256
        %v2351 = vunpack.c.l.b16 %v2260
        %v2352 = vunpack.c.l.b16 %v2263
        %v2353 = vunpack.c.l.b16 %v2267
        %v2354 = vunpack.c.l.b16 %v2270
        %v2355 = vunpack.c.l.b16 %v2274
        %v2356 = vunpack.c.l.b16 %v2277
        %v2357 = vunpack.c.l.b16 %v2281
        %v2358 = vunpack.c.l.b16 %v2284
        %v2359 = vunpack.c.l.b16 %v2288
        %v2360 = vunpack.c.l.b16 %v2291
        %v2361 = vunpack.c.l.b16 %v2295
        %v2362 = vunpack.c.l.b16 %v2298
        %v2363 = vunpack.c.l.b16 %v2302
        %v2364 = vunpack.c.l.b16 %v2305
        %v2365 = vunpack.c.l.b16 %v2309
        %v2366 = vunpack.c.l.b16 %v2312
        %v2367 = vunpack.c.l.b16 %v2316
        %v2368 = vunpack.c.l.b16 %v2319
        %v2369 = vpack.c.b16 %v2338, %v2337
        %v2370 = vpack.c.b16 %v2340, %v2339
        %v2371 = vpack.c.b16 %v2342, %v2341
        %v2372 = vpack.c.b16 %v2344, %v2343
        %v2373 = vpack.c.b16 %v2346, %v2345
        %v2374 = vpack.c.b16 %v2348, %v2347
        %v2375 = vpack.c.b16 %v2350, %v2349
        %v2376 = vpack.c.b16 %v2352, %v2351
        %v2377 = vpack.c.b16 %v2354, %v2353
        %v2378 = vpack.c.b16 %v2356, %v2355
        %v2379 = vpack.c.b16 %v2358, %v2357
        %v2380 = vpack.c.b16 %v2360, %v2359
        %v2381 = vpack.c.b16 %v2362, %v2361
        %v2382 = vpack.c.b16 %v2364, %v2363
        %v2383 = vpack.c.b16 %v2366, %v2365
        %v2384 = vpack.c.b16 %v2368, %v2367
        %v2417 = vunpack.c.l.b16 %v2321
        %v2418 = vunpack.c.l.b16 %v2322
        %v2419 = vunpack.c.l.b16 %v2323
        %v2420 = vunpack.c.l.b16 %v2324
        %v2421 = vunpack.c.l.b16 %v2325
        %v2422 = vunpack.c.l.b16 %v2326
        %v2423 = vunpack.c.l.b16 %v2327
        %v2424 = vunpack.c.l.b16 %v2328
        %v2425 = vunpack.c.l.b16 %v2329
        %v2426 = vunpack.c.l.b16 %v2330
        %v2427 = vunpack.c.l.b16 %v2331
        %v2428 = vunpack.c.l.b16 %v2332
        %v2429 = vunpack.c.l.b16 %v2333
        %v2430 = vunpack.c.l.b16 %v2334
        %v2431 = vunpack.c.l.b16 %v2335
        %v2432 = vunpack.c.l.b16 %v2336
        %v2433 = vpack.c.b16 %v2418, %v2417
        %v2434 = vpack.c.b16 %v2420, %v2419
        %v2435 = vpack.c.b16 %v2422, %v2421
        %v2436 = vpack.c.b16 %v2424, %v2423
        %v2437 = vpack.c.b16 %v2426, %v2425
        %v2438 = vpack.c.b16 %v2428, %v2427
        %v2439 = vpack.c.b16 %v2430, %v2429
        %v2440 = vpack.c.b16 %v2432, %v2431
        %2449 = vmatprep.subr.bf16.mxu0 0
        %2450 = vmatpush1.bf16.msra.mxu0 %v2440
        %2451 = vmatprep.subr.bf16.mxu0 0
        %2452 = vmatpush1.bf16.msra.mxu0 %v2439
        %2453 = vmatprep.subr.bf16.mxu0 0
        %2454 = vmatpush1.bf16.msra.mxu0 %v2438
        %2455 = vmatprep.subr.bf16.mxu0 0
        %2456 = vmatpush1.bf16.msra.mxu0 %v2437
        %2457 = vmatprep.subr.bf16.mxu0 0
        %2458 = vmatpush1.bf16.msra.mxu0 %v2436
        %2459 = vmatprep.subr.bf16.mxu0 0
        %2460 = vmatpush1.bf16.msra.mxu0 %v2435
        %2461 = vmatprep.subr.bf16.mxu0 0
        %2462 = vmatpush1.bf16.msra.mxu0 %v2434
        %2463 = vmatprep.subr.bf16.mxu0 0
        %2464 = vmatpush1.bf16.msra.mxu0 %v2433
        %2465 = vmatprep.subr.bf16.mxu0 0
        %2466 = vmatpush2.bf16.msra.mxu0 0
        %2467 = vmatprep.subr.bf16.mxu0 0
        %2468 = vmatpush2.bf16.msra.mxu0 0
        %2469 = vmatprep.subr.bf16.mxu0 0
        %2470 = vmatpush2.bf16.msra.mxu0 0
        %2471 = vmatprep.subr.bf16.mxu0 0
        %2472 = vmatpush2.bf16.msra.mxu0 0
        %2473 = vmatprep.subr.bf16.mxu0 0
        %2474 = vmatpush2.bf16.msra.mxu0 0
        %2475 = vmatprep.subr.bf16.mxu0 0
        %2476 = vmatpush2.bf16.msra.mxu0 0
        %2477 = vmatprep.subr.bf16.mxu0 0
        %2478 = vmatpush2.bf16.msra.mxu0 0
        %2479 = vmatprep.subr.bf16.mxu0 0
        %2480 = vmatpush2.bf16.msra.mxu0 0
        %2481 = vmatprep.mubr.bf16.mxu0 0
        %2482 = vmatmul.mubr.bf16.gmra.mxu0 %v2369
        %v2483 = vpop.f32.mrf.mxu0
        %v2484 = vadd.f32 0.0, %v2483
        %v2485 = vpop.f32.mrf.mxu0
        %v2486 = vpop.f32.mrf.mxu0
        %v2487 = vadd.f32 0.0, %v2486
        %v2488 = vpop.f32.mrf.mxu0
        %2489 = vmatprep.mubr.bf16.mxu0 0
        %2490 = vmatmul.mubr.bf16.gmra.mxu0 %v2370
        %v2491 = vpop.f32.mrf.mxu0
        %v2492 = vadd.f32 0.0, %v2491
        %v2493 = vpop.f32.mrf.mxu0
        %v2494 = vpop.f32.mrf.mxu0
        %v2495 = vadd.f32 0.0, %v2494
        %v2496 = vpop.f32.mrf.mxu0
        %2497 = vmatprep.mubr.bf16.mxu0 0
        %2498 = vmatmul.mubr.bf16.gmra.mxu0 %v2371
        %v2499 = vpop.f32.mrf.mxu0
        %v2500 = vadd.f32 0.0, %v2499
        %v2501 = vpop.f32.mrf.mxu0
        %v2502 = vpop.f32.mrf.mxu0
        %v2503 = vadd.f32 0.0, %v2502
        %v2504 = vpop.f32.mrf.mxu0
        %2505 = vmatprep.mubr.bf16.mxu0 0
        %2506 = vmatmul.mubr.bf16.gmra.mxu0 %v2372
        %v2507 = vpop.f32.mrf.mxu0
        %v2508 = vadd.f32 0.0, %v2507
        %v2509 = vpop.f32.mrf.mxu0
        %v2510 = vpop.f32.mrf.mxu0
        %v2511 = vadd.f32 0.0, %v2510
        %v2512 = vpop.f32.mrf.mxu0
        %2513 = vmatprep.mubr.bf16.mxu0 0
        %2514 = vmatmul.mubr.bf16.gmra.mxu0 %v2373
        %v2515 = vpop.f32.mrf.mxu0
        %v2516 = vadd.f32 0.0, %v2515
        %v2517 = vpop.f32.mrf.mxu0
        %v2518 = vpop.f32.mrf.mxu0
        %v2519 = vadd.f32 0.0, %v2518
        %v2520 = vpop.f32.mrf.mxu0
        %2521 = vmatprep.mubr.bf16.mxu0 0
        %2522 = vmatmul.mubr.bf16.gmra.mxu0 %v2374
        %v2523 = vpop.f32.mrf.mxu0
        %v2524 = vadd.f32 0.0, %v2523
        %v2525 = vpop.f32.mrf.mxu0
        %v2526 = vpop.f32.mrf.mxu0
        %v2527 = vadd.f32 0.0, %v2526
        %v2528 = vpop.f32.mrf.mxu0
        %2529 = vmatprep.mubr.bf16.mxu0 0
        %2530 = vmatmul.mubr.bf16.gmra.mxu0 %v2375
        %v2531 = vpop.f32.mrf.mxu0
        %v2532 = vadd.f32 0.0, %v2531
        %v2533 = vpop.f32.mrf.mxu0
        %v2534 = vpop.f32.mrf.mxu0
        %v2535 = vadd.f32 0.0, %v2534
        %v2536 = vpop.f32.mrf.mxu0
        %2537 = vmatprep.mubr.bf16.mxu0 0
        %2538 = vmatmul.mubr.bf16.gmra.mxu0 %v2376
        %v2539 = vpop.f32.mrf.mxu0
        %v2540 = vadd.f32 0.0, %v2539
        %v2541 = vpop.f32.mrf.mxu0
        %v2542 = vpop.f32.mrf.mxu0
        %v2543 = vadd.f32 0.0, %v2542
        %v2544 = vpop.f32.mrf.mxu0
        %2545 = vmatprep.mubr.bf16.mxu0 0
        %2546 = vmatmul.mubr.bf16.gmra.mxu0 %v2377
        %v2547 = vpop.f32.mrf.mxu0
        %v2548 = vadd.f32 0.0, %v2547
        %v2549 = vpop.f32.mrf.mxu0
        %v2550 = vpop.f32.mrf.mxu0
        %v2551 = vadd.f32 0.0, %v2550
        %v2552 = vpop.f32.mrf.mxu0
        %2553 = vmatprep.mubr.bf16.mxu0 0
        %2554 = vmatmul.mubr.bf16.gmra.mxu0 %v2378
        %v2555 = vpop.f32.mrf.mxu0
        %v2556 = vadd.f32 0.0, %v2555
        %v2557 = vpop.f32.mrf.mxu0
        %v2558 = vpop.f32.mrf.mxu0
        %v2559 = vadd.f32 0.0, %v2558
        %v2560 = vpop.f32.mrf.mxu0
        %2561 = vmatprep.mubr.bf16.mxu0 0
        %2562 = vmatmul.mubr.bf16.gmra.mxu0 %v2379
        %v2563 = vpop.f32.mrf.mxu0
        %v2564 = vadd.f32 0.0, %v2563
        %v2565 = vpop.f32.mrf.mxu0
        %v2566 = vpop.f32.mrf.mxu0
        %v2567 = vadd.f32 0.0, %v2566
        %v2568 = vpop.f32.mrf.mxu0
        %2569 = vmatprep.mubr.bf16.mxu0 0
        %2570 = vmatmul.mubr.bf16.gmra.mxu0 %v2380
        %v2571 = vpop.f32.mrf.mxu0
        %v2572 = vadd.f32 0.0, %v2571
        %v2573 = vpop.f32.mrf.mxu0
        %v2574 = vpop.f32.mrf.mxu0
        %v2575 = vadd.f32 0.0, %v2574
        %v2576 = vpop.f32.mrf.mxu0
        %2577 = vmatprep.mubr.bf16.mxu0 0
        %2578 = vmatmul.mubr.bf16.gmra.mxu0 %v2381
        %v2579 = vpop.f32.mrf.mxu0
        %v2580 = vadd.f32 0.0, %v2579
        %v2581 = vpop.f32.mrf.mxu0
        %v2582 = vpop.f32.mrf.mxu0
        %v2583 = vadd.f32 0.0, %v2582
        %v2584 = vpop.f32.mrf.mxu0
        %2585 = vmatprep.mubr.bf16.mxu0 0
        %2586 = vmatmul.mubr.bf16.gmra.mxu0 %v2382
        %v2587 = vpop.f32.mrf.mxu0
        %v2588 = vadd.f32 0.0, %v2587
        %v2589 = vpop.f32.mrf.mxu0
        %v2590 = vpop.f32.mrf.mxu0
        %v2591 = vadd.f32 0.0, %v2590
        %v2592 = vpop.f32.mrf.mxu0
        %2593 = vmatprep.mubr.bf16.mxu0 0
        %2594 = vmatmul.mubr.bf16.gmra.mxu0 %v2383
        %v2595 = vpop.f32.mrf.mxu0
        %v2596 = vadd.f32 0.0, %v2595
        %v2597 = vpop.f32.mrf.mxu0
        %v2598 = vpop.f32.mrf.mxu0
        %v2599 = vadd.f32 0.0, %v2598
        %v2600 = vpop.f32.mrf.mxu0
        %2601 = vmatprep.mubr.bf16.mxu0 0
        %2602 = vmatmul.mubr.bf16.gmra.mxu0 %v2384
        %v2603 = vpop.f32.mrf.mxu0
        %v2604 = vadd.f32 0.0, %v2603
        %v2605 = vpop.f32.mrf.mxu0
        %v2606 = vpop.f32.mrf.mxu0
        %v2607 = vadd.f32 0.0, %v2606
        %v2608 = vpop.f32.mrf.mxu0
        %2609 = vdwg.mxu0
        %v2610 = vadd.f32 %v2031, %v2484
        %v2611 = vadd.f32 %v2034, %v2487
        %v2612 = vadd.f32 %v2039, %v2492
        %v2613 = vadd.f32 %v2042, %v2495
        %v2614 = vadd.f32 %v2047, %v2500
        %v2615 = vadd.f32 %v2050, %v2503
        %v2616 = vadd.f32 %v2055, %v2508
        %v2617 = vadd.f32 %v2058, %v2511
        %v2618 = vadd.f32 %v2063, %v2516
        %v2619 = vadd.f32 %v2066, %v2519
        %v2620 = vadd.f32 %v2071, %v2524
        %v2621 = vadd.f32 %v2074, %v2527
        %v2622 = vadd.f32 %v2079, %v2532
        %v2623 = vadd.f32 %v2082, %v2535
        %v2624 = vadd.f32 %v2087, %v2540
        %v2625 = vadd.f32 %v2090, %v2543
        %v2626 = vadd.f32 %v2095, %v2548
        %v2627 = vadd.f32 %v2098, %v2551
        %v2628 = vadd.f32 %v2103, %v2556
        %v2629 = vadd.f32 %v2106, %v2559
        %v2630 = vadd.f32 %v2111, %v2564
        %v2631 = vadd.f32 %v2114, %v2567
        %v2632 = vadd.f32 %v2119, %v2572
        %v2633 = vadd.f32 %v2122, %v2575
        %v2634 = vadd.f32 %v2127, %v2580
        %v2635 = vadd.f32 %v2130, %v2583
        %v2636 = vadd.f32 %v2135, %v2588
        %v2637 = vadd.f32 %v2138, %v2591
        %v2638 = vadd.f32 %v2143, %v2596
        %v2639 = vadd.f32 %v2146, %v2599
        %v2640 = vadd.f32 %v2151, %v2604
        %v2641 = vadd.f32 %v2154, %v2607
        %v2642 = vld [vmem:[%s885] sm:$0xf]
        %v2643 = vld [vmem:[%s885 + $0x4] sm:$0xf]
        %v2644 = vld [vmem:[%s885 + $0xc] sm:$0xf]
        %v2645 = vld [vmem:[%s885 + $0x10] sm:$0xf]
        %v2646 = vld [vmem:[%s885 + $0x18] sm:$0xf]
        %v2647 = vld [vmem:[%s885 + $0x1c] sm:$0xf]
        %v2648 = vld [vmem:[%s885 + $0x24] sm:$0xf]
        %v2649 = vld [vmem:[%s885 + $0x28] sm:$0xf]
        %v2650 = vld [vmem:[%s885 + $0x30] sm:$0xf]
        %v2651 = vld [vmem:[%s885 + $0x34] sm:$0xf]
        %v2652 = vld [vmem:[%s885 + $0x3c] sm:$0xf]
        %v2653 = vld [vmem:[%s885 + $0x40] sm:$0xf]
        %v2654 = vld [vmem:[%s885 + $0x48] sm:$0xf]
        %v2655 = vld [vmem:[%s885 + $0x4c] sm:$0xf]
        %v2656 = vld [vmem:[%s885 + $0x54] sm:$0xf]
        %v2657 = vld [vmem:[%s885 + $0x58] sm:$0xf]
        %v2658 = vld [vmem:[%s885 + $0x60] sm:$0xf]
        %v2659 = vld [vmem:[%s885 + $0x64] sm:$0xf]
        %v2660 = vld [vmem:[%s885 + $0x6c] sm:$0xf]
        %v2661 = vld [vmem:[%s885 + $0x70] sm:$0xf]
        %v2662 = vld [vmem:[%s885 + $0x78] sm:$0xf]
        %v2663 = vld [vmem:[%s885 + $0x7c] sm:$0xf]
        %v2664 = vld [vmem:[%s885 + $0x84] sm:$0xf]
        %v2665 = vld [vmem:[%s885 + $0x88] sm:$0xf]
        %v2666 = vld [vmem:[%s885 + $0x90] sm:$0xf]
        %v2667 = vld [vmem:[%s885 + $0x94] sm:$0xf]
        %v2668 = vld [vmem:[%s885 + $0x9c] sm:$0xf]
        %v2669 = vld [vmem:[%s885 + $0xa0] sm:$0xf]
        %v2670 = vld [vmem:[%s885 + $0xa8] sm:$0xf]
        %v2671 = vld [vmem:[%s885 + $0xac] sm:$0xf]
        %v2672 = vld [vmem:[%s885 + $0xb4] sm:$0xf]
        %v2673 = vld [vmem:[%s885 + $0xb8] sm:$0xf]
        %s2674 = scalar_lea.vmem %s2, 192
        %v2675 = vld [vmem:[%s2674] sm:$0xf]
        %v2676 = vld [vmem:[%s2674 + $0x4] sm:$0xf]
        %v2677 = vld [vmem:[%s2674 + $0x8] sm:$0xf]
        %v2678 = vld [vmem:[%s2674 + $0xc] sm:$0xf]
        %v2679 = vld [vmem:[%s2674 + $0x10] sm:$0xf]
        %v2680 = vld [vmem:[%s2674 + $0x14] sm:$0xf]
        %v2681 = vld [vmem:[%s2674 + $0x18] sm:$0xf]
        %v2682 = vld [vmem:[%s2674 + $0x1c] sm:$0xf]
        %v2683 = vld [vmem:[%s2674 + $0x20] sm:$0xf]
        %v2684 = vld [vmem:[%s2674 + $0x24] sm:$0xf]
        %v2685 = vld [vmem:[%s2674 + $0x28] sm:$0xf]
        %v2686 = vld [vmem:[%s2674 + $0x2c] sm:$0xf]
        %v2687 = vld [vmem:[%s2674 + $0x30] sm:$0xf]
        %v2688 = vld [vmem:[%s2674 + $0x34] sm:$0xf]
        %v2689 = vld [vmem:[%s2674 + $0x38] sm:$0xf]
        %v2690 = vld [vmem:[%s2674 + $0x3c] sm:$0xf]
        %v2723 = vunpack.c.l.b16 %v2642
        %v2724 = vunpack.c.l.b16 %v2643
        %v2725 = vunpack.c.l.b16 %v2644
        %v2726 = vunpack.c.l.b16 %v2645
        %v2727 = vunpack.c.l.b16 %v2646
        %v2728 = vunpack.c.l.b16 %v2647
        %v2729 = vunpack.c.l.b16 %v2648
        %v2730 = vunpack.c.l.b16 %v2649
        %v2731 = vunpack.c.l.b16 %v2650
        %v2732 = vunpack.c.l.b16 %v2651
        %v2733 = vunpack.c.l.b16 %v2652
        %v2734 = vunpack.c.l.b16 %v2653
        %v2735 = vunpack.c.l.b16 %v2654
        %v2736 = vunpack.c.l.b16 %v2655
        %v2737 = vunpack.c.l.b16 %v2656
        %v2738 = vunpack.c.l.b16 %v2657
        %v2739 = vunpack.c.l.b16 %v2658
        %v2740 = vunpack.c.l.b16 %v2659
        %v2741 = vunpack.c.l.b16 %v2660
        %v2742 = vunpack.c.l.b16 %v2661
        %v2743 = vunpack.c.l.b16 %v2662
        %v2744 = vunpack.c.l.b16 %v2663
        %v2745 = vunpack.c.l.b16 %v2664
        %v2746 = vunpack.c.l.b16 %v2665
        %v2747 = vunpack.c.l.b16 %v2666
        %v2748 = vunpack.c.l.b16 %v2667
        %v2749 = vunpack.c.l.b16 %v2668
        %v2750 = vunpack.c.l.b16 %v2669
        %v2751 = vunpack.c.l.b16 %v2670
        %v2752 = vunpack.c.l.b16 %v2671
        %v2753 = vunpack.c.l.b16 %v2672
        %v2754 = vunpack.c.l.b16 %v2673
        %v2755 = vpack.c.b16 %v2724, %v2723
        %v2756 = vpack.c.b16 %v2726, %v2725
        %v2757 = vpack.c.b16 %v2728, %v2727
        %v2758 = vpack.c.b16 %v2730, %v2729
        %v2759 = vpack.c.b16 %v2732, %v2731
        %v2760 = vpack.c.b16 %v2734, %v2733
        %v2761 = vpack.c.b16 %v2736, %v2735
        %v2762 = vpack.c.b16 %v2738, %v2737
        %v2763 = vpack.c.b16 %v2740, %v2739
        %v2764 = vpack.c.b16 %v2742, %v2741
        %v2765 = vpack.c.b16 %v2744, %v2743
        %v2766 = vpack.c.b16 %v2746, %v2745
        %v2767 = vpack.c.b16 %v2748, %v2747
        %v2768 = vpack.c.b16 %v2750, %v2749
        %v2769 = vpack.c.b16 %v2752, %v2751
        %v2770 = vpack.c.b16 %v2754, %v2753
        %v2803 = vunpack.c.l.b16 %v2675
        %v2804 = vunpack.c.l.b16 %v2676
        %v2805 = vunpack.c.l.b16 %v2677
        %v2806 = vunpack.c.l.b16 %v2678
        %v2807 = vunpack.c.l.b16 %v2679
        %v2808 = vunpack.c.l.b16 %v2680
        %v2809 = vunpack.c.l.b16 %v2681
        %v2810 = vunpack.c.l.b16 %v2682
        %v2811 = vunpack.c.l.b16 %v2683
        %v2812 = vunpack.c.l.b16 %v2684
        %v2813 = vunpack.c.l.b16 %v2685
        %v2814 = vunpack.c.l.b16 %v2686
        %v2815 = vunpack.c.l.b16 %v2687
        %v2816 = vunpack.c.l.b16 %v2688
        %v2817 = vunpack.c.l.b16 %v2689
        %v2818 = vunpack.c.l.b16 %v2690
        %v2819 = vpack.c.b16 %v2804, %v2803
        %v2820 = vpack.c.b16 %v2806, %v2805
        %v2821 = vpack.c.b16 %v2808, %v2807
        %v2822 = vpack.c.b16 %v2810, %v2809
        %v2823 = vpack.c.b16 %v2812, %v2811
        %v2824 = vpack.c.b16 %v2814, %v2813
        %v2825 = vpack.c.b16 %v2816, %v2815
        %v2826 = vpack.c.b16 %v2818, %v2817
        %2835 = vmatprep.subr.bf16.mxu0 0
        %2836 = vmatpush1.bf16.msra.mxu0 %v2826
        %2837 = vmatprep.subr.bf16.mxu0 0
        %2838 = vmatpush1.bf16.msra.mxu0 %v2825
        %2839 = vmatprep.subr.bf16.mxu0 0
        %2840 = vmatpush1.bf16.msra.mxu0 %v2824
        %2841 = vmatprep.subr.bf16.mxu0 0
        %2842 = vmatpush1.bf16.msra.mxu0 %v2823
        %2843 = vmatprep.subr.bf16.mxu0 0
        %2844 = vmatpush1.bf16.msra.mxu0 %v2822
        %2845 = vmatprep.subr.bf16.mxu0 0
        %2846 = vmatpush1.bf16.msra.mxu0 %v2821
        %2847 = vmatprep.subr.bf16.mxu0 0
        %2848 = vmatpush1.bf16.msra.mxu0 %v2820
        %2849 = vmatprep.subr.bf16.mxu0 0
        %2850 = vmatpush1.bf16.msra.mxu0 %v2819
        %2851 = vmatprep.subr.bf16.mxu0 0
        %2852 = vmatpush2.bf16.msra.mxu0 0
        %2853 = vmatprep.subr.bf16.mxu0 0
        %2854 = vmatpush2.bf16.msra.mxu0 0
        %2855 = vmatprep.subr.bf16.mxu0 0
        %2856 = vmatpush2.bf16.msra.mxu0 0
        %2857 = vmatprep.subr.bf16.mxu0 0
        %2858 = vmatpush2.bf16.msra.mxu0 0
        %2859 = vmatprep.subr.bf16.mxu0 0
        %2860 = vmatpush2.bf16.msra.mxu0 0
        %2861 = vmatprep.subr.bf16.mxu0 0
        %2862 = vmatpush2.bf16.msra.mxu0 0
        %2863 = vmatprep.subr.bf16.mxu0 0
        %2864 = vmatpush2.bf16.msra.mxu0 0
        %2865 = vmatprep.subr.bf16.mxu0 0
        %2866 = vmatpush2.bf16.msra.mxu0 0
        %2867 = vmatprep.mubr.bf16.mxu0 0
        %2868 = vmatmul.mubr.bf16.gmra.mxu0 %v2755
        %v2869 = vpop.f32.mrf.mxu0
        %v2870 = vadd.f32 0.0, %v2869
        %v2871 = vpop.f32.mrf.mxu0
        %v2872 = vpop.f32.mrf.mxu0
        %v2873 = vadd.f32 0.0, %v2872
        %v2874 = vpop.f32.mrf.mxu0
        %2875 = vmatprep.mubr.bf16.mxu0 0
        %2876 = vmatmul.mubr.bf16.gmra.mxu0 %v2756
        %v2877 = vpop.f32.mrf.mxu0
        %v2878 = vadd.f32 0.0, %v2877
        %v2879 = vpop.f32.mrf.mxu0
        %v2880 = vpop.f32.mrf.mxu0
        %v2881 = vadd.f32 0.0, %v2880
        %v2882 = vpop.f32.mrf.mxu0
        %2883 = vmatprep.mubr.bf16.mxu0 0
        %2884 = vmatmul.mubr.bf16.gmra.mxu0 %v2757
        %v2885 = vpop.f32.mrf.mxu0
        %v2886 = vadd.f32 0.0, %v2885
        %v2887 = vpop.f32.mrf.mxu0
        %v2888 = vpop.f32.mrf.mxu0
        %v2889 = vadd.f32 0.0, %v2888
        %v2890 = vpop.f32.mrf.mxu0
        %2891 = vmatprep.mubr.bf16.mxu0 0
        %2892 = vmatmul.mubr.bf16.gmra.mxu0 %v2758
        %v2893 = vpop.f32.mrf.mxu0
        %v2894 = vadd.f32 0.0, %v2893
        %v2895 = vpop.f32.mrf.mxu0
        %v2896 = vpop.f32.mrf.mxu0
        %v2897 = vadd.f32 0.0, %v2896
        %v2898 = vpop.f32.mrf.mxu0
        %2899 = vmatprep.mubr.bf16.mxu0 0
        %2900 = vmatmul.mubr.bf16.gmra.mxu0 %v2759
        %v2901 = vpop.f32.mrf.mxu0
        %v2902 = vadd.f32 0.0, %v2901
        %v2903 = vpop.f32.mrf.mxu0
        %v2904 = vpop.f32.mrf.mxu0
        %v2905 = vadd.f32 0.0, %v2904
        %v2906 = vpop.f32.mrf.mxu0
        %2907 = vmatprep.mubr.bf16.mxu0 0
        %2908 = vmatmul.mubr.bf16.gmra.mxu0 %v2760
        %v2909 = vpop.f32.mrf.mxu0
        %v2910 = vadd.f32 0.0, %v2909
        %v2911 = vpop.f32.mrf.mxu0
        %v2912 = vpop.f32.mrf.mxu0
        %v2913 = vadd.f32 0.0, %v2912
        %v2914 = vpop.f32.mrf.mxu0
        %2915 = vmatprep.mubr.bf16.mxu0 0
        %2916 = vmatmul.mubr.bf16.gmra.mxu0 %v2761
        %v2917 = vpop.f32.mrf.mxu0
        %v2918 = vadd.f32 0.0, %v2917
        %v2919 = vpop.f32.mrf.mxu0
        %v2920 = vpop.f32.mrf.mxu0
        %v2921 = vadd.f32 0.0, %v2920
        %v2922 = vpop.f32.mrf.mxu0
        %2923 = vmatprep.mubr.bf16.mxu0 0
        %2924 = vmatmul.mubr.bf16.gmra.mxu0 %v2762
        %v2925 = vpop.f32.mrf.mxu0
        %v2926 = vadd.f32 0.0, %v2925
        %v2927 = vpop.f32.mrf.mxu0
        %v2928 = vpop.f32.mrf.mxu0
        %v2929 = vadd.f32 0.0, %v2928
        %v2930 = vpop.f32.mrf.mxu0
        %2931 = vmatprep.mubr.bf16.mxu0 0
        %2932 = vmatmul.mubr.bf16.gmra.mxu0 %v2763
        %v2933 = vpop.f32.mrf.mxu0
        %v2934 = vadd.f32 0.0, %v2933
        %v2935 = vpop.f32.mrf.mxu0
        %v2936 = vpop.f32.mrf.mxu0
        %v2937 = vadd.f32 0.0, %v2936
        %v2938 = vpop.f32.mrf.mxu0
        %2939 = vmatprep.mubr.bf16.mxu0 0
        %2940 = vmatmul.mubr.bf16.gmra.mxu0 %v2764
        %v2941 = vpop.f32.mrf.mxu0
        %v2942 = vadd.f32 0.0, %v2941
        %v2943 = vpop.f32.mrf.mxu0
        %v2944 = vpop.f32.mrf.mxu0
        %v2945 = vadd.f32 0.0, %v2944
        %v2946 = vpop.f32.mrf.mxu0
        %2947 = vmatprep.mubr.bf16.mxu0 0
        %2948 = vmatmul.mubr.bf16.gmra.mxu0 %v2765
        %v2949 = vpop.f32.mrf.mxu0
        %v2950 = vadd.f32 0.0, %v2949
        %v2951 = vpop.f32.mrf.mxu0
        %v2952 = vpop.f32.mrf.mxu0
        %v2953 = vadd.f32 0.0, %v2952
        %v2954 = vpop.f32.mrf.mxu0
        %2955 = vmatprep.mubr.bf16.mxu0 0
        %2956 = vmatmul.mubr.bf16.gmra.mxu0 %v2766
        %v2957 = vpop.f32.mrf.mxu0
        %v2958 = vadd.f32 0.0, %v2957
        %v2959 = vpop.f32.mrf.mxu0
        %v2960 = vpop.f32.mrf.mxu0
        %v2961 = vadd.f32 0.0, %v2960
        %v2962 = vpop.f32.mrf.mxu0
        %2963 = vmatprep.mubr.bf16.mxu0 0
        %2964 = vmatmul.mubr.bf16.gmra.mxu0 %v2767
        %v2965 = vpop.f32.mrf.mxu0
        %v2966 = vadd.f32 0.0, %v2965
        %v2967 = vpop.f32.mrf.mxu0
        %v2968 = vpop.f32.mrf.mxu0
        %v2969 = vadd.f32 0.0, %v2968
        %v2970 = vpop.f32.mrf.mxu0
        %2971 = vmatprep.mubr.bf16.mxu0 0
        %2972 = vmatmul.mubr.bf16.gmra.mxu0 %v2768
        %v2973 = vpop.f32.mrf.mxu0
        %v2974 = vadd.f32 0.0, %v2973
        %v2975 = vpop.f32.mrf.mxu0
        %v2976 = vpop.f32.mrf.mxu0
        %v2977 = vadd.f32 0.0, %v2976
        %v2978 = vpop.f32.mrf.mxu0
        %2979 = vmatprep.mubr.bf16.mxu0 0
        %2980 = vmatmul.mubr.bf16.gmra.mxu0 %v2769
        %v2981 = vpop.f32.mrf.mxu0
        %v2982 = vadd.f32 0.0, %v2981
        %v2983 = vpop.f32.mrf.mxu0
        %v2984 = vpop.f32.mrf.mxu0
        %v2985 = vadd.f32 0.0, %v2984
        %v2986 = vpop.f32.mrf.mxu0
        %2987 = vmatprep.mubr.bf16.mxu0 0
        %2988 = vmatmul.mubr.bf16.gmra.mxu0 %v2770
        %v2989 = vpop.f32.mrf.mxu0
        %v2990 = vadd.f32 0.0, %v2989
        %v2991 = vpop.f32.mrf.mxu0
        %v2992 = vpop.f32.mrf.mxu0
        %v2993 = vadd.f32 0.0, %v2992
        %v2994 = vpop.f32.mrf.mxu0
        %2995 = vdwg.mxu0
        %v2996 = vadd.f32 %v2610, %v2870
        %v2997 = vadd.f32 %v2611, %v2873
        %v2998 = vadd.f32 %v2612, %v2878
        %v2999 = vadd.f32 %v2613, %v2881
        %v3000 = vadd.f32 %v2614, %v2886
        %v3001 = vadd.f32 %v2615, %v2889
        %v3002 = vadd.f32 %v2616, %v2894
        %v3003 = vadd.f32 %v2617, %v2897
        %v3004 = vadd.f32 %v2618, %v2902
        %v3005 = vadd.f32 %v2619, %v2905
        %v3006 = vadd.f32 %v2620, %v2910
        %v3007 = vadd.f32 %v2621, %v2913
        %v3008 = vadd.f32 %v2622, %v2918
        %v3009 = vadd.f32 %v2623, %v2921
        %v3010 = vadd.f32 %v2624, %v2926
        %v3011 = vadd.f32 %v2625, %v2929
        %v3012 = vadd.f32 %v2626, %v2934
        %v3013 = vadd.f32 %v2627, %v2937
        %v3014 = vadd.f32 %v2628, %v2942
        %v3015 = vadd.f32 %v2629, %v2945
        %v3016 = vadd.f32 %v2630, %v2950
        %v3017 = vadd.f32 %v2631, %v2953
        %v3018 = vadd.f32 %v2632, %v2958
        %v3019 = vadd.f32 %v2633, %v2961
        %v3020 = vadd.f32 %v2634, %v2966
        %v3021 = vadd.f32 %v2635, %v2969
        %v3022 = vadd.f32 %v2636, %v2974
        %v3023 = vadd.f32 %v2637, %v2977
        %v3024 = vadd.f32 %v2638, %v2982
        %v3025 = vadd.f32 %v2639, %v2985
        %v3026 = vadd.f32 %v2640, %v2990
        %v3027 = vadd.f32 %v2641, %v2993
        %v3028 = vld [vmem:[%s885] sm:$0xf]
        %v3029 = vld [vmem:[%s885 + $0x4] sm:$0xf]
        %v3030 = vld [vmem:[%s885 + $0x8] sm:$0x1]
        %v3031 = vld [vmem:[%s885 + $0xc] sm:$0xf]
        %v3032 = vld [vmem:[%s885 + $0x10] sm:$0xf]
        %v3033 = vld [vmem:[%s885 + $0x14] sm:$0x1]
        %v3034 = vld [vmem:[%s885 + $0x18] sm:$0xf]
        %v3035 = vld [vmem:[%s885 + $0x1c] sm:$0xf]
        %v3036 = vld [vmem:[%s885 + $0x20] sm:$0x1]
        %v3037 = vld [vmem:[%s885 + $0x24] sm:$0xf]
        %v3038 = vld [vmem:[%s885 + $0x28] sm:$0xf]
        %v3039 = vld [vmem:[%s885 + $0x2c] sm:$0x1]
        %v3040 = vld [vmem:[%s885 + $0x30] sm:$0xf]
        %v3041 = vld [vmem:[%s885 + $0x34] sm:$0xf]
        %v3042 = vld [vmem:[%s885 + $0x38] sm:$0x1]
        %v3043 = vld [vmem:[%s885 + $0x3c] sm:$0xf]
        %v3044 = vld [vmem:[%s885 + $0x40] sm:$0xf]
        %v3045 = vld [vmem:[%s885 + $0x44] sm:$0x1]
        %v3046 = vld [vmem:[%s885 + $0x48] sm:$0xf]
        %v3047 = vld [vmem:[%s885 + $0x4c] sm:$0xf]
        %v3048 = vld [vmem:[%s885 + $0x50] sm:$0x1]
        %v3049 = vld [vmem:[%s885 + $0x54] sm:$0xf]
        %v3050 = vld [vmem:[%s885 + $0x58] sm:$0xf]
        %v3051 = vld [vmem:[%s885 + $0x5c] sm:$0x1]
        %v3052 = vld [vmem:[%s885 + $0x60] sm:$0xf]
        %v3053 = vld [vmem:[%s885 + $0x64] sm:$0xf]
        %v3054 = vld [vmem:[%s885 + $0x68] sm:$0x1]
        %v3055 = vld [vmem:[%s885 + $0x6c] sm:$0xf]
        %v3056 = vld [vmem:[%s885 + $0x70] sm:$0xf]
        %v3057 = vld [vmem:[%s885 + $0x74] sm:$0x1]
        %v3058 = vld [vmem:[%s885 + $0x78] sm:$0xf]
        %v3059 = vld [vmem:[%s885 + $0x7c] sm:$0xf]
        %v3060 = vld [vmem:[%s885 + $0x80] sm:$0x1]
        %v3061 = vld [vmem:[%s885 + $0x84] sm:$0xf]
        %v3062 = vld [vmem:[%s885 + $0x88] sm:$0xf]
        %v3063 = vld [vmem:[%s885 + $0x8c] sm:$0x1]
        %v3064 = vld [vmem:[%s885 + $0x90] sm:$0xf]
        %v3065 = vld [vmem:[%s885 + $0x94] sm:$0xf]
        %v3066 = vld [vmem:[%s885 + $0x98] sm:$0x1]
        %v3067 = vld [vmem:[%s885 + $0x9c] sm:$0xf]
        %v3068 = vld [vmem:[%s885 + $0xa0] sm:$0xf]
        %v3069 = vld [vmem:[%s885 + $0xa4] sm:$0x1]
        %v3070 = vld [vmem:[%s885 + $0xa8] sm:$0xf]
        %v3071 = vld [vmem:[%s885 + $0xac] sm:$0xf]
        %v3072 = vld [vmem:[%s885 + $0xb0] sm:$0x1]
        %v3073 = vld [vmem:[%s885 + $0xb4] sm:$0xf]
        %v3074 = vld [vmem:[%s885 + $0xb8] sm:$0xf]
        %v3075 = vld [vmem:[%s885 + $0xbc] sm:$0x1]
        %v3077 = vshrl.u32 %v3028, 16
        %v3079 = vrot.slane %v3077, 4
        %v3080 = vshll.u32 %v3028, 16
        %v3082 = vrot.slane %v3080, 5
        %v3083 = vor.u32 %v3079, %v3082
        %v3084 = vrot.slane %v3083, 4
        %v3086 = vshll.u32 %v3029, 16
        %v3088 = vrot.slane %v3086, 5
        %v3089 = vsel %vm1177, %v3084, %v3088
        %v3090 = vshrl.u32 %v3029, 16
        %v3092 = vrot.slane %v3090, 4
        %v3093 = vor.u32 %v3092, %v3088
        %v3094 = vrot.slane %v3093, 4
        %v3096 = vshll.u32 %v3030, 16
        %v3098 = vrot.slane %v3096, 5
        %v3099 = vsel %vm1177, %v3094, %v3098
        %v3101 = vshrl.u32 %v3031, 16
        %v3103 = vrot.slane %v3101, 4
        %v3104 = vshll.u32 %v3031, 16
        %v3106 = vrot.slane %v3104, 5
        %v3107 = vor.u32 %v3103, %v3106
        %v3108 = vrot.slane %v3107, 4
        %v3110 = vshll.u32 %v3032, 16
        %v3112 = vrot.slane %v3110, 5
        %v3113 = vsel %vm1177, %v3108, %v3112
        %v3114 = vshrl.u32 %v3032, 16
        %v3116 = vrot.slane %v3114, 4
        %v3117 = vor.u32 %v3116, %v3112
        %v3118 = vrot.slane %v3117, 4
        %v3120 = vshll.u32 %v3033, 16
        %v3122 = vrot.slane %v3120, 5
        %v3123 = vsel %vm1177, %v3118, %v3122
        %v3125 = vshrl.u32 %v3034, 16
        %v3127 = vrot.slane %v3125, 4
        %v3128 = vshll.u32 %v3034, 16
        %v3130 = vrot.slane %v3128, 5
        %v3131 = vor.u32 %v3127, %v3130
        %v3132 = vrot.slane %v3131, 4
        %v3134 = vshll.u32 %v3035, 16
        %v3136 = vrot.slane %v3134, 5
        %v3137 = vsel %vm1177, %v3132, %v3136
        %v3138 = vshrl.u32 %v3035, 16
        %v3140 = vrot.slane %v3138, 4
        %v3141 = vor.u32 %v3140, %v3136
        %v3142 = vrot.slane %v3141, 4
        %v3144 = vshll.u32 %v3036, 16
        %v3146 = vrot.slane %v3144, 5
        %v3147 = vsel %vm1177, %v3142, %v3146
        %v3149 = vshrl.u32 %v3037, 16
        %v3151 = vrot.slane %v3149, 4
        %v3152 = vshll.u32 %v3037, 16
        %v3154 = vrot.slane %v3152, 5
        %v3155 = vor.u32 %v3151, %v3154
        %v3156 = vrot.slane %v3155, 4
        %v3158 = vshll.u32 %v3038, 16
        %v3160 = vrot.slane %v3158, 5
        %v3161 = vsel %vm1177, %v3156, %v3160
        %v3162 = vshrl.u32 %v3038, 16
        %v3164 = vrot.slane %v3162, 4
        %v3165 = vor.u32 %v3164, %v3160
        %v3166 = vrot.slane %v3165, 4
        %v3168 = vshll.u32 %v3039, 16
        %v3170 = vrot.slane %v3168, 5
        %v3171 = vsel %vm1177, %v3166, %v3170
        %v3173 = vshrl.u32 %v3040, 16
        %v3175 = vrot.slane %v3173, 4
        %v3176 = vshll.u32 %v3040, 16
        %v3178 = vrot.slane %v3176, 5
        %v3179 = vor.u32 %v3175, %v3178
        %v3180 = vrot.slane %v3179, 4
        %v3182 = vshll.u32 %v3041, 16
        %v3184 = vrot.slane %v3182, 5
        %v3185 = vsel %vm1177, %v3180, %v3184
        %v3186 = vshrl.u32 %v3041, 16
        %v3188 = vrot.slane %v3186, 4
        %v3189 = vor.u32 %v3188, %v3184
        %v3190 = vrot.slane %v3189, 4
        %v3192 = vshll.u32 %v3042, 16
        %v3194 = vrot.slane %v3192, 5
        %v3195 = vsel %vm1177, %v3190, %v3194
        %v3197 = vshrl.u32 %v3043, 16
        %v3199 = vrot.slane %v3197, 4
        %v3200 = vshll.u32 %v3043, 16
        %v3202 = vrot.slane %v3200, 5
        %v3203 = vor.u32 %v3199, %v3202
        %v3204 = vrot.slane %v3203, 4
        %v3206 = vshll.u32 %v3044, 16
        %v3208 = vrot.slane %v3206, 5
        %v3209 = vsel %vm1177, %v3204, %v3208
        %v3210 = vshrl.u32 %v3044, 16
        %v3212 = vrot.slane %v3210, 4
        %v3213 = vor.u32 %v3212, %v3208
        %v3214 = vrot.slane %v3213, 4
        %v3216 = vshll.u32 %v3045, 16
        %v3218 = vrot.slane %v3216, 5
        %v3219 = vsel %vm1177, %v3214, %v3218
        %v3221 = vshrl.u32 %v3046, 16
        %v3223 = vrot.slane %v3221, 4
        %v3224 = vshll.u32 %v3046, 16
        %v3226 = vrot.slane %v3224, 5
        %v3227 = vor.u32 %v3223, %v3226
        %v3228 = vrot.slane %v3227, 4
        %v3230 = vshll.u32 %v3047, 16
        %v3232 = vrot.slane %v3230, 5
        %v3233 = vsel %vm1177, %v3228, %v3232
        %v3234 = vshrl.u32 %v3047, 16
        %v3236 = vrot.slane %v3234, 4
        %v3237 = vor.u32 %v3236, %v3232
        %v3238 = vrot.slane %v3237, 4
        %v3240 = vshll.u32 %v3048, 16
        %v3242 = vrot.slane %v3240, 5
        %v3243 = vsel %vm1177, %v3238, %v3242
        %v3245 = vshrl.u32 %v3049, 16
        %v3247 = vrot.slane %v3245, 4
        %v3248 = vshll.u32 %v3049, 16
        %v3250 = vrot.slane %v3248, 5
        %v3251 = vor.u32 %v3247, %v3250
        %v3252 = vrot.slane %v3251, 4
        %v3254 = vshll.u32 %v3050, 16
        %v3256 = vrot.slane %v3254, 5
        %v3257 = vsel %vm1177, %v3252, %v3256
        %v3258 = vshrl.u32 %v3050, 16
        %v3260 = vrot.slane %v3258, 4
        %v3261 = vor.u32 %v3260, %v3256
        %v3262 = vrot.slane %v3261, 4
        %v3264 = vshll.u32 %v3051, 16
        %v3266 = vrot.slane %v3264, 5
        %v3267 = vsel %vm1177, %v3262, %v3266
        %v3269 = vshrl.u32 %v3052, 16
        %v3271 = vrot.slane %v3269, 4
        %v3272 = vshll.u32 %v3052, 16
        %v3274 = vrot.slane %v3272, 5
        %v3275 = vor.u32 %v3271, %v3274
        %v3276 = vrot.slane %v3275, 4
        %v3278 = vshll.u32 %v3053, 16
        %v3280 = vrot.slane %v3278, 5
        %v3281 = vsel %vm1177, %v3276, %v3280
        %v3282 = vshrl.u32 %v3053, 16
        %v3284 = vrot.slane %v3282, 4
        %v3285 = vor.u32 %v3284, %v3280
        %v3286 = vrot.slane %v3285, 4
        %v3288 = vshll.u32 %v3054, 16
        %v3290 = vrot.slane %v3288, 5
        %v3291 = vsel %vm1177, %v3286, %v3290
        %v3293 = vshrl.u32 %v3055, 16
        %v3295 = vrot.slane %v3293, 4
        %v3296 = vshll.u32 %v3055, 16
        %v3298 = vrot.slane %v3296, 5
        %v3299 = vor.u32 %v3295, %v3298
        %v3300 = vrot.slane %v3299, 4
        %v3302 = vshll.u32 %v3056, 16
        %v3304 = vrot.slane %v3302, 5
        %v3305 = vsel %vm1177, %v3300, %v3304
        %v3306 = vshrl.u32 %v3056, 16
        %v3308 = vrot.slane %v3306, 4
        %v3309 = vor.u32 %v3308, %v3304
        %v3310 = vrot.slane %v3309, 4
        %v3312 = vshll.u32 %v3057, 16
        %v3314 = vrot.slane %v3312, 5
        %v3315 = vsel %vm1177, %v3310, %v3314
        %v3317 = vshrl.u32 %v3058, 16
        %v3319 = vrot.slane %v3317, 4
        %v3320 = vshll.u32 %v3058, 16
        %v3322 = vrot.slane %v3320, 5
        %v3323 = vor.u32 %v3319, %v3322
        %v3324 = vrot.slane %v3323, 4
        %v3326 = vshll.u32 %v3059, 16
        %v3328 = vrot.slane %v3326, 5
        %v3329 = vsel %vm1177, %v3324, %v3328
        %v3330 = vshrl.u32 %v3059, 16
        %v3332 = vrot.slane %v3330, 4
        %v3333 = vor.u32 %v3332, %v3328
        %v3334 = vrot.slane %v3333, 4
        %v3336 = vshll.u32 %v3060, 16
        %v3338 = vrot.slane %v3336, 5
        %v3339 = vsel %vm1177, %v3334, %v3338
        %v3341 = vshrl.u32 %v3061, 16
        %v3343 = vrot.slane %v3341, 4
        %v3344 = vshll.u32 %v3061, 16
        %v3346 = vrot.slane %v3344, 5
        %v3347 = vor.u32 %v3343, %v3346
        %v3348 = vrot.slane %v3347, 4
        %v3350 = vshll.u32 %v3062, 16
        %v3352 = vrot.slane %v3350, 5
        %v3353 = vsel %vm1177, %v3348, %v3352
        %v3354 = vshrl.u32 %v3062, 16
        %v3356 = vrot.slane %v3354, 4
        %v3357 = vor.u32 %v3356, %v3352
        %v3358 = vrot.slane %v3357, 4
        %v3360 = vshll.u32 %v3063, 16
        %v3362 = vrot.slane %v3360, 5
        %v3363 = vsel %vm1177, %v3358, %v3362
        %v3365 = vshrl.u32 %v3064, 16
        %v3367 = vrot.slane %v3365, 4
        %v3368 = vshll.u32 %v3064, 16
        %v3370 = vrot.slane %v3368, 5
        %v3371 = vor.u32 %v3367, %v3370
        %v3372 = vrot.slane %v3371, 4
        %v3374 = vshll.u32 %v3065, 16
        %v3376 = vrot.slane %v3374, 5
        %v3377 = vsel %vm1177, %v3372, %v3376
        %v3378 = vshrl.u32 %v3065, 16
        %v3380 = vrot.slane %v3378, 4
        %v3381 = vor.u32 %v3380, %v3376
        %v3382 = vrot.slane %v3381, 4
        %v3384 = vshll.u32 %v3066, 16
        %v3386 = vrot.slane %v3384, 5
        %v3387 = vsel %vm1177, %v3382, %v3386
        %v3389 = vshrl.u32 %v3067, 16
        %v3391 = vrot.slane %v3389, 4
        %v3392 = vshll.u32 %v3067, 16
        %v3394 = vrot.slane %v3392, 5
        %v3395 = vor.u32 %v3391, %v3394
        %v3396 = vrot.slane %v3395, 4
        %v3398 = vshll.u32 %v3068, 16
        %v3400 = vrot.slane %v3398, 5
        %v3401 = vsel %vm1177, %v3396, %v3400
        %v3402 = vshrl.u32 %v3068, 16
        %v3404 = vrot.slane %v3402, 4
        %v3405 = vor.u32 %v3404, %v3400
        %v3406 = vrot.slane %v3405, 4
        %v3408 = vshll.u32 %v3069, 16
        %v3410 = vrot.slane %v3408, 5
        %v3411 = vsel %vm1177, %v3406, %v3410
        %v3413 = vshrl.u32 %v3070, 16
        %v3415 = vrot.slane %v3413, 4
        %v3416 = vshll.u32 %v3070, 16
        %v3418 = vrot.slane %v3416, 5
        %v3419 = vor.u32 %v3415, %v3418
        %v3420 = vrot.slane %v3419, 4
        %v3422 = vshll.u32 %v3071, 16
        %v3424 = vrot.slane %v3422, 5
        %v3425 = vsel %vm1177, %v3420, %v3424
        %v3426 = vshrl.u32 %v3071, 16
        %v3428 = vrot.slane %v3426, 4
        %v3429 = vor.u32 %v3428, %v3424
        %v3430 = vrot.slane %v3429, 4
        %v3432 = vshll.u32 %v3072, 16
        %v3434 = vrot.slane %v3432, 5
        %v3435 = vsel %vm1177, %v3430, %v3434
        %v3437 = vshrl.u32 %v3073, 16
        %v3439 = vrot.slane %v3437, 4
        %v3440 = vshll.u32 %v3073, 16
        %v3442 = vrot.slane %v3440, 5
        %v3443 = vor.u32 %v3439, %v3442
        %v3444 = vrot.slane %v3443, 4
        %v3446 = vshll.u32 %v3074, 16
        %v3448 = vrot.slane %v3446, 5
        %v3449 = vsel %vm1177, %v3444, %v3448
        %v3450 = vshrl.u32 %v3074, 16
        %v3452 = vrot.slane %v3450, 4
        %v3453 = vor.u32 %v3452, %v3448
        %v3454 = vrot.slane %v3453, 4
        %v3456 = vshll.u32 %v3075, 16
        %v3458 = vrot.slane %v3456, 5
        %v3459 = vsel %vm1177, %v3454, %v3458
        %s3460 = scalar_lea.vmem %s2, 256
        %v3461 = vld [vmem:[%s3460] sm:$0xf]
        %v3462 = vld [vmem:[%s3460 + $0x4] sm:$0xf]
        %v3463 = vld [vmem:[%s3460 + $0x8] sm:$0xf]
        %v3464 = vld [vmem:[%s3460 + $0xc] sm:$0xf]
        %v3465 = vld [vmem:[%s3460 + $0x10] sm:$0xf]
        %v3466 = vld [vmem:[%s3460 + $0x14] sm:$0xf]
        %v3467 = vld [vmem:[%s3460 + $0x18] sm:$0xf]
        %v3468 = vld [vmem:[%s3460 + $0x1c] sm:$0xf]
        %v3469 = vld [vmem:[%s3460 + $0x20] sm:$0xf]
        %v3470 = vld [vmem:[%s3460 + $0x24] sm:$0xf]
        %v3471 = vld [vmem:[%s3460 + $0x28] sm:$0xf]
        %v3472 = vld [vmem:[%s3460 + $0x2c] sm:$0xf]
        %v3473 = vld [vmem:[%s3460 + $0x30] sm:$0xf]
        %v3474 = vld [vmem:[%s3460 + $0x34] sm:$0xf]
        %v3475 = vld [vmem:[%s3460 + $0x38] sm:$0xf]
        %v3476 = vld [vmem:[%s3460 + $0x3c] sm:$0xf]
        %v3477 = vunpack.c.l.b16 %v3089
        %v3478 = vunpack.c.l.b16 %v3099
        %v3479 = vunpack.c.l.b16 %v3113
        %v3480 = vunpack.c.l.b16 %v3123
        %v3481 = vunpack.c.l.b16 %v3137
        %v3482 = vunpack.c.l.b16 %v3147
        %v3483 = vunpack.c.l.b16 %v3161
        %v3484 = vunpack.c.l.b16 %v3171
        %v3485 = vunpack.c.l.b16 %v3185
        %v3486 = vunpack.c.l.b16 %v3195
        %v3487 = vunpack.c.l.b16 %v3209
        %v3488 = vunpack.c.l.b16 %v3219
        %v3489 = vunpack.c.l.b16 %v3233
        %v3490 = vunpack.c.l.b16 %v3243
        %v3491 = vunpack.c.l.b16 %v3257
        %v3492 = vunpack.c.l.b16 %v3267
        %v3493 = vunpack.c.l.b16 %v3281
        %v3494 = vunpack.c.l.b16 %v3291
        %v3495 = vunpack.c.l.b16 %v3305
        %v3496 = vunpack.c.l.b16 %v3315
        %v3497 = vunpack.c.l.b16 %v3329
        %v3498 = vunpack.c.l.b16 %v3339
        %v3499 = vunpack.c.l.b16 %v3353
        %v3500 = vunpack.c.l.b16 %v3363
        %v3501 = vunpack.c.l.b16 %v3377
        %v3502 = vunpack.c.l.b16 %v3387
        %v3503 = vunpack.c.l.b16 %v3401
        %v3504 = vunpack.c.l.b16 %v3411
        %v3505 = vunpack.c.l.b16 %v3425
        %v3506 = vunpack.c.l.b16 %v3435
        %v3507 = vunpack.c.l.b16 %v3449
        %v3508 = vunpack.c.l.b16 %v3459
        %v3509 = vpack.c.b16 %v3478, %v3477
        %v3510 = vpack.c.b16 %v3480, %v3479
        %v3511 = vpack.c.b16 %v3482, %v3481
        %v3512 = vpack.c.b16 %v3484, %v3483
        %v3513 = vpack.c.b16 %v3486, %v3485
        %v3514 = vpack.c.b16 %v3488, %v3487
        %v3515 = vpack.c.b16 %v3490, %v3489
        %v3516 = vpack.c.b16 %v3492, %v3491
        %v3517 = vpack.c.b16 %v3494, %v3493
        %v3518 = vpack.c.b16 %v3496, %v3495
        %v3519 = vpack.c.b16 %v3498, %v3497
        %v3520 = vpack.c.b16 %v3500, %v3499
        %v3521 = vpack.c.b16 %v3502, %v3501
        %v3522 = vpack.c.b16 %v3504, %v3503
        %v3523 = vpack.c.b16 %v3506, %v3505
        %v3524 = vpack.c.b16 %v3508, %v3507
        %v3557 = vunpack.c.l.b16 %v3461
        %v3558 = vunpack.c.l.b16 %v3462
        %v3559 = vunpack.c.l.b16 %v3463
        %v3560 = vunpack.c.l.b16 %v3464
        %v3561 = vunpack.c.l.b16 %v3465
        %v3562 = vunpack.c.l.b16 %v3466
        %v3563 = vunpack.c.l.b16 %v3467
        %v3564 = vunpack.c.l.b16 %v3468
        %v3565 = vunpack.c.l.b16 %v3469
        %v3566 = vunpack.c.l.b16 %v3470
        %v3567 = vunpack.c.l.b16 %v3471
        %v3568 = vunpack.c.l.b16 %v3472
        %v3569 = vunpack.c.l.b16 %v3473
        %v3570 = vunpack.c.l.b16 %v3474
        %v3571 = vunpack.c.l.b16 %v3475
        %v3572 = vunpack.c.l.b16 %v3476
        %v3573 = vpack.c.b16 %v3558, %v3557
        %v3574 = vpack.c.b16 %v3560, %v3559
        %v3575 = vpack.c.b16 %v3562, %v3561
        %v3576 = vpack.c.b16 %v3564, %v3563
        %v3577 = vpack.c.b16 %v3566, %v3565
        %v3578 = vpack.c.b16 %v3568, %v3567
        %v3579 = vpack.c.b16 %v3570, %v3569
        %v3580 = vpack.c.b16 %v3572, %v3571
        %3589 = vmatprep.subr.bf16.mxu0 0
        %3590 = vmatpush1.bf16.msra.mxu0 %v3580
        %3591 = vmatprep.subr.bf16.mxu0 0
        %3592 = vmatpush1.bf16.msra.mxu0 %v3579
        %3593 = vmatprep.subr.bf16.mxu0 0
        %3594 = vmatpush1.bf16.msra.mxu0 %v3578
        %3595 = vmatprep.subr.bf16.mxu0 0
        %3596 = vmatpush1.bf16.msra.mxu0 %v3577
        %3597 = vmatprep.subr.bf16.mxu0 0
        %3598 = vmatpush1.bf16.msra.mxu0 %v3576
        %3599 = vmatprep.subr.bf16.mxu0 0
        %3600 = vmatpush1.bf16.msra.mxu0 %v3575
        %3601 = vmatprep.subr.bf16.mxu0 0
        %3602 = vmatpush1.bf16.msra.mxu0 %v3574
        %3603 = vmatprep.subr.bf16.mxu0 0
        %3604 = vmatpush1.bf16.msra.mxu0 %v3573
        %3605 = vmatprep.subr.bf16.mxu0 0
        %3606 = vmatpush2.bf16.msra.mxu0 0
        %3607 = vmatprep.subr.bf16.mxu0 0
        %3608 = vmatpush2.bf16.msra.mxu0 0
        %3609 = vmatprep.subr.bf16.mxu0 0
        %3610 = vmatpush2.bf16.msra.mxu0 0
        %3611 = vmatprep.subr.bf16.mxu0 0
        %3612 = vmatpush2.bf16.msra.mxu0 0
        %3613 = vmatprep.subr.bf16.mxu0 0
        %3614 = vmatpush2.bf16.msra.mxu0 0
        %3615 = vmatprep.subr.bf16.mxu0 0
        %3616 = vmatpush2.bf16.msra.mxu0 0
        %3617 = vmatprep.subr.bf16.mxu0 0
        %3618 = vmatpush2.bf16.msra.mxu0 0
        %3619 = vmatprep.subr.bf16.mxu0 0
        %3620 = vmatpush2.bf16.msra.mxu0 0
        %3621 = vmatprep.mubr.bf16.mxu0 0
        %3622 = vmatmul.mubr.bf16.gmra.mxu0 %v3509
        %v3623 = vpop.f32.mrf.mxu0
        %v3624 = vadd.f32 0.0, %v3623
        %v3625 = vpop.f32.mrf.mxu0
        %v3626 = vpop.f32.mrf.mxu0
        %v3627 = vadd.f32 0.0, %v3626
        %v3628 = vpop.f32.mrf.mxu0
        %3629 = vmatprep.mubr.bf16.mxu0 0
        %3630 = vmatmul.mubr.bf16.gmra.mxu0 %v3510
        %v3631 = vpop.f32.mrf.mxu0
        %v3632 = vadd.f32 0.0, %v3631
        %v3633 = vpop.f32.mrf.mxu0
        %v3634 = vpop.f32.mrf.mxu0
        %v3635 = vadd.f32 0.0, %v3634
        %v3636 = vpop.f32.mrf.mxu0
        %3637 = vmatprep.mubr.bf16.mxu0 0
        %3638 = vmatmul.mubr.bf16.gmra.mxu0 %v3511
        %v3639 = vpop.f32.mrf.mxu0
        %v3640 = vadd.f32 0.0, %v3639
        %v3641 = vpop.f32.mrf.mxu0
        %v3642 = vpop.f32.mrf.mxu0
        %v3643 = vadd.f32 0.0, %v3642
        %v3644 = vpop.f32.mrf.mxu0
        %3645 = vmatprep.mubr.bf16.mxu0 0
        %3646 = vmatmul.mubr.bf16.gmra.mxu0 %v3512
        %v3647 = vpop.f32.mrf.mxu0
        %v3648 = vadd.f32 0.0, %v3647
        %v3649 = vpop.f32.mrf.mxu0
        %v3650 = vpop.f32.mrf.mxu0
        %v3651 = vadd.f32 0.0, %v3650
        %v3652 = vpop.f32.mrf.mxu0
        %3653 = vmatprep.mubr.bf16.mxu0 0
        %3654 = vmatmul.mubr.bf16.gmra.mxu0 %v3513
        %v3655 = vpop.f32.mrf.mxu0
        %v3656 = vadd.f32 0.0, %v3655
        %v3657 = vpop.f32.mrf.mxu0
        %v3658 = vpop.f32.mrf.mxu0
        %v3659 = vadd.f32 0.0, %v3658
        %v3660 = vpop.f32.mrf.mxu0
        %3661 = vmatprep.mubr.bf16.mxu0 0
        %3662 = vmatmul.mubr.bf16.gmra.mxu0 %v3514
        %v3663 = vpop.f32.mrf.mxu0
        %v3664 = vadd.f32 0.0, %v3663
        %v3665 = vpop.f32.mrf.mxu0
        %v3666 = vpop.f32.mrf.mxu0
        %v3667 = vadd.f32 0.0, %v3666
        %v3668 = vpop.f32.mrf.mxu0
        %3669 = vmatprep.mubr.bf16.mxu0 0
        %3670 = vmatmul.mubr.bf16.gmra.mxu0 %v3515
        %v3671 = vpop.f32.mrf.mxu0
        %v3672 = vadd.f32 0.0, %v3671
        %v3673 = vpop.f32.mrf.mxu0
        %v3674 = vpop.f32.mrf.mxu0
        %v3675 = vadd.f32 0.0, %v3674
        %v3676 = vpop.f32.mrf.mxu0
        %3677 = vmatprep.mubr.bf16.mxu0 0
        %3678 = vmatmul.mubr.bf16.gmra.mxu0 %v3516
        %v3679 = vpop.f32.mrf.mxu0
        %v3680 = vadd.f32 0.0, %v3679
        %v3681 = vpop.f32.mrf.mxu0
        %v3682 = vpop.f32.mrf.mxu0
        %v3683 = vadd.f32 0.0, %v3682
        %v3684 = vpop.f32.mrf.mxu0
        %3685 = vmatprep.mubr.bf16.mxu0 0
        %3686 = vmatmul.mubr.bf16.gmra.mxu0 %v3517
        %v3687 = vpop.f32.mrf.mxu0
        %v3688 = vadd.f32 0.0, %v3687
        %v3689 = vpop.f32.mrf.mxu0
        %v3690 = vpop.f32.mrf.mxu0
        %v3691 = vadd.f32 0.0, %v3690
        %v3692 = vpop.f32.mrf.mxu0
        %3693 = vmatprep.mubr.bf16.mxu0 0
        %3694 = vmatmul.mubr.bf16.gmra.mxu0 %v3518
        %v3695 = vpop.f32.mrf.mxu0
        %v3696 = vadd.f32 0.0, %v3695
        %v3697 = vpop.f32.mrf.mxu0
        %v3698 = vpop.f32.mrf.mxu0
        %v3699 = vadd.f32 0.0, %v3698
        %v3700 = vpop.f32.mrf.mxu0
        %3701 = vmatprep.mubr.bf16.mxu0 0
        %3702 = vmatmul.mubr.bf16.gmra.mxu0 %v3519
        %v3703 = vpop.f32.mrf.mxu0
        %v3704 = vadd.f32 0.0, %v3703
        %v3705 = vpop.f32.mrf.mxu0
        %v3706 = vpop.f32.mrf.mxu0
        %v3707 = vadd.f32 0.0, %v3706
        %v3708 = vpop.f32.mrf.mxu0
        %3709 = vmatprep.mubr.bf16.mxu0 0
        %3710 = vmatmul.mubr.bf16.gmra.mxu0 %v3520
        %v3711 = vpop.f32.mrf.mxu0
        %v3712 = vadd.f32 0.0, %v3711
        %v3713 = vpop.f32.mrf.mxu0
        %v3714 = vpop.f32.mrf.mxu0
        %v3715 = vadd.f32 0.0, %v3714
        %v3716 = vpop.f32.mrf.mxu0
        %3717 = vmatprep.mubr.bf16.mxu0 0
        %3718 = vmatmul.mubr.bf16.gmra.mxu0 %v3521
        %v3719 = vpop.f32.mrf.mxu0
        %v3720 = vadd.f32 0.0, %v3719
        %v3721 = vpop.f32.mrf.mxu0
        %v3722 = vpop.f32.mrf.mxu0
        %v3723 = vadd.f32 0.0, %v3722
        %v3724 = vpop.f32.mrf.mxu0
        %3725 = vmatprep.mubr.bf16.mxu0 0
        %3726 = vmatmul.mubr.bf16.gmra.mxu0 %v3522
        %v3727 = vpop.f32.mrf.mxu0
        %v3728 = vadd.f32 0.0, %v3727
        %v3729 = vpop.f32.mrf.mxu0
        %v3730 = vpop.f32.mrf.mxu0
        %v3731 = vadd.f32 0.0, %v3730
        %v3732 = vpop.f32.mrf.mxu0
        %3733 = vmatprep.mubr.bf16.mxu0 0
        %3734 = vmatmul.mubr.bf16.gmra.mxu0 %v3523
        %v3735 = vpop.f32.mrf.mxu0
        %v3736 = vadd.f32 0.0, %v3735
        %v3737 = vpop.f32.mrf.mxu0
        %v3738 = vpop.f32.mrf.mxu0
        %v3739 = vadd.f32 0.0, %v3738
        %v3740 = vpop.f32.mrf.mxu0
        %3741 = vmatprep.mubr.bf16.mxu0 0
        %3742 = vmatmul.mubr.bf16.gmra.mxu0 %v3524
        %v3743 = vpop.f32.mrf.mxu0
        %v3744 = vadd.f32 0.0, %v3743
        %v3745 = vpop.f32.mrf.mxu0
        %v3746 = vpop.f32.mrf.mxu0
        %v3747 = vadd.f32 0.0, %v3746
        %v3748 = vpop.f32.mrf.mxu0
        %3749 = vdwg.mxu0
        %v3750 = vadd.f32 %v2996, %v3624
        %v3751 = vadd.f32 %v2997, %v3627
        %v3752 = vadd.f32 %v2998, %v3632
        %v3753 = vadd.f32 %v2999, %v3635
        %v3754 = vadd.f32 %v3000, %v3640
        %v3755 = vadd.f32 %v3001, %v3643
        %v3756 = vadd.f32 %v3002, %v3648
        %v3757 = vadd.f32 %v3003, %v3651
        %v3758 = vadd.f32 %v3004, %v3656
        %v3759 = vadd.f32 %v3005, %v3659
        %v3760 = vadd.f32 %v3006, %v3664
        %v3761 = vadd.f32 %v3007, %v3667
        %v3762 = vadd.f32 %v3008, %v3672
        %v3763 = vadd.f32 %v3009, %v3675
        %v3764 = vadd.f32 %v3010, %v3680
        %v3765 = vadd.f32 %v3011, %v3683
        %v3766 = vadd.f32 %v3012, %v3688
        %v3767 = vadd.f32 %v3013, %v3691
        %v3768 = vadd.f32 %v3014, %v3696
        %v3769 = vadd.f32 %v3015, %v3699
        %v3770 = vadd.f32 %v3016, %v3704
        %v3771 = vadd.f32 %v3017, %v3707
        %v3772 = vadd.f32 %v3018, %v3712
        %v3773 = vadd.f32 %v3019, %v3715
        %v3774 = vadd.f32 %v3020, %v3720
        %v3775 = vadd.f32 %v3021, %v3723
        %v3776 = vadd.f32 %v3022, %v3728
        %v3777 = vadd.f32 %v3023, %v3731
        %v3778 = vadd.f32 %v3024, %v3736
        %v3779 = vadd.f32 %v3025, %v3739
        %v3780 = vadd.f32 %v3026, %v3744
        %v3781 = vadd.f32 %v3027, %v3747
        %v3782 = vld [vmem:[%s885] sm:$0xe]
        %v3783 = vld [vmem:[%s885 + $0xc] sm:$0xe]
        %v3784 = vld [vmem:[%s885 + $0x18] sm:$0xe]
        %v3785 = vld [vmem:[%s885 + $0x24] sm:$0xe]
        %v3786 = vld [vmem:[%s885 + $0x30] sm:$0xe]
        %v3787 = vld [vmem:[%s885 + $0x3c] sm:$0xe]
        %v3788 = vld [vmem:[%s885 + $0x48] sm:$0xe]
        %v3789 = vld [vmem:[%s885 + $0x54] sm:$0xe]
        %v3790 = vld [vmem:[%s885 + $0x60] sm:$0xe]
        %v3791 = vld [vmem:[%s885 + $0x6c] sm:$0xe]
        %v3792 = vld [vmem:[%s885 + $0x78] sm:$0xe]
        %v3793 = vld [vmem:[%s885 + $0x84] sm:$0xe]
        %v3794 = vld [vmem:[%s885 + $0x90] sm:$0xe]
        %v3795 = vld [vmem:[%s885 + $0x9c] sm:$0xe]
        %v3796 = vld [vmem:[%s885 + $0xa8] sm:$0xe]
        %v3797 = vld [vmem:[%s885 + $0xb4] sm:$0xe]
        %v3846 = vrot.slane %v3782, 5
        %v3847 = vrot.slane %v3846, 4
        %v3848 = vrot.slane %v3029, 5
        %v3849 = vsel %vm2207, %v3847, %v3848
        %v3850 = vrot.slane %v3848, 4
        %v3851 = vrot.slane %v3030, 5
        %v3852 = vsel %vm2207, %v3850, %v3851
        %v3853 = vrot.slane %v3783, 5
        %v3854 = vrot.slane %v3853, 4
        %v3855 = vrot.slane %v3032, 5
        %v3856 = vsel %vm2207, %v3854, %v3855
        %v3857 = vrot.slane %v3855, 4
        %v3858 = vrot.slane %v3033, 5
        %v3859 = vsel %vm2207, %v3857, %v3858
        %v3860 = vrot.slane %v3784, 5
        %v3861 = vrot.slane %v3860, 4
        %v3862 = vrot.slane %v3035, 5
        %v3863 = vsel %vm2207, %v3861, %v3862
        %v3864 = vrot.slane %v3862, 4
        %v3865 = vrot.slane %v3036, 5
        %v3866 = vsel %vm2207, %v3864, %v3865
        %v3867 = vrot.slane %v3785, 5
        %v3868 = vrot.slane %v3867, 4
        %v3869 = vrot.slane %v3038, 5
        %v3870 = vsel %vm2207, %v3868, %v3869
        %v3871 = vrot.slane %v3869, 4
        %v3872 = vrot.slane %v3039, 5
        %v3873 = vsel %vm2207, %v3871, %v3872
        %v3874 = vrot.slane %v3786, 5
        %v3875 = vrot.slane %v3874, 4
        %v3876 = vrot.slane %v3041, 5
        %v3877 = vsel %vm2207, %v3875, %v3876
        %v3878 = vrot.slane %v3876, 4
        %v3879 = vrot.slane %v3042, 5
        %v3880 = vsel %vm2207, %v3878, %v3879
        %v3881 = vrot.slane %v3787, 5
        %v3882 = vrot.slane %v3881, 4
        %v3883 = vrot.slane %v3044, 5
        %v3884 = vsel %vm2207, %v3882, %v3883
        %v3885 = vrot.slane %v3883, 4
        %v3886 = vrot.slane %v3045, 5
        %v3887 = vsel %vm2207, %v3885, %v3886
        %v3888 = vrot.slane %v3788, 5
        %v3889 = vrot.slane %v3888, 4
        %v3890 = vrot.slane %v3047, 5
        %v3891 = vsel %vm2207, %v3889, %v3890
        %v3892 = vrot.slane %v3890, 4
        %v3893 = vrot.slane %v3048, 5
        %v3894 = vsel %vm2207, %v3892, %v3893
        %v3895 = vrot.slane %v3789, 5
        %v3896 = vrot.slane %v3895, 4
        %v3897 = vrot.slane %v3050, 5
        %v3898 = vsel %vm2207, %v3896, %v3897
        %v3899 = vrot.slane %v3897, 4
        %v3900 = vrot.slane %v3051, 5
        %v3901 = vsel %vm2207, %v3899, %v3900
        %v3902 = vrot.slane %v3790, 5
        %v3903 = vrot.slane %v3902, 4
        %v3904 = vrot.slane %v3053, 5
        %v3905 = vsel %vm2207, %v3903, %v3904
        %v3906 = vrot.slane %v3904, 4
        %v3907 = vrot.slane %v3054, 5
        %v3908 = vsel %vm2207, %v3906, %v3907
        %v3909 = vrot.slane %v3791, 5
        %v3910 = vrot.slane %v3909, 4
        %v3911 = vrot.slane %v3056, 5
        %v3912 = vsel %vm2207, %v3910, %v3911
        %v3913 = vrot.slane %v3911, 4
        %v3914 = vrot.slane %v3057, 5
        %v3915 = vsel %vm2207, %v3913, %v3914
        %v3916 = vrot.slane %v3792, 5
        %v3917 = vrot.slane %v3916, 4
        %v3918 = vrot.slane %v3059, 5
        %v3919 = vsel %vm2207, %v3917, %v3918
        %v3920 = vrot.slane %v3918, 4
        %v3921 = vrot.slane %v3060, 5
        %v3922 = vsel %vm2207, %v3920, %v3921
        %v3923 = vrot.slane %v3793, 5
        %v3924 = vrot.slane %v3923, 4
        %v3925 = vrot.slane %v3062, 5
        %v3926 = vsel %vm2207, %v3924, %v3925
        %v3927 = vrot.slane %v3925, 4
        %v3928 = vrot.slane %v3063, 5
        %v3929 = vsel %vm2207, %v3927, %v3928
        %v3930 = vrot.slane %v3794, 5
        %v3931 = vrot.slane %v3930, 4
        %v3932 = vrot.slane %v3065, 5
        %v3933 = vsel %vm2207, %v3931, %v3932
        %v3934 = vrot.slane %v3932, 4
        %v3935 = vrot.slane %v3066, 5
        %v3936 = vsel %vm2207, %v3934, %v3935
        %v3937 = vrot.slane %v3795, 5
        %v3938 = vrot.slane %v3937, 4
        %v3939 = vrot.slane %v3068, 5
        %v3940 = vsel %vm2207, %v3938, %v3939
        %v3941 = vrot.slane %v3939, 4
        %v3942 = vrot.slane %v3069, 5
        %v3943 = vsel %vm2207, %v3941, %v3942
        %v3944 = vrot.slane %v3796, 5
        %v3945 = vrot.slane %v3944, 4
        %v3946 = vrot.slane %v3071, 5
        %v3947 = vsel %vm2207, %v3945, %v3946
        %v3948 = vrot.slane %v3946, 4
        %v3949 = vrot.slane %v3072, 5
        %v3950 = vsel %vm2207, %v3948, %v3949
        %v3951 = vrot.slane %v3797, 5
        %v3952 = vrot.slane %v3951, 4
        %v3953 = vrot.slane %v3074, 5
        %v3954 = vsel %vm2207, %v3952, %v3953
        %v3955 = vrot.slane %v3953, 4
        %v3956 = vrot.slane %v3075, 5
        %v3957 = vsel %vm2207, %v3955, %v3956
        %s3958 = scalar_lea.vmem %s2, 320
        %v3959 = vld [vmem:[%s3958] sm:$0xf]
        %v3960 = vld [vmem:[%s3958 + $0x4] sm:$0xf]
        %v3961 = vld [vmem:[%s3958 + $0x8] sm:$0xf]
        %v3962 = vld [vmem:[%s3958 + $0xc] sm:$0xf]
        %v3963 = vld [vmem:[%s3958 + $0x10] sm:$0xf]
        %v3964 = vld [vmem:[%s3958 + $0x14] sm:$0xf]
        %v3965 = vld [vmem:[%s3958 + $0x18] sm:$0xf]
        %v3966 = vld [vmem:[%s3958 + $0x1c] sm:$0xf]
        %v3967 = vld [vmem:[%s3958 + $0x20] sm:$0xf]
        %v3968 = vld [vmem:[%s3958 + $0x24] sm:$0xf]
        %v3969 = vld [vmem:[%s3958 + $0x28] sm:$0xf]
        %v3970 = vld [vmem:[%s3958 + $0x2c] sm:$0xf]
        %v3971 = vld [vmem:[%s3958 + $0x30] sm:$0xf]
        %v3972 = vld [vmem:[%s3958 + $0x34] sm:$0xf]
        %v3973 = vld [vmem:[%s3958 + $0x38] sm:$0xf]
        %v3974 = vld [vmem:[%s3958 + $0x3c] sm:$0xf]
        %v3975 = vunpack.c.l.b16 %v3849
        %v3976 = vunpack.c.l.b16 %v3852
        %v3977 = vunpack.c.l.b16 %v3856
        %v3978 = vunpack.c.l.b16 %v3859
        %v3979 = vunpack.c.l.b16 %v3863
        %v3980 = vunpack.c.l.b16 %v3866
        %v3981 = vunpack.c.l.b16 %v3870
        %v3982 = vunpack.c.l.b16 %v3873
        %v3983 = vunpack.c.l.b16 %v3877
        %v3984 = vunpack.c.l.b16 %v3880
        %v3985 = vunpack.c.l.b16 %v3884
        %v3986 = vunpack.c.l.b16 %v3887
        %v3987 = vunpack.c.l.b16 %v3891
        %v3988 = vunpack.c.l.b16 %v3894
        %v3989 = vunpack.c.l.b16 %v3898
        %v3990 = vunpack.c.l.b16 %v3901
        %v3991 = vunpack.c.l.b16 %v3905
        %v3992 = vunpack.c.l.b16 %v3908
        %v3993 = vunpack.c.l.b16 %v3912
        %v3994 = vunpack.c.l.b16 %v3915
        %v3995 = vunpack.c.l.b16 %v3919
        %v3996 = vunpack.c.l.b16 %v3922
        %v3997 = vunpack.c.l.b16 %v3926
        %v3998 = vunpack.c.l.b16 %v3929
        %v3999 = vunpack.c.l.b16 %v3933
        %v4000 = vunpack.c.l.b16 %v3936
        %v4001 = vunpack.c.l.b16 %v3940
        %v4002 = vunpack.c.l.b16 %v3943
        %v4003 = vunpack.c.l.b16 %v3947
        %v4004 = vunpack.c.l.b16 %v3950
        %v4005 = vunpack.c.l.b16 %v3954
        %v4006 = vunpack.c.l.b16 %v3957
        %v4007 = vpack.c.b16 %v3976, %v3975
        %v4008 = vpack.c.b16 %v3978, %v3977
        %v4009 = vpack.c.b16 %v3980, %v3979
        %v4010 = vpack.c.b16 %v3982, %v3981
        %v4011 = vpack.c.b16 %v3984, %v3983
        %v4012 = vpack.c.b16 %v3986, %v3985
        %v4013 = vpack.c.b16 %v3988, %v3987
        %v4014 = vpack.c.b16 %v3990, %v3989
        %v4015 = vpack.c.b16 %v3992, %v3991
        %v4016 = vpack.c.b16 %v3994, %v3993
        %v4017 = vpack.c.b16 %v3996, %v3995
        %v4018 = vpack.c.b16 %v3998, %v3997
        %v4019 = vpack.c.b16 %v4000, %v3999
        %v4020 = vpack.c.b16 %v4002, %v4001
        %v4021 = vpack.c.b16 %v4004, %v4003
        %v4022 = vpack.c.b16 %v4006, %v4005
        %v4055 = vunpack.c.l.b16 %v3959
        %v4056 = vunpack.c.l.b16 %v3960
        %v4057 = vunpack.c.l.b16 %v3961
        %v4058 = vunpack.c.l.b16 %v3962
        %v4059 = vunpack.c.l.b16 %v3963
        %v4060 = vunpack.c.l.b16 %v3964
        %v4061 = vunpack.c.l.b16 %v3965
        %v4062 = vunpack.c.l.b16 %v3966
        %v4063 = vunpack.c.l.b16 %v3967
        %v4064 = vunpack.c.l.b16 %v3968
        %v4065 = vunpack.c.l.b16 %v3969
        %v4066 = vunpack.c.l.b16 %v3970
        %v4067 = vunpack.c.l.b16 %v3971
        %v4068 = vunpack.c.l.b16 %v3972
        %v4069 = vunpack.c.l.b16 %v3973
        %v4070 = vunpack.c.l.b16 %v3974
        %v4071 = vpack.c.b16 %v4056, %v4055
        %v4072 = vpack.c.b16 %v4058, %v4057
        %v4073 = vpack.c.b16 %v4060, %v4059
        %v4074 = vpack.c.b16 %v4062, %v4061
        %v4075 = vpack.c.b16 %v4064, %v4063
        %v4076 = vpack.c.b16 %v4066, %v4065
        %v4077 = vpack.c.b16 %v4068, %v4067
        %v4078 = vpack.c.b16 %v4070, %v4069
        %4087 = vmatprep.subr.bf16.mxu0 0
        %4088 = vmatpush1.bf16.msra.mxu0 %v4078
        %4089 = vmatprep.subr.bf16.mxu0 0
        %4090 = vmatpush1.bf16.msra.mxu0 %v4077
        %4091 = vmatprep.subr.bf16.mxu0 0
        %4092 = vmatpush1.bf16.msra.mxu0 %v4076
        %4093 = vmatprep.subr.bf16.mxu0 0
        %4094 = vmatpush1.bf16.msra.mxu0 %v4075
        %4095 = vmatprep.subr.bf16.mxu0 0
        %4096 = vmatpush1.bf16.msra.mxu0 %v4074
        %4097 = vmatprep.subr.bf16.mxu0 0
        %4098 = vmatpush1.bf16.msra.mxu0 %v4073
        %4099 = vmatprep.subr.bf16.mxu0 0
        %4100 = vmatpush1.bf16.msra.mxu0 %v4072
        %4101 = vmatprep.subr.bf16.mxu0 0
        %4102 = vmatpush1.bf16.msra.mxu0 %v4071
        %4103 = vmatprep.subr.bf16.mxu0 0
        %4104 = vmatpush2.bf16.msra.mxu0 0
        %4105 = vmatprep.subr.bf16.mxu0 0
        %4106 = vmatpush2.bf16.msra.mxu0 0
        %4107 = vmatprep.subr.bf16.mxu0 0
        %4108 = vmatpush2.bf16.msra.mxu0 0
        %4109 = vmatprep.subr.bf16.mxu0 0
        %4110 = vmatpush2.bf16.msra.mxu0 0
        %4111 = vmatprep.subr.bf16.mxu0 0
        %4112 = vmatpush2.bf16.msra.mxu0 0
        %4113 = vmatprep.subr.bf16.mxu0 0
        %4114 = vmatpush2.bf16.msra.mxu0 0
        %4115 = vmatprep.subr.bf16.mxu0 0
        %4116 = vmatpush2.bf16.msra.mxu0 0
        %4117 = vmatprep.subr.bf16.mxu0 0
        %4118 = vmatpush2.bf16.msra.mxu0 0
        %4119 = vmatprep.mubr.bf16.mxu0 0
        %4120 = vmatmul.mubr.bf16.gmra.mxu0 %v4007
        %v4121 = vpop.f32.mrf.mxu0
        %v4122 = vadd.f32 0.0, %v4121
        %v4123 = vpop.f32.mrf.mxu0
        %v4124 = vpop.f32.mrf.mxu0
        %v4125 = vadd.f32 0.0, %v4124
        %v4126 = vpop.f32.mrf.mxu0
        %4127 = vmatprep.mubr.bf16.mxu0 0
        %4128 = vmatmul.mubr.bf16.gmra.mxu0 %v4008
        %v4129 = vpop.f32.mrf.mxu0
        %v4130 = vadd.f32 0.0, %v4129
        %v4131 = vpop.f32.mrf.mxu0
        %v4132 = vpop.f32.mrf.mxu0
        %v4133 = vadd.f32 0.0, %v4132
        %v4134 = vpop.f32.mrf.mxu0
        %4135 = vmatprep.mubr.bf16.mxu0 0
        %4136 = vmatmul.mubr.bf16.gmra.mxu0 %v4009
        %v4137 = vpop.f32.mrf.mxu0
        %v4138 = vadd.f32 0.0, %v4137
        %v4139 = vpop.f32.mrf.mxu0
        %v4140 = vpop.f32.mrf.mxu0
        %v4141 = vadd.f32 0.0, %v4140
        %v4142 = vpop.f32.mrf.mxu0
        %4143 = vmatprep.mubr.bf16.mxu0 0
        %4144 = vmatmul.mubr.bf16.gmra.mxu0 %v4010
        %v4145 = vpop.f32.mrf.mxu0
        %v4146 = vadd.f32 0.0, %v4145
        %v4147 = vpop.f32.mrf.mxu0
        %v4148 = vpop.f32.mrf.mxu0
        %v4149 = vadd.f32 0.0, %v4148
        %v4150 = vpop.f32.mrf.mxu0
        %4151 = vmatprep.mubr.bf16.mxu0 0
        %4152 = vmatmul.mubr.bf16.gmra.mxu0 %v4011
        %v4153 = vpop.f32.mrf.mxu0
        %v4154 = vadd.f32 0.0, %v4153
        %v4155 = vpop.f32.mrf.mxu0
        %v4156 = vpop.f32.mrf.mxu0
        %v4157 = vadd.f32 0.0, %v4156
        %v4158 = vpop.f32.mrf.mxu0
        %4159 = vmatprep.mubr.bf16.mxu0 0
        %4160 = vmatmul.mubr.bf16.gmra.mxu0 %v4012
        %v4161 = vpop.f32.mrf.mxu0
        %v4162 = vadd.f32 0.0, %v4161
        %v4163 = vpop.f32.mrf.mxu0
        %v4164 = vpop.f32.mrf.mxu0
        %v4165 = vadd.f32 0.0, %v4164
        %v4166 = vpop.f32.mrf.mxu0
        %4167 = vmatprep.mubr.bf16.mxu0 0
        %4168 = vmatmul.mubr.bf16.gmra.mxu0 %v4013
        %v4169 = vpop.f32.mrf.mxu0
        %v4170 = vadd.f32 0.0, %v4169
        %v4171 = vpop.f32.mrf.mxu0
        %v4172 = vpop.f32.mrf.mxu0
        %v4173 = vadd.f32 0.0, %v4172
        %v4174 = vpop.f32.mrf.mxu0
        %4175 = vmatprep.mubr.bf16.mxu0 0
        %4176 = vmatmul.mubr.bf16.gmra.mxu0 %v4014
        %v4177 = vpop.f32.mrf.mxu0
        %v4178 = vadd.f32 0.0, %v4177
        %v4179 = vpop.f32.mrf.mxu0
        %v4180 = vpop.f32.mrf.mxu0
        %v4181 = vadd.f32 0.0, %v4180
        %v4182 = vpop.f32.mrf.mxu0
        %4183 = vmatprep.mubr.bf16.mxu0 0
        %4184 = vmatmul.mubr.bf16.gmra.mxu0 %v4015
        %v4185 = vpop.f32.mrf.mxu0
        %v4186 = vadd.f32 0.0, %v4185
        %v4187 = vpop.f32.mrf.mxu0
        %v4188 = vpop.f32.mrf.mxu0
        %v4189 = vadd.f32 0.0, %v4188
        %v4190 = vpop.f32.mrf.mxu0
        %4191 = vmatprep.mubr.bf16.mxu0 0
        %4192 = vmatmul.mubr.bf16.gmra.mxu0 %v4016
        %v4193 = vpop.f32.mrf.mxu0
        %v4194 = vadd.f32 0.0, %v4193
        %v4195 = vpop.f32.mrf.mxu0
        %v4196 = vpop.f32.mrf.mxu0
        %v4197 = vadd.f32 0.0, %v4196
        %v4198 = vpop.f32.mrf.mxu0
        %4199 = vmatprep.mubr.bf16.mxu0 0
        %4200 = vmatmul.mubr.bf16.gmra.mxu0 %v4017
        %v4201 = vpop.f32.mrf.mxu0
        %v4202 = vadd.f32 0.0, %v4201
        %v4203 = vpop.f32.mrf.mxu0
        %v4204 = vpop.f32.mrf.mxu0
        %v4205 = vadd.f32 0.0, %v4204
        %v4206 = vpop.f32.mrf.mxu0
        %4207 = vmatprep.mubr.bf16.mxu0 0
        %4208 = vmatmul.mubr.bf16.gmra.mxu0 %v4018
        %v4209 = vpop.f32.mrf.mxu0
        %v4210 = vadd.f32 0.0, %v4209
        %v4211 = vpop.f32.mrf.mxu0
        %v4212 = vpop.f32.mrf.mxu0
        %v4213 = vadd.f32 0.0, %v4212
        %v4214 = vpop.f32.mrf.mxu0
        %4215 = vmatprep.mubr.bf16.mxu0 0
        %4216 = vmatmul.mubr.bf16.gmra.mxu0 %v4019
        %v4217 = vpop.f32.mrf.mxu0
        %v4218 = vadd.f32 0.0, %v4217
        %v4219 = vpop.f32.mrf.mxu0
        %v4220 = vpop.f32.mrf.mxu0
        %v4221 = vadd.f32 0.0, %v4220
        %v4222 = vpop.f32.mrf.mxu0
        %4223 = vmatprep.mubr.bf16.mxu0 0
        %4224 = vmatmul.mubr.bf16.gmra.mxu0 %v4020
        %v4225 = vpop.f32.mrf.mxu0
        %v4226 = vadd.f32 0.0, %v4225
        %v4227 = vpop.f32.mrf.mxu0
        %v4228 = vpop.f32.mrf.mxu0
        %v4229 = vadd.f32 0.0, %v4228
        %v4230 = vpop.f32.mrf.mxu0
        %4231 = vmatprep.mubr.bf16.mxu0 0
        %4232 = vmatmul.mubr.bf16.gmra.mxu0 %v4021
        %v4233 = vpop.f32.mrf.mxu0
        %v4234 = vadd.f32 0.0, %v4233
        %v4235 = vpop.f32.mrf.mxu0
        %v4236 = vpop.f32.mrf.mxu0
        %v4237 = vadd.f32 0.0, %v4236
        %v4238 = vpop.f32.mrf.mxu0
        %4239 = vmatprep.mubr.bf16.mxu0 0
        %4240 = vmatmul.mubr.bf16.gmra.mxu0 %v4022
        %v4241 = vpop.f32.mrf.mxu0
        %v4242 = vadd.f32 0.0, %v4241
        %v4243 = vpop.f32.mrf.mxu0
        %v4244 = vpop.f32.mrf.mxu0
        %v4245 = vadd.f32 0.0, %v4244
        %v4246 = vpop.f32.mrf.mxu0
        %4247 = vdwg.mxu0
        %v4248 = vadd.f32 %v3750, %v4122
        %v4249 = vadd.f32 %v3751, %v4125
        %v4250 = vadd.f32 %v3752, %v4130
        %v4251 = vadd.f32 %v3753, %v4133
        %v4252 = vadd.f32 %v3754, %v4138
        %v4253 = vadd.f32 %v3755, %v4141
        %v4254 = vadd.f32 %v3756, %v4146
        %v4255 = vadd.f32 %v3757, %v4149
        %v4256 = vadd.f32 %v3758, %v4154
        %v4257 = vadd.f32 %v3759, %v4157
        %v4258 = vadd.f32 %v3760, %v4162
        %v4259 = vadd.f32 %v3761, %v4165
        %v4260 = vadd.f32 %v3762, %v4170
        %v4261 = vadd.f32 %v3763, %v4173
        %v4262 = vadd.f32 %v3764, %v4178
        %v4263 = vadd.f32 %v3765, %v4181
        %v4264 = vadd.f32 %v3766, %v4186
        %v4265 = vadd.f32 %v3767, %v4189
        %v4266 = vadd.f32 %v3768, %v4194
        %v4267 = vadd.f32 %v3769, %v4197
        %v4268 = vadd.f32 %v3770, %v4202
        %v4269 = vadd.f32 %v3771, %v4205
        %v4270 = vadd.f32 %v3772, %v4210
        %v4271 = vadd.f32 %v3773, %v4213
        %v4272 = vadd.f32 %v3774, %v4218
        %v4273 = vadd.f32 %v3775, %v4221
        %v4274 = vadd.f32 %v3776, %v4226
        %v4275 = vadd.f32 %v3777, %v4229
        %v4276 = vadd.f32 %v3778, %v4234
        %v4277 = vadd.f32 %v3779, %v4237
        %v4278 = vadd.f32 %v3780, %v4242
        %v4279 = vadd.f32 %v3781, %v4245
        %s4280 = scalar_lea.vmem [#allocation2], 24
        %v4281 = vld [vmem:[%s4280] sm:$0xf]
        %v4282 = vld [vmem:[%s4280 + $0x4] sm:$0xf]
        %v4283 = vld [vmem:[%s4280 + $0xc] sm:$0xf]
        %v4284 = vld [vmem:[%s4280 + $0x10] sm:$0xf]
        %v4285 = vld [vmem:[%s4280 + $0x18] sm:$0xf]
        %v4286 = vld [vmem:[%s4280 + $0x1c] sm:$0xf]
        %v4287 = vld [vmem:[%s4280 + $0x24] sm:$0xf]
        %v4288 = vld [vmem:[%s4280 + $0x28] sm:$0xf]
        %v4289 = vld [vmem:[%s4280 + $0x30] sm:$0xf]
        %v4290 = vld [vmem:[%s4280 + $0x34] sm:$0xf]
        %v4291 = vld [vmem:[%s4280 + $0x3c] sm:$0xf]
        %v4292 = vld [vmem:[%s4280 + $0x40] sm:$0xf]
        %v4293 = vld [vmem:[%s4280 + $0x48] sm:$0xf]
        %v4294 = vld [vmem:[%s4280 + $0x4c] sm:$0xf]
        %v4295 = vld [vmem:[%s4280 + $0x54] sm:$0xf]
        %v4296 = vld [vmem:[%s4280 + $0x58] sm:$0xf]
        %v4297 = vld [vmem:[%s4280 + $0x60] sm:$0xf]
        %v4298 = vld [vmem:[%s4280 + $0x64] sm:$0xf]
        %v4299 = vld [vmem:[%s4280 + $0x6c] sm:$0xf]
        %v4300 = vld [vmem:[%s4280 + $0x70] sm:$0xf]
        %v4301 = vld [vmem:[%s4280 + $0x78] sm:$0xf]
        %v4302 = vld [vmem:[%s4280 + $0x7c] sm:$0xf]
        %v4303 = vld [vmem:[%s4280 + $0x84] sm:$0xf]
        %v4304 = vld [vmem:[%s4280 + $0x88] sm:$0xf]
        %v4305 = vld [vmem:[%s4280 + $0x90] sm:$0xf]
        %v4306 = vld [vmem:[%s4280 + $0x94] sm:$0xf]
        %v4307 = vld [vmem:[%s4280 + $0x9c] sm:$0xf]
        %v4308 = vld [vmem:[%s4280 + $0xa0] sm:$0xf]
        %v4309 = vld [vmem:[%s4280 + $0xa8] sm:$0xf]
        %v4310 = vld [vmem:[%s4280 + $0xac] sm:$0xf]
        %v4311 = vld [vmem:[%s4280 + $0xb4] sm:$0xf]
        %v4312 = vld [vmem:[%s4280 + $0xb8] sm:$0xf]
        %s4313 = scalar_lea.vmem %s2, 384
        %v4314 = vld [vmem:[%s4313] sm:$0xf]
        %v4315 = vld [vmem:[%s4313 + $0x4] sm:$0xf]
        %v4316 = vld [vmem:[%s4313 + $0x8] sm:$0xf]
        %v4317 = vld [vmem:[%s4313 + $0xc] sm:$0xf]
        %v4318 = vld [vmem:[%s4313 + $0x10] sm:$0xf]
        %v4319 = vld [vmem:[%s4313 + $0x14] sm:$0xf]
        %v4320 = vld [vmem:[%s4313 + $0x18] sm:$0xf]
        %v4321 = vld [vmem:[%s4313 + $0x1c] sm:$0xf]
        %v4322 = vld [vmem:[%s4313 + $0x20] sm:$0xf]
        %v4323 = vld [vmem:[%s4313 + $0x24] sm:$0xf]
        %v4324 = vld [vmem:[%s4313 + $0x28] sm:$0xf]
        %v4325 = vld [vmem:[%s4313 + $0x2c] sm:$0xf]
        %v4326 = vld [vmem:[%s4313 + $0x30] sm:$0xf]
        %v4327 = vld [vmem:[%s4313 + $0x34] sm:$0xf]
        %v4328 = vld [vmem:[%s4313 + $0x38] sm:$0xf]
        %v4329 = vld [vmem:[%s4313 + $0x3c] sm:$0xf]
        %v4362 = vunpack.c.l.b16 %v4281
        %v4363 = vunpack.c.l.b16 %v4282
        %v4364 = vunpack.c.l.b16 %v4283
        %v4365 = vunpack.c.l.b16 %v4284
        %v4366 = vunpack.c.l.b16 %v4285
        %v4367 = vunpack.c.l.b16 %v4286
        %v4368 = vunpack.c.l.b16 %v4287
        %v4369 = vunpack.c.l.b16 %v4288
        %v4370 = vunpack.c.l.b16 %v4289
        %v4371 = vunpack.c.l.b16 %v4290
        %v4372 = vunpack.c.l.b16 %v4291
        %v4373 = vunpack.c.l.b16 %v4292
        %v4374 = vunpack.c.l.b16 %v4293
        %v4375 = vunpack.c.l.b16 %v4294
        %v4376 = vunpack.c.l.b16 %v4295
        %v4377 = vunpack.c.l.b16 %v4296
        %v4378 = vunpack.c.l.b16 %v4297
        %v4379 = vunpack.c.l.b16 %v4298
        %v4380 = vunpack.c.l.b16 %v4299
        %v4381 = vunpack.c.l.b16 %v4300
        %v4382 = vunpack.c.l.b16 %v4301
        %v4383 = vunpack.c.l.b16 %v4302
        %v4384 = vunpack.c.l.b16 %v4303
        %v4385 = vunpack.c.l.b16 %v4304
        %v4386 = vunpack.c.l.b16 %v4305
        %v4387 = vunpack.c.l.b16 %v4306
        %v4388 = vunpack.c.l.b16 %v4307
        %v4389 = vunpack.c.l.b16 %v4308
        %v4390 = vunpack.c.l.b16 %v4309
        %v4391 = vunpack.c.l.b16 %v4310
        %v4392 = vunpack.c.l.b16 %v4311
        %v4393 = vunpack.c.l.b16 %v4312
        %v4394 = vpack.c.b16 %v4363, %v4362
        %v4395 = vpack.c.b16 %v4365, %v4364
        %v4396 = vpack.c.b16 %v4367, %v4366
        %v4397 = vpack.c.b16 %v4369, %v4368
        %v4398 = vpack.c.b16 %v4371, %v4370
        %v4399 = vpack.c.b16 %v4373, %v4372
        %v4400 = vpack.c.b16 %v4375, %v4374
        %v4401 = vpack.c.b16 %v4377, %v4376
        %v4402 = vpack.c.b16 %v4379, %v4378
        %v4403 = vpack.c.b16 %v4381, %v4380
        %v4404 = vpack.c.b16 %v4383, %v4382
        %v4405 = vpack.c.b16 %v4385, %v4384
        %v4406 = vpack.c.b16 %v4387, %v4386
        %v4407 = vpack.c.b16 %v4389, %v4388
        %v4408 = vpack.c.b16 %v4391, %v4390
        %v4409 = vpack.c.b16 %v4393, %v4392
        %v4442 = vunpack.c.l.b16 %v4314
        %v4443 = vunpack.c.l.b16 %v4315
        %v4444 = vunpack.c.l.b16 %v4316
        %v4445 = vunpack.c.l.b16 %v4317
        %v4446 = vunpack.c.l.b16 %v4318
        %v4447 = vunpack.c.l.b16 %v4319
        %v4448 = vunpack.c.l.b16 %v4320
        %v4449 = vunpack.c.l.b16 %v4321
        %v4450 = vunpack.c.l.b16 %v4322
        %v4451 = vunpack.c.l.b16 %v4323
        %v4452 = vunpack.c.l.b16 %v4324
        %v4453 = vunpack.c.l.b16 %v4325
        %v4454 = vunpack.c.l.b16 %v4326
        %v4455 = vunpack.c.l.b16 %v4327
        %v4456 = vunpack.c.l.b16 %v4328
        %v4457 = vunpack.c.l.b16 %v4329
        %v4458 = vpack.c.b16 %v4443, %v4442
        %v4459 = vpack.c.b16 %v4445, %v4444
        %v4460 = vpack.c.b16 %v4447, %v4446
        %v4461 = vpack.c.b16 %v4449, %v4448
        %v4462 = vpack.c.b16 %v4451, %v4450
        %v4463 = vpack.c.b16 %v4453, %v4452
        %v4464 = vpack.c.b16 %v4455, %v4454
        %v4465 = vpack.c.b16 %v4457, %v4456
        %4474 = vmatprep.subr.bf16.mxu0 0
        %4475 = vmatpush1.bf16.msra.mxu0 %v4465
        %4476 = vmatprep.subr.bf16.mxu0 0
        %4477 = vmatpush1.bf16.msra.mxu0 %v4464
        %4478 = vmatprep.subr.bf16.mxu0 0
        %4479 = vmatpush1.bf16.msra.mxu0 %v4463
        %4480 = vmatprep.subr.bf16.mxu0 0
        %4481 = vmatpush1.bf16.msra.mxu0 %v4462
        %4482 = vmatprep.subr.bf16.mxu0 0
        %4483 = vmatpush1.bf16.msra.mxu0 %v4461
        %4484 = vmatprep.subr.bf16.mxu0 0
        %4485 = vmatpush1.bf16.msra.mxu0 %v4460
        %4486 = vmatprep.subr.bf16.mxu0 0
        %4487 = vmatpush1.bf16.msra.mxu0 %v4459
        %4488 = vmatprep.subr.bf16.mxu0 0
        %4489 = vmatpush1.bf16.msra.mxu0 %v4458
        %4490 = vmatprep.subr.bf16.mxu0 0
        %4491 = vmatpush2.bf16.msra.mxu0 0
        %4492 = vmatprep.subr.bf16.mxu0 0
        %4493 = vmatpush2.bf16.msra.mxu0 0
        %4494 = vmatprep.subr.bf16.mxu0 0
        %4495 = vmatpush2.bf16.msra.mxu0 0
        %4496 = vmatprep.subr.bf16.mxu0 0
        %4497 = vmatpush2.bf16.msra.mxu0 0
        %4498 = vmatprep.subr.bf16.mxu0 0
        %4499 = vmatpush2.bf16.msra.mxu0 0
        %4500 = vmatprep.subr.bf16.mxu0 0
        %4501 = vmatpush2.bf16.msra.mxu0 0
        %4502 = vmatprep.subr.bf16.mxu0 0
        %4503 = vmatpush2.bf16.msra.mxu0 0
        %4504 = vmatprep.subr.bf16.mxu0 0
        %4505 = vmatpush2.bf16.msra.mxu0 0
        %4506 = vmatprep.mubr.bf16.mxu0 0
        %4507 = vmatmul.mubr.bf16.gmra.mxu0 %v4394
        %v4508 = vpop.f32.mrf.mxu0
        %v4509 = vadd.f32 0.0, %v4508
        %v4510 = vpop.f32.mrf.mxu0
        %v4511 = vpop.f32.mrf.mxu0
        %v4512 = vadd.f32 0.0, %v4511
        %v4513 = vpop.f32.mrf.mxu0
        %4514 = vmatprep.mubr.bf16.mxu0 0
        %4515 = vmatmul.mubr.bf16.gmra.mxu0 %v4395
        %v4516 = vpop.f32.mrf.mxu0
        %v4517 = vadd.f32 0.0, %v4516
        %v4518 = vpop.f32.mrf.mxu0
        %v4519 = vpop.f32.mrf.mxu0
        %v4520 = vadd.f32 0.0, %v4519
        %v4521 = vpop.f32.mrf.mxu0
        %4522 = vmatprep.mubr.bf16.mxu0 0
        %4523 = vmatmul.mubr.bf16.gmra.mxu0 %v4396
        %v4524 = vpop.f32.mrf.mxu0
        %v4525 = vadd.f32 0.0, %v4524
        %v4526 = vpop.f32.mrf.mxu0
        %v4527 = vpop.f32.mrf.mxu0
        %v4528 = vadd.f32 0.0, %v4527
        %v4529 = vpop.f32.mrf.mxu0
        %4530 = vmatprep.mubr.bf16.mxu0 0
        %4531 = vmatmul.mubr.bf16.gmra.mxu0 %v4397
        %v4532 = vpop.f32.mrf.mxu0
        %v4533 = vadd.f32 0.0, %v4532
        %v4534 = vpop.f32.mrf.mxu0
        %v4535 = vpop.f32.mrf.mxu0
        %v4536 = vadd.f32 0.0, %v4535
        %v4537 = vpop.f32.mrf.mxu0
        %4538 = vmatprep.mubr.bf16.mxu0 0
        %4539 = vmatmul.mubr.bf16.gmra.mxu0 %v4398
        %v4540 = vpop.f32.mrf.mxu0
        %v4541 = vadd.f32 0.0, %v4540
        %v4542 = vpop.f32.mrf.mxu0
        %v4543 = vpop.f32.mrf.mxu0
        %v4544 = vadd.f32 0.0, %v4543
        %v4545 = vpop.f32.mrf.mxu0
        %4546 = vmatprep.mubr.bf16.mxu0 0
        %4547 = vmatmul.mubr.bf16.gmra.mxu0 %v4399
        %v4548 = vpop.f32.mrf.mxu0
        %v4549 = vadd.f32 0.0, %v4548
        %v4550 = vpop.f32.mrf.mxu0
        %v4551 = vpop.f32.mrf.mxu0
        %v4552 = vadd.f32 0.0, %v4551
        %v4553 = vpop.f32.mrf.mxu0
        %4554 = vmatprep.mubr.bf16.mxu0 0
        %4555 = vmatmul.mubr.bf16.gmra.mxu0 %v4400
        %v4556 = vpop.f32.mrf.mxu0
        %v4557 = vadd.f32 0.0, %v4556
        %v4558 = vpop.f32.mrf.mxu0
        %v4559 = vpop.f32.mrf.mxu0
        %v4560 = vadd.f32 0.0, %v4559
        %v4561 = vpop.f32.mrf.mxu0
        %4562 = vmatprep.mubr.bf16.mxu0 0
        %4563 = vmatmul.mubr.bf16.gmra.mxu0 %v4401
        %v4564 = vpop.f32.mrf.mxu0
        %v4565 = vadd.f32 0.0, %v4564
        %v4566 = vpop.f32.mrf.mxu0
        %v4567 = vpop.f32.mrf.mxu0
        %v4568 = vadd.f32 0.0, %v4567
        %v4569 = vpop.f32.mrf.mxu0
        %4570 = vmatprep.mubr.bf16.mxu0 0
        %4571 = vmatmul.mubr.bf16.gmra.mxu0 %v4402
        %v4572 = vpop.f32.mrf.mxu0
        %v4573 = vadd.f32 0.0, %v4572
        %v4574 = vpop.f32.mrf.mxu0
        %v4575 = vpop.f32.mrf.mxu0
        %v4576 = vadd.f32 0.0, %v4575
        %v4577 = vpop.f32.mrf.mxu0
        %4578 = vmatprep.mubr.bf16.mxu0 0
        %4579 = vmatmul.mubr.bf16.gmra.mxu0 %v4403
        %v4580 = vpop.f32.mrf.mxu0
        %v4581 = vadd.f32 0.0, %v4580
        %v4582 = vpop.f32.mrf.mxu0
        %v4583 = vpop.f32.mrf.mxu0
        %v4584 = vadd.f32 0.0, %v4583
        %v4585 = vpop.f32.mrf.mxu0
        %4586 = vmatprep.mubr.bf16.mxu0 0
        %4587 = vmatmul.mubr.bf16.gmra.mxu0 %v4404
        %v4588 = vpop.f32.mrf.mxu0
        %v4589 = vadd.f32 0.0, %v4588
        %v4590 = vpop.f32.mrf.mxu0
        %v4591 = vpop.f32.mrf.mxu0
        %v4592 = vadd.f32 0.0, %v4591
        %v4593 = vpop.f32.mrf.mxu0
        %4594 = vmatprep.mubr.bf16.mxu0 0
        %4595 = vmatmul.mubr.bf16.gmra.mxu0 %v4405
        %v4596 = vpop.f32.mrf.mxu0
        %v4597 = vadd.f32 0.0, %v4596
        %v4598 = vpop.f32.mrf.mxu0
        %v4599 = vpop.f32.mrf.mxu0
        %v4600 = vadd.f32 0.0, %v4599
        %v4601 = vpop.f32.mrf.mxu0
        %4602 = vmatprep.mubr.bf16.mxu0 0
        %4603 = vmatmul.mubr.bf16.gmra.mxu0 %v4406
        %v4604 = vpop.f32.mrf.mxu0
        %v4605 = vadd.f32 0.0, %v4604
        %v4606 = vpop.f32.mrf.mxu0
        %v4607 = vpop.f32.mrf.mxu0
        %v4608 = vadd.f32 0.0, %v4607
        %v4609 = vpop.f32.mrf.mxu0
        %4610 = vmatprep.mubr.bf16.mxu0 0
        %4611 = vmatmul.mubr.bf16.gmra.mxu0 %v4407
        %v4612 = vpop.f32.mrf.mxu0
        %v4613 = vadd.f32 0.0, %v4612
        %v4614 = vpop.f32.mrf.mxu0
        %v4615 = vpop.f32.mrf.mxu0
        %v4616 = vadd.f32 0.0, %v4615
        %v4617 = vpop.f32.mrf.mxu0
        %4618 = vmatprep.mubr.bf16.mxu0 0
        %4619 = vmatmul.mubr.bf16.gmra.mxu0 %v4408
        %v4620 = vpop.f32.mrf.mxu0
        %v4621 = vadd.f32 0.0, %v4620
        %v4622 = vpop.f32.mrf.mxu0
        %v4623 = vpop.f32.mrf.mxu0
        %v4624 = vadd.f32 0.0, %v4623
        %v4625 = vpop.f32.mrf.mxu0
        %4626 = vmatprep.mubr.bf16.mxu0 0
        %4627 = vmatmul.mubr.bf16.gmra.mxu0 %v4409
        %v4628 = vpop.f32.mrf.mxu0
        %v4629 = vadd.f32 0.0, %v4628
        %v4630 = vpop.f32.mrf.mxu0
        %v4631 = vpop.f32.mrf.mxu0
        %v4632 = vadd.f32 0.0, %v4631
        %v4633 = vpop.f32.mrf.mxu0
        %4634 = vdwg.mxu0
        %v4635 = vadd.f32 %v4248, %v4509
        %v4636 = vadd.f32 %v4249, %v4512
        %v4637 = vadd.f32 %v4250, %v4517
        %v4638 = vadd.f32 %v4251, %v4520
        %v4639 = vadd.f32 %v4252, %v4525
        %v4640 = vadd.f32 %v4253, %v4528
        %v4641 = vadd.f32 %v4254, %v4533
        %v4642 = vadd.f32 %v4255, %v4536
        %v4643 = vadd.f32 %v4256, %v4541
        %v4644 = vadd.f32 %v4257, %v4544
        %v4645 = vadd.f32 %v4258, %v4549
        %v4646 = vadd.f32 %v4259, %v4552
        %v4647 = vadd.f32 %v4260, %v4557
        %v4648 = vadd.f32 %v4261, %v4560
        %v4649 = vadd.f32 %v4262, %v4565
        %v4650 = vadd.f32 %v4263, %v4568
        %v4651 = vadd.f32 %v4264, %v4573
        %v4652 = vadd.f32 %v4265, %v4576
        %v4653 = vadd.f32 %v4266, %v4581
        %v4654 = vadd.f32 %v4267, %v4584
        %v4655 = vadd.f32 %v4268, %v4589
        %v4656 = vadd.f32 %v4269, %v4592
        %v4657 = vadd.f32 %v4270, %v4597
        %v4658 = vadd.f32 %v4271, %v4600
        %v4659 = vadd.f32 %v4272, %v4605
        %v4660 = vadd.f32 %v4273, %v4608
        %v4661 = vadd.f32 %v4274, %v4613
        %v4662 = vadd.f32 %v4275, %v4616
        %v4663 = vadd.f32 %v4276, %v4621
        %v4664 = vadd.f32 %v4277, %v4624
        %v4665 = vadd.f32 %v4278, %v4629
        %v4666 = vadd.f32 %v4279, %v4632
        %v4667 = vld [vmem:[%s4280] sm:$0xf]
        %v4668 = vld [vmem:[%s4280 + $0x4] sm:$0xf]
        %v4669 = vld [vmem:[%s4280 + $0x8] sm:$0x1]
        %v4670 = vld [vmem:[%s4280 + $0xc] sm:$0xf]
        %v4671 = vld [vmem:[%s4280 + $0x10] sm:$0xf]
        %v4672 = vld [vmem:[%s4280 + $0x14] sm:$0x1]
        %v4673 = vld [vmem:[%s4280 + $0x18] sm:$0xf]
        %v4674 = vld [vmem:[%s4280 + $0x1c] sm:$0xf]
        %v4675 = vld [vmem:[%s4280 + $0x20] sm:$0x1]
        %v4676 = vld [vmem:[%s4280 + $0x24] sm:$0xf]
        %v4677 = vld [vmem:[%s4280 + $0x28] sm:$0xf]
        %v4678 = vld [vmem:[%s4280 + $0x2c] sm:$0x1]
        %v4679 = vld [vmem:[%s4280 + $0x30] sm:$0xf]
        %v4680 = vld [vmem:[%s4280 + $0x34] sm:$0xf]
        %v4681 = vld [vmem:[%s4280 + $0x38] sm:$0x1]
        %v4682 = vld [vmem:[%s4280 + $0x3c] sm:$0xf]
        %v4683 = vld [vmem:[%s4280 + $0x40] sm:$0xf]
        %v4684 = vld [vmem:[%s4280 + $0x44] sm:$0x1]
        %v4685 = vld [vmem:[%s4280 + $0x48] sm:$0xf]
        %v4686 = vld [vmem:[%s4280 + $0x4c] sm:$0xf]
        %v4687 = vld [vmem:[%s4280 + $0x50] sm:$0x1]
        %v4688 = vld [vmem:[%s4280 + $0x54] sm:$0xf]
        %v4689 = vld [vmem:[%s4280 + $0x58] sm:$0xf]
        %v4690 = vld [vmem:[%s4280 + $0x5c] sm:$0x1]
        %v4691 = vld [vmem:[%s4280 + $0x60] sm:$0xf]
        %v4692 = vld [vmem:[%s4280 + $0x64] sm:$0xf]
        %v4693 = vld [vmem:[%s4280 + $0x68] sm:$0x1]
        %v4694 = vld [vmem:[%s4280 + $0x6c] sm:$0xf]
        %v4695 = vld [vmem:[%s4280 + $0x70] sm:$0xf]
        %v4696 = vld [vmem:[%s4280 + $0x74] sm:$0x1]
        %v4697 = vld [vmem:[%s4280 + $0x78] sm:$0xf]
        %v4698 = vld [vmem:[%s4280 + $0x7c] sm:$0xf]
        %v4699 = vld [vmem:[%s4280 + $0x80] sm:$0x1]
        %v4700 = vld [vmem:[%s4280 + $0x84] sm:$0xf]
        %v4701 = vld [vmem:[%s4280 + $0x88] sm:$0xf]
        %v4702 = vld [vmem:[%s4280 + $0x8c] sm:$0x1]
        %v4703 = vld [vmem:[%s4280 + $0x90] sm:$0xf]
        %v4704 = vld [vmem:[%s4280 + $0x94] sm:$0xf]
        %v4705 = vld [vmem:[%s4280 + $0x98] sm:$0x1]
        %v4706 = vld [vmem:[%s4280 + $0x9c] sm:$0xf]
        %v4707 = vld [vmem:[%s4280 + $0xa0] sm:$0xf]
        %v4708 = vld [vmem:[%s4280 + $0xa4] sm:$0x1]
        %v4709 = vld [vmem:[%s4280 + $0xa8] sm:$0xf]
        %v4710 = vld [vmem:[%s4280 + $0xac] sm:$0xf]
        %v4711 = vld [vmem:[%s4280 + $0xb0] sm:$0x1]
        %v4712 = vld [vmem:[%s4280 + $0xb4] sm:$0xf]
        %v4713 = vld [vmem:[%s4280 + $0xb8] sm:$0xf]
        %v4714 = vld [vmem:[%s4280 + $0xbc] sm:$0x1]
        %v4716 = vshrl.u32 %v4667, 16
        %v4718 = vrot.slane %v4716, 4
        %v4719 = vshll.u32 %v4667, 16
        %v4721 = vrot.slane %v4719, 5
        %v4722 = vor.u32 %v4718, %v4721
        %v4723 = vrot.slane %v4722, 4
        %v4725 = vshll.u32 %v4668, 16
        %v4727 = vrot.slane %v4725, 5
        %v4728 = vsel %vm1177, %v4723, %v4727
        %v4729 = vshrl.u32 %v4668, 16
        %v4731 = vrot.slane %v4729, 4
        %v4732 = vor.u32 %v4731, %v4727
        %v4733 = vrot.slane %v4732, 4
        %v4735 = vshll.u32 %v4669, 16
        %v4737 = vrot.slane %v4735, 5
        %v4738 = vsel %vm1177, %v4733, %v4737
        %v4740 = vshrl.u32 %v4670, 16
        %v4742 = vrot.slane %v4740, 4
        %v4743 = vshll.u32 %v4670, 16
        %v4745 = vrot.slane %v4743, 5
        %v4746 = vor.u32 %v4742, %v4745
        %v4747 = vrot.slane %v4746, 4
        %v4749 = vshll.u32 %v4671, 16
        %v4751 = vrot.slane %v4749, 5
        %v4752 = vsel %vm1177, %v4747, %v4751
        %v4753 = vshrl.u32 %v4671, 16
        %v4755 = vrot.slane %v4753, 4
        %v4756 = vor.u32 %v4755, %v4751
        %v4757 = vrot.slane %v4756, 4
        %v4759 = vshll.u32 %v4672, 16
        %v4761 = vrot.slane %v4759, 5
        %v4762 = vsel %vm1177, %v4757, %v4761
        %v4764 = vshrl.u32 %v4673, 16
        %v4766 = vrot.slane %v4764, 4
        %v4767 = vshll.u32 %v4673, 16
        %v4769 = vrot.slane %v4767, 5
        %v4770 = vor.u32 %v4766, %v4769
        %v4771 = vrot.slane %v4770, 4
        %v4773 = vshll.u32 %v4674, 16
        %v4775 = vrot.slane %v4773, 5
        %v4776 = vsel %vm1177, %v4771, %v4775
        %v4777 = vshrl.u32 %v4674, 16
        %v4779 = vrot.slane %v4777, 4
        %v4780 = vor.u32 %v4779, %v4775
        %v4781 = vrot.slane %v4780, 4
        %v4783 = vshll.u32 %v4675, 16
        %v4785 = vrot.slane %v4783, 5
        %v4786 = vsel %vm1177, %v4781, %v4785
        %v4788 = vshrl.u32 %v4676, 16
        %v4790 = vrot.slane %v4788, 4
        %v4791 = vshll.u32 %v4676, 16
        %v4793 = vrot.slane %v4791, 5
        %v4794 = vor.u32 %v4790, %v4793
        %v4795 = vrot.slane %v4794, 4
        %v4797 = vshll.u32 %v4677, 16
        %v4799 = vrot.slane %v4797, 5
        %v4800 = vsel %vm1177, %v4795, %v4799
        %v4801 = vshrl.u32 %v4677, 16
        %v4803 = vrot.slane %v4801, 4
        %v4804 = vor.u32 %v4803, %v4799
        %v4805 = vrot.slane %v4804, 4
        %v4807 = vshll.u32 %v4678, 16
        %v4809 = vrot.slane %v4807, 5
        %v4810 = vsel %vm1177, %v4805, %v4809
        %v4812 = vshrl.u32 %v4679, 16
        %v4814 = vrot.slane %v4812, 4
        %v4815 = vshll.u32 %v4679, 16
        %v4817 = vrot.slane %v4815, 5
        %v4818 = vor.u32 %v4814, %v4817
        %v4819 = vrot.slane %v4818, 4
        %v4821 = vshll.u32 %v4680, 16
        %v4823 = vrot.slane %v4821, 5
        %v4824 = vsel %vm1177, %v4819, %v4823
        %v4825 = vshrl.u32 %v4680, 16
        %v4827 = vrot.slane %v4825, 4
        %v4828 = vor.u32 %v4827, %v4823
        %v4829 = vrot.slane %v4828, 4
        %v4831 = vshll.u32 %v4681, 16
        %v4833 = vrot.slane %v4831, 5
        %v4834 = vsel %vm1177, %v4829, %v4833
        %v4836 = vshrl.u32 %v4682, 16
        %v4838 = vrot.slane %v4836, 4
        %v4839 = vshll.u32 %v4682, 16
        %v4841 = vrot.slane %v4839, 5
        %v4842 = vor.u32 %v4838, %v4841
        %v4843 = vrot.slane %v4842, 4
        %v4845 = vshll.u32 %v4683, 16
        %v4847 = vrot.slane %v4845, 5
        %v4848 = vsel %vm1177, %v4843, %v4847
        %v4849 = vshrl.u32 %v4683, 16
        %v4851 = vrot.slane %v4849, 4
        %v4852 = vor.u32 %v4851, %v4847
        %v4853 = vrot.slane %v4852, 4
        %v4855 = vshll.u32 %v4684, 16
        %v4857 = vrot.slane %v4855, 5
        %v4858 = vsel %vm1177, %v4853, %v4857
        %v4860 = vshrl.u32 %v4685, 16
        %v4862 = vrot.slane %v4860, 4
        %v4863 = vshll.u32 %v4685, 16
        %v4865 = vrot.slane %v4863, 5
        %v4866 = vor.u32 %v4862, %v4865
        %v4867 = vrot.slane %v4866, 4
        %v4869 = vshll.u32 %v4686, 16
        %v4871 = vrot.slane %v4869, 5
        %v4872 = vsel %vm1177, %v4867, %v4871
        %v4873 = vshrl.u32 %v4686, 16
        %v4875 = vrot.slane %v4873, 4
        %v4876 = vor.u32 %v4875, %v4871
        %v4877 = vrot.slane %v4876, 4
        %v4879 = vshll.u32 %v4687, 16
        %v4881 = vrot.slane %v4879, 5
        %v4882 = vsel %vm1177, %v4877, %v4881
        %v4884 = vshrl.u32 %v4688, 16
        %v4886 = vrot.slane %v4884, 4
        %v4887 = vshll.u32 %v4688, 16
        %v4889 = vrot.slane %v4887, 5
        %v4890 = vor.u32 %v4886, %v4889
        %v4891 = vrot.slane %v4890, 4
        %v4893 = vshll.u32 %v4689, 16
        %v4895 = vrot.slane %v4893, 5
        %v4896 = vsel %vm1177, %v4891, %v4895
        %v4897 = vshrl.u32 %v4689, 16
        %v4899 = vrot.slane %v4897, 4
        %v4900 = vor.u32 %v4899, %v4895
        %v4901 = vrot.slane %v4900, 4
        %v4903 = vshll.u32 %v4690, 16
        %v4905 = vrot.slane %v4903, 5
        %v4906 = vsel %vm1177, %v4901, %v4905
        %v4908 = vshrl.u32 %v4691, 16
        %v4910 = vrot.slane %v4908, 4
        %v4911 = vshll.u32 %v4691, 16
        %v4913 = vrot.slane %v4911, 5
        %v4914 = vor.u32 %v4910, %v4913
        %v4915 = vrot.slane %v4914, 4
        %v4917 = vshll.u32 %v4692, 16
        %v4919 = vrot.slane %v4917, 5
        %v4920 = vsel %vm1177, %v4915, %v4919
        %v4921 = vshrl.u32 %v4692, 16
        %v4923 = vrot.slane %v4921, 4
        %v4924 = vor.u32 %v4923, %v4919
        %v4925 = vrot.slane %v4924, 4
        %v4927 = vshll.u32 %v4693, 16
        %v4929 = vrot.slane %v4927, 5
        %v4930 = vsel %vm1177, %v4925, %v4929
        %v4932 = vshrl.u32 %v4694, 16
        %v4934 = vrot.slane %v4932, 4
        %v4935 = vshll.u32 %v4694, 16
        %v4937 = vrot.slane %v4935, 5
        %v4938 = vor.u32 %v4934, %v4937
        %v4939 = vrot.slane %v4938, 4
        %v4941 = vshll.u32 %v4695, 16
        %v4943 = vrot.slane %v4941, 5
        %v4944 = vsel %vm1177, %v4939, %v4943
        %v4945 = vshrl.u32 %v4695, 16
        %v4947 = vrot.slane %v4945, 4
        %v4948 = vor.u32 %v4947, %v4943
        %v4949 = vrot.slane %v4948, 4
        %v4951 = vshll.u32 %v4696, 16
        %v4953 = vrot.slane %v4951, 5
        %v4954 = vsel %vm1177, %v4949, %v4953
        %v4956 = vshrl.u32 %v4697, 16
        %v4958 = vrot.slane %v4956, 4
        %v4959 = vshll.u32 %v4697, 16
        %v4961 = vrot.slane %v4959, 5
        %v4962 = vor.u32 %v4958, %v4961
        %v4963 = vrot.slane %v4962, 4
        %v4965 = vshll.u32 %v4698, 16
        %v4967 = vrot.slane %v4965, 5
        %v4968 = vsel %vm1177, %v4963, %v4967
        %v4969 = vshrl.u32 %v4698, 16
        %v4971 = vrot.slane %v4969, 4
        %v4972 = vor.u32 %v4971, %v4967
        %v4973 = vrot.slane %v4972, 4
        %v4975 = vshll.u32 %v4699, 16
        %v4977 = vrot.slane %v4975, 5
        %v4978 = vsel %vm1177, %v4973, %v4977
        %v4980 = vshrl.u32 %v4700, 16
        %v4982 = vrot.slane %v4980, 4
        %v4983 = vshll.u32 %v4700, 16
        %v4985 = vrot.slane %v4983, 5
        %v4986 = vor.u32 %v4982, %v4985
        %v4987 = vrot.slane %v4986, 4
        %v4989 = vshll.u32 %v4701, 16
        %v4991 = vrot.slane %v4989, 5
        %v4992 = vsel %vm1177, %v4987, %v4991
        %v4993 = vshrl.u32 %v4701, 16
        %v4995 = vrot.slane %v4993, 4
        %v4996 = vor.u32 %v4995, %v4991
        %v4997 = vrot.slane %v4996, 4
        %v4999 = vshll.u32 %v4702, 16
        %v5001 = vrot.slane %v4999, 5
        %v5002 = vsel %vm1177, %v4997, %v5001
        %v5004 = vshrl.u32 %v4703, 16
        %v5006 = vrot.slane %v5004, 4
        %v5007 = vshll.u32 %v4703, 16
        %v5009 = vrot.slane %v5007, 5
        %v5010 = vor.u32 %v5006, %v5009
        %v5011 = vrot.slane %v5010, 4
        %v5013 = vshll.u32 %v4704, 16
        %v5015 = vrot.slane %v5013, 5
        %v5016 = vsel %vm1177, %v5011, %v5015
        %v5017 = vshrl.u32 %v4704, 16
        %v5019 = vrot.slane %v5017, 4
        %v5020 = vor.u32 %v5019, %v5015
        %v5021 = vrot.slane %v5020, 4
        %v5023 = vshll.u32 %v4705, 16
        %v5025 = vrot.slane %v5023, 5
        %v5026 = vsel %vm1177, %v5021, %v5025
        %v5028 = vshrl.u32 %v4706, 16
        %v5030 = vrot.slane %v5028, 4
        %v5031 = vshll.u32 %v4706, 16
        %v5033 = vrot.slane %v5031, 5
        %v5034 = vor.u32 %v5030, %v5033
        %v5035 = vrot.slane %v5034, 4
        %v5037 = vshll.u32 %v4707, 16
        %v5039 = vrot.slane %v5037, 5
        %v5040 = vsel %vm1177, %v5035, %v5039
        %v5041 = vshrl.u32 %v4707, 16
        %v5043 = vrot.slane %v5041, 4
        %v5044 = vor.u32 %v5043, %v5039
        %v5045 = vrot.slane %v5044, 4
        %v5047 = vshll.u32 %v4708, 16
        %v5049 = vrot.slane %v5047, 5
        %v5050 = vsel %vm1177, %v5045, %v5049
        %v5052 = vshrl.u32 %v4709, 16
        %v5054 = vrot.slane %v5052, 4
        %v5055 = vshll.u32 %v4709, 16
        %v5057 = vrot.slane %v5055, 5
        %v5058 = vor.u32 %v5054, %v5057
        %v5059 = vrot.slane %v5058, 4
        %v5061 = vshll.u32 %v4710, 16
        %v5063 = vrot.slane %v5061, 5
        %v5064 = vsel %vm1177, %v5059, %v5063
        %v5065 = vshrl.u32 %v4710, 16
        %v5067 = vrot.slane %v5065, 4
        %v5068 = vor.u32 %v5067, %v5063
        %v5069 = vrot.slane %v5068, 4
        %v5071 = vshll.u32 %v4711, 16
        %v5073 = vrot.slane %v5071, 5
        %v5074 = vsel %vm1177, %v5069, %v5073
        %v5076 = vshrl.u32 %v4712, 16
        %v5078 = vrot.slane %v5076, 4
        %v5079 = vshll.u32 %v4712, 16
        %v5081 = vrot.slane %v5079, 5
        %v5082 = vor.u32 %v5078, %v5081
        %v5083 = vrot.slane %v5082, 4
        %v5085 = vshll.u32 %v4713, 16
        %v5087 = vrot.slane %v5085, 5
        %v5088 = vsel %vm1177, %v5083, %v5087
        %v5089 = vshrl.u32 %v4713, 16
        %v5091 = vrot.slane %v5089, 4
        %v5092 = vor.u32 %v5091, %v5087
        %v5093 = vrot.slane %v5092, 4
        %v5095 = vshll.u32 %v4714, 16
        %v5097 = vrot.slane %v5095, 5
        %v5098 = vsel %vm1177, %v5093, %v5097
        %s5099 = scalar_lea.vmem %s2, 448
        %v5100 = vld [vmem:[%s5099] sm:$0xf]
        %v5101 = vld [vmem:[%s5099 + $0x4] sm:$0xf]
        %v5102 = vld [vmem:[%s5099 + $0x8] sm:$0xf]
        %v5103 = vld [vmem:[%s5099 + $0xc] sm:$0xf]
        %v5104 = vld [vmem:[%s5099 + $0x10] sm:$0xf]
        %v5105 = vld [vmem:[%s5099 + $0x14] sm:$0xf]
        %v5106 = vld [vmem:[%s5099 + $0x18] sm:$0xf]
        %v5107 = vld [vmem:[%s5099 + $0x1c] sm:$0xf]
        %v5108 = vld [vmem:[%s5099 + $0x20] sm:$0xf]
        %v5109 = vld [vmem:[%s5099 + $0x24] sm:$0xf]
        %v5110 = vld [vmem:[%s5099 + $0x28] sm:$0xf]
        %v5111 = vld [vmem:[%s5099 + $0x2c] sm:$0xf]
        %v5112 = vld [vmem:[%s5099 + $0x30] sm:$0xf]
        %v5113 = vld [vmem:[%s5099 + $0x34] sm:$0xf]
        %v5114 = vld [vmem:[%s5099 + $0x38] sm:$0xf]
        %v5115 = vld [vmem:[%s5099 + $0x3c] sm:$0xf]
        %v5116 = vunpack.c.l.b16 %v4728
        %v5117 = vunpack.c.l.b16 %v4738
        %v5118 = vunpack.c.l.b16 %v4752
        %v5119 = vunpack.c.l.b16 %v4762
        %v5120 = vunpack.c.l.b16 %v4776
        %v5121 = vunpack.c.l.b16 %v4786
        %v5122 = vunpack.c.l.b16 %v4800
        %v5123 = vunpack.c.l.b16 %v4810
        %v5124 = vunpack.c.l.b16 %v4824
        %v5125 = vunpack.c.l.b16 %v4834
        %v5126 = vunpack.c.l.b16 %v4848
        %v5127 = vunpack.c.l.b16 %v4858
        %v5128 = vunpack.c.l.b16 %v4872
        %v5129 = vunpack.c.l.b16 %v4882
        %v5130 = vunpack.c.l.b16 %v4896
        %v5131 = vunpack.c.l.b16 %v4906
        %v5132 = vunpack.c.l.b16 %v4920
        %v5133 = vunpack.c.l.b16 %v4930
        %v5134 = vunpack.c.l.b16 %v4944
        %v5135 = vunpack.c.l.b16 %v4954
        %v5136 = vunpack.c.l.b16 %v4968
        %v5137 = vunpack.c.l.b16 %v4978
        %v5138 = vunpack.c.l.b16 %v4992
        %v5139 = vunpack.c.l.b16 %v5002
        %v5140 = vunpack.c.l.b16 %v5016
        %v5141 = vunpack.c.l.b16 %v5026
        %v5142 = vunpack.c.l.b16 %v5040
        %v5143 = vunpack.c.l.b16 %v5050
        %v5144 = vunpack.c.l.b16 %v5064
        %v5145 = vunpack.c.l.b16 %v5074
        %v5146 = vunpack.c.l.b16 %v5088
        %v5147 = vunpack.c.l.b16 %v5098
        %v5148 = vpack.c.b16 %v5117, %v5116
        %v5149 = vpack.c.b16 %v5119, %v5118
        %v5150 = vpack.c.b16 %v5121, %v5120
        %v5151 = vpack.c.b16 %v5123, %v5122
        %v5152 = vpack.c.b16 %v5125, %v5124
        %v5153 = vpack.c.b16 %v5127, %v5126
        %v5154 = vpack.c.b16 %v5129, %v5128
        %v5155 = vpack.c.b16 %v5131, %v5130
        %v5156 = vpack.c.b16 %v5133, %v5132
        %v5157 = vpack.c.b16 %v5135, %v5134
        %v5158 = vpack.c.b16 %v5137, %v5136
        %v5159 = vpack.c.b16 %v5139, %v5138
        %v5160 = vpack.c.b16 %v5141, %v5140
        %v5161 = vpack.c.b16 %v5143, %v5142
        %v5162 = vpack.c.b16 %v5145, %v5144
        %v5163 = vpack.c.b16 %v5147, %v5146
        %v5196 = vunpack.c.l.b16 %v5100
        %v5197 = vunpack.c.l.b16 %v5101
        %v5198 = vunpack.c.l.b16 %v5102
        %v5199 = vunpack.c.l.b16 %v5103
        %v5200 = vunpack.c.l.b16 %v5104
        %v5201 = vunpack.c.l.b16 %v5105
        %v5202 = vunpack.c.l.b16 %v5106
        %v5203 = vunpack.c.l.b16 %v5107
        %v5204 = vunpack.c.l.b16 %v5108
        %v5205 = vunpack.c.l.b16 %v5109
        %v5206 = vunpack.c.l.b16 %v5110
        %v5207 = vunpack.c.l.b16 %v5111
        %v5208 = vunpack.c.l.b16 %v5112
        %v5209 = vunpack.c.l.b16 %v5113
        %v5210 = vunpack.c.l.b16 %v5114
        %v5211 = vunpack.c.l.b16 %v5115
        %v5212 = vpack.c.b16 %v5197, %v5196
        %v5213 = vpack.c.b16 %v5199, %v5198
        %v5214 = vpack.c.b16 %v5201, %v5200
        %v5215 = vpack.c.b16 %v5203, %v5202
        %v5216 = vpack.c.b16 %v5205, %v5204
        %v5217 = vpack.c.b16 %v5207, %v5206
        %v5218 = vpack.c.b16 %v5209, %v5208
        %v5219 = vpack.c.b16 %v5211, %v5210
        %5228 = vmatprep.subr.bf16.mxu0 0
        %5229 = vmatpush1.bf16.msra.mxu0 %v5219
        %5230 = vmatprep.subr.bf16.mxu0 0
        %5231 = vmatpush1.bf16.msra.mxu0 %v5218
        %5232 = vmatprep.subr.bf16.mxu0 0
        %5233 = vmatpush1.bf16.msra.mxu0 %v5217
        %5234 = vmatprep.subr.bf16.mxu0 0
        %5235 = vmatpush1.bf16.msra.mxu0 %v5216
        %5236 = vmatprep.subr.bf16.mxu0 0
        %5237 = vmatpush1.bf16.msra.mxu0 %v5215
        %5238 = vmatprep.subr.bf16.mxu0 0
        %5239 = vmatpush1.bf16.msra.mxu0 %v5214
        %5240 = vmatprep.subr.bf16.mxu0 0
        %5241 = vmatpush1.bf16.msra.mxu0 %v5213
        %5242 = vmatprep.subr.bf16.mxu0 0
        %5243 = vmatpush1.bf16.msra.mxu0 %v5212
        %5244 = vmatprep.subr.bf16.mxu0 0
        %5245 = vmatpush2.bf16.msra.mxu0 0
        %5246 = vmatprep.subr.bf16.mxu0 0
        %5247 = vmatpush2.bf16.msra.mxu0 0
        %5248 = vmatprep.subr.bf16.mxu0 0
        %5249 = vmatpush2.bf16.msra.mxu0 0
        %5250 = vmatprep.subr.bf16.mxu0 0
        %5251 = vmatpush2.bf16.msra.mxu0 0
        %5252 = vmatprep.subr.bf16.mxu0 0
        %5253 = vmatpush2.bf16.msra.mxu0 0
        %5254 = vmatprep.subr.bf16.mxu0 0
        %5255 = vmatpush2.bf16.msra.mxu0 0
        %5256 = vmatprep.subr.bf16.mxu0 0
        %5257 = vmatpush2.bf16.msra.mxu0 0
        %5258 = vmatprep.subr.bf16.mxu0 0
        %5259 = vmatpush2.bf16.msra.mxu0 0
        %5260 = vmatprep.mubr.bf16.mxu0 0
        %5261 = vmatmul.mubr.bf16.gmra.mxu0 %v5148
        %v5262 = vpop.f32.mrf.mxu0
        %v5263 = vadd.f32 0.0, %v5262
        %v5264 = vpop.f32.mrf.mxu0
        %v5265 = vpop.f32.mrf.mxu0
        %v5266 = vadd.f32 0.0, %v5265
        %v5267 = vpop.f32.mrf.mxu0
        %5268 = vmatprep.mubr.bf16.mxu0 0
        %5269 = vmatmul.mubr.bf16.gmra.mxu0 %v5149
        %v5270 = vpop.f32.mrf.mxu0
        %v5271 = vadd.f32 0.0, %v5270
        %v5272 = vpop.f32.mrf.mxu0
        %v5273 = vpop.f32.mrf.mxu0
        %v5274 = vadd.f32 0.0, %v5273
        %v5275 = vpop.f32.mrf.mxu0
        %5276 = vmatprep.mubr.bf16.mxu0 0
        %5277 = vmatmul.mubr.bf16.gmra.mxu0 %v5150
        %v5278 = vpop.f32.mrf.mxu0
        %v5279 = vadd.f32 0.0, %v5278
        %v5280 = vpop.f32.mrf.mxu0
        %v5281 = vpop.f32.mrf.mxu0
        %v5282 = vadd.f32 0.0, %v5281
        %v5283 = vpop.f32.mrf.mxu0
        %5284 = vmatprep.mubr.bf16.mxu0 0
        %5285 = vmatmul.mubr.bf16.gmra.mxu0 %v5151
        %v5286 = vpop.f32.mrf.mxu0
        %v5287 = vadd.f32 0.0, %v5286
        %v5288 = vpop.f32.mrf.mxu0
        %v5289 = vpop.f32.mrf.mxu0
        %v5290 = vadd.f32 0.0, %v5289
        %v5291 = vpop.f32.mrf.mxu0
        %5292 = vmatprep.mubr.bf16.mxu0 0
        %5293 = vmatmul.mubr.bf16.gmra.mxu0 %v5152
        %v5294 = vpop.f32.mrf.mxu0
        %v5295 = vadd.f32 0.0, %v5294
        %v5296 = vpop.f32.mrf.mxu0
        %v5297 = vpop.f32.mrf.mxu0
        %v5298 = vadd.f32 0.0, %v5297
        %v5299 = vpop.f32.mrf.mxu0
        %5300 = vmatprep.mubr.bf16.mxu0 0
        %5301 = vmatmul.mubr.bf16.gmra.mxu0 %v5153
        %v5302 = vpop.f32.mrf.mxu0
        %v5303 = vadd.f32 0.0, %v5302
        %v5304 = vpop.f32.mrf.mxu0
        %v5305 = vpop.f32.mrf.mxu0
        %v5306 = vadd.f32 0.0, %v5305
        %v5307 = vpop.f32.mrf.mxu0
        %5308 = vmatprep.mubr.bf16.mxu0 0
        %5309 = vmatmul.mubr.bf16.gmra.mxu0 %v5154
        %v5310 = vpop.f32.mrf.mxu0
        %v5311 = vadd.f32 0.0, %v5310
        %v5312 = vpop.f32.mrf.mxu0
        %v5313 = vpop.f32.mrf.mxu0
        %v5314 = vadd.f32 0.0, %v5313
        %v5315 = vpop.f32.mrf.mxu0
        %5316 = vmatprep.mubr.bf16.mxu0 0
        %5317 = vmatmul.mubr.bf16.gmra.mxu0 %v5155
        %v5318 = vpop.f32.mrf.mxu0
        %v5319 = vadd.f32 0.0, %v5318
        %v5320 = vpop.f32.mrf.mxu0
        %v5321 = vpop.f32.mrf.mxu0
        %v5322 = vadd.f32 0.0, %v5321
        %v5323 = vpop.f32.mrf.mxu0
        %5324 = vmatprep.mubr.bf16.mxu0 0
        %5325 = vmatmul.mubr.bf16.gmra.mxu0 %v5156
        %v5326 = vpop.f32.mrf.mxu0
        %v5327 = vadd.f32 0.0, %v5326
        %v5328 = vpop.f32.mrf.mxu0
        %v5329 = vpop.f32.mrf.mxu0
        %v5330 = vadd.f32 0.0, %v5329
        %v5331 = vpop.f32.mrf.mxu0
        %5332 = vmatprep.mubr.bf16.mxu0 0
        %5333 = vmatmul.mubr.bf16.gmra.mxu0 %v5157
        %v5334 = vpop.f32.mrf.mxu0
        %v5335 = vadd.f32 0.0, %v5334
        %v5336 = vpop.f32.mrf.mxu0
        %v5337 = vpop.f32.mrf.mxu0
        %v5338 = vadd.f32 0.0, %v5337
        %v5339 = vpop.f32.mrf.mxu0
        %5340 = vmatprep.mubr.bf16.mxu0 0
        %5341 = vmatmul.mubr.bf16.gmra.mxu0 %v5158
        %v5342 = vpop.f32.mrf.mxu0
        %v5343 = vadd.f32 0.0, %v5342
        %v5344 = vpop.f32.mrf.mxu0
        %v5345 = vpop.f32.mrf.mxu0
        %v5346 = vadd.f32 0.0, %v5345
        %v5347 = vpop.f32.mrf.mxu0
        %5348 = vmatprep.mubr.bf16.mxu0 0
        %5349 = vmatmul.mubr.bf16.gmra.mxu0 %v5159
        %v5350 = vpop.f32.mrf.mxu0
        %v5351 = vadd.f32 0.0, %v5350
        %v5352 = vpop.f32.mrf.mxu0
        %v5353 = vpop.f32.mrf.mxu0
        %v5354 = vadd.f32 0.0, %v5353
        %v5355 = vpop.f32.mrf.mxu0
        %5356 = vmatprep.mubr.bf16.mxu0 0
        %5357 = vmatmul.mubr.bf16.gmra.mxu0 %v5160
        %v5358 = vpop.f32.mrf.mxu0
        %v5359 = vadd.f32 0.0, %v5358
        %v5360 = vpop.f32.mrf.mxu0
        %v5361 = vpop.f32.mrf.mxu0
        %v5362 = vadd.f32 0.0, %v5361
        %v5363 = vpop.f32.mrf.mxu0
        %5364 = vmatprep.mubr.bf16.mxu0 0
        %5365 = vmatmul.mubr.bf16.gmra.mxu0 %v5161
        %v5366 = vpop.f32.mrf.mxu0
        %v5367 = vadd.f32 0.0, %v5366
        %v5368 = vpop.f32.mrf.mxu0
        %v5369 = vpop.f32.mrf.mxu0
        %v5370 = vadd.f32 0.0, %v5369
        %v5371 = vpop.f32.mrf.mxu0
        %5372 = vmatprep.mubr.bf16.mxu0 0
        %5373 = vmatmul.mubr.bf16.gmra.mxu0 %v5162
        %v5374 = vpop.f32.mrf.mxu0
        %v5375 = vadd.f32 0.0, %v5374
        %v5376 = vpop.f32.mrf.mxu0
        %v5377 = vpop.f32.mrf.mxu0
        %v5378 = vadd.f32 0.0, %v5377
        %v5379 = vpop.f32.mrf.mxu0
        %5380 = vmatprep.mubr.bf16.mxu0 0
        %5381 = vmatmul.mubr.bf16.gmra.mxu0 %v5163
        %v5382 = vpop.f32.mrf.mxu0
        %v5383 = vadd.f32 0.0, %v5382
        %v5384 = vpop.f32.mrf.mxu0
        %v5385 = vpop.f32.mrf.mxu0
        %v5386 = vadd.f32 0.0, %v5385
        %v5387 = vpop.f32.mrf.mxu0
        %5388 = vdwg.mxu0
        %v5389 = vadd.f32 %v4635, %v5263
        %v5390 = vadd.f32 %v4636, %v5266
        %v5391 = vadd.f32 %v4637, %v5271
        %v5392 = vadd.f32 %v4638, %v5274
        %v5393 = vadd.f32 %v4639, %v5279
        %v5394 = vadd.f32 %v4640, %v5282
        %v5395 = vadd.f32 %v4641, %v5287
        %v5396 = vadd.f32 %v4642, %v5290
        %v5397 = vadd.f32 %v4643, %v5295
        %v5398 = vadd.f32 %v4644, %v5298
        %v5399 = vadd.f32 %v4645, %v5303
        %v5400 = vadd.f32 %v4646, %v5306
        %v5401 = vadd.f32 %v4647, %v5311
        %v5402 = vadd.f32 %v4648, %v5314
        %v5403 = vadd.f32 %v4649, %v5319
        %v5404 = vadd.f32 %v4650, %v5322
        %v5405 = vadd.f32 %v4651, %v5327
        %v5406 = vadd.f32 %v4652, %v5330
        %v5407 = vadd.f32 %v4653, %v5335
        %v5408 = vadd.f32 %v4654, %v5338
        %v5409 = vadd.f32 %v4655, %v5343
        %v5410 = vadd.f32 %v4656, %v5346
        %v5411 = vadd.f32 %v4657, %v5351
        %v5412 = vadd.f32 %v4658, %v5354
        %v5413 = vadd.f32 %v4659, %v5359
        %v5414 = vadd.f32 %v4660, %v5362
        %v5415 = vadd.f32 %v4661, %v5367
        %v5416 = vadd.f32 %v4662, %v5370
        %v5417 = vadd.f32 %v4663, %v5375
        %v5418 = vadd.f32 %v4664, %v5378
        %v5419 = vadd.f32 %v4665, %v5383
        %v5420 = vadd.f32 %v4666, %v5386
        %v5421 = vld [vmem:[%s4280] sm:$0xe]
        %v5422 = vld [vmem:[%s4280 + $0xc] sm:$0xe]
        %v5423 = vld [vmem:[%s4280 + $0x18] sm:$0xe]
        %v5424 = vld [vmem:[%s4280 + $0x24] sm:$0xe]
        %v5425 = vld [vmem:[%s4280 + $0x30] sm:$0xe]
        %v5426 = vld [vmem:[%s4280 + $0x3c] sm:$0xe]
        %v5427 = vld [vmem:[%s4280 + $0x48] sm:$0xe]
        %v5428 = vld [vmem:[%s4280 + $0x54] sm:$0xe]
        %v5429 = vld [vmem:[%s4280 + $0x60] sm:$0xe]
        %v5430 = vld [vmem:[%s4280 + $0x6c] sm:$0xe]
        %v5431 = vld [vmem:[%s4280 + $0x78] sm:$0xe]
        %v5432 = vld [vmem:[%s4280 + $0x84] sm:$0xe]
        %v5433 = vld [vmem:[%s4280 + $0x90] sm:$0xe]
        %v5434 = vld [vmem:[%s4280 + $0x9c] sm:$0xe]
        %v5435 = vld [vmem:[%s4280 + $0xa8] sm:$0xe]
        %v5436 = vld [vmem:[%s4280 + $0xb4] sm:$0xe]
        %v5485 = vrot.slane %v5421, 5
        %v5486 = vrot.slane %v5485, 4
        %v5487 = vrot.slane %v4668, 5
        %v5488 = vsel %vm2207, %v5486, %v5487
        %v5489 = vrot.slane %v5487, 4
        %v5490 = vrot.slane %v4669, 5
        %v5491 = vsel %vm2207, %v5489, %v5490
        %v5492 = vrot.slane %v5422, 5
        %v5493 = vrot.slane %v5492, 4
        %v5494 = vrot.slane %v4671, 5
        %v5495 = vsel %vm2207, %v5493, %v5494
        %v5496 = vrot.slane %v5494, 4
        %v5497 = vrot.slane %v4672, 5
        %v5498 = vsel %vm2207, %v5496, %v5497
        %v5499 = vrot.slane %v5423, 5
        %v5500 = vrot.slane %v5499, 4
        %v5501 = vrot.slane %v4674, 5
        %v5502 = vsel %vm2207, %v5500, %v5501
        %v5503 = vrot.slane %v5501, 4
        %v5504 = vrot.slane %v4675, 5
        %v5505 = vsel %vm2207, %v5503, %v5504
        %v5506 = vrot.slane %v5424, 5
        %v5507 = vrot.slane %v5506, 4
        %v5508 = vrot.slane %v4677, 5
        %v5509 = vsel %vm2207, %v5507, %v5508
        %v5510 = vrot.slane %v5508, 4
        %v5511 = vrot.slane %v4678, 5
        %v5512 = vsel %vm2207, %v5510, %v5511
        %v5513 = vrot.slane %v5425, 5
        %v5514 = vrot.slane %v5513, 4
        %v5515 = vrot.slane %v4680, 5
        %v5516 = vsel %vm2207, %v5514, %v5515
        %v5517 = vrot.slane %v5515, 4
        %v5518 = vrot.slane %v4681, 5
        %v5519 = vsel %vm2207, %v5517, %v5518
        %v5520 = vrot.slane %v5426, 5
        %v5521 = vrot.slane %v5520, 4
        %v5522 = vrot.slane %v4683, 5
        %v5523 = vsel %vm2207, %v5521, %v5522
        %v5524 = vrot.slane %v5522, 4
        %v5525 = vrot.slane %v4684, 5
        %v5526 = vsel %vm2207, %v5524, %v5525
        %v5527 = vrot.slane %v5427, 5
        %v5528 = vrot.slane %v5527, 4
        %v5529 = vrot.slane %v4686, 5
        %v5530 = vsel %vm2207, %v5528, %v5529
        %v5531 = vrot.slane %v5529, 4
        %v5532 = vrot.slane %v4687, 5
        %v5533 = vsel %vm2207, %v5531, %v5532
        %v5534 = vrot.slane %v5428, 5
        %v5535 = vrot.slane %v5534, 4
        %v5536 = vrot.slane %v4689, 5
        %v5537 = vsel %vm2207, %v5535, %v5536
        %v5538 = vrot.slane %v5536, 4
        %v5539 = vrot.slane %v4690, 5
        %v5540 = vsel %vm2207, %v5538, %v5539
        %v5541 = vrot.slane %v5429, 5
        %v5542 = vrot.slane %v5541, 4
        %v5543 = vrot.slane %v4692, 5
        %v5544 = vsel %vm2207, %v5542, %v5543
        %v5545 = vrot.slane %v5543, 4
        %v5546 = vrot.slane %v4693, 5
        %v5547 = vsel %vm2207, %v5545, %v5546
        %v5548 = vrot.slane %v5430, 5
        %v5549 = vrot.slane %v5548, 4
        %v5550 = vrot.slane %v4695, 5
        %v5551 = vsel %vm2207, %v5549, %v5550
        %v5552 = vrot.slane %v5550, 4
        %v5553 = vrot.slane %v4696, 5
        %v5554 = vsel %vm2207, %v5552, %v5553
        %v5555 = vrot.slane %v5431, 5
        %v5556 = vrot.slane %v5555, 4
        %v5557 = vrot.slane %v4698, 5
        %v5558 = vsel %vm2207, %v5556, %v5557
        %v5559 = vrot.slane %v5557, 4
        %v5560 = vrot.slane %v4699, 5
        %v5561 = vsel %vm2207, %v5559, %v5560
        %v5562 = vrot.slane %v5432, 5
        %v5563 = vrot.slane %v5562, 4
        %v5564 = vrot.slane %v4701, 5
        %v5565 = vsel %vm2207, %v5563, %v5564
        %v5566 = vrot.slane %v5564, 4
        %v5567 = vrot.slane %v4702, 5
        %v5568 = vsel %vm2207, %v5566, %v5567
        %v5569 = vrot.slane %v5433, 5
        %v5570 = vrot.slane %v5569, 4
        %v5571 = vrot.slane %v4704, 5
        %v5572 = vsel %vm2207, %v5570, %v5571
        %v5573 = vrot.slane %v5571, 4
        %v5574 = vrot.slane %v4705, 5
        %v5575 = vsel %vm2207, %v5573, %v5574
        %v5576 = vrot.slane %v5434, 5
        %v5577 = vrot.slane %v5576, 4
        %v5578 = vrot.slane %v4707, 5
        %v5579 = vsel %vm2207, %v5577, %v5578
        %v5580 = vrot.slane %v5578, 4
        %v5581 = vrot.slane %v4708, 5
        %v5582 = vsel %vm2207, %v5580, %v5581
        %v5583 = vrot.slane %v5435, 5
        %v5584 = vrot.slane %v5583, 4
        %v5585 = vrot.slane %v4710, 5
        %v5586 = vsel %vm2207, %v5584, %v5585
        %v5587 = vrot.slane %v5585, 4
        %v5588 = vrot.slane %v4711, 5
        %v5589 = vsel %vm2207, %v5587, %v5588
        %v5590 = vrot.slane %v5436, 5
        %v5591 = vrot.slane %v5590, 4
        %v5592 = vrot.slane %v4713, 5
        %v5593 = vsel %vm2207, %v5591, %v5592
        %v5594 = vrot.slane %v5592, 4
        %v5595 = vrot.slane %v4714, 5
        %v5596 = vsel %vm2207, %v5594, %v5595
        %s5597 = scalar_lea.vmem %s2, 512
        %v5598 = vld [vmem:[%s5597] sm:$0xf]
        %v5599 = vld [vmem:[%s5597 + $0x4] sm:$0xf]
        %v5600 = vld [vmem:[%s5597 + $0x8] sm:$0xf]
        %v5601 = vld [vmem:[%s5597 + $0xc] sm:$0xf]
        %v5602 = vld [vmem:[%s5597 + $0x10] sm:$0xf]
        %v5603 = vld [vmem:[%s5597 + $0x14] sm:$0xf]
        %v5604 = vld [vmem:[%s5597 + $0x18] sm:$0xf]
        %v5605 = vld [vmem:[%s5597 + $0x1c] sm:$0xf]
        %v5606 = vld [vmem:[%s5597 + $0x20] sm:$0xf]
        %v5607 = vld [vmem:[%s5597 + $0x24] sm:$0xf]
        %v5608 = vld [vmem:[%s5597 + $0x28] sm:$0xf]
        %v5609 = vld [vmem:[%s5597 + $0x2c] sm:$0xf]
        %v5610 = vld [vmem:[%s5597 + $0x30] sm:$0xf]
        %v5611 = vld [vmem:[%s5597 + $0x34] sm:$0xf]
        %v5612 = vld [vmem:[%s5597 + $0x38] sm:$0xf]
        %v5613 = vld [vmem:[%s5597 + $0x3c] sm:$0xf]
        %v5614 = vunpack.c.l.b16 %v5488
        %v5615 = vunpack.c.l.b16 %v5491
        %v5616 = vunpack.c.l.b16 %v5495
        %v5617 = vunpack.c.l.b16 %v5498
        %v5618 = vunpack.c.l.b16 %v5502
        %v5619 = vunpack.c.l.b16 %v5505
        %v5620 = vunpack.c.l.b16 %v5509
        %v5621 = vunpack.c.l.b16 %v5512
        %v5622 = vunpack.c.l.b16 %v5516
        %v5623 = vunpack.c.l.b16 %v5519
        %v5624 = vunpack.c.l.b16 %v5523
        %v5625 = vunpack.c.l.b16 %v5526
        %v5626 = vunpack.c.l.b16 %v5530
        %v5627 = vunpack.c.l.b16 %v5533
        %v5628 = vunpack.c.l.b16 %v5537
        %v5629 = vunpack.c.l.b16 %v5540
        %v5630 = vunpack.c.l.b16 %v5544
        %v5631 = vunpack.c.l.b16 %v5547
        %v5632 = vunpack.c.l.b16 %v5551
        %v5633 = vunpack.c.l.b16 %v5554
        %v5634 = vunpack.c.l.b16 %v5558
        %v5635 = vunpack.c.l.b16 %v5561
        %v5636 = vunpack.c.l.b16 %v5565
        %v5637 = vunpack.c.l.b16 %v5568
        %v5638 = vunpack.c.l.b16 %v5572
        %v5639 = vunpack.c.l.b16 %v5575
        %v5640 = vunpack.c.l.b16 %v5579
        %v5641 = vunpack.c.l.b16 %v5582
        %v5642 = vunpack.c.l.b16 %v5586
        %v5643 = vunpack.c.l.b16 %v5589
        %v5644 = vunpack.c.l.b16 %v5593
        %v5645 = vunpack.c.l.b16 %v5596
        %v5646 = vpack.c.b16 %v5615, %v5614
        %v5647 = vpack.c.b16 %v5617, %v5616
        %v5648 = vpack.c.b16 %v5619, %v5618
        %v5649 = vpack.c.b16 %v5621, %v5620
        %v5650 = vpack.c.b16 %v5623, %v5622
        %v5651 = vpack.c.b16 %v5625, %v5624
        %v5652 = vpack.c.b16 %v5627, %v5626
        %v5653 = vpack.c.b16 %v5629, %v5628
        %v5654 = vpack.c.b16 %v5631, %v5630
        %v5655 = vpack.c.b16 %v5633, %v5632
        %v5656 = vpack.c.b16 %v5635, %v5634
        %v5657 = vpack.c.b16 %v5637, %v5636
        %v5658 = vpack.c.b16 %v5639, %v5638
        %v5659 = vpack.c.b16 %v5641, %v5640
        %v5660 = vpack.c.b16 %v5643, %v5642
        %v5661 = vpack.c.b16 %v5645, %v5644
        %v5694 = vunpack.c.l.b16 %v5598
        %v5695 = vunpack.c.l.b16 %v5599
        %v5696 = vunpack.c.l.b16 %v5600
        %v5697 = vunpack.c.l.b16 %v5601
        %v5698 = vunpack.c.l.b16 %v5602
        %v5699 = vunpack.c.l.b16 %v5603
        %v5700 = vunpack.c.l.b16 %v5604
        %v5701 = vunpack.c.l.b16 %v5605
        %v5702 = vunpack.c.l.b16 %v5606
        %v5703 = vunpack.c.l.b16 %v5607
        %v5704 = vunpack.c.l.b16 %v5608
        %v5705 = vunpack.c.l.b16 %v5609
        %v5706 = vunpack.c.l.b16 %v5610
        %v5707 = vunpack.c.l.b16 %v5611
        %v5708 = vunpack.c.l.b16 %v5612
        %v5709 = vunpack.c.l.b16 %v5613
        %v5710 = vpack.c.b16 %v5695, %v5694
        %v5711 = vpack.c.b16 %v5697, %v5696
        %v5712 = vpack.c.b16 %v5699, %v5698
        %v5713 = vpack.c.b16 %v5701, %v5700
        %v5714 = vpack.c.b16 %v5703, %v5702
        %v5715 = vpack.c.b16 %v5705, %v5704
        %v5716 = vpack.c.b16 %v5707, %v5706
        %v5717 = vpack.c.b16 %v5709, %v5708
        %5726 = vmatprep.subr.bf16.mxu0 0
        %5727 = vmatpush1.bf16.msra.mxu0 %v5717
        %5728 = vmatprep.subr.bf16.mxu0 0
        %5729 = vmatpush1.bf16.msra.mxu0 %v5716
        %5730 = vmatprep.subr.bf16.mxu0 0
        %5731 = vmatpush1.bf16.msra.mxu0 %v5715
        %5732 = vmatprep.subr.bf16.mxu0 0
        %5733 = vmatpush1.bf16.msra.mxu0 %v5714
        %5734 = vmatprep.subr.bf16.mxu0 0
        %5735 = vmatpush1.bf16.msra.mxu0 %v5713
        %5736 = vmatprep.subr.bf16.mxu0 0
        %5737 = vmatpush1.bf16.msra.mxu0 %v5712
        %5738 = vmatprep.subr.bf16.mxu0 0
        %5739 = vmatpush1.bf16.msra.mxu0 %v5711
        %5740 = vmatprep.subr.bf16.mxu0 0
        %5741 = vmatpush1.bf16.msra.mxu0 %v5710
        %5742 = vmatprep.subr.bf16.mxu0 0
        %5743 = vmatpush2.bf16.msra.mxu0 0
        %5744 = vmatprep.subr.bf16.mxu0 0
        %5745 = vmatpush2.bf16.msra.mxu0 0
        %5746 = vmatprep.subr.bf16.mxu0 0
        %5747 = vmatpush2.bf16.msra.mxu0 0
        %5748 = vmatprep.subr.bf16.mxu0 0
        %5749 = vmatpush2.bf16.msra.mxu0 0
        %5750 = vmatprep.subr.bf16.mxu0 0
        %5751 = vmatpush2.bf16.msra.mxu0 0
        %5752 = vmatprep.subr.bf16.mxu0 0
        %5753 = vmatpush2.bf16.msra.mxu0 0
        %5754 = vmatprep.subr.bf16.mxu0 0
        %5755 = vmatpush2.bf16.msra.mxu0 0
        %5756 = vmatprep.subr.bf16.mxu0 0
        %5757 = vmatpush2.bf16.msra.mxu0 0
        %5758 = vmatprep.mubr.bf16.mxu0 0
        %5759 = vmatmul.mubr.bf16.gmra.mxu0 %v5646
        %v5760 = vpop.f32.mrf.mxu0
        %v5761 = vadd.f32 0.0, %v5760
        %v5762 = vpop.f32.mrf.mxu0
        %v5763 = vpop.f32.mrf.mxu0
        %v5764 = vadd.f32 0.0, %v5763
        %v5765 = vpop.f32.mrf.mxu0
        %5766 = vmatprep.mubr.bf16.mxu0 0
        %5767 = vmatmul.mubr.bf16.gmra.mxu0 %v5647
        %v5768 = vpop.f32.mrf.mxu0
        %v5769 = vadd.f32 0.0, %v5768
        %v5770 = vpop.f32.mrf.mxu0
        %v5771 = vpop.f32.mrf.mxu0
        %v5772 = vadd.f32 0.0, %v5771
        %v5773 = vpop.f32.mrf.mxu0
        %5774 = vmatprep.mubr.bf16.mxu0 0
        %5775 = vmatmul.mubr.bf16.gmra.mxu0 %v5648
        %v5776 = vpop.f32.mrf.mxu0
        %v5777 = vadd.f32 0.0, %v5776
        %v5778 = vpop.f32.mrf.mxu0
        %v5779 = vpop.f32.mrf.mxu0
        %v5780 = vadd.f32 0.0, %v5779
        %v5781 = vpop.f32.mrf.mxu0
        %5782 = vmatprep.mubr.bf16.mxu0 0
        %5783 = vmatmul.mubr.bf16.gmra.mxu0 %v5649
        %v5784 = vpop.f32.mrf.mxu0
        %v5785 = vadd.f32 0.0, %v5784
        %v5786 = vpop.f32.mrf.mxu0
        %v5787 = vpop.f32.mrf.mxu0
        %v5788 = vadd.f32 0.0, %v5787
        %v5789 = vpop.f32.mrf.mxu0
        %5790 = vmatprep.mubr.bf16.mxu0 0
        %5791 = vmatmul.mubr.bf16.gmra.mxu0 %v5650
        %v5792 = vpop.f32.mrf.mxu0
        %v5793 = vadd.f32 0.0, %v5792
        %v5794 = vpop.f32.mrf.mxu0
        %v5795 = vpop.f32.mrf.mxu0
        %v5796 = vadd.f32 0.0, %v5795
        %v5797 = vpop.f32.mrf.mxu0
        %5798 = vmatprep.mubr.bf16.mxu0 0
        %5799 = vmatmul.mubr.bf16.gmra.mxu0 %v5651
        %v5800 = vpop.f32.mrf.mxu0
        %v5801 = vadd.f32 0.0, %v5800
        %v5802 = vpop.f32.mrf.mxu0
        %v5803 = vpop.f32.mrf.mxu0
        %v5804 = vadd.f32 0.0, %v5803
        %v5805 = vpop.f32.mrf.mxu0
        %5806 = vmatprep.mubr.bf16.mxu0 0
        %5807 = vmatmul.mubr.bf16.gmra.mxu0 %v5652
        %v5808 = vpop.f32.mrf.mxu0
        %v5809 = vadd.f32 0.0, %v5808
        %v5810 = vpop.f32.mrf.mxu0
        %v5811 = vpop.f32.mrf.mxu0
        %v5812 = vadd.f32 0.0, %v5811
        %v5813 = vpop.f32.mrf.mxu0
        %5814 = vmatprep.mubr.bf16.mxu0 0
        %5815 = vmatmul.mubr.bf16.gmra.mxu0 %v5653
        %v5816 = vpop.f32.mrf.mxu0
        %v5817 = vadd.f32 0.0, %v5816
        %v5818 = vpop.f32.mrf.mxu0
        %v5819 = vpop.f32.mrf.mxu0
        %v5820 = vadd.f32 0.0, %v5819
        %v5821 = vpop.f32.mrf.mxu0
        %5822 = vmatprep.mubr.bf16.mxu0 0
        %5823 = vmatmul.mubr.bf16.gmra.mxu0 %v5654
        %v5824 = vpop.f32.mrf.mxu0
        %v5825 = vadd.f32 0.0, %v5824
        %v5826 = vpop.f32.mrf.mxu0
        %v5827 = vpop.f32.mrf.mxu0
        %v5828 = vadd.f32 0.0, %v5827
        %v5829 = vpop.f32.mrf.mxu0
        %5830 = vmatprep.mubr.bf16.mxu0 0
        %5831 = vmatmul.mubr.bf16.gmra.mxu0 %v5655
        %v5832 = vpop.f32.mrf.mxu0
        %v5833 = vadd.f32 0.0, %v5832
        %v5834 = vpop.f32.mrf.mxu0
        %v5835 = vpop.f32.mrf.mxu0
        %v5836 = vadd.f32 0.0, %v5835
        %v5837 = vpop.f32.mrf.mxu0
        %5838 = vmatprep.mubr.bf16.mxu0 0
        %5839 = vmatmul.mubr.bf16.gmra.mxu0 %v5656
        %v5840 = vpop.f32.mrf.mxu0
        %v5841 = vadd.f32 0.0, %v5840
        %v5842 = vpop.f32.mrf.mxu0
        %v5843 = vpop.f32.mrf.mxu0
        %v5844 = vadd.f32 0.0, %v5843
        %v5845 = vpop.f32.mrf.mxu0
        %5846 = vmatprep.mubr.bf16.mxu0 0
        %5847 = vmatmul.mubr.bf16.gmra.mxu0 %v5657
        %v5848 = vpop.f32.mrf.mxu0
        %v5849 = vadd.f32 0.0, %v5848
        %v5850 = vpop.f32.mrf.mxu0
        %v5851 = vpop.f32.mrf.mxu0
        %v5852 = vadd.f32 0.0, %v5851
        %v5853 = vpop.f32.mrf.mxu0
        %5854 = vmatprep.mubr.bf16.mxu0 0
        %5855 = vmatmul.mubr.bf16.gmra.mxu0 %v5658
        %v5856 = vpop.f32.mrf.mxu0
        %v5857 = vadd.f32 0.0, %v5856
        %v5858 = vpop.f32.mrf.mxu0
        %v5859 = vpop.f32.mrf.mxu0
        %v5860 = vadd.f32 0.0, %v5859
        %v5861 = vpop.f32.mrf.mxu0
        %5862 = vmatprep.mubr.bf16.mxu0 0
        %5863 = vmatmul.mubr.bf16.gmra.mxu0 %v5659
        %v5864 = vpop.f32.mrf.mxu0
        %v5865 = vadd.f32 0.0, %v5864
        %v5866 = vpop.f32.mrf.mxu0
        %v5867 = vpop.f32.mrf.mxu0
        %v5868 = vadd.f32 0.0, %v5867
        %v5869 = vpop.f32.mrf.mxu0
        %5870 = vmatprep.mubr.bf16.mxu0 0
        %5871 = vmatmul.mubr.bf16.gmra.mxu0 %v5660
        %v5872 = vpop.f32.mrf.mxu0
        %v5873 = vadd.f32 0.0, %v5872
        %v5874 = vpop.f32.mrf.mxu0
        %v5875 = vpop.f32.mrf.mxu0
        %v5876 = vadd.f32 0.0, %v5875
        %v5877 = vpop.f32.mrf.mxu0
        %5878 = vmatprep.mubr.bf16.mxu0 0
        %5879 = vmatmul.mubr.bf16.gmra.mxu0 %v5661
        %v5880 = vpop.f32.mrf.mxu0
        %v5881 = vadd.f32 0.0, %v5880
        %v5882 = vpop.f32.mrf.mxu0
        %v5883 = vpop.f32.mrf.mxu0
        %v5884 = vadd.f32 0.0, %v5883
        %v5885 = vpop.f32.mrf.mxu0
        %5886 = vdwg.mxu0
        %v5887 = vadd.f32 %v5389, %v5761
        %v5888 = vadd.f32 %v5390, %v5764
        %v5889 = vadd.f32 %v5391, %v5769
        %v5890 = vadd.f32 %v5392, %v5772
        %v5891 = vadd.f32 %v5393, %v5777
        %v5892 = vadd.f32 %v5394, %v5780
        %v5893 = vadd.f32 %v5395, %v5785
        %v5894 = vadd.f32 %v5396, %v5788
        %v5895 = vadd.f32 %v5397, %v5793
        %v5896 = vadd.f32 %v5398, %v5796
        %v5897 = vadd.f32 %v5399, %v5801
        %v5898 = vadd.f32 %v5400, %v5804
        %v5899 = vadd.f32 %v5401, %v5809
        %v5900 = vadd.f32 %v5402, %v5812
        %v5901 = vadd.f32 %v5403, %v5817
        %v5902 = vadd.f32 %v5404, %v5820
        %v5903 = vadd.f32 %v5405, %v5825
        %v5904 = vadd.f32 %v5406, %v5828
        %v5905 = vadd.f32 %v5407, %v5833
        %v5906 = vadd.f32 %v5408, %v5836
        %v5907 = vadd.f32 %v5409, %v5841
        %v5908 = vadd.f32 %v5410, %v5844
        %v5909 = vadd.f32 %v5411, %v5849
        %v5910 = vadd.f32 %v5412, %v5852
        %v5911 = vadd.f32 %v5413, %v5857
        %v5912 = vadd.f32 %v5414, %v5860
        %v5913 = vadd.f32 %v5415, %v5865
        %v5914 = vadd.f32 %v5416, %v5868
        %v5915 = vadd.f32 %v5417, %v5873
        %v5916 = vadd.f32 %v5418, %v5876
        %v5917 = vadd.f32 %v5419, %v5881
        %v5918 = vadd.f32 %v5420, %v5884
        %v5919 = vadd.f32 %v330, %v5887
        %v5920 = vadd.f32 %v331, %v5888
        %v5921 = vadd.f32 %v332, %v5889
        %v5922 = vadd.f32 %v333, %v5890
        %v5923 = vadd.f32 %v334, %v5891
        %v5924 = vadd.f32 %v335, %v5892
        %v5925 = vadd.f32 %v336, %v5893
        %v5926 = vadd.f32 %v337, %v5894
        %v5927 = vadd.f32 %v338, %v5895
        %v5928 = vadd.f32 %v339, %v5896
        %v5929 = vadd.f32 %v340, %v5897
        %v5930 = vadd.f32 %v341, %v5898
        %v5931 = vadd.f32 %v342, %v5899
        %v5932 = vadd.f32 %v343, %v5900
        %v5933 = vadd.f32 %v344, %v5901
        %v5934 = vadd.f32 %v345, %v5902
        %v5935 = vadd.f32 %v346, %v5903
        %v5936 = vadd.f32 %v347, %v5904
        %v5937 = vadd.f32 %v348, %v5905
        %v5938 = vadd.f32 %v349, %v5906
        %v5939 = vadd.f32 %v350, %v5907
        %v5940 = vadd.f32 %v351, %v5908
        %v5941 = vadd.f32 %v352, %v5909
        %v5942 = vadd.f32 %v353, %v5910
        %v5943 = vadd.f32 %v354, %v5911
        %v5944 = vadd.f32 %v355, %v5912
        %v5945 = vadd.f32 %v356, %v5913
        %v5946 = vadd.f32 %v357, %v5914
        %v5947 = vadd.f32 %v358, %v5915
        %v5948 = vadd.f32 %v359, %v5916
        %v5949 = vadd.f32 %v360, %v5917
        %v5950 = vadd.f32 %v361, %v5918
        %v5951 = vlaneseq
        %v5952 = vshrl.u32 %v5951, 7
        %v5953 = vsub.s32 0, %v5952
        %v5954 = vrot.slane %v240, %v5953
        %v5955 = vadd.f32 %v5919, %v5954
        %v5956 = vadd.f32 %v5920, %v5954
        %v5957 = vadd.f32 %v5921, %v5954
        %v5958 = vadd.f32 %v5922, %v5954
        %v5959 = vadd.f32 %v5923, %v5954
        %v5960 = vadd.f32 %v5924, %v5954
        %v5961 = vadd.f32 %v5925, %v5954
        %v5962 = vadd.f32 %v5926, %v5954
        %v5963 = vadd.f32 %v5927, %v5954
        %v5964 = vadd.f32 %v5928, %v5954
        %v5965 = vadd.f32 %v5929, %v5954
        %v5966 = vadd.f32 %v5930, %v5954
        %v5967 = vadd.f32 %v5931, %v5954
        %v5968 = vadd.f32 %v5932, %v5954
        %v5969 = vadd.f32 %v5933, %v5954
        %v5970 = vadd.f32 %v5934, %v5954
        %v5971 = vadd.f32 %v5935, %v5954
        %v5972 = vadd.f32 %v5936, %v5954
        %v5973 = vadd.f32 %v5937, %v5954
        %v5974 = vadd.f32 %v5938, %v5954
        %v5975 = vadd.f32 %v5939, %v5954
        %v5976 = vadd.f32 %v5940, %v5954
        %v5977 = vadd.f32 %v5941, %v5954
        %v5978 = vadd.f32 %v5942, %v5954
        %v5979 = vadd.f32 %v5943, %v5954
        %v5980 = vadd.f32 %v5944, %v5954
        %v5981 = vadd.f32 %v5945, %v5954
        %v5982 = vadd.f32 %v5946, %v5954
        %v5983 = vadd.f32 %v5947, %v5954
        %v5984 = vadd.f32 %v5948, %v5954
        %v5985 = vadd.f32 %v5949, %v5954
        %v5986 = vadd.f32 %v5950, %v5954
        %v5987 = vpack.c.bf16 %v5956, %v5955
        %v5988 = vpack.c.bf16 %v5958, %v5957
        %v5989 = vpack.c.bf16 %v5960, %v5959
        %v5990 = vpack.c.bf16 %v5962, %v5961
        %v5991 = vpack.c.bf16 %v5964, %v5963
        %v5992 = vpack.c.bf16 %v5966, %v5965
        %v5993 = vpack.c.bf16 %v5968, %v5967
        %v5994 = vpack.c.bf16 %v5970, %v5969
        %v5995 = vpack.c.bf16 %v5972, %v5971
        %v5996 = vpack.c.bf16 %v5974, %v5973
        %v5997 = vpack.c.bf16 %v5976, %v5975
        %v5998 = vpack.c.bf16 %v5978, %v5977
        %v5999 = vpack.c.bf16 %v5980, %v5979
        %v6000 = vpack.c.bf16 %v5982, %v5981
        %v6001 = vpack.c.bf16 %v5984, %v5983
        %v6002 = vpack.c.bf16 %v5986, %v5985
        %v6019 = vunpack.c.l.b16 %v5987
        %v6020 = vunpack.c.h.b16 %v5987
        %v6021 = vunpack.c.l.b16 %v5988
        %v6022 = vunpack.c.h.b16 %v5988
        %v6023 = vunpack.c.l.b16 %v5989
        %v6024 = vunpack.c.h.b16 %v5989
        %v6025 = vunpack.c.l.b16 %v5990
        %v6026 = vunpack.c.h.b16 %v5990
        %v6027 = vunpack.c.l.b16 %v5991
        %v6028 = vunpack.c.h.b16 %v5991
        %v6029 = vunpack.c.l.b16 %v5992
        %v6030 = vunpack.c.h.b16 %v5992
        %v6031 = vunpack.c.l.b16 %v5993
        %v6032 = vunpack.c.h.b16 %v5993
        %v6033 = vunpack.c.l.b16 %v5994
        %v6034 = vunpack.c.h.b16 %v5994
        %v6035 = vunpack.c.l.b16 %v5995
        %v6036 = vunpack.c.h.b16 %v5995
        %v6037 = vunpack.c.l.b16 %v5996
        %v6038 = vunpack.c.h.b16 %v5996
        %v6039 = vunpack.c.l.b16 %v5997
        %v6040 = vunpack.c.h.b16 %v5997
        %v6041 = vunpack.c.l.b16 %v5998
        %v6042 = vunpack.c.h.b16 %v5998
        %v6043 = vunpack.c.l.b16 %v5999
        %v6044 = vunpack.c.h.b16 %v5999
        %v6045 = vunpack.c.l.b16 %v6000
        %v6046 = vunpack.c.h.b16 %v6000
        %v6047 = vunpack.c.l.b16 %v6001
        %v6048 = vunpack.c.h.b16 %v6001
        %v6049 = vunpack.c.l.b16 %v6002
        %v6050 = vunpack.c.h.b16 %v6002
        %v6051 = vpack.c.b16 %v6019, %v6019
        %v6052 = vpack.c.b16 %v6020, %v6020
        %v6053 = vpack.c.b16 %v6021, %v6021
        %v6054 = vpack.c.b16 %v6022, %v6022
        %v6055 = vpack.c.b16 %v6023, %v6023
        %v6056 = vpack.c.b16 %v6024, %v6024
        %v6057 = vpack.c.b16 %v6025, %v6025
        %v6058 = vpack.c.b16 %v6026, %v6026
        %v6059 = vpack.c.b16 %v6027, %v6027
        %v6060 = vpack.c.b16 %v6028, %v6028
        %v6061 = vpack.c.b16 %v6029, %v6029
        %v6062 = vpack.c.b16 %v6030, %v6030
        %v6063 = vpack.c.b16 %v6031, %v6031
        %v6064 = vpack.c.b16 %v6032, %v6032
        %v6065 = vpack.c.b16 %v6033, %v6033
        %v6066 = vpack.c.b16 %v6034, %v6034
        %v6067 = vpack.c.b16 %v6035, %v6035
        %v6068 = vpack.c.b16 %v6036, %v6036
        %v6069 = vpack.c.b16 %v6037, %v6037
        %v6070 = vpack.c.b16 %v6038, %v6038
        %v6071 = vpack.c.b16 %v6039, %v6039
        %v6072 = vpack.c.b16 %v6040, %v6040
        %v6073 = vpack.c.b16 %v6041, %v6041
        %v6074 = vpack.c.b16 %v6042, %v6042
        %v6075 = vpack.c.b16 %v6043, %v6043
        %v6076 = vpack.c.b16 %v6044, %v6044
        %v6077 = vpack.c.b16 %v6045, %v6045
        %v6078 = vpack.c.b16 %v6046, %v6046
        %v6079 = vpack.c.b16 %v6047, %v6047
        %v6080 = vpack.c.b16 %v6048, %v6048
        %v6081 = vpack.c.b16 %v6049, %v6049
        %v6082 = vpack.c.b16 %v6050, %v6050
        %6115 = vst [vmem:[%s234] sm:$0xf] %v6051
        %6116 = vst [vmem:[%s234 + $0x4] sm:$0xf] %v6052
        %6117 = vst [vmem:[%s234 + $0x8] sm:$0xf] %v6053
        %6118 = vst [vmem:[%s234 + $0xc] sm:$0xf] %v6054
        %6119 = vst [vmem:[%s234 + $0x10] sm:$0xf] %v6055
        %6120 = vst [vmem:[%s234 + $0x14] sm:$0xf] %v6056
        %6121 = vst [vmem:[%s234 + $0x18] sm:$0xf] %v6057
        %6122 = vst [vmem:[%s234 + $0x1c] sm:$0xf] %v6058
        %6123 = vst [vmem:[%s234 + $0x20] sm:$0xf] %v6059
        %6124 = vst [vmem:[%s234 + $0x24] sm:$0xf] %v6060
        %6125 = vst [vmem:[%s234 + $0x28] sm:$0xf] %v6061
        %6126 = vst [vmem:[%s234 + $0x2c] sm:$0xf] %v6062
        %6127 = vst [vmem:[%s234 + $0x30] sm:$0xf] %v6063
        %6128 = vst [vmem:[%s234 + $0x34] sm:$0xf] %v6064
        %6129 = vst [vmem:[%s234 + $0x38] sm:$0xf] %v6065
        %6130 = vst [vmem:[%s234 + $0x3c] sm:$0xf] %v6066
        %6131 = vst [vmem:[%s234 + $0x40] sm:$0xf] %v6067
        %6132 = vst [vmem:[%s234 + $0x44] sm:$0xf] %v6068
        %6133 = vst [vmem:[%s234 + $0x48] sm:$0xf] %v6069
        %6134 = vst [vmem:[%s234 + $0x4c] sm:$0xf] %v6070
        %6135 = vst [vmem:[%s234 + $0x50] sm:$0xf] %v6071
        %6136 = vst [vmem:[%s234 + $0x54] sm:$0xf] %v6072
        %6137 = vst [vmem:[%s234 + $0x58] sm:$0xf] %v6073
        %6138 = vst [vmem:[%s234 + $0x5c] sm:$0xf] %v6074
        %6139 = vst [vmem:[%s234 + $0x60] sm:$0xf] %v6075
        %6140 = vst [vmem:[%s234 + $0x64] sm:$0xf] %v6076
        %6141 = vst [vmem:[%s234 + $0x68] sm:$0xf] %v6077
        %6142 = vst [vmem:[%s234 + $0x6c] sm:$0xf] %v6078
        %6143 = vst [vmem:[%s234 + $0x70] sm:$0xf] %v6079
        %6144 = vst [vmem:[%s234 + $0x74] sm:$0xf] %v6080
        %6145 = vst [vmem:[%s234 + $0x78] sm:$0xf] %v6081
        %6146 = vst [vmem:[%s234 + $0x7c] sm:$0xf] %v6082
        %v6147 = vadd.f32 %v5955, %v5956
        %v6148 = vadd.f32 %v6147, %v5957
        %v6149 = vadd.f32 %v6148, %v5958
        %v6150 = vadd.f32 %v6149, %v5959
        %v6151 = vadd.f32 %v6150, %v5960
        %v6152 = vadd.f32 %v6151, %v5961
        %v6153 = vadd.f32 %v6152, %v5962
        %v6154 = vadd.f32 %v6153, %v5963
        %v6155 = vadd.f32 %v6154, %v5964
        %v6156 = vadd.f32 %v6155, %v5965
        %v6157 = vadd.f32 %v6156, %v5966
        %v6158 = vadd.f32 %v6157, %v5967
        %v6159 = vadd.f32 %v6158, %v5968
        %v6160 = vadd.f32 %v6159, %v5969
        %v6161 = vadd.f32 %v6160, %v5970
        %v6162 = vadd.f32 %v6161, %v5971
        %v6163 = vadd.f32 %v6162, %v5972
        %v6164 = vadd.f32 %v6163, %v5973
        %v6165 = vadd.f32 %v6164, %v5974
        %v6166 = vadd.f32 %v6165, %v5975
        %v6167 = vadd.f32 %v6166, %v5976
        %v6168 = vadd.f32 %v6167, %v5977
        %v6169 = vadd.f32 %v6168, %v5978
        %v6170 = vadd.f32 %v6169, %v5979
        %v6171 = vadd.f32 %v6170, %v5980
        %v6172 = vadd.f32 %v6171, %v5981
        %v6173 = vadd.f32 %v6172, %v5982
        %v6174 = vadd.f32 %v6173, %v5983
        %v6175 = vadd.f32 %v6174, %v5984
        %v6176 = vadd.f32 %v6175, %v5985
        %v6177 = vadd.f32 %v6176, %v5986
        %v6178 = vrot.slane %v6177, 4
        %v6179 = vadd.f32 %v6177, %v6178
        %v6180 = vrot.slane %v6179, 2
        %v6181 = vadd.f32 %v6179, %v6180
        %v6182 = vrot.slane %v6181, 1
        %v6183 = vadd.f32 %v6181, %v6182
        %v6184 = vmul.f32 %v6183, 0.00390625
        %v6185 = vsub.f32 %v5955, %v6184
        %v6186 = vsub.f32 %v5956, %v6184
        %v6187 = vsub.f32 %v5957, %v6184
        %v6188 = vsub.f32 %v5958, %v6184
        %v6189 = vsub.f32 %v5959, %v6184
        %v6190 = vsub.f32 %v5960, %v6184
        %v6191 = vsub.f32 %v5961, %v6184
        %v6192 = vsub.f32 %v5962, %v6184
        %v6193 = vsub.f32 %v5963, %v6184
        %v6194 = vsub.f32 %v5964, %v6184
        %v6195 = vsub.f32 %v5965, %v6184
        %v6196 = vsub.f32 %v5966, %v6184
        %v6197 = vsub.f32 %v5967, %v6184
        %v6198 = vsub.f32 %v5968, %v6184
        %v6199 = vsub.f32 %v5969, %v6184
        %v6200 = vsub.f32 %v5970, %v6184
        %v6201 = vsub.f32 %v5971, %v6184
        %v6202 = vsub.f32 %v5972, %v6184
        %v6203 = vsub.f32 %v5973, %v6184
        %v6204 = vsub.f32 %v5974, %v6184
        %v6205 = vsub.f32 %v5975, %v6184
        %v6206 = vsub.f32 %v5976, %v6184
        %v6207 = vsub.f32 %v5977, %v6184
        %v6208 = vsub.f32 %v5978, %v6184
        %v6209 = vsub.f32 %v5979, %v6184
        %v6210 = vsub.f32 %v5980, %v6184
        %v6211 = vsub.f32 %v5981, %v6184
        %v6212 = vsub.f32 %v5982, %v6184
        %v6213 = vsub.f32 %v5983, %v6184
        %v6214 = vsub.f32 %v5984, %v6184
        %v6215 = vsub.f32 %v5985, %v6184
        %v6216 = vsub.f32 %v5986, %v6184
        %v6217 = vmul.f32 %v6185, %v6185
        %v6218 = vmul.f32 %v6186, %v6186
        %v6219 = vmul.f32 %v6187, %v6187
        %v6220 = vmul.f32 %v6188, %v6188
        %v6221 = vmul.f32 %v6189, %v6189
        %v6222 = vmul.f32 %v6190, %v6190
        %v6223 = vmul.f32 %v6191, %v6191
        %v6224 = vmul.f32 %v6192, %v6192
        %v6225 = vmul.f32 %v6193, %v6193
        %v6226 = vmul.f32 %v6194, %v6194
        %v6227 = vmul.f32 %v6195, %v6195
        %v6228 = vmul.f32 %v6196, %v6196
        %v6229 = vmul.f32 %v6197, %v6197
        %v6230 = vmul.f32 %v6198, %v6198
        %v6231 = vmul.f32 %v6199, %v6199
        %v6232 = vmul.f32 %v6200, %v6200
        %v6233 = vmul.f32 %v6201, %v6201
        %v6234 = vmul.f32 %v6202, %v6202
        %v6235 = vmul.f32 %v6203, %v6203
        %v6236 = vmul.f32 %v6204, %v6204
        %v6237 = vmul.f32 %v6205, %v6205
        %v6238 = vmul.f32 %v6206, %v6206
        %v6239 = vmul.f32 %v6207, %v6207
        %v6240 = vmul.f32 %v6208, %v6208
        %v6241 = vmul.f32 %v6209, %v6209
        %v6242 = vmul.f32 %v6210, %v6210
        %v6243 = vmul.f32 %v6211, %v6211
        %v6244 = vmul.f32 %v6212, %v6212
        %v6245 = vmul.f32 %v6213, %v6213
        %v6246 = vmul.f32 %v6214, %v6214
        %v6247 = vmul.f32 %v6215, %v6215
        %v6248 = vmul.f32 %v6216, %v6216
        %v6249 = vadd.f32 %v6217, %v6218
        %v6250 = vadd.f32 %v6249, %v6219
        %v6251 = vadd.f32 %v6250, %v6220
        %v6252 = vadd.f32 %v6251, %v6221
        %v6253 = vadd.f32 %v6252, %v6222
        %v6254 = vadd.f32 %v6253, %v6223
        %v6255 = vadd.f32 %v6254, %v6224
        %v6256 = vadd.f32 %v6255, %v6225
        %v6257 = vadd.f32 %v6256, %v6226
        %v6258 = vadd.f32 %v6257, %v6227
        %v6259 = vadd.f32 %v6258, %v6228
        %v6260 = vadd.f32 %v6259, %v6229
        %v6261 = vadd.f32 %v6260, %v6230
        %v6262 = vadd.f32 %v6261, %v6231
        %v6263 = vadd.f32 %v6262, %v6232
        %v6264 = vadd.f32 %v6263, %v6233
        %v6265 = vadd.f32 %v6264, %v6234
        %v6266 = vadd.f32 %v6265, %v6235
        %v6267 = vadd.f32 %v6266, %v6236
        %v6268 = vadd.f32 %v6267, %v6237
        %v6269 = vadd.f32 %v6268, %v6238
        %v6270 = vadd.f32 %v6269, %v6239
        %v6271 = vadd.f32 %v6270, %v6240
        %v6272 = vadd.f32 %v6271, %v6241
        %v6273 = vadd.f32 %v6272, %v6242
        %v6274 = vadd.f32 %v6273, %v6243
        %v6275 = vadd.f32 %v6274, %v6244
        %v6276 = vadd.f32 %v6275, %v6245
        %v6277 = vadd.f32 %v6276, %v6246
        %v6278 = vadd.f32 %v6277, %v6247
        %v6279 = vadd.f32 %v6278, %v6248
        %v6280 = vrot.slane %v6279, 4
        %v6281 = vadd.f32 %v6279, %v6280
        %v6282 = vrot.slane %v6281, 2
        %v6283 = vadd.f32 %v6281, %v6282
        %v6284 = vrot.slane %v6283, 1
        %v6285 = vadd.f32 %v6283, %v6284
        %6286 = vst [vmem:[%s219] sm:$0x1] %v6183
        %6287 = vst [vmem:[%s219 + $0x1] sm:$0x1] %v6285
        %s6288 = smul.u32 16, %s24
        %p6289 = scmp.lt.s32.totalorder %s23, 1
        %s6290 = scalar_select %p6289, %s23, 1
        %p6291 = scmp.lt.s32.totalorder %s6288, 15
        %s6292 = scalar_select %p6291, %s6288, 15
        %s6293 = smul.addr %s6292, 2
        %s6294 = smul.addr %s6290, 32
        %s6295 = sadd.s32 %s6293, %s6294
        %s6296 = smul.addr %s6295, 4
        %s6297 = scalar_lea.vmem %s3, %s6296
        %s6298 = sand.u32 %s137, 1
        %s6299 = scalar_lea.sflag [#allocation4], %s6298
        %s6300 = sand.u32 %s137, 1
        %s6301 = smul.addr %s6300, 2
        %s6302 = scalar_lea.vmem [#allocation3], %s6301
        // Predicated region
        $region41: #{dense_block_forward.3} parent=31 // pred_check
          %p6303 = pneg %p119
        $region42: #{dense_block_forward.3} parent=31 // pred_check_branch
          %6305 = sbr.rel (%p6303) target = $region44
        $region43: #{dense_block_forward.3} parent=31 // pred_region
          %s6306 = smul.u32 16, %s24
        $region44: #{dense_block_forward.3} parent=31 // pred_fallthru
          _
        // Predicated region
        $region45: #{dense_block_forward.3} parent=31 // pred_check
          %p6307 = pneg %p147
        $region46: #{dense_block_forward.3} parent=31 // pred_check_branch
          %6309 = sbr.rel (%p6307) target = $region48
        $region47: #{dense_block_forward.3} parent=31 // pred_region
          %s6311 = ssub.s32 32, 32
          %6312 = vsyncadd %s6299, %s6311
          %s6313 = sadd.s32 %s24, %s23
          %s6314 = smul.addr %s6313, 32
          %s6315 = scalar_lea.hbm %s4, %s6314
          %s6317 = sshll.u32 %s6302, 4
          %s6318 = int_to_ptr.vmem [resolvable:$true] %s6317
          %6320 = dma.vmem_to_hbm [thread:$0]  %s6318, 32, %s6315, %s6299
        $region48: #{dense_block_forward.3} parent=31 // pred_fallthru
          _
      $region32: #{dense_block_forward.3} parent=5 // pred_fallthru
        _
      %p6321 = scmp.le.s32.totalorder 2, %s14
      // Predicated region
      $region49: #{dense_block_forward.3} parent=5 // pred_check
        %p6322 = pneg %p6321
      $region50: #{dense_block_forward.3} parent=5 // pred_check_branch
        %6324 = sbr.rel (%p6322) target = $region52
      $region51: #{dense_block_forward.3} parent=5 // pred_region
        %s6325 = ssub.s32 %s14, 2
        // Predicated region
        $region53: #{dense_block_forward.3} parent=51 // pred_check
          %p6326 = pneg %p125
        $region54: #{dense_block_forward.3} parent=51 // pred_check_branch
          %6328 = sbr.rel (%p6326) target = $region56
        $region55: #{dense_block_forward.3} parent=51 // pred_region
          %s6329 = smul.u32 16, %s26
          %p6330 = scmp.lt.s32.totalorder %s25, 1
          %s6331 = scalar_select %p6330, %s25, 1
          %p6332 = scmp.lt.s32.totalorder %s6329, 15
          %s6333 = scalar_select %p6332, %s6329, 15
          %s6334 = smul.addr %s6333, 2
          %s6335 = smul.addr %s6331, 32
          %s6336 = sadd.s32 %s6334, %s6335
          %s6337 = smul.addr %s6336, 4
          %s6338 = scalar_lea.vmem %s3, %s6337
        $region56: #{dense_block_forward.3} parent=51 // pred_fallthru
          _
        // Predicated region
        $region57: #{dense_block_forward.3} parent=51 // pred_check
          %p6339 = pneg %p153
        $region58: #{dense_block_forward.3} parent=51 // pred_check_branch
          %6341 = sbr.rel (%p6339) target = $region60
        $region59: #{dense_block_forward.3} parent=51 // pred_region
          %s6342 = sand.u32 %s138, 1
          %s6343 = scalar_lea.sflag [#allocation4], %s6342
          %s6344 = sand.u32 %s138, 1
          %s6345 = smul.addr %s6344, 2
          %s6346 = scalar_lea.vmem [#allocation3], %s6345
          %6347 = dma.done %s6343, 32
        $region60: #{dense_block_forward.3} parent=51 // pred_fallthru
          _
      $region52: #{dense_block_forward.3} parent=5 // pred_fallthru
        _
    $region6: #{dense_block_forward.3} parent=1 // loop_footer
      %s18 = sadd.s32 1, %s14
    $region7: #{dense_block_forward.3} parent=1 // loop_footer_branch
      %13 = sbr.rel target = $region3
    $region8: #{dense_block_forward.3} parent=1 // loop_exit
      _
    %6348 = vsyncpa [#allocation4], 1
    %s6349 = scalar_lea.sflag [#allocation4], 1
    %6350 = vsyncpa %s6349, 1

// kernel: dense_block_forward.2
$region0: #{dense_block_forward.2}
  #allocation0 [shape = 'u32[]', space=smem, size = 0x4, offset = 0x4, fixed_abs, tag = 'smem constant byte address 0x4 - core index']
  #allocation1 [shape = 'u32[144,128]{1,0:T(1,128)}', space=vmem, size = 0x12000, scoped, tag = 'internal scratch']
  #allocation2 [shape = 'bf16[18,18,128]{2,1,0:T(8,128)(2,1)}', space=vmem, size = 0x1b000, scoped, tag = 'scratch operand']
  %s0 = inlined_call_operand.vmem [shape: bf16[2,16,16,128], index: 0, kind: input, shape index: {}]
  %s1 = inlined_call_operand.vmem [shape: f32[8,128], index: 1, kind: input, shape index: {}]
  %s2 = inlined_call_operand.vmem [shape: bf16[9,128,128], index: 2, kind: input, shape index: {}]
  %s3 = inlined_call_operand.vmem [shape: bf16[2,16,16,128], index: 3, kind: output, shape index: {0}]
  %s4 = inlined_call_operand.vmem [shape: f32[2,1,2,128], index: 4, kind: output, shape index: {1}]
  %5 = xla_tuple %s3, %s4
  %s6 = sld [smem:[#allocation0]]
  $region61: #{dense_block_forward.2} parent=0
    _
  %s8 = ssub.s32 1, %s6
  %s9 = scalar_select 0, %s8, %s6
  loop: start=0, step=1, limit=4
  $region2: #{dense_block_forward.2} parent=0 // loop_pre_header
    _
  $region3: #{dense_block_forward.2} parent=0 // loop_header
    %s11 = sphi 0, %s15
    %p12 = scmp.ge.s32.totalorder %s11, 4
    %s18 = sphi 0, %s30
    %s19 = sphi 0, %s26
    %s20 = sphi 0, %s18
    %s21 = sphi 0, %s19
    %s22 = sphi 0, %s20
    %s23 = sphi 0, %s21
    %s33 = sphi 0, %s35
    %s36 = sphi 0, %s33
    %s37 = sphi 0, %s36
    %s53 = sphi 0, %s37
    %s57 = sphi 0, %s57
    %s59 = sphi 0, %s57
    %s60 = sphi 0, %s59
    %s74 = sphi 0, %s60
    %s78 = sphi 0, %s78
    %s80 = sphi 0, %s78
    %s81 = sphi 0, %s80
    %s95 = sphi 0, %s81
    %s103 = sphi 0, %s105
    %s106 = sphi 0, %s103
    %s107 = sphi 0, %s106
    %s123 = sphi 0, %s107
    %s131 = sphi 0, %s133
    %s134 = sphi 0, %s131
    %s135 = sphi 0, %s134
    %s151 = sphi 0, %s135
  $region4: #{dense_block_forward.2} parent=0 // loop_header_branch
    %14 = sbr.rel (%p12) target = $region8
  $region5: #{dense_block_forward.2} parent=0 // loop_body
    %s16 = ssub.s32 %s11, 1
    %s17 = ssub.s32 %s11, 2
    %s24 = sadd.s32 1, %s19
    %p25 = scmp.ge.s32.totalorder %s24, 1
    %s26 = scalar_select %p25, 0, %s24
    %s27 = sadd.s32 1, %s18
    %s28 = scalar_select %p25, %s27, %s18
    %p29 = scmp.ge.s32.totalorder %s28, 2
    %s30 = scalar_select %p29, 0, %s28
    %s31 = ssub.s32 %s18, %s30
    %p32 = scmp.eq.s32.totalorder %s31, 0
    %s34 = sadd.s32 %s33, 1
    %s35 = scalar_select %p32, %s33, %s34
    %p38 = pneg %p32
    %p39 = scmp.eq.s32.totalorder %s11, 1
    %p40 = por %p38, %p39
    %p41 = scmp.ne.s32.totalorder %s33, %s36
    %p42 = scmp.eq.s32.totalorder %s11, 0
    %p43 = por %p41, %p42
    %p44 = scmp.ne.s32.totalorder %s33, %s36
    %p45 = scmp.eq.s32.totalorder %s16, 1
    %p46 = por %p44, %p45
    %p47 = scmp.ne.s32.totalorder %s36, %s37
    %p48 = scmp.eq.s32.totalorder %s16, 0
    %p49 = por %p47, %p48
    %p50 = scmp.ne.s32.totalorder %s36, %s37
    %p51 = scmp.eq.s32.totalorder %s17, 1
    %p52 = por %p50, %p51
    %p54 = scmp.ne.s32.totalorder %s37, %s53
    %p55 = scmp.eq.s32.totalorder %s17, 0
    %p56 = por %p54, %p55
    %s58 = sadd.s32 %s57, 1
    %p61 = scmp.eq.s32.totalorder %s11, 1
    %p62 = scmp.ne.s32.totalorder %s57, %s59
    %p63 = scmp.eq.s32.totalorder %s11, 0
    %p64 = por %p62, %p63
    %p65 = scmp.ne.s32.totalorder %s57, %s59
    %p66 = scmp.eq.s32.totalorder %s16, 1
    %p67 = por %p65, %p66
    %p68 = scmp.ne.s32.totalorder %s59, %s60
    %p69 = scmp.eq.s32.totalorder %s16, 0
    %p70 = por %p68, %p69
    %p71 = scmp.ne.s32.totalorder %s59, %s60
    %p72 = scmp.eq.s32.totalorder %s17, 1
    %p73 = por %p71, %p72
    %p75 = scmp.ne.s32.totalorder %s60, %s74
    %p76 = scmp.eq.s32.totalorder %s17, 0
    %p77 = por %p75, %p76
    %s79 = sadd.s32 %s78, 1
    %p82 = scmp.eq.s32.totalorder %s11, 1
    %p83 = scmp.ne.s32.totalorder %s78, %s80
    %p84 = scmp.eq.s32.totalorder %s11, 0
    %p85 = por %p83, %p84
    %p86 = scmp.ne.s32.totalorder %s78, %s80
    %p87 = scmp.eq.s32.totalorder %s16, 1
    %p88 = por %p86, %p87
    %p89 = scmp.ne.s32.totalorder %s80, %s81
    %p90 = scmp.eq.s32.totalorder %s16, 0
    %p91 = por %p89, %p90
    %p92 = scmp.ne.s32.totalorder %s80, %s81
    %p93 = scmp.eq.s32.totalorder %s17, 1
    %p94 = por %p92, %p93
    %p96 = scmp.ne.s32.totalorder %s81, %s95
    %p97 = scmp.eq.s32.totalorder %s17, 0
    %p98 = por %p96, %p97
    %s99 = ssub.s32 %s18, %s30
    %s100 = ssub.s32 %s19, %s26
    %s101 = sor.u32 %s99, %s100
    %p102 = scmp.eq.s32.totalorder %s101, 0
    %s104 = sadd.s32 %s103, 1
    %s105 = scalar_select %p102, %s103, %s104
    %p108 = pneg %p102
    %p109 = scmp.eq.s32.totalorder %s11, 1
    %p110 = por %p108, %p109
    %p111 = scmp.ne.s32.totalorder %s103, %s106
    %p112 = scmp.eq.s32.totalorder %s11, 0
    %p113 = por %p111, %p112
    %p114 = scmp.ne.s32.totalorder %s103, %s106
    %p115 = scmp.eq.s32.totalorder %s16, 1
    %p116 = por %p114, %p115
    %p117 = scmp.ne.s32.totalorder %s106, %s107
    %p118 = scmp.eq.s32.totalorder %s16, 0
    %p119 = por %p117, %p118
    %p120 = scmp.ne.s32.totalorder %s106, %s107
    %p121 = scmp.eq.s32.totalorder %s17, 1
    %p122 = por %p120, %p121
    %p124 = scmp.ne.s32.totalorder %s107, %s123
    %p125 = scmp.eq.s32.totalorder %s17, 0
    %p126 = por %p124, %p125
    %s127 = ssub.s32 %s18, %s30
    %s128 = ssub.s32 %s19, %s26
    %s129 = sor.u32 %s127, %s128
    %p130 = scmp.eq.s32.totalorder %s129, 0
    %s132 = sadd.s32 %s131, 1
    %s133 = scalar_select %p130, %s131, %s132
    %p136 = pneg %p130
    %p137 = scmp.eq.s32.totalorder %s11, 1
    %p138 = por %p136, %p137
    %p139 = scmp.ne.s32.totalorder %s131, %s134
    %p140 = scmp.eq.s32.totalorder %s11, 0
    %p141 = por %p139, %p140
    %p142 = scmp.ne.s32.totalorder %s131, %s134
    %p143 = scmp.eq.s32.totalorder %s16, 1
    %p144 = por %p142, %p143
    %p145 = scmp.ne.s32.totalorder %s134, %s135
    %p146 = scmp.eq.s32.totalorder %s16, 0
    %p147 = por %p145, %p146
    %p148 = scmp.ne.s32.totalorder %s134, %s135
    %p149 = scmp.eq.s32.totalorder %s17, 1
    %p150 = por %p148, %p149
    %p152 = scmp.ne.s32.totalorder %s135, %s151
    %p153 = scmp.eq.s32.totalorder %s17, 0
    %p154 = por %p152, %p153
    %p155 = scmp.le.s32.totalorder 1, %s11
    %p156 = scmp.lt.s32.totalorder %s11, 3
    %p157 = pnand %p155, %p156
    %p158 = pneg %p157
    // Predicated region
    $region9: #{dense_block_forward.2} parent=5 // pred_check
      _
    $region10: #{dense_block_forward.2} parent=5 // pred_check_branch
      %160 = sbr.rel (%p157) target = $region12
    $region11: #{dense_block_forward.2} parent=5 // pred_region
      %s161 = ssub.s32 %s11, 1
      // Predicated region
      $region13: #{dense_block_forward.2} parent=11 // pred_check
        %p162 = pneg %p70
      $region14: #{dense_block_forward.2} parent=11 // pred_check_branch
        %164 = sbr.rel (%p162) target = $region16
      $region15: #{dense_block_forward.2} parent=11 // pred_region
        _
      $region16: #{dense_block_forward.2} parent=11 // pred_fallthru
        _
      // Predicated region
      $region17: #{dense_block_forward.2} parent=11 // pred_check
        %p165 = pneg %p91
      $region18: #{dense_block_forward.2} parent=11 // pred_check_branch
        %167 = sbr.rel (%p165) target = $region20
      $region19: #{dense_block_forward.2} parent=11 // pred_region
        _
      $region20: #{dense_block_forward.2} parent=11 // pred_fallthru
        _
    $region12: #{dense_block_forward.2} parent=5 // pred_fallthru
      _
    %p168 = scmp.lt.s32.totalorder %s11, 2
    // Predicated region
    $region21: #{dense_block_forward.2} parent=5 // pred_check
      %p169 = pneg %p168
    $region22: #{dense_block_forward.2} parent=5 // pred_check_branch
      %171 = sbr.rel (%p169) target = $region24
    $region23: #{dense_block_forward.2} parent=5 // pred_region
      // Predicated region
      $region25: #{dense_block_forward.2} parent=23 // pred_check
        %p172 = pneg %p43
      $region26: #{dense_block_forward.2} parent=23 // pred_check_branch
        %174 = sbr.rel (%p172) target = $region28
      $region27: #{dense_block_forward.2} parent=23 // pred_region
        %p175 = scmp.lt.s32.totalorder %s18, 1
        %s176 = scalar_select %p175, %s18, 1
        %s177 = smul.addr %s176, 32
        %s178 = smul.addr %s177, 4
        %s179 = scalar_lea.vmem %s0, %s178
      $region28: #{dense_block_forward.2} parent=23 // pred_fallthru
        _
    $region24: #{dense_block_forward.2} parent=5 // pred_fallthru
      _
    %p180 = scmp.le.s32.totalorder 1, %s11
    %p181 = scmp.lt.s32.totalorder %s11, 3
    %p182 = pnand %p180, %p181
    %p183 = pneg %p182
    // Predicated region
    $region29: #{dense_block_forward.2} parent=5 // pred_check
      _
    $region30: #{dense_block_forward.2} parent=5 // pred_check_branch
      %185 = sbr.rel (%p182) target = $region32
    $region31: #{dense_block_forward.2} parent=5 // pred_region
      %s186 = ssub.s32 %s11, 1
      %p187 = scmp.lt.s32.totalorder %s20, 1
      %s188 = scalar_select %p187, %s20, 1
      %s189 = smul.addr %s188, 32
      %s190 = smul.addr %s189, 4
      %s191 = scalar_lea.vmem %s0, %s190
      %p192 = pneg %p49
      %p193 = pneg %p46
      %p194 = pneg %p70
      %p195 = pneg %p67
      %p196 = pneg %p91
      %p197 = pneg %p88
      %p198 = pneg %p119
      %p199 = pneg %p116
      %s200 = smul.u32 16, %s21
      %p201 = scmp.lt.s32.totalorder %s20, 1
      %s202 = scalar_select %p201, %s20, 1
      %p203 = scmp.lt.s32.totalorder %s200, 15
      %s204 = scalar_select %p203, %s200, 15
      %s205 = smul.addr %s204, 2
      %s206 = smul.addr %s202, 32
      %s207 = sadd.s32 %s205, %s206
      %s208 = smul.addr %s207, 4
      %s209 = scalar_lea.vmem %s3, %s208
      %p210 = pneg %p147
      %p211 = pneg %p144
      %p212 = scmp.lt.s32.totalorder %s20, 1
      %s213 = scalar_select %p212, %s20, 1
      %p214 = scmp.lt.s32.totalorder %s21, 0
      %s215 = scalar_select %p214, %s21, 0
      %s216 = sadd.s32 %s215, %s213
      %s217 = smul.addr %s216, 2
      %s218 = scalar_lea.vmem %s4, %s217
      %p219 = scmp.lt.s32.totalorder %s20, 1
      %s220 = scalar_select %p219, %s20, 1
      %s221 = smul.addr %s220, 32
      %s222 = smul.addr %s221, 4
      %s223 = scalar_lea.vmem %s0, %s222
      %s224 = smul.u32 16, %s21
      %p225 = scmp.lt.s32.totalorder %s20, 1
      %s226 = scalar_select %p225, %s20, 1
      %p227 = scmp.lt.s32.totalorder %s224, 15
      %s228 = scalar_select %p227, %s224, 15
      %s229 = smul.addr %s228, 2
      %s230 = smul.addr %s226, 32
      %s231 = sadd.s32 %s229, %s230
      %s232 = smul.addr %s231, 4
      %s233 = scalar_lea.vmem %s3, %s232
      %s234 = smul.u32 16, %s21
      %p235 = scmp.lt.s32.totalorder %s20, 1
      %s236 = scalar_select %p235, %s20, 1
      %p237 = scmp.lt.s32.totalorder %s21, 0
      %s238 = scalar_select %p237, %s21, 0
      %s239 = sadd.s32 %s238, %s236
      %s240 = smul.addr %s239, 2
      %s241 = scalar_lea.vmem %s4, %s240
      %s243 = smul.u32 %s21, 16
      %v244 = vld [vmem:[%s1] sm:$0x1]
      %v245 = vld [vmem:[%s1 + $0x1] sm:$0x1]
      %v246 = vld [vmem:[%s1 + $0x2] sm:$0x1]
      %s247 = smul.u32 %s243, 2
      %s248 = smul.addr %s247, 4
      %s249 = scalar_lea.vmem %s223, %s248
      %v250 = vld [vmem:[%s249] sm:$0xf]
      %v251 = vld [vmem:[%s249 + $0x4] sm:$0xf]
      %v252 = vld [vmem:[%s249 + $0x8] sm:$0xf]
      %v253 = vld [vmem:[%s249 + $0xc] sm:$0xf]
      %v254 = vld [vmem:[%s249 + $0x10] sm:$0xf]
      %v255 = vld [vmem:[%s249 + $0x14] sm:$0xf]
      %v256 = vld [vmem:[%s249 + $0x18] sm:$0xf]
      %v257 = vld [vmem:[%s249 + $0x1c] sm:$0xf]
      %v258 = vld [vmem:[%s249 + $0x20] sm:$0xf]
      %v259 = vld [vmem:[%s249 + $0x24] sm:$0xf]
      %v260 = vld [vmem:[%s249 + $0x28] sm:$0xf]
      %v261 = vld [vmem:[%s249 + $0x2c] sm:$0xf]
      %v262 = vld [vmem:[%s249 + $0x30] sm:$0xf]
      %v263 = vld [vmem:[%s249 + $0x34] sm:$0xf]
      %v264 = vld [vmem:[%s249 + $0x38] sm:$0xf]
      %v265 = vld [vmem:[%s249 + $0x3c] sm:$0xf]
      %v266 = vld [vmem:[%s249 + $0x40] sm:$0xf]
      %v267 = vld [vmem:[%s249 + $0x44] sm:$0xf]
      %v268 = vld [vmem:[%s249 + $0x48] sm:$0xf]
      %v269 = vld [vmem:[%s249 + $0x4c] sm:$0xf]
      %v270 = vld [vmem:[%s249 + $0x50] sm:$0xf]
      %v271 = vld [vmem:[%s249 + $0x54] sm:$0xf]
      %v272 = vld [vmem:[%s249 + $0x58] sm:$0xf]
      %v273 = vld [vmem:[%s249 + $0x5c] sm:$0xf]
      %v274 = vld [vmem:[%s249 + $0x60] sm:$0xf]
      %v275 = vld [vmem:[%s249 + $0x64] sm:$0xf]
      %v276 = vld [vmem:[%s249 + $0x68] sm:$0xf]
      %v277 = vld [vmem:[%s249 + $0x6c] sm:$0xf]
      %v278 = vld [vmem:[%s249 + $0x70] sm:$0xf]
      %v279 = vld [vmem:[%s249 + $0x74] sm:$0xf]
      %v280 = vld [vmem:[%s249 + $0x78] sm:$0xf]
      %v281 = vld [vmem:[%s249 + $0x7c] sm:$0xf]
      %282 = vst [vmem:[#allocation2] sm:$0xf] 0
      %283 = vst [vmem:[#allocation2 + $0x4] sm:$0xf] 0
      %284 = vst [vmem:[#allocation2 + $0x8] sm:$0x1] 0
      %285 = vst [vmem:[#allocation2 + $0xc] sm:$0xf] 0
      %286 = vst [vmem:[#allocation2 + $0x10] sm:$0xf] 0
      %287 = vst [vmem:[#allocation2 + $0x14] sm:$0x1] 0
      %288 = vst [vmem:[#allocation2 + $0x18] sm:$0xf] 0
      %289 = vst [vmem:[#allocation2 + $0x1c] sm:$0xf] 0
      %290 = vst [vmem:[#allocation2 + $0x20] sm:$0x1] 0
      %291 = vst [vmem:[#allocation2 + $0x24] sm:$0xf] 0
      %292 = vst [vmem:[#allocation2 + $0x28] sm:$0xf] 0
      %293 = vst [vmem:[#allocation2 + $0x2c] sm:$0x1] 0
      %294 = vst [vmem:[#allocation2 + $0x30] sm:$0xf] 0
      %295 = vst [vmem:[#allocation2 + $0x34] sm:$0xf] 0
      %296 = vst [vmem:[#allocation2 + $0x38] sm:$0x1] 0
      %297 = vst [vmem:[#allocation2 + $0x3c] sm:$0xf] 0
      %298 = vst [vmem:[#allocation2 + $0x40] sm:$0xf] 0
      %299 = vst [vmem:[#allocation2 + $0x44] sm:$0x1] 0
      %300 = vst [vmem:[#allocation2 + $0x48] sm:$0xf] 0
      %301 = vst [vmem:[#allocation2 + $0x4c] sm:$0xf] 0
      %302 = vst [vmem:[#allocation2 + $0x50] sm:$0x1] 0
      %303 = vst [vmem:[#allocation2 + $0x54] sm:$0xf] 0
      %304 = vst [vmem:[#allocation2 + $0x58] sm:$0xf] 0
      %305 = vst [vmem:[#allocation2 + $0x5c] sm:$0x1] 0
      %306 = vst [vmem:[#allocation2 + $0x60] sm:$0xf] 0
      %307 = vst [vmem:[#allocation2 + $0x64] sm:$0xf] 0
      %308 = vst [vmem:[#allocation2 + $0x68] sm:$0x1] 0
      %309 = vst [vmem:[#allocation2 + $0x6c] sm:$0xf] 0
      %310 = vst [vmem:[#allocation2 + $0x70] sm:$0xf] 0
      %311 = vst [vmem:[#allocation2 + $0x74] sm:$0x1] 0
      %312 = vst [vmem:[#allocation2 + $0x78] sm:$0xf] 0
      %313 = vst [vmem:[#allocation2 + $0x7c] sm:$0xf] 0
      %314 = vst [vmem:[#allocation2 + $0x80] sm:$0x1] 0
      %315 = vst [vmem:[#allocation2 + $0x84] sm:$0xf] 0
      %316 = vst [vmem:[#allocation2 + $0x88] sm:$0xf] 0
      %317 = vst [vmem:[#allocation2 + $0x8c] sm:$0x1] 0
      %318 = vst [vmem:[#allocation2 + $0x90] sm:$0xf] 0
      %319 = vst [vmem:[#allocation2 + $0x94] sm:$0xf] 0
      %320 = vst [vmem:[#allocation2 + $0x98] sm:$0x1] 0
      %321 = vst [vmem:[#allocation2 + $0x9c] sm:$0xf] 0
      %322 = vst [vmem:[#allocation2 + $0xa0] sm:$0xf] 0
      %323 = vst [vmem:[#allocation2 + $0xa4] sm:$0x1] 0
      %324 = vst [vmem:[#allocation2 + $0xa8] sm:$0xf] 0
      %325 = vst [vmem:[#allocation2 + $0xac] sm:$0xf] 0
      %326 = vst [vmem:[#allocation2 + $0xb0] sm:$0x1] 0
      %327 = vst [vmem:[#allocation2 + $0xb4] sm:$0xf] 0
      %328 = vst [vmem:[#allocation2 + $0xb8] sm:$0xf] 0
      %329 = vst [vmem:[#allocation2 + $0xbc] sm:$0x1] 0
      %330 = vst [vmem:[#allocation2 + $0xc0] sm:$0xf] 0
      %331 = vst [vmem:[#allocation2 + $0xc4] sm:$0xf] 0
      %332 = vst [vmem:[#allocation2 + $0xc8] sm:$0x1] 0
      %333 = vst [vmem:[#allocation2 + $0xcc] sm:$0xf] 0
      %334 = vst [vmem:[#allocation2 + $0xd0] sm:$0xf] 0
      %335 = vst [vmem:[#allocation2 + $0xd4] sm:$0x1] 0
      %v336 = vunpack.c.l.bf16 %v250
      %v337 = vunpack.c.l.bf16 %v251
      %v338 = vunpack.c.l.bf16 %v252
      %v339 = vunpack.c.l.bf16 %v253
      %v340 = vunpack.c.l.bf16 %v254
      %v341 = vunpack.c.l.bf16 %v255
      %v342 = vunpack.c.l.bf16 %v256
      %v343 = vunpack.c.l.bf16 %v257
      %v344 = vunpack.c.l.bf16 %v258
      %v345 = vunpack.c.l.bf16 %v259
      %v346 = vunpack.c.l.bf16 %v260
      %v347 = vunpack.c.l.bf16 %v261
      %v348 = vunpack.c.l.bf16 %v262
      %v349 = vunpack.c.l.bf16 %v263
      %v350 = vunpack.c.l.bf16 %v264
      %v351 = vunpack.c.l.bf16 %v265
      %v352 = vunpack.c.l.bf16 %v266
      %v353 = vunpack.c.l.bf16 %v267
      %v354 = vunpack.c.l.bf16 %v268
      %v355 = vunpack.c.l.bf16 %v269
      %v356 = vunpack.c.l.bf16 %v270
      %v357 = vunpack.c.l.bf16 %v271
      %v358 = vunpack.c.l.bf16 %v272
      %v359 = vunpack.c.l.bf16 %v273
      %v360 = vunpack.c.l.bf16 %v274
      %v361 = vunpack.c.l.bf16 %v275
      %v362 = vunpack.c.l.bf16 %v276
      %v363 = vunpack.c.l.bf16 %v277
      %v364 = vunpack.c.l.bf16 %v278
      %v365 = vunpack.c.l.bf16 %v279
      %v366 = vunpack.c.l.bf16 %v280
      %v367 = vunpack.c.l.bf16 %v281
      %v368 = vlaneseq
      %v369 = vshrl.u32 %v368, 7
      %v370 = vsub.s32 0, %v369
      %v371 = vrot.slane %v244, %v370
      %v372 = vmul.f32 %v336, %v371
      %v373 = vmul.f32 %v337, %v371
      %v374 = vmul.f32 %v338, %v371
      %v375 = vmul.f32 %v339, %v371
      %v376 = vmul.f32 %v340, %v371
      %v377 = vmul.f32 %v341, %v371
      %v378 = vmul.f32 %v342, %v371
      %v379 = vmul.f32 %v343, %v371
      %v380 = vmul.f32 %v344, %v371
      %v381 = vmul.f32 %v345, %v371
      %v382 = vmul.f32 %v346, %v371
      %v383 = vmul.f32 %v347, %v371
      %v384 = vmul.f32 %v348, %v371
      %v385 = vmul.f32 %v349, %v371
      %v386 = vmul.f32 %v350, %v371
      %v387 = vmul.f32 %v351, %v371
      %v388 = vmul.f32 %v352, %v371
      %v389 = vmul.f32 %v353, %v371
      %v390 = vmul.f32 %v354, %v371
      %v391 = vmul.f32 %v355, %v371
      %v392 = vmul.f32 %v356, %v371
      %v393 = vmul.f32 %v357, %v371
      %v394 = vmul.f32 %v358, %v371
      %v395 = vmul.f32 %v359, %v371
      %v396 = vmul.f32 %v360, %v371
      %v397 = vmul.f32 %v361, %v371
      %v398 = vmul.f32 %v362, %v371
      %v399 = vmul.f32 %v363, %v371
      %v400 = vmul.f32 %v364, %v371
      %v401 = vmul.f32 %v365, %v371
      %v402 = vmul.f32 %v366, %v371
      %v403 = vmul.f32 %v367, %v371
      %v404 = vlaneseq
      %v405 = vshrl.u32 %v404, 7
      %v406 = vsub.s32 0, %v405
      %v407 = vrot.slane %v245, %v406
      %v408 = vadd.f32 %v372, %v407
      %v409 = vadd.f32 %v373, %v407
      %v410 = vadd.f32 %v374, %v407
      %v411 = vadd.f32 %v375, %v407
      %v412 = vadd.f32 %v376, %v407
      %v413 = vadd.f32 %v377, %v407
      %v414 = vadd.f32 %v378, %v407
      %v415 = vadd.f32 %v379, %v407
      %v416 = vadd.f32 %v380, %v407
      %v417 = vadd.f32 %v381, %v407
      %v418 = vadd.f32 %v382, %v407
      %v419 = vadd.f32 %v383, %v407
      %v420 = vadd.f32 %v384, %v407
      %v421 = vadd.f32 %v385, %v407
      %v422 = vadd.f32 %v386, %v407
      %v423 = vadd.f32 %v387, %v407
      %v424 = vadd.f32 %v388, %v407
      %v425 = vadd.f32 %v389, %v407
      %v426 = vadd.f32 %v390, %v407
      %v427 = vadd.f32 %v391, %v407
      %v428 = vadd.f32 %v392, %v407
      %v429 = vadd.f32 %v393, %v407
      %v430 = vadd.f32 %v394, %v407
      %v431 = vadd.f32 %v395, %v407
      %v432 = vadd.f32 %v396, %v407
      %v433 = vadd.f32 %v397, %v407
      %v434 = vadd.f32 %v398, %v407
      %v435 = vadd.f32 %v399, %v407
      %v436 = vadd.f32 %v400, %v407
      %v437 = vadd.f32 %v401, %v407
      %v438 = vadd.f32 %v402, %v407
      %v439 = vadd.f32 %v403, %v407
      %v440 = vmax.f32 %v408, 0.0
      %v441 = vmax.f32 %v409, 0.0
      %v442 = vmax.f32 %v410, 0.0
      %v443 = vmax.f32 %v411, 0.0
      %v444 = vmax.f32 %v412, 0.0
      %v445 = vmax.f32 %v413, 0.0
      %v446 = vmax.f32 %v414, 0.0
      %v447 = vmax.f32 %v415, 0.0
      %v448 = vmax.f32 %v416, 0.0
      %v449 = vmax.f32 %v417, 0.0
      %v450 = vmax.f32 %v418, 0.0
      %v451 = vmax.f32 %v419, 0.0
      %v452 = vmax.f32 %v420, 0.0
      %v453 = vmax.f32 %v421, 0.0
      %v454 = vmax.f32 %v422, 0.0
      %v455 = vmax.f32 %v423, 0.0
      %v456 = vmax.f32 %v424, 0.0
      %v457 = vmax.f32 %v425, 0.0
      %v458 = vmax.f32 %v426, 0.0
      %v459 = vmax.f32 %v427, 0.0
      %v460 = vmax.f32 %v428, 0.0
      %v461 = vmax.f32 %v429, 0.0
      %v462 = vmax.f32 %v430, 0.0
      %v463 = vmax.f32 %v431, 0.0
      %v464 = vmax.f32 %v432, 0.0
      %v465 = vmax.f32 %v433, 0.0
      %v466 = vmax.f32 %v434, 0.0
      %v467 = vmax.f32 %v435, 0.0
      %v468 = vmax.f32 %v436, 0.0
      %v469 = vmax.f32 %v437, 0.0
      %v470 = vmax.f32 %v438, 0.0
      %v471 = vmax.f32 %v439, 0.0
      %v472 = vpack.c.bf16 %v441, %v440
      %v473 = vpack.c.bf16 %v443, %v442
      %v474 = vpack.c.bf16 %v445, %v444
      %v475 = vpack.c.bf16 %v447, %v446
      %v476 = vpack.c.bf16 %v449, %v448
      %v477 = vpack.c.bf16 %v451, %v450
      %v478 = vpack.c.bf16 %v453, %v452
      %v479 = vpack.c.bf16 %v455, %v454
      %v480 = vpack.c.bf16 %v457, %v456
      %v481 = vpack.c.bf16 %v459, %v458
      %v482 = vpack.c.bf16 %v461, %v460
      %v483 = vpack.c.bf16 %v463, %v462
      %v484 = vpack.c.bf16 %v465, %v464
      %v485 = vpack.c.bf16 %v467, %v466
      %v486 = vpack.c.bf16 %v469, %v468
      %v487 = vpack.c.bf16 %v471, %v470
      %v504 = vunpack.c.l.b16 %v472
      %v505 = vunpack.c.h.b16 %v472
      %v506 = vunpack.c.l.b16 %v473
      %v507 = vunpack.c.h.b16 %v473
      %v508 = vunpack.c.l.b16 %v474
      %v509 = vunpack.c.h.b16 %v474
      %v510 = vunpack.c.l.b16 %v475
      %v511 = vunpack.c.h.b16 %v475
      %v512 = vunpack.c.l.b16 %v476
      %v513 = vunpack.c.h.b16 %v476
      %v514 = vunpack.c.l.b16 %v477
      %v515 = vunpack.c.h.b16 %v477
      %v516 = vunpack.c.l.b16 %v478
      %v517 = vunpack.c.h.b16 %v478
      %v518 = vunpack.c.l.b16 %v479
      %v519 = vunpack.c.h.b16 %v479
      %v520 = vunpack.c.l.b16 %v480
      %v521 = vunpack.c.h.b16 %v480
      %v522 = vunpack.c.l.b16 %v481
      %v523 = vunpack.c.h.b16 %v481
      %v524 = vunpack.c.l.b16 %v482
      %v525 = vunpack.c.h.b16 %v482
      %v526 = vunpack.c.l.b16 %v483
      %v527 = vunpack.c.h.b16 %v483
      %v528 = vunpack.c.l.b16 %v484
      %v529 = vunpack.c.h.b16 %v484
      %v530 = vunpack.c.l.b16 %v485
      %v531 = vunpack.c.h.b16 %v485
      %v532 = vunpack.c.l.b16 %v486
      %v533 = vunpack.c.h.b16 %v486
      %v534 = vunpack.c.l.b16 %v487
      %v535 = vunpack.c.h.b16 %v487
      %v536 = vpack.c.b16 %v504, %v504
      %v537 = vpack.c.b16 %v505, %v505
      %v538 = vpack.c.b16 %v506, %v506
      %v539 = vpack.c.b16 %v507, %v507
      %v540 = vpack.c.b16 %v508, %v508
      %v541 = vpack.c.b16 %v509, %v509
      %v542 = vpack.c.b16 %v510, %v510
      %v543 = vpack.c.b16 %v511, %v511
      %v544 = vpack.c.b16 %v512, %v512
      %v545 = vpack.c.b16 %v513, %v513
      %v546 = vpack.c.b16 %v514, %v514
      %v547 = vpack.c.b16 %v515, %v515
      %v548 = vpack.c.b16 %v516, %v516
      %v549 = vpack.c.b16 %v517, %v517
      %v550 = vpack.c.b16 %v518, %v518
      %v551 = vpack.c.b16 %v519, %v519
      %v552 = vpack.c.b16 %v520, %v520
      %v553 = vpack.c.b16 %v521, %v521
      %v554 = vpack.c.b16 %v522, %v522
      %v555 = vpack.c.b16 %v523, %v523
      %v556 = vpack.c.b16 %v524, %v524
      %v557 = vpack.c.b16 %v525, %v525
      %v558 = vpack.c.b16 %v526, %v526
      %v559 = vpack.c.b16 %v527, %v527
      %v560 = vpack.c.b16 %v528, %v528
      %v561 = vpack.c.b16 %v529, %v529
      %v562 = vpack.c.b16 %v530, %v530
      %v563 = vpack.c.b16 %v531, %v531
      %v564 = vpack.c.b16 %v532, %v532
      %v565 = vpack.c.b16 %v533, %v533
      %v566 = vpack.c.b16 %v534, %v534
      %v567 = vpack.c.b16 %v535, %v535
      %vm568 = vsmask.f32 256
      %vm569 = vsmask.f32 4368
      %vm570 = vmor %vm568, %vm569
      %v572 = vshrl.u32 %v536, 16
      %v574 = vrot.slane %v572, 7
      %v575 = vshll.u32 %v536, 16
      %v577 = vor.u32 %v574, %v575
      %v578 = vrot.slane %v574, 4
      %v580 = vshrl.u32 %v537, 16
      %v582 = vrot.slane %v580, 7
      %v583 = vshll.u32 %v537, 16
      %v585 = vor.u32 %v582, %v583
      %v586 = vsel %vm570, %v578, %v585
      %v587 = vrot.slane %v582, 4
      %v589 = vshrl.u32 %v538, 16
      %v591 = vrot.slane %v589, 7
      %v592 = vshll.u32 %v538, 16
      %v594 = vor.u32 %v591, %v592
      %v595 = vrot.slane %v591, 4
      %v597 = vshrl.u32 %v539, 16
      %v599 = vrot.slane %v597, 7
      %v600 = vshll.u32 %v539, 16
      %v602 = vor.u32 %v599, %v600
      %v603 = vsel %vm570, %v595, %v602
      %v604 = vrot.slane %v599, 4
      %v606 = vshrl.u32 %v540, 16
      %v608 = vrot.slane %v606, 7
      %v609 = vshll.u32 %v540, 16
      %v611 = vor.u32 %v608, %v609
      %v612 = vrot.slane %v608, 4
      %v614 = vshrl.u32 %v541, 16
      %v616 = vrot.slane %v614, 7
      %v617 = vshll.u32 %v541, 16
      %v619 = vor.u32 %v616, %v617
      %v620 = vsel %vm570, %v612, %v619
      %v621 = vrot.slane %v616, 4
      %v623 = vshrl.u32 %v542, 16
      %v625 = vrot.slane %v623, 7
      %v626 = vshll.u32 %v542, 16
      %v628 = vor.u32 %v625, %v626
      %v629 = vrot.slane %v625, 4
      %v631 = vshrl.u32 %v543, 16
      %v633 = vrot.slane %v631, 7
      %v634 = vshll.u32 %v543, 16
      %v636 = vor.u32 %v633, %v634
      %v637 = vsel %vm570, %v629, %v636
      %v638 = vrot.slane %v633, 4
      %v640 = vshrl.u32 %v544, 16
      %v642 = vrot.slane %v640, 7
      %v643 = vshll.u32 %v544, 16
      %v645 = vor.u32 %v642, %v643
      %v646 = vrot.slane %v642, 4
      %v648 = vshrl.u32 %v545, 16
      %v650 = vrot.slane %v648, 7
      %v651 = vshll.u32 %v545, 16
      %v653 = vor.u32 %v650, %v651
      %v654 = vsel %vm570, %v646, %v653
      %v655 = vrot.slane %v650, 4
      %v657 = vshrl.u32 %v546, 16
      %v659 = vrot.slane %v657, 7
      %v660 = vshll.u32 %v546, 16
      %v662 = vor.u32 %v659, %v660
      %v663 = vrot.slane %v659, 4
      %v665 = vshrl.u32 %v547, 16
      %v667 = vrot.slane %v665, 7
      %v668 = vshll.u32 %v547, 16
      %v670 = vor.u32 %v667, %v668
      %v671 = vsel %vm570, %v663, %v670
      %v672 = vrot.slane %v667, 4
      %v674 = vshrl.u32 %v548, 16
      %v676 = vrot.slane %v674, 7
      %v677 = vshll.u32 %v548, 16
      %v679 = vor.u32 %v676, %v677
      %v680 = vrot.slane %v676, 4
      %v682 = vshrl.u32 %v549, 16
      %v684 = vrot.slane %v682, 7
      %v685 = vshll.u32 %v549, 16
      %v687 = vor.u32 %v684, %v685
      %v688 = vsel %vm570, %v680, %v687
      %v689 = vrot.slane %v684, 4
      %v691 = vshrl.u32 %v550, 16
      %v693 = vrot.slane %v691, 7
      %v694 = vshll.u32 %v550, 16
      %v696 = vor.u32 %v693, %v694
      %v697 = vrot.slane %v693, 4
      %v699 = vshrl.u32 %v551, 16
      %v701 = vrot.slane %v699, 7
      %v702 = vshll.u32 %v551, 16
      %v704 = vor.u32 %v701, %v702
      %v705 = vsel %vm570, %v697, %v704
      %v706 = vrot.slane %v701, 4
      %v708 = vshrl.u32 %v552, 16
      %v710 = vrot.slane %v708, 7
      %v711 = vshll.u32 %v552, 16
      %v713 = vor.u32 %v710, %v711
      %v714 = vrot.slane %v710, 4
      %v716 = vshrl.u32 %v553, 16
      %v718 = vrot.slane %v716, 7
      %v719 = vshll.u32 %v553, 16
      %v721 = vor.u32 %v718, %v719
      %v722 = vsel %vm570, %v714, %v721
      %v723 = vrot.slane %v718, 4
      %v725 = vshrl.u32 %v554, 16
      %v727 = vrot.slane %v725, 7
      %v728 = vshll.u32 %v554, 16
      %v730 = vor.u32 %v727, %v728
      %v731 = vrot.slane %v727, 4
      %v733 = vshrl.u32 %v555, 16
      %v735 = vrot.slane %v733, 7
      %v736 = vshll.u32 %v555, 16
      %v738 = vor.u32 %v735, %v736
      %v739 = vsel %vm570, %v731, %v738
      %v740 = vrot.slane %v735, 4
      %v742 = vshrl.u32 %v556, 16
      %v744 = vrot.slane %v742, 7
      %v745 = vshll.u32 %v556, 16
      %v747 = vor.u32 %v744, %v745
      %v748 = vrot.slane %v744, 4
      %v750 = vshrl.u32 %v557, 16
      %v752 = vrot.slane %v750, 7
      %v753 = vshll.u32 %v557, 16
      %v755 = vor.u32 %v752, %v753
      %v756 = vsel %vm570, %v748, %v755
      %v757 = vrot.slane %v752, 4
      %v759 = vshrl.u32 %v558, 16
      %v761 = vrot.slane %v759, 7
      %v762 = vshll.u32 %v558, 16
      %v764 = vor.u32 %v761, %v762
      %v765 = vrot.slane %v761, 4
      %v767 = vshrl.u32 %v559, 16
      %v769 = vrot.slane %v767, 7
      %v770 = vshll.u32 %v559, 16
      %v772 = vor.u32 %v769, %v770
      %v773 = vsel %vm570, %v765, %v772
      %v774 = vrot.slane %v769, 4
      %v776 = vshrl.u32 %v560, 16
      %v778 = vrot.slane %v776, 7
      %v779 = vshll.u32 %v560, 16
      %v781 = vor.u32 %v778, %v779
      %v782 = vrot.slane %v778, 4
      %v784 = vshrl.u32 %v561, 16
      %v786 = vrot.slane %v784, 7
      %v787 = vshll.u32 %v561, 16
      %v789 = vor.u32 %v786, %v787
      %v790 = vsel %vm570, %v782, %v789
      %v791 = vrot.slane %v786, 4
      %v793 = vshrl.u32 %v562, 16
      %v795 = vrot.slane %v793, 7
      %v796 = vshll.u32 %v562, 16
      %v798 = vor.u32 %v795, %v796
      %v799 = vrot.slane %v795, 4
      %v801 = vshrl.u32 %v563, 16
      %v803 = vrot.slane %v801, 7
      %v804 = vshll.u32 %v563, 16
      %v806 = vor.u32 %v803, %v804
      %v807 = vsel %vm570, %v799, %v806
      %v808 = vrot.slane %v803, 4
      %v810 = vshrl.u32 %v564, 16
      %v812 = vrot.slane %v810, 7
      %v813 = vshll.u32 %v564, 16
      %v815 = vor.u32 %v812, %v813
      %v816 = vrot.slane %v812, 4
      %v818 = vshrl.u32 %v565, 16
      %v820 = vrot.slane %v818, 7
      %v821 = vshll.u32 %v565, 16
      %v823 = vor.u32 %v820, %v821
      %v824 = vsel %vm570, %v816, %v823
      %v825 = vrot.slane %v820, 4
      %v827 = vshrl.u32 %v566, 16
      %v829 = vrot.slane %v827, 7
      %v830 = vshll.u32 %v566, 16
      %v832 = vor.u32 %v829, %v830
      %v833 = vrot.slane %v829, 4
      %v835 = vshrl.u32 %v567, 16
      %v837 = vrot.slane %v835, 7
      %v838 = vshll.u32 %v567, 16
      %v840 = vor.u32 %v837, %v838
      %v841 = vsel %vm570, %v833, %v840
      %v842 = vrot.slane %v837, 4
      %s891 = scalar_lea.vmem [#allocation2], 12
      %vm892 = vcmask 1043456
      %vm893 = vsmask.f32 7938
      %vm894 = vmand %vm892, %vm893
      %v895 = vld [vmem:[%s891] sm:$0xf]
      %v896 = vsel %vm894, %v577, %v895
      %897 = vst [vmem:[%s891] sm:$0xf] %v896
      %898 = vst [vmem:[%s891 + $0x4] sm:$0xf] %v586
      %vm899 = vcmask 1040384
      %vm900 = vmand %vm899, %vm568
      %v901 = vld [vmem:[%s891 + $0x8] sm:$0x1]
      %v902 = vsel %vm900, %v587, %v901
      %903 = vst [vmem:[%s891 + $0x8] sm:$0x1] %v902
      %v904 = vld [vmem:[%s891 + $0xc] sm:$0xf]
      %v905 = vsel %vm894, %v594, %v904
      %906 = vst [vmem:[%s891 + $0xc] sm:$0xf] %v905
      %907 = vst [vmem:[%s891 + $0x10] sm:$0xf] %v603
      %v908 = vld [vmem:[%s891 + $0x14] sm:$0x1]
      %v909 = vsel %vm900, %v604, %v908
      %910 = vst [vmem:[%s891 + $0x14] sm:$0x1] %v909
      %v911 = vld [vmem:[%s891 + $0x18] sm:$0xf]
      %v912 = vsel %vm894, %v611, %v911
      %913 = vst [vmem:[%s891 + $0x18] sm:$0xf] %v912
      %914 = vst [vmem:[%s891 + $0x1c] sm:$0xf] %v620
      %v915 = vld [vmem:[%s891 + $0x20] sm:$0x1]
      %v916 = vsel %vm900, %v621, %v915
      %917 = vst [vmem:[%s891 + $0x20] sm:$0x1] %v916
      %v918 = vld [vmem:[%s891 + $0x24] sm:$0xf]
      %v919 = vsel %vm894, %v628, %v918
      %920 = vst [vmem:[%s891 + $0x24] sm:$0xf] %v919
      %921 = vst [vmem:[%s891 + $0x28] sm:$0xf] %v637
      %v922 = vld [vmem:[%s891 + $0x2c] sm:$0x1]
      %v923 = vsel %vm900, %v638, %v922
      %924 = vst [vmem:[%s891 + $0x2c] sm:$0x1] %v923
      %v925 = vld [vmem:[%s891 + $0x30] sm:$0xf]
      %v926 = vsel %vm894, %v645, %v925
      %927 = vst [vmem:[%s891 + $0x30] sm:$0xf] %v926
      %928 = vst [vmem:[%s891 + $0x34] sm:$0xf] %v654
      %v929 = vld [vmem:[%s891 + $0x38] sm:$0x1]
      %v930 = vsel %vm900, %v655, %v929
      %931 = vst [vmem:[%s891 + $0x38] sm:$0x1] %v930
      %v932 = vld [vmem:[%s891 + $0x3c] sm:$0xf]
      %v933 = vsel %vm894, %v662, %v932
      %934 = vst [vmem:[%s891 + $0x3c] sm:$0xf] %v933
      %935 = vst [vmem:[%s891 + $0x40] sm:$0xf] %v671
      %v936 = vld [vmem:[%s891 + $0x44] sm:$0x1]
      %v937 = vsel %vm900, %v672, %v936
      %938 = vst [vmem:[%s891 + $0x44] sm:$0x1] %v937
      %v939 = vld [vmem:[%s891 + $0x48] sm:$0xf]
      %v940 = vsel %vm894, %v679, %v939
      %941 = vst [vmem:[%s891 + $0x48] sm:$0xf] %v940
      %942 = vst [vmem:[%s891 + $0x4c] sm:$0xf] %v688
      %v943 = vld [vmem:[%s891 + $0x50] sm:$0x1]
      %v944 = vsel %vm900, %v689, %v943
      %945 = vst [vmem:[%s891 + $0x50] sm:$0x1] %v944
      %v946 = vld [vmem:[%s891 + $0x54] sm:$0xf]
      %v947 = vsel %vm894, %v696, %v946
      %948 = vst [vmem:[%s891 + $0x54] sm:$0xf] %v947
      %949 = vst [vmem:[%s891 + $0x58] sm:$0xf] %v705
      %v950 = vld [vmem:[%s891 + $0x5c] sm:$0x1]
      %v951 = vsel %vm900, %v706, %v950
      %952 = vst [vmem:[%s891 + $0x5c] sm:$0x1] %v951
      %v953 = vld [vmem:[%s891 + $0x60] sm:$0xf]
      %v954 = vsel %vm894, %v713, %v953
      %955 = vst [vmem:[%s891 + $0x60] sm:$0xf] %v954
      %956 = vst [vmem:[%s891 + $0x64] sm:$0xf] %v722
      %v957 = vld [vmem:[%s891 + $0x68] sm:$0x1]
      %v958 = vsel %vm900, %v723, %v957
      %959 = vst [vmem:[%s891 + $0x68] sm:$0x1] %v958
      %v960 = vld [vmem:[%s891 + $0x6c] sm:$0xf]
      %v961 = vsel %vm894, %v730, %v960
      %962 = vst [vmem:[%s891 + $0x6c] sm:$0xf] %v961
      %963 = vst [vmem:[%s891 + $0x70] sm:$0xf] %v739
      %v964 = vld [vmem:[%s891 + $0x74] sm:$0x1]
      %v965 = vsel %vm900, %v740, %v964
      %966 = vst [vmem:[%s891 + $0x74] sm:$0x1] %v965
      %v967 = vld [vmem:[%s891 + $0x78] sm:$0xf]
      %v968 = vsel %vm894, %v747, %v967
      %969 = vst [vmem:[%s891 + $0x78] sm:$0xf] %v968
      %970 = vst [vmem:[%s891 + $0x7c] sm:$0xf] %v756
      %v971 = vld [vmem:[%s891 + $0x80] sm:$0x1]
      %v972 = vsel %vm900, %v757, %v971
      %973 = vst [vmem:[%s891 + $0x80] sm:$0x1] %v972
      %v974 = vld [vmem:[%s891 + $0x84] sm:$0xf]
      %v975 = vsel %vm894, %v764, %v974
      %976 = vst [vmem:[%s891 + $0x84] sm:$0xf] %v975
      %977 = vst [vmem:[%s891 + $0x88] sm:$0xf] %v773
      %v978 = vld [vmem:[%s891 + $0x8c] sm:$0x1]
      %v979 = vsel %vm900, %v774, %v978
      %980 = vst [vmem:[%s891 + $0x8c] sm:$0x1] %v979
      %v981 = vld [vmem:[%s891 + $0x90] sm:$0xf]
      %v982 = vsel %vm894, %v781, %v981
      %983 = vst [vmem:[%s891 + $0x90] sm:$0xf] %v982
      %984 = vst [vmem:[%s891 + $0x94] sm:$0xf] %v790
      %v985 = vld [vmem:[%s891 + $0x98] sm:$0x1]
      %v986 = vsel %vm900, %v791, %v985
      %987 = vst [vmem:[%s891 + $0x98] sm:$0x1] %v986
      %v988 = vld [vmem:[%s891 + $0x9c] sm:$0xf]
      %v989 = vsel %vm894, %v798, %v988
      %990 = vst [vmem:[%s891 + $0x9c] sm:$0xf] %v989
      %991 = vst [vmem:[%s891 + $0xa0] sm:$0xf] %v807
      %v992 = vld [vmem:[%s891 + $0xa4] sm:$0x1]
      %v993 = vsel %vm900, %v808, %v992
      %994 = vst [vmem:[%s891 + $0xa4] sm:$0x1] %v993
      %v995 = vld [vmem:[%s891 + $0xa8] sm:$0xf]
      %v996 = vsel %vm894, %v815, %v995
      %997 = vst [vmem:[%s891 + $0xa8] sm:$0xf] %v996
      %998 = vst [vmem:[%s891 + $0xac] sm:$0xf] %v824
      %v999 = vld [vmem:[%s891 + $0xb0] sm:$0x1]
      %v1000 = vsel %vm900, %v825, %v999
      %1001 = vst [vmem:[%s891 + $0xb0] sm:$0x1] %v1000
      %v1002 = vld [vmem:[%s891 + $0xb4] sm:$0xf]
      %v1003 = vsel %vm894, %v832, %v1002
      %1004 = vst [vmem:[%s891 + $0xb4] sm:$0xf] %v1003
      %1005 = vst [vmem:[%s891 + $0xb8] sm:$0xf] %v841
      %v1006 = vld [vmem:[%s891 + $0xbc] sm:$0x1]
      %v1007 = vsel %vm900, %v842, %v1006
      %1008 = vst [vmem:[%s891 + $0xbc] sm:$0x1] %v1007
      %p1009 = scmp.gt.s32.totalorder %s21, 0
      // Predicated region
      $region33: #{dense_block_forward.2} parent=31 // pred_check
        %p1010 = pneg %p1009
      $region34: #{dense_block_forward.2} parent=31 // pred_check_branch
        %1012 = sbr.rel (%p1010) target = $region36
      $region35: #{dense_block_forward.2} parent=31 // pred_region
        %s1013 = ssub.s32 %s243, 1
        %p1014 = scmp.gt.s32.totalorder %s1013, 0
        %s1015 = scalar_select %p1014, %s1013, 0
        %s1016 = smul.u32 %s1015, 2
        %s1017 = smul.addr %s1016, 4
        %s1018 = scalar_lea.vmem %s223, %s1017
        %v1019 = vld [vmem:[%s1018] sm:$0xf]
        %v1020 = vld [vmem:[%s1018 + $0x4] sm:$0xf]
        %v1021 = vunpack.c.l.bf16 %v1019
        %v1022 = vunpack.c.l.bf16 %v1020
        %v1023 = vmul.f32 %v1021, %v371
        %v1024 = vmul.f32 %v1022, %v371
        %v1025 = vadd.f32 %v1023, %v407
        %v1026 = vadd.f32 %v1024, %v407
        %v1027 = vmax.f32 %v1025, 0.0
        %v1028 = vmax.f32 %v1026, 0.0
        %v1029 = vpack.c.bf16 %v1028, %v1027
        %v1031 = vunpack.c.l.b16 %v1029
        %v1032 = vunpack.c.h.b16 %v1029
        %v1033 = vpack.c.b16 %v1031, %v1031
        %v1034 = vpack.c.b16 %v1032, %v1032
        %v1036 = vshrl.u32 %v1033, 16
        %v1038 = vrot.slane %v1036, 7
        %v1039 = vshll.u32 %v1033, 16
        %v1041 = vor.u32 %v1038, %v1039
        %v1042 = vrot.slane %v1038, 4
        %v1044 = vshrl.u32 %v1034, 16
        %v1046 = vrot.slane %v1044, 7
        %v1047 = vshll.u32 %v1034, 16
        %v1049 = vor.u32 %v1046, %v1047
        %v1050 = vsel %vm570, %v1042, %v1049
        %v1051 = vrot.slane %v1046, 4
        %v1055 = vld [vmem:[#allocation2] sm:$0xf]
        %v1056 = vsel %vm894, %v1041, %v1055
        %1057 = vst [vmem:[#allocation2] sm:$0xf] %v1056
        %1058 = vst [vmem:[#allocation2 + $0x4] sm:$0xf] %v1050
        %v1059 = vld [vmem:[#allocation2 + $0x8] sm:$0x1]
        %v1060 = vsel %vm900, %v1051, %v1059
        %1061 = vst [vmem:[#allocation2 + $0x8] sm:$0x1] %v1060
      $region36: #{dense_block_forward.2} parent=31 // pred_fallthru
        _
      %s1062 = sadd.s32 %s21, 1
      %p1063 = scmp.lt.s32.totalorder %s1062, 1
      // Predicated region
      $region37: #{dense_block_forward.2} parent=31 // pred_check
        %p1064 = pneg %p1063
      $region38: #{dense_block_forward.2} parent=31 // pred_check_branch
        %1066 = sbr.rel (%p1064) target = $region40
      $region39: #{dense_block_forward.2} parent=31 // pred_region
        %s1067 = sadd.s32 %s243, 16
        %p1068 = scmp.lt.s32.totalorder %s1067, 15
        %s1069 = scalar_select %p1068, %s1067, 15
        %s1070 = smul.u32 %s1069, 2
        %s1071 = smul.addr %s1070, 4
        %s1072 = scalar_lea.vmem %s223, %s1071
        %v1073 = vld [vmem:[%s1072] sm:$0xf]
        %v1074 = vld [vmem:[%s1072 + $0x4] sm:$0xf]
        %v1075 = vunpack.c.l.bf16 %v1073
        %v1076 = vunpack.c.l.bf16 %v1074
        %v1077 = vmul.f32 %v1075, %v371
        %v1078 = vmul.f32 %v1076, %v371
        %v1079 = vadd.f32 %v1077, %v407
        %v1080 = vadd.f32 %v1078, %v407
        %v1081 = vmax.f32 %v1079, 0.0
        %v1082 = vmax.f32 %v1080, 0.0
        %v1083 = vpack.c.bf16 %v1082, %v1081
        %v1085 = vunpack.c.l.b16 %v1083
        %v1086 = vunpack.c.h.b16 %v1083
        %v1087 = vpack.c.b16 %v1085, %v1085
        %v1088 = vpack.c.b16 %v1086, %v1086
        %v1090 = vshrl.u32 %v1087, 16
        %v1092 = vrot.slane %v1090, 7
        %v1093 = vshll.u32 %v1087, 16
        %v1095 = vor.u32 %v1092, %v1093
        %v1096 = vrot.slane %v1092, 4
        %v1098 = vshrl.u32 %v1088, 16
        %v1100 = vrot.slane %v1098, 7
        %v1101 = vshll.u32 %v1088, 16
        %v1103 = vor.u32 %v1100, %v1101
        %v1104 = vsel %vm570, %v1096, %v1103
        %v1105 = vrot.slane %v1100, 4
        %s1109 = scalar_lea.vmem [#allocation2], 204
        %v1110 = vld [vmem:[%s1109] sm:$0xf]
        %v1111 = vsel %vm894, %v1095, %v1110
        %1112 = vst [vmem:[%s1109] sm:$0xf] %v1111
        %1113 = vst [vmem:[%s1109 + $0x4] sm:$0xf] %v1104
        %v1114 = vld [vmem:[%s1109 + $0x8] sm:$0x1]
        %v1115 = vsel %vm900, %v1105, %v1114
        %1116 = vst [vmem:[%s1109 + $0x8] sm:$0x1] %v1115
      $region40: #{dense_block_forward.2} parent=31 // pred_fallthru
        _
      %v1117 = vld [vmem:[#allocation2] sm:$0xf]
      %v1118 = vld [vmem:[#allocation2 + $0x4] sm:$0xf]
      %v1119 = vld [vmem:[#allocation2 + $0xc] sm:$0xf]
      %v1120 = vld [vmem:[#allocation2 + $0x10] sm:$0xf]
      %v1121 = vld [vmem:[#allocation2 + $0x18] sm:$0xf]
      %v1122 = vld [vmem:[#allocation2 + $0x1c] sm:$0xf]
      %v1123 = vld [vmem:[#allocation2 + $0x24] sm:$0xf]
      %v1124 = vld [vmem:[#allocation2 + $0x28] sm:$0xf]
      %v1125 = vld [vmem:[#allocation2 + $0x30] sm:$0xf]
      %v1126 = vld [vmem:[#allocation2 + $0x34] sm:$0xf]
      %v1127 = vld [vmem:[#allocation2 + $0x3c] sm:$0xf]
      %v1128 = vld [vmem:[#allocation2 + $0x40] sm:$0xf]
      %v1129 = vld [vmem:[#allocation2 + $0x48] sm:$0xf]
      %v1130 = vld [vmem:[#allocation2 + $0x4c] sm:$0xf]
      %v1131 = vld [vmem:[#allocation2 + $0x54] sm:$0xf]
      %v1132 = vld [vmem:[#allocation2 + $0x58] sm:$0xf]
      %v1133 = vld [vmem:[#allocation2 + $0x60] sm:$0xf]
      %v1134 = vld [vmem:[#allocation2 + $0x64] sm:$0xf]
      %v1135 = vld [vmem:[#allocation2 + $0x6c] sm:$0xf]
      %v1136 = vld [vmem:[#allocation2 + $0x70] sm:$0xf]
      %v1137 = vld [vmem:[#allocation2 + $0x78] sm:$0xf]
      %v1138 = vld [vmem:[#allocation2 + $0x7c] sm:$0xf]
      %v1139 = vld [vmem:[#allocation2 + $0x84] sm:$0xf]
      %v1140 = vld [vmem:[#allocation2 + $0x88] sm:$0xf]
      %v1141 = vld [vmem:[#allocation2 + $0x90] sm:$0xf]
      %v1142 = vld [vmem:[#allocation2 + $0x94] sm:$0xf]
      %v1143 = vld [vmem:[#allocation2 + $0x9c] sm:$0xf]
      %v1144 = vld [vmem:[#allocation2 + $0xa0] sm:$0xf]
      %v1145 = vld [vmem:[#allocation2 + $0xa8] sm:$0xf]
      %v1146 = vld [vmem:[#allocation2 + $0xac] sm:$0xf]
      %v1147 = vld [vmem:[#allocation2 + $0xb4] sm:$0xf]
      %v1148 = vld [vmem:[#allocation2 + $0xb8] sm:$0xf]
      %v1149 = vld [vmem:[%s2] sm:$0xf]
      %v1150 = vld [vmem:[%s2 + $0x4] sm:$0xf]
      %v1151 = vld [vmem:[%s2 + $0x8] sm:$0xf]
      %v1152 = vld [vmem:[%s2 + $0xc] sm:$0xf]
      %v1153 = vld [vmem:[%s2 + $0x10] sm:$0xf]
      %v1154 = vld [vmem:[%s2 + $0x14] sm:$0xf]
      %v1155 = vld [vmem:[%s2 + $0x18] sm:$0xf]
      %v1156 = vld [vmem:[%s2 + $0x1c] sm:$0xf]
      %v1157 = vld [vmem:[%s2 + $0x20] sm:$0xf]
      %v1158 = vld [vmem:[%s2 + $0x24] sm:$0xf]
      %v1159 = vld [vmem:[%s2 + $0x28] sm:$0xf]
      %v1160 = vld [vmem:[%s2 + $0x2c] sm:$0xf]
      %v1161 = vld [vmem:[%s2 + $0x30] sm:$0xf]
      %v1162 = vld [vmem:[%s2 + $0x34] sm:$0xf]
      %v1163 = vld [vmem:[%s2 + $0x38] sm:$0xf]
      %v1164 = vld [vmem:[%s2 + $0x3c] sm:$0xf]
      %v1165 = vld [vmem:[#allocation2 + $0x8] sm:$0x1]
      %v1166 = vld [vmem:[#allocation2 + $0x14] sm:$0x1]
      %v1167 = vld [vmem:[#allocation2 + $0x20] sm:$0x1]
      %v1168 = vld [vmem:[#allocation2 + $0x2c] sm:$0x1]
      %v1169 = vld [vmem:[#allocation2 + $0x38] sm:$0x1]
      %v1170 = vld [vmem:[#allocation2 + $0x44] sm:$0x1]
      %v1171 = vld [vmem:[#allocation2 + $0x50] sm:$0x1]
      %v1172 = vld [vmem:[#allocation2 + $0x5c] sm:$0x1]
      %v1173 = vld [vmem:[#allocation2 + $0x68] sm:$0x1]
      %v1174 = vld [vmem:[#allocation2 + $0x74] sm:$0x1]
      %v1175 = vld [vmem:[#allocation2 + $0x80] sm:$0x1]
      %v1176 = vld [vmem:[#allocation2 + $0x8c] sm:$0x1]
      %v1177 = vld [vmem:[#allocation2 + $0x98] sm:$0x1]
      %v1178 = vld [vmem:[#allocation2 + $0xa4] sm:$0x1]
      %v1179 = vld [vmem:[#allocation2 + $0xb0] sm:$0x1]
      %v1180 = vld [vmem:[#allocation2 + $0xbc] sm:$0x1]
      %vm1181 = vsmask.f32 3328
      %vm1182 = vsmask.f32 7440
      %vm1183 = vmor %vm1181, %vm1182
      %v1185 = vshrl.u32 %v1117, 16
      %v1187 = vrot.slane %v1185, 4
      %v1188 = vshll.u32 %v1117, 16
      %v1190 = vrot.slane %v1188, 5
      %v1191 = vor.u32 %v1187, %v1190
      %v1192 = vrot.slane %v1191, 4
      %v1194 = vshll.u32 %v1118, 16
      %v1196 = vrot.slane %v1194, 5
      %v1197 = vsel %vm1183, %v1192, %v1196
      %v1198 = vshrl.u32 %v1118, 16
      %v1200 = vrot.slane %v1198, 4
      %v1201 = vor.u32 %v1200, %v1196
      %v1202 = vrot.slane %v1201, 4
      %v1204 = vshll.u32 %v1165, 16
      %v1206 = vrot.slane %v1204, 5
      %v1207 = vsel %vm1183, %v1202, %v1206
      %v1209 = vshrl.u32 %v1119, 16
      %v1211 = vrot.slane %v1209, 4
      %v1212 = vshll.u32 %v1119, 16
      %v1214 = vrot.slane %v1212, 5
      %v1215 = vor.u32 %v1211, %v1214
      %v1216 = vrot.slane %v1215, 4
      %v1218 = vshll.u32 %v1120, 16
      %v1220 = vrot.slane %v1218, 5
      %v1221 = vsel %vm1183, %v1216, %v1220
      %v1222 = vshrl.u32 %v1120, 16
      %v1224 = vrot.slane %v1222, 4
      %v1225 = vor.u32 %v1224, %v1220
      %v1226 = vrot.slane %v1225, 4
      %v1228 = vshll.u32 %v1166, 16
      %v1230 = vrot.slane %v1228, 5
      %v1231 = vsel %vm1183, %v1226, %v1230
      %v1233 = vshrl.u32 %v1121, 16
      %v1235 = vrot.slane %v1233, 4
      %v1236 = vshll.u32 %v1121, 16
      %v1238 = vrot.slane %v1236, 5
      %v1239 = vor.u32 %v1235, %v1238
      %v1240 = vrot.slane %v1239, 4
      %v1242 = vshll.u32 %v1122, 16
      %v1244 = vrot.slane %v1242, 5
      %v1245 = vsel %vm1183, %v1240, %v1244
      %v1246 = vshrl.u32 %v1122, 16
      %v1248 = vrot.slane %v1246, 4
      %v1249 = vor.u32 %v1248, %v1244
      %v1250 = vrot.slane %v1249, 4
      %v1252 = vshll.u32 %v1167, 16
      %v1254 = vrot.slane %v1252, 5
      %v1255 = vsel %vm1183, %v1250, %v1254
      %v1257 = vshrl.u32 %v1123, 16
      %v1259 = vrot.slane %v1257, 4
      %v1260 = vshll.u32 %v1123, 16
      %v1262 = vrot.slane %v1260, 5
      %v1263 = vor.u32 %v1259, %v1262
      %v1264 = vrot.slane %v1263, 4
      %v1266 = vshll.u32 %v1124, 16
      %v1268 = vrot.slane %v1266, 5
      %v1269 = vsel %vm1183, %v1264, %v1268
      %v1270 = vshrl.u32 %v1124, 16
      %v1272 = vrot.slane %v1270, 4
      %v1273 = vor.u32 %v1272, %v1268
      %v1274 = vrot.slane %v1273, 4
      %v1276 = vshll.u32 %v1168, 16
      %v1278 = vrot.slane %v1276, 5
      %v1279 = vsel %vm1183, %v1274, %v1278
      %v1281 = vshrl.u32 %v1125, 16
      %v1283 = vrot.slane %v1281, 4
      %v1284 = vshll.u32 %v1125, 16
      %v1286 = vrot.slane %v1284, 5
      %v1287 = vor.u32 %v1283, %v1286
      %v1288 = vrot.slane %v1287, 4
      %v1290 = vshll.u32 %v1126, 16
      %v1292 = vrot.slane %v1290, 5
      %v1293 = vsel %vm1183, %v1288, %v1292
      %v1294 = vshrl.u32 %v1126, 16
      %v1296 = vrot.slane %v1294, 4
      %v1297 = vor.u32 %v1296, %v1292
      %v1298 = vrot.slane %v1297, 4
      %v1300 = vshll.u32 %v1169, 16
      %v1302 = vrot.slane %v1300, 5
      %v1303 = vsel %vm1183, %v1298, %v1302
      %v1305 = vshrl.u32 %v1127, 16
      %v1307 = vrot.slane %v1305, 4
      %v1308 = vshll.u32 %v1127, 16
      %v1310 = vrot.slane %v1308, 5
      %v1311 = vor.u32 %v1307, %v1310
      %v1312 = vrot.slane %v1311, 4
      %v1314 = vshll.u32 %v1128, 16
      %v1316 = vrot.slane %v1314, 5
      %v1317 = vsel %vm1183, %v1312, %v1316
      %v1318 = vshrl.u32 %v1128, 16
      %v1320 = vrot.slane %v1318, 4
      %v1321 = vor.u32 %v1320, %v1316
      %v1322 = vrot.slane %v1321, 4
      %v1324 = vshll.u32 %v1170, 16
      %v1326 = vrot.slane %v1324, 5
      %v1327 = vsel %vm1183, %v1322, %v1326
      %v1329 = vshrl.u32 %v1129, 16
      %v1331 = vrot.slane %v1329, 4
      %v1332 = vshll.u32 %v1129, 16
      %v1334 = vrot.slane %v1332, 5
      %v1335 = vor.u32 %v1331, %v1334
      %v1336 = vrot.slane %v1335, 4
      %v1338 = vshll.u32 %v1130, 16
      %v1340 = vrot.slane %v1338, 5
      %v1341 = vsel %vm1183, %v1336, %v1340
      %v1342 = vshrl.u32 %v1130, 16
      %v1344 = vrot.slane %v1342, 4
      %v1345 = vor.u32 %v1344, %v1340
      %v1346 = vrot.slane %v1345, 4
      %v1348 = vshll.u32 %v1171, 16
      %v1350 = vrot.slane %v1348, 5
      %v1351 = vsel %vm1183, %v1346, %v1350
      %v1353 = vshrl.u32 %v1131, 16
      %v1355 = vrot.slane %v1353, 4
      %v1356 = vshll.u32 %v1131, 16
      %v1358 = vrot.slane %v1356, 5
      %v1359 = vor.u32 %v1355, %v1358
      %v1360 = vrot.slane %v1359, 4
      %v1362 = vshll.u32 %v1132, 16
      %v1364 = vrot.slane %v1362, 5
      %v1365 = vsel %vm1183, %v1360, %v1364
      %v1366 = vshrl.u32 %v1132, 16
      %v1368 = vrot.slane %v1366, 4
      %v1369 = vor.u32 %v1368, %v1364
      %v1370 = vrot.slane %v1369, 4
      %v1372 = vshll.u32 %v1172, 16
      %v1374 = vrot.slane %v1372, 5
      %v1375 = vsel %vm1183, %v1370, %v1374
      %v1377 = vshrl.u32 %v1133, 16
      %v1379 = vrot.slane %v1377, 4
      %v1380 = vshll.u32 %v1133, 16
      %v1382 = vrot.slane %v1380, 5
      %v1383 = vor.u32 %v1379, %v1382
      %v1384 = vrot.slane %v1383, 4
      %v1386 = vshll.u32 %v1134, 16
      %v1388 = vrot.slane %v1386, 5
      %v1389 = vsel %vm1183, %v1384, %v1388
      %v1390 = vshrl.u32 %v1134, 16
      %v1392 = vrot.slane %v1390, 4
      %v1393 = vor.u32 %v1392, %v1388
      %v1394 = vrot.slane %v1393, 4
      %v1396 = vshll.u32 %v1173, 16
      %v1398 = vrot.slane %v1396, 5
      %v1399 = vsel %vm1183, %v1394, %v1398
      %v1401 = vshrl.u32 %v1135, 16
      %v1403 = vrot.slane %v1401, 4
      %v1404 = vshll.u32 %v1135, 16
      %v1406 = vrot.slane %v1404, 5
      %v1407 = vor.u32 %v1403, %v1406
      %v1408 = vrot.slane %v1407, 4
      %v1410 = vshll.u32 %v1136, 16
      %v1412 = vrot.slane %v1410, 5
      %v1413 = vsel %vm1183, %v1408, %v1412
      %v1414 = vshrl.u32 %v1136, 16
      %v1416 = vrot.slane %v1414, 4
      %v1417 = vor.u32 %v1416, %v1412
      %v1418 = vrot.slane %v1417, 4
      %v1420 = vshll.u32 %v1174, 16
      %v1422 = vrot.slane %v1420, 5
      %v1423 = vsel %vm1183, %v1418, %v1422
      %v1425 = vshrl.u32 %v1137, 16
      %v1427 = vrot.slane %v1425, 4
      %v1428 = vshll.u32 %v1137, 16
      %v1430 = vrot.slane %v1428, 5
      %v1431 = vor.u32 %v1427, %v1430
      %v1432 = vrot.slane %v1431, 4
      %v1434 = vshll.u32 %v1138, 16
      %v1436 = vrot.slane %v1434, 5
      %v1437 = vsel %vm1183, %v1432, %v1436
      %v1438 = vshrl.u32 %v1138, 16
      %v1440 = vrot.slane %v1438, 4
      %v1441 = vor.u32 %v1440, %v1436
      %v1442 = vrot.slane %v1441, 4
      %v1444 = vshll.u32 %v1175, 16
      %v1446 = vrot.slane %v1444, 5
      %v1447 = vsel %vm1183, %v1442, %v1446
      %v1449 = vshrl.u32 %v1139, 16
      %v1451 = vrot.slane %v1449, 4
      %v1452 = vshll.u32 %v1139, 16
      %v1454 = vrot.slane %v1452, 5
      %v1455 = vor.u32 %v1451, %v1454
      %v1456 = vrot.slane %v1455, 4
      %v1458 = vshll.u32 %v1140, 16
      %v1460 = vrot.slane %v1458, 5
      %v1461 = vsel %vm1183, %v1456, %v1460
      %v1462 = vshrl.u32 %v1140, 16
      %v1464 = vrot.slane %v1462, 4
      %v1465 = vor.u32 %v1464, %v1460
      %v1466 = vrot.slane %v1465, 4
      %v1468 = vshll.u32 %v1176, 16
      %v1470 = vrot.slane %v1468, 5
      %v1471 = vsel %vm1183, %v1466, %v1470
      %v1473 = vshrl.u32 %v1141, 16
      %v1475 = vrot.slane %v1473, 4
      %v1476 = vshll.u32 %v1141, 16
      %v1478 = vrot.slane %v1476, 5
      %v1479 = vor.u32 %v1475, %v1478
      %v1480 = vrot.slane %v1479, 4
      %v1482 = vshll.u32 %v1142, 16
      %v1484 = vrot.slane %v1482, 5
      %v1485 = vsel %vm1183, %v1480, %v1484
      %v1486 = vshrl.u32 %v1142, 16
      %v1488 = vrot.slane %v1486, 4
      %v1489 = vor.u32 %v1488, %v1484
      %v1490 = vrot.slane %v1489, 4
      %v1492 = vshll.u32 %v1177, 16
      %v1494 = vrot.slane %v1492, 5
      %v1495 = vsel %vm1183, %v1490, %v1494
      %v1497 = vshrl.u32 %v1143, 16
      %v1499 = vrot.slane %v1497, 4
      %v1500 = vshll.u32 %v1143, 16
      %v1502 = vrot.slane %v1500, 5
      %v1503 = vor.u32 %v1499, %v1502
      %v1504 = vrot.slane %v1503, 4
      %v1506 = vshll.u32 %v1144, 16
      %v1508 = vrot.slane %v1506, 5
      %v1509 = vsel %vm1183, %v1504, %v1508
      %v1510 = vshrl.u32 %v1144, 16
      %v1512 = vrot.slane %v1510, 4
      %v1513 = vor.u32 %v1512, %v1508
      %v1514 = vrot.slane %v1513, 4
      %v1516 = vshll.u32 %v1178, 16
      %v1518 = vrot.slane %v1516, 5
      %v1519 = vsel %vm1183, %v1514, %v1518
      %v1521 = vshrl.u32 %v1145, 16
      %v1523 = vrot.slane %v1521, 4
      %v1524 = vshll.u32 %v1145, 16
      %v1526 = vrot.slane %v1524, 5
      %v1527 = vor.u32 %v1523, %v1526
      %v1528 = vrot.slane %v1527, 4
      %v1530 = vshll.u32 %v1146, 16
      %v1532 = vrot.slane %v1530, 5
      %v1533 = vsel %vm1183, %v1528, %v1532
      %v1534 = vshrl.u32 %v1146, 16
      %v1536 = vrot.slane %v1534, 4
      %v1537 = vor.u32 %v1536, %v1532
      %v1538 = vrot.slane %v1537, 4
      %v1540 = vshll.u32 %v1179, 16
      %v1542 = vrot.slane %v1540, 5
      %v1543 = vsel %vm1183, %v1538, %v1542
      %v1545 = vshrl.u32 %v1147, 16
      %v1547 = vrot.slane %v1545, 4
      %v1548 = vshll.u32 %v1147, 16
      %v1550 = vrot.slane %v1548, 5
      %v1551 = vor.u32 %v1547, %v1550
      %v1552 = vrot.slane %v1551, 4
      %v1554 = vshll.u32 %v1148, 16
      %v1556 = vrot.slane %v1554, 5
      %v1557 = vsel %vm1183, %v1552, %v1556
      %v1558 = vshrl.u32 %v1148, 16
      %v1560 = vrot.slane %v1558, 4
      %v1561 = vor.u32 %v1560, %v1556
      %v1562 = vrot.slane %v1561, 4
      %v1564 = vshll.u32 %v1180, 16
      %v1566 = vrot.slane %v1564, 5
      %v1567 = vsel %vm1183, %v1562, %v1566
      %s1568 = scalar_lea.vmem %s2, 64
      %v1569 = vld [vmem:[%s1568] sm:$0xf]
      %v1570 = vld [vmem:[%s1568 + $0x4] sm:$0xf]
      %v1571 = vld [vmem:[%s1568 + $0x8] sm:$0xf]
      %v1572 = vld [vmem:[%s1568 + $0xc] sm:$0xf]
      %v1573 = vld [vmem:[%s1568 + $0x10] sm:$0xf]
      %v1574 = vld [vmem:[%s1568 + $0x14] sm:$0xf]
      %v1575 = vld [vmem:[%s1568 + $0x18] sm:$0xf]
      %v1576 = vld [vmem:[%s1568 + $0x1c] sm:$0xf]
      %v1577 = vld [vmem:[%s1568 + $0x20] sm:$0xf]
      %v1578 = vld [vmem:[%s1568 + $0x24] sm:$0xf]
      %v1579 = vld [vmem:[%s1568 + $0x28] sm:$0xf]
      %v1580 = vld [vmem:[%s1568 + $0x2c] sm:$0xf]
      %v1581 = vld [vmem:[%s1568 + $0x30] sm:$0xf]
      %v1582 = vld [vmem:[%s1568 + $0x34] sm:$0xf]
      %v1583 = vld [vmem:[%s1568 + $0x38] sm:$0xf]
      %v1584 = vld [vmem:[%s1568 + $0x3c] sm:$0xf]
      %v1585 = vunpack.c.l.b16 %v1197
      %v1586 = vunpack.c.l.b16 %v1207
      %v1587 = vunpack.c.l.b16 %v1221
      %v1588 = vunpack.c.l.b16 %v1231
      %v1589 = vunpack.c.l.b16 %v1245
      %v1590 = vunpack.c.l.b16 %v1255
      %v1591 = vunpack.c.l.b16 %v1269
      %v1592 = vunpack.c.l.b16 %v1279
      %v1593 = vunpack.c.l.b16 %v1293
      %v1594 = vunpack.c.l.b16 %v1303
      %v1595 = vunpack.c.l.b16 %v1317
      %v1596 = vunpack.c.l.b16 %v1327
      %v1597 = vunpack.c.l.b16 %v1341
      %v1598 = vunpack.c.l.b16 %v1351
      %v1599 = vunpack.c.l.b16 %v1365
      %v1600 = vunpack.c.l.b16 %v1375
      %v1601 = vunpack.c.l.b16 %v1389
      %v1602 = vunpack.c.l.b16 %v1399
      %v1603 = vunpack.c.l.b16 %v1413
      %v1604 = vunpack.c.l.b16 %v1423
      %v1605 = vunpack.c.l.b16 %v1437
      %v1606 = vunpack.c.l.b16 %v1447
      %v1607 = vunpack.c.l.b16 %v1461
      %v1608 = vunpack.c.l.b16 %v1471
      %v1609 = vunpack.c.l.b16 %v1485
      %v1610 = vunpack.c.l.b16 %v1495
      %v1611 = vunpack.c.l.b16 %v1509
      %v1612 = vunpack.c.l.b16 %v1519
      %v1613 = vunpack.c.l.b16 %v1533
      %v1614 = vunpack.c.l.b16 %v1543
      %v1615 = vunpack.c.l.b16 %v1557
      %v1616 = vunpack.c.l.b16 %v1567
      %v1617 = vpack.c.b16 %v1586, %v1585
      %v1618 = vpack.c.b16 %v1588, %v1587
      %v1619 = vpack.c.b16 %v1590, %v1589
      %v1620 = vpack.c.b16 %v1592, %v1591
      %v1621 = vpack.c.b16 %v1594, %v1593
      %v1622 = vpack.c.b16 %v1596, %v1595
      %v1623 = vpack.c.b16 %v1598, %v1597
      %v1624 = vpack.c.b16 %v1600, %v1599
      %v1625 = vpack.c.b16 %v1602, %v1601
      %v1626 = vpack.c.b16 %v1604, %v1603
      %v1627 = vpack.c.b16 %v1606, %v1605
      %v1628 = vpack.c.b16 %v1608, %v1607
      %v1629 = vpack.c.b16 %v1610, %v1609
      %v1630 = vpack.c.b16 %v1612, %v1611
      %v1631 = vpack.c.b16 %v1614, %v1613
      %v1632 = vpack.c.b16 %v1616, %v1615
      %v1665 = vunpack.c.l.b16 %v1569
      %v1666 = vunpack.c.l.b16 %v1570
      %v1667 = vunpack.c.l.b16 %v1571
      %v1668 = vunpack.c.l.b16 %v1572
      %v1669 = vunpack.c.l.b16 %v1573
      %v1670 = vunpack.c.l.b16 %v1574
      %v1671 = vunpack.c.l.b16 %v1575
      %v1672 = vunpack.c.l.b16 %v1576
      %v1673 = vunpack.c.l.b16 %v1577
      %v1674 = vunpack.c.l.b16 %v1578
      %v1675 = vunpack.c.l.b16 %v1579
      %v1676 = vunpack.c.l.b16 %v1580
      %v1677 = vunpack.c.l.b16 %v1581
      %v1678 = vunpack.c.l.b16 %v1582
      %v1679 = vunpack.c.l.b16 %v1583
      %v1680 = vunpack.c.l.b16 %v1584
      %v1681 = vpack.c.b16 %v1666, %v1665
      %v1682 = vpack.c.b16 %v1668, %v1667
      %v1683 = vpack.c.b16 %v1670, %v1669
      %v1684 = vpack.c.b16 %v1672, %v1671
      %v1685 = vpack.c.b16 %v1674, %v1673
      %v1686 = vpack.c.b16 %v1676, %v1675
      %v1687 = vpack.c.b16 %v1678, %v1677
      %v1688 = vpack.c.b16 %v1680, %v1679
      %1697 = vmatprep.subr.bf16.mxu0 0
      %1698 = vmatpush1.bf16.msra.mxu0 %v1688
      %1699 = vmatprep.subr.bf16.mxu0 0
      %1700 = vmatpush1.bf16.msra.mxu0 %v1687
      %1701 = vmatprep.subr.bf16.mxu0 0
      %1702 = vmatpush1.bf16.msra.mxu0 %v1686
      %1703 = vmatprep.subr.bf16.mxu0 0
      %1704 = vmatpush1.bf16.msra.mxu0 %v1685
      %1705 = vmatprep.subr.bf16.mxu0 0
      %1706 = vmatpush1.bf16.msra.mxu0 %v1684
      %1707 = vmatprep.subr.bf16.mxu0 0
      %1708 = vmatpush1.bf16.msra.mxu0 %v1683
      %1709 = vmatprep.subr.bf16.mxu0 0
      %1710 = vmatpush1.bf16.msra.mxu0 %v1682
      %1711 = vmatprep.subr.bf16.mxu0 0
      %1712 = vmatpush1.bf16.msra.mxu0 %v1681
      %1713 = vmatprep.subr.bf16.mxu0 0
      %1714 = vmatpush2.bf16.msra.mxu0 0
      %1715 = vmatprep.subr.bf16.mxu0 0
      %1716 = vmatpush2.bf16.msra.mxu0 0
      %1717 = vmatprep.subr.bf16.mxu0 0
      %1718 = vmatpush2.bf16.msra.mxu0 0
      %1719 = vmatprep.subr.bf16.mxu0 0
      %1720 = vmatpush2.bf16.msra.mxu0 0
      %1721 = vmatprep.subr.bf16.mxu0 0
      %1722 = vmatpush2.bf16.msra.mxu0 0
      %1723 = vmatprep.subr.bf16.mxu0 0
      %1724 = vmatpush2.bf16.msra.mxu0 0
      %1725 = vmatprep.subr.bf16.mxu0 0
      %1726 = vmatpush2.bf16.msra.mxu0 0
      %1727 = vmatprep.subr.bf16.mxu0 0
      %1728 = vmatpush2.bf16.msra.mxu0 0
      %1729 = vmatprep.mubr.bf16.mxu0 0
      %1730 = vmatmul.mubr.bf16.gmra.mxu0 %v1617
      %v1731 = vpop.f32.mrf.mxu0
      %v1732 = vadd.f32 0.0, %v1731
      %v1733 = vpop.f32.mrf.mxu0
      %v1734 = vpop.f32.mrf.mxu0
      %v1735 = vadd.f32 0.0, %v1734
      %v1736 = vpop.f32.mrf.mxu0
      %1737 = vmatprep.mubr.bf16.mxu0 0
      %1738 = vmatmul.mubr.bf16.gmra.mxu0 %v1618
      %v1739 = vpop.f32.mrf.mxu0
      %v1740 = vadd.f32 0.0, %v1739
      %v1741 = vpop.f32.mrf.mxu0
      %v1742 = vpop.f32.mrf.mxu0
      %v1743 = vadd.f32 0.0, %v1742
      %v1744 = vpop.f32.mrf.mxu0
      %1745 = vmatprep.mubr.bf16.mxu0 0
      %1746 = vmatmul.mubr.bf16.gmra.mxu0 %v1619
      %v1747 = vpop.f32.mrf.mxu0
      %v1748 = vadd.f32 0.0, %v1747
      %v1749 = vpop.f32.mrf.mxu0
      %v1750 = vpop.f32.mrf.mxu0
      %v1751 = vadd.f32 0.0, %v1750
      %v1752 = vpop.f32.mrf.mxu0
      %1753 = vmatprep.mubr.bf16.mxu0 0
      %1754 = vmatmul.mubr.bf16.gmra.mxu0 %v1620
      %v1755 = vpop.f32.mrf.mxu0
      %v1756 = vadd.f32 0.0, %v1755
      %v1757 = vpop.f32.mrf.mxu0
      %v1758 = vpop.f32.mrf.mxu0
      %v1759 = vadd.f32 0.0, %v1758
      %v1760 = vpop.f32.mrf.mxu0
      %1761 = vmatprep.mubr.bf16.mxu0 0
      %1762 = vmatmul.mubr.bf16.gmra.mxu0 %v1621
      %v1763 = vpop.f32.mrf.mxu0
      %v1764 = vadd.f32 0.0, %v1763
      %v1765 = vpop.f32.mrf.mxu0
      %v1766 = vpop.f32.mrf.mxu0
      %v1767 = vadd.f32 0.0, %v1766
      %v1768 = vpop.f32.mrf.mxu0
      %1769 = vmatprep.mubr.bf16.mxu0 0
      %1770 = vmatmul.mubr.bf16.gmra.mxu0 %v1622
      %v1771 = vpop.f32.mrf.mxu0
      %v1772 = vadd.f32 0.0, %v1771
      %v1773 = vpop.f32.mrf.mxu0
      %v1774 = vpop.f32.mrf.mxu0
      %v1775 = vadd.f32 0.0, %v1774
      %v1776 = vpop.f32.mrf.mxu0
      %1777 = vmatprep.mubr.bf16.mxu0 0
      %1778 = vmatmul.mubr.bf16.gmra.mxu0 %v1623
      %v1779 = vpop.f32.mrf.mxu0
      %v1780 = vadd.f32 0.0, %v1779
      %v1781 = vpop.f32.mrf.mxu0
      %v1782 = vpop.f32.mrf.mxu0
      %v1783 = vadd.f32 0.0, %v1782
      %v1784 = vpop.f32.mrf.mxu0
      %1785 = vmatprep.mubr.bf16.mxu0 0
      %1786 = vmatmul.mubr.bf16.gmra.mxu0 %v1624
      %v1787 = vpop.f32.mrf.mxu0
      %v1788 = vadd.f32 0.0, %v1787
      %v1789 = vpop.f32.mrf.mxu0
      %v1790 = vpop.f32.mrf.mxu0
      %v1791 = vadd.f32 0.0, %v1790
      %v1792 = vpop.f32.mrf.mxu0
      %1793 = vmatprep.mubr.bf16.mxu0 0
      %1794 = vmatmul.mubr.bf16.gmra.mxu0 %v1625
      %v1795 = vpop.f32.mrf.mxu0
      %v1796 = vadd.f32 0.0, %v1795
      %v1797 = vpop.f32.mrf.mxu0
      %v1798 = vpop.f32.mrf.mxu0
      %v1799 = vadd.f32 0.0, %v1798
      %v1800 = vpop.f32.mrf.mxu0
      %1801 = vmatprep.mubr.bf16.mxu0 0
      %1802 = vmatmul.mubr.bf16.gmra.mxu0 %v1626
      %v1803 = vpop.f32.mrf.mxu0
      %v1804 = vadd.f32 0.0, %v1803
      %v1805 = vpop.f32.mrf.mxu0
      %v1806 = vpop.f32.mrf.mxu0
      %v1807 = vadd.f32 0.0, %v1806
      %v1808 = vpop.f32.mrf.mxu0
      %1809 = vmatprep.mubr.bf16.mxu0 0
      %1810 = vmatmul.mubr.bf16.gmra.mxu0 %v1627
      %v1811 = vpop.f32.mrf.mxu0
      %v1812 = vadd.f32 0.0, %v1811
      %v1813 = vpop.f32.mrf.mxu0
      %v1814 = vpop.f32.mrf.mxu0
      %v1815 = vadd.f32 0.0, %v1814
      %v1816 = vpop.f32.mrf.mxu0
      %1817 = vmatprep.mubr.bf16.mxu0 0
      %1818 = vmatmul.mubr.bf16.gmra.mxu0 %v1628
      %v1819 = vpop.f32.mrf.mxu0
      %v1820 = vadd.f32 0.0, %v1819
      %v1821 = vpop.f32.mrf.mxu0
      %v1822 = vpop.f32.mrf.mxu0
      %v1823 = vadd.f32 0.0, %v1822
      %v1824 = vpop.f32.mrf.mxu0
      %1825 = vmatprep.mubr.bf16.mxu0 0
      %1826 = vmatmul.mubr.bf16.gmra.mxu0 %v1629
      %v1827 = vpop.f32.mrf.mxu0
      %v1828 = vadd.f32 0.0, %v1827
      %v1829 = vpop.f32.mrf.mxu0
      %v1830 = vpop.f32.mrf.mxu0
      %v1831 = vadd.f32 0.0, %v1830
      %v1832 = vpop.f32.mrf.mxu0
      %1833 = vmatprep.mubr.bf16.mxu0 0
      %1834 = vmatmul.mubr.bf16.gmra.mxu0 %v1630
      %v1835 = vpop.f32.mrf.mxu0
      %v1836 = vadd.f32 0.0, %v1835
      %v1837 = vpop.f32.mrf.mxu0
      %v1838 = vpop.f32.mrf.mxu0
      %v1839 = vadd.f32 0.0, %v1838
      %v1840 = vpop.f32.mrf.mxu0
      %1841 = vmatprep.mubr.bf16.mxu0 0
      %1842 = vmatmul.mubr.bf16.gmra.mxu0 %v1631
      %v1843 = vpop.f32.mrf.mxu0
      %v1844 = vadd.f32 0.0, %v1843
      %v1845 = vpop.f32.mrf.mxu0
      %v1846 = vpop.f32.mrf.mxu0
      %v1847 = vadd.f32 0.0, %v1846
      %v1848 = vpop.f32.mrf.mxu0
      %1849 = vmatprep.mubr.bf16.mxu0 0
      %1850 = vmatmul.mubr.bf16.gmra.mxu0 %v1632
      %v1851 = vpop.f32.mrf.mxu0
      %v1852 = vadd.f32 0.0, %v1851
      %v1853 = vpop.f32.mrf.mxu0
      %v1854 = vpop.f32.mrf.mxu0
      %v1855 = vadd.f32 0.0, %v1854
      %v1856 = vpop.f32.mrf.mxu0
      %1857 = vdwg.mxu0
      %v1890 = vunpack.c.l.b16 %v1117
      %v1891 = vunpack.c.l.b16 %v1118
      %v1892 = vunpack.c.l.b16 %v1119
      %v1893 = vunpack.c.l.b16 %v1120
      %v1894 = vunpack.c.l.b16 %v1121
      %v1895 = vunpack.c.l.b16 %v1122
      %v1896 = vunpack.c.l.b16 %v1123
      %v1897 = vunpack.c.l.b16 %v1124
      %v1898 = vunpack.c.l.b16 %v1125
      %v1899 = vunpack.c.l.b16 %v1126
      %v1900 = vunpack.c.l.b16 %v1127
      %v1901 = vunpack.c.l.b16 %v1128
      %v1902 = vunpack.c.l.b16 %v1129
      %v1903 = vunpack.c.l.b16 %v1130
      %v1904 = vunpack.c.l.b16 %v1131
      %v1905 = vunpack.c.l.b16 %v1132
      %v1906 = vunpack.c.l.b16 %v1133
      %v1907 = vunpack.c.l.b16 %v1134
      %v1908 = vunpack.c.l.b16 %v1135
      %v1909 = vunpack.c.l.b16 %v1136
      %v1910 = vunpack.c.l.b16 %v1137
      %v1911 = vunpack.c.l.b16 %v1138
      %v1912 = vunpack.c.l.b16 %v1139
      %v1913 = vunpack.c.l.b16 %v1140
      %v1914 = vunpack.c.l.b16 %v1141
      %v1915 = vunpack.c.l.b16 %v1142
      %v1916 = vunpack.c.l.b16 %v1143
      %v1917 = vunpack.c.l.b16 %v1144
      %v1918 = vunpack.c.l.b16 %v1145
      %v1919 = vunpack.c.l.b16 %v1146
      %v1920 = vunpack.c.l.b16 %v1147
      %v1921 = vunpack.c.l.b16 %v1148
      %v1922 = vpack.c.b16 %v1891, %v1890
      %v1923 = vpack.c.b16 %v1893, %v1892
      %v1924 = vpack.c.b16 %v1895, %v1894
      %v1925 = vpack.c.b16 %v1897, %v1896
      %v1926 = vpack.c.b16 %v1899, %v1898
      %v1927 = vpack.c.b16 %v1901, %v1900
      %v1928 = vpack.c.b16 %v1903, %v1902
      %v1929 = vpack.c.b16 %v1905, %v1904
      %v1930 = vpack.c.b16 %v1907, %v1906
      %v1931 = vpack.c.b16 %v1909, %v1908
      %v1932 = vpack.c.b16 %v1911, %v1910
      %v1933 = vpack.c.b16 %v1913, %v1912
      %v1934 = vpack.c.b16 %v1915, %v1914
      %v1935 = vpack.c.b16 %v1917, %v1916
      %v1936 = vpack.c.b16 %v1919, %v1918
      %v1937 = vpack.c.b16 %v1921, %v1920
      %v1970 = vunpack.c.l.b16 %v1149
      %v1971 = vunpack.c.l.b16 %v1150
      %v1972 = vunpack.c.l.b16 %v1151
      %v1973 = vunpack.c.l.b16 %v1152
      %v1974 = vunpack.c.l.b16 %v1153
      %v1975 = vunpack.c.l.b16 %v1154
      %v1976 = vunpack.c.l.b16 %v1155
      %v1977 = vunpack.c.l.b16 %v1156
      %v1978 = vunpack.c.l.b16 %v1157
      %v1979 = vunpack.c.l.b16 %v1158
      %v1980 = vunpack.c.l.b16 %v1159
      %v1981 = vunpack.c.l.b16 %v1160
      %v1982 = vunpack.c.l.b16 %v1161
      %v1983 = vunpack.c.l.b16 %v1162
      %v1984 = vunpack.c.l.b16 %v1163
      %v1985 = vunpack.c.l.b16 %v1164
      %v1986 = vpack.c.b16 %v1971, %v1970
      %v1987 = vpack.c.b16 %v1973, %v1972
      %v1988 = vpack.c.b16 %v1975, %v1974
      %v1989 = vpack.c.b16 %v1977, %v1976
      %v1990 = vpack.c.b16 %v1979, %v1978
      %v1991 = vpack.c.b16 %v1981, %v1980
      %v1992 = vpack.c.b16 %v1983, %v1982
      %v1993 = vpack.c.b16 %v1985, %v1984
      %2002 = vmatprep.subr.bf16.mxu0 0
      %2003 = vmatpush1.bf16.msra.mxu0 %v1993
      %2004 = vmatprep.subr.bf16.mxu0 0
      %2005 = vmatpush1.bf16.msra.mxu0 %v1992
      %2006 = vmatprep.subr.bf16.mxu0 0
      %2007 = vmatpush1.bf16.msra.mxu0 %v1991
      %2008 = vmatprep.subr.bf16.mxu0 0
      %2009 = vmatpush1.bf16.msra.mxu0 %v1990
      %2010 = vmatprep.subr.bf16.mxu0 0
      %2011 = vmatpush1.bf16.msra.mxu0 %v1989
      %2012 = vmatprep.subr.bf16.mxu0 0
      %2013 = vmatpush1.bf16.msra.mxu0 %v1988
      %2014 = vmatprep.subr.bf16.mxu0 0
      %2015 = vmatpush1.bf16.msra.mxu0 %v1987
      %2016 = vmatprep.subr.bf16.mxu0 0
      %2017 = vmatpush1.bf16.msra.mxu0 %v1986
      %2018 = vmatprep.subr.bf16.mxu0 0
      %2019 = vmatpush2.bf16.msra.mxu0 0
      %2020 = vmatprep.subr.bf16.mxu0 0
      %2021 = vmatpush2.bf16.msra.mxu0 0
      %2022 = vmatprep.subr.bf16.mxu0 0
      %2023 = vmatpush2.bf16.msra.mxu0 0
      %2024 = vmatprep.subr.bf16.mxu0 0
      %2025 = vmatpush2.bf16.msra.mxu0 0
      %2026 = vmatprep.subr.bf16.mxu0 0
      %2027 = vmatpush2.bf16.msra.mxu0 0
      %2028 = vmatprep.subr.bf16.mxu0 0
      %2029 = vmatpush2.bf16.msra.mxu0 0
      %2030 = vmatprep.subr.bf16.mxu0 0
      %2031 = vmatpush2.bf16.msra.mxu0 0
      %2032 = vmatprep.subr.bf16.mxu0 0
      %2033 = vmatpush2.bf16.msra.mxu0 0
      %2034 = vmatprep.mubr.bf16.mxu0 0
      %2035 = vmatmul.mubr.bf16.gmra.mxu0 %v1922
      %v2036 = vpop.f32.mrf.mxu0
      %v2037 = vadd.f32 %v1732, %v2036
      %v2038 = vpop.f32.mrf.mxu0
      %v2039 = vpop.f32.mrf.mxu0
      %v2040 = vadd.f32 %v1735, %v2039
      %v2041 = vpop.f32.mrf.mxu0
      %2042 = vmatprep.mubr.bf16.mxu0 0
      %2043 = vmatmul.mubr.bf16.gmra.mxu0 %v1923
      %v2044 = vpop.f32.mrf.mxu0
      %v2045 = vadd.f32 %v1740, %v2044
      %v2046 = vpop.f32.mrf.mxu0
      %v2047 = vpop.f32.mrf.mxu0
      %v2048 = vadd.f32 %v1743, %v2047
      %v2049 = vpop.f32.mrf.mxu0
      %2050 = vmatprep.mubr.bf16.mxu0 0
      %2051 = vmatmul.mubr.bf16.gmra.mxu0 %v1924
      %v2052 = vpop.f32.mrf.mxu0
      %v2053 = vadd.f32 %v1748, %v2052
      %v2054 = vpop.f32.mrf.mxu0
      %v2055 = vpop.f32.mrf.mxu0
      %v2056 = vadd.f32 %v1751, %v2055
      %v2057 = vpop.f32.mrf.mxu0
      %2058 = vmatprep.mubr.bf16.mxu0 0
      %2059 = vmatmul.mubr.bf16.gmra.mxu0 %v1925
      %v2060 = vpop.f32.mrf.mxu0
      %v2061 = vadd.f32 %v1756, %v2060
      %v2062 = vpop.f32.mrf.mxu0
      %v2063 = vpop.f32.mrf.mxu0
      %v2064 = vadd.f32 %v1759, %v2063
      %v2065 = vpop.f32.mrf.mxu0
      %2066 = vmatprep.mubr.bf16.mxu0 0
      %2067 = vmatmul.mubr.bf16.gmra.mxu0 %v1926
      %v2068 = vpop.f32.mrf.mxu0
      %v2069 = vadd.f32 %v1764, %v2068
      %v2070 = vpop.f32.mrf.mxu0
      %v2071 = vpop.f32.mrf.mxu0
      %v2072 = vadd.f32 %v1767, %v2071
      %v2073 = vpop.f32.mrf.mxu0
      %2074 = vmatprep.mubr.bf16.mxu0 0
      %2075 = vmatmul.mubr.bf16.gmra.mxu0 %v1927
      %v2076 = vpop.f32.mrf.mxu0
      %v2077 = vadd.f32 %v1772, %v2076
      %v2078 = vpop.f32.mrf.mxu0
      %v2079 = vpop.f32.mrf.mxu0
      %v2080 = vadd.f32 %v1775, %v2079
      %v2081 = vpop.f32.mrf.mxu0
      %2082 = vmatprep.mubr.bf16.mxu0 0
      %2083 = vmatmul.mubr.bf16.gmra.mxu0 %v1928
      %v2084 = vpop.f32.mrf.mxu0
      %v2085 = vadd.f32 %v1780, %v2084
      %v2086 = vpop.f32.mrf.mxu0
      %v2087 = vpop.f32.mrf.mxu0
      %v2088 = vadd.f32 %v1783, %v2087
      %v2089 = vpop.f32.mrf.mxu0
      %2090 = vmatprep.mubr.bf16.mxu0 0
      %2091 = vmatmul.mubr.bf16.gmra.mxu0 %v1929
      %v2092 = vpop.f32.mrf.mxu0
      %v2093 = vadd.f32 %v1788, %v2092
      %v2094 = vpop.f32.mrf.mxu0
      %v2095 = vpop.f32.mrf.mxu0
      %v2096 = vadd.f32 %v1791, %v2095
      %v2097 = vpop.f32.mrf.mxu0
      %2098 = vmatprep.mubr.bf16.mxu0 0
      %2099 = vmatmul.mubr.bf16.gmra.mxu0 %v1930
      %v2100 = vpop.f32.mrf.mxu0
      %v2101 = vadd.f32 %v1796, %v2100
      %v2102 = vpop.f32.mrf.mxu0
      %v2103 = vpop.f32.mrf.mxu0
      %v2104 = vadd.f32 %v1799, %v2103
      %v2105 = vpop.f32.mrf.mxu0
      %2106 = vmatprep.mubr.bf16.mxu0 0
      %2107 = vmatmul.mubr.bf16.gmra.mxu0 %v1931
      %v2108 = vpop.f32.mrf.mxu0
      %v2109 = vadd.f32 %v1804, %v2108
      %v2110 = vpop.f32.mrf.mxu0
      %v2111 = vpop.f32.mrf.mxu0
      %v2112 = vadd.f32 %v1807, %v2111
      %v2113 = vpop.f32.mrf.mxu0
      %2114 = vmatprep.mubr.bf16.mxu0 0
      %2115 = vmatmul.mubr.bf16.gmra.mxu0 %v1932
      %v2116 = vpop.f32.mrf.mxu0
      %v2117 = vadd.f32 %v1812, %v2116
      %v2118 = vpop.f32.mrf.mxu0
      %v2119 = vpop.f32.mrf.mxu0
      %v2120 = vadd.f32 %v1815, %v2119
      %v2121 = vpop.f32.mrf.mxu0
      %2122 = vmatprep.mubr.bf16.mxu0 0
      %2123 = vmatmul.mubr.bf16.gmra.mxu0 %v1933
      %v2124 = vpop.f32.mrf.mxu0
      %v2125 = vadd.f32 %v1820, %v2124
      %v2126 = vpop.f32.mrf.mxu0
      %v2127 = vpop.f32.mrf.mxu0
      %v2128 = vadd.f32 %v1823, %v2127
      %v2129 = vpop.f32.mrf.mxu0
      %2130 = vmatprep.mubr.bf16.mxu0 0
      %2131 = vmatmul.mubr.bf16.gmra.mxu0 %v1934
      %v2132 = vpop.f32.mrf.mxu0
      %v2133 = vadd.f32 %v1828, %v2132
      %v2134 = vpop.f32.mrf.mxu0
      %v2135 = vpop.f32.mrf.mxu0
      %v2136 = vadd.f32 %v1831, %v2135
      %v2137 = vpop.f32.mrf.mxu0
      %2138 = vmatprep.mubr.bf16.mxu0 0
      %2139 = vmatmul.mubr.bf16.gmra.mxu0 %v1935
      %v2140 = vpop.f32.mrf.mxu0
      %v2141 = vadd.f32 %v1836, %v2140
      %v2142 = vpop.f32.mrf.mxu0
      %v2143 = vpop.f32.mrf.mxu0
      %v2144 = vadd.f32 %v1839, %v2143
      %v2145 = vpop.f32.mrf.mxu0
      %2146 = vmatprep.mubr.bf16.mxu0 0
      %2147 = vmatmul.mubr.bf16.gmra.mxu0 %v1936
      %v2148 = vpop.f32.mrf.mxu0
      %v2149 = vadd.f32 %v1844, %v2148
      %v2150 = vpop.f32.mrf.mxu0
      %v2151 = vpop.f32.mrf.mxu0
      %v2152 = vadd.f32 %v1847, %v2151
      %v2153 = vpop.f32.mrf.mxu0
      %2154 = vmatprep.mubr.bf16.mxu0 0
      %2155 = vmatmul.mubr.bf16.gmra.mxu0 %v1937
      %v2156 = vpop.f32.mrf.mxu0
      %v2157 = vadd.f32 %v1852, %v2156
      %v2158 = vpop.f32.mrf.mxu0
      %v2159 = vpop.f32.mrf.mxu0
      %v2160 = vadd.f32 %v1855, %v2159
      %v2161 = vpop.f32.mrf.mxu0
      %2162 = vdwg.mxu0
      %v2163 = vld [vmem:[#allocation2] sm:$0xe]
      %v2164 = vld [vmem:[#allocation2 + $0xc] sm:$0xe]
      %v2165 = vld [vmem:[#allocation2 + $0x18] sm:$0xe]
      %v2166 = vld [vmem:[#allocation2 + $0x24] sm:$0xe]
      %v2167 = vld [vmem:[#allocation2 + $0x30] sm:$0xe]
      %v2168 = vld [vmem:[#allocation2 + $0x3c] sm:$0xe]
      %v2169 = vld [vmem:[#allocation2 + $0x48] sm:$0xe]
      %v2170 = vld [vmem:[#allocation2 + $0x54] sm:$0xe]
      %v2171 = vld [vmem:[#allocation2 + $0x60] sm:$0xe]
      %v2172 = vld [vmem:[#allocation2 + $0x6c] sm:$0xe]
      %v2173 = vld [vmem:[#allocation2 + $0x78] sm:$0xe]
      %v2174 = vld [vmem:[#allocation2 + $0x84] sm:$0xe]
      %v2175 = vld [vmem:[#allocation2 + $0x90] sm:$0xe]
      %v2176 = vld [vmem:[#allocation2 + $0x9c] sm:$0xe]
      %v2177 = vld [vmem:[#allocation2 + $0xa8] sm:$0xe]
      %v2178 = vld [vmem:[#allocation2 + $0xb4] sm:$0xe]
      %vm2211 = vcmask 1042432
      %vm2212 = vcmask 1046532
      %vm2213 = vmor %vm2211, %vm2212
      %v2214 = vrot.slane %v2163, 5
      %v2215 = vrot.slane %v2214, 4
      %v2216 = vrot.slane %v1118, 5
      %v2217 = vsel %vm2213, %v2215, %v2216
      %v2218 = vrot.slane %v2216, 4
      %v2219 = vrot.slane %v1165, 5
      %v2220 = vsel %vm2213, %v2218, %v2219
      %v2221 = vrot.slane %v2164, 5
      %v2222 = vrot.slane %v2221, 4
      %v2223 = vrot.slane %v1120, 5
      %v2224 = vsel %vm2213, %v2222, %v2223
      %v2225 = vrot.slane %v2223, 4
      %v2226 = vrot.slane %v1166, 5
      %v2227 = vsel %vm2213, %v2225, %v2226
      %v2228 = vrot.slane %v2165, 5
      %v2229 = vrot.slane %v2228, 4
      %v2230 = vrot.slane %v1122, 5
      %v2231 = vsel %vm2213, %v2229, %v2230
      %v2232 = vrot.slane %v2230, 4
      %v2233 = vrot.slane %v1167, 5
      %v2234 = vsel %vm2213, %v2232, %v2233
      %v2235 = vrot.slane %v2166, 5
      %v2236 = vrot.slane %v2235, 4
      %v2237 = vrot.slane %v1124, 5
      %v2238 = vsel %vm2213, %v2236, %v2237
      %v2239 = vrot.slane %v2237, 4
      %v2240 = vrot.slane %v1168, 5
      %v2241 = vsel %vm2213, %v2239, %v2240
      %v2242 = vrot.slane %v2167, 5
      %v2243 = vrot.slane %v2242, 4
      %v2244 = vrot.slane %v1126, 5
      %v2245 = vsel %vm2213, %v2243, %v2244
      %v2246 = vrot.slane %v2244, 4
      %v2247 = vrot.slane %v1169, 5
      %v2248 = vsel %vm2213, %v2246, %v2247
      %v2249 = vrot.slane %v2168, 5
      %v2250 = vrot.slane %v2249, 4
      %v2251 = vrot.slane %v1128, 5
      %v2252 = vsel %vm2213, %v2250, %v2251
      %v2253 = vrot.slane %v2251, 4
      %v2254 = vrot.slane %v1170, 5
      %v2255 = vsel %vm2213, %v2253, %v2254
      %v2256 = vrot.slane %v2169, 5
      %v2257 = vrot.slane %v2256, 4
      %v2258 = vrot.slane %v1130, 5
      %v2259 = vsel %vm2213, %v2257, %v2258
      %v2260 = vrot.slane %v2258, 4
      %v2261 = vrot.slane %v1171, 5
      %v2262 = vsel %vm2213, %v2260, %v2261
      %v2263 = vrot.slane %v2170, 5
      %v2264 = vrot.slane %v2263, 4
      %v2265 = vrot.slane %v1132, 5
      %v2266 = vsel %vm2213, %v2264, %v2265
      %v2267 = vrot.slane %v2265, 4
      %v2268 = vrot.slane %v1172, 5
      %v2269 = vsel %vm2213, %v2267, %v2268
      %v2270 = vrot.slane %v2171, 5
      %v2271 = vrot.slane %v2270, 4
      %v2272 = vrot.slane %v1134, 5
      %v2273 = vsel %vm2213, %v2271, %v2272
      %v2274 = vrot.slane %v2272, 4
      %v2275 = vrot.slane %v1173, 5
      %v2276 = vsel %vm2213, %v2274, %v2275
      %v2277 = vrot.slane %v2172, 5
      %v2278 = vrot.slane %v2277, 4
      %v2279 = vrot.slane %v1136, 5
      %v2280 = vsel %vm2213, %v2278, %v2279
      %v2281 = vrot.slane %v2279, 4
      %v2282 = vrot.slane %v1174, 5
      %v2283 = vsel %vm2213, %v2281, %v2282
      %v2284 = vrot.slane %v2173, 5
      %v2285 = vrot.slane %v2284, 4
      %v2286 = vrot.slane %v1138, 5
      %v2287 = vsel %vm2213, %v2285, %v2286
      %v2288 = vrot.slane %v2286, 4
      %v2289 = vrot.slane %v1175, 5
      %v2290 = vsel %vm2213, %v2288, %v2289
      %v2291 = vrot.slane %v2174, 5
      %v2292 = vrot.slane %v2291, 4
      %v2293 = vrot.slane %v1140, 5
      %v2294 = vsel %vm2213, %v2292, %v2293
      %v2295 = vrot.slane %v2293, 4
      %v2296 = vrot.slane %v1176, 5
      %v2297 = vsel %vm2213, %v2295, %v2296
      %v2298 = vrot.slane %v2175, 5
      %v2299 = vrot.slane %v2298, 4
      %v2300 = vrot.slane %v1142, 5
      %v2301 = vsel %vm2213, %v2299, %v2300
      %v2302 = vrot.slane %v2300, 4
      %v2303 = vrot.slane %v1177, 5
      %v2304 = vsel %vm2213, %v2302, %v2303
      %v2305 = vrot.slane %v2176, 5
      %v2306 = vrot.slane %v2305, 4
      %v2307 = vrot.slane %v1144, 5
      %v2308 = vsel %vm2213, %v2306, %v2307
      %v2309 = vrot.slane %v2307, 4
      %v2310 = vrot.slane %v1178, 5
      %v2311 = vsel %vm2213, %v2309, %v2310
      %v2312 = vrot.slane %v2177, 5
      %v2313 = vrot.slane %v2312, 4
      %v2314 = vrot.slane %v1146, 5
      %v2315 = vsel %vm2213, %v2313, %v2314
      %v2316 = vrot.slane %v2314, 4
      %v2317 = vrot.slane %v1179, 5
      %v2318 = vsel %vm2213, %v2316, %v2317
      %v2319 = vrot.slane %v2178, 5
      %v2320 = vrot.slane %v2319, 4
      %v2321 = vrot.slane %v1148, 5
      %v2322 = vsel %vm2213, %v2320, %v2321
      %v2323 = vrot.slane %v2321, 4
      %v2324 = vrot.slane %v1180, 5
      %v2325 = vsel %vm2213, %v2323, %v2324
      %s2326 = scalar_lea.vmem %s2, 128
      %v2327 = vld [vmem:[%s2326] sm:$0xf]
      %v2328 = vld [vmem:[%s2326 + $0x4] sm:$0xf]
      %v2329 = vld [vmem:[%s2326 + $0x8] sm:$0xf]
      %v2330 = vld [vmem:[%s2326 + $0xc] sm:$0xf]
      %v2331 = vld [vmem:[%s2326 + $0x10] sm:$0xf]
      %v2332 = vld [vmem:[%s2326 + $0x14] sm:$0xf]
      %v2333 = vld [vmem:[%s2326 + $0x18] sm:$0xf]
      %v2334 = vld [vmem:[%s2326 + $0x1c] sm:$0xf]
      %v2335 = vld [vmem:[%s2326 + $0x20] sm:$0xf]
      %v2336 = vld [vmem:[%s2326 + $0x24] sm:$0xf]
      %v2337 = vld [vmem:[%s2326 + $0x28] sm:$0xf]
      %v2338 = vld [vmem:[%s2326 + $0x2c] sm:$0xf]
      %v2339 = vld [vmem:[%s2326 + $0x30] sm:$0xf]
      %v2340 = vld [vmem:[%s2326 + $0x34] sm:$0xf]
      %v2341 = vld [vmem:[%s2326 + $0x38] sm:$0xf]
      %v2342 = vld [vmem:[%s2326 + $0x3c] sm:$0xf]
      %v2343 = vunpack.c.l.b16 %v2217
      %v2344 = vunpack.c.l.b16 %v2220
      %v2345 = vunpack.c.l.b16 %v2224
      %v2346 = vunpack.c.l.b16 %v2227
      %v2347 = vunpack.c.l.b16 %v2231
      %v2348 = vunpack.c.l.b16 %v2234
      %v2349 = vunpack.c.l.b16 %v2238
      %v2350 = vunpack.c.l.b16 %v2241
      %v2351 = vunpack.c.l.b16 %v2245
      %v2352 = vunpack.c.l.b16 %v2248
      %v2353 = vunpack.c.l.b16 %v2252
      %v2354 = vunpack.c.l.b16 %v2255
      %v2355 = vunpack.c.l.b16 %v2259
      %v2356 = vunpack.c.l.b16 %v2262
      %v2357 = vunpack.c.l.b16 %v2266
      %v2358 = vunpack.c.l.b16 %v2269
      %v2359 = vunpack.c.l.b16 %v2273
      %v2360 = vunpack.c.l.b16 %v2276
      %v2361 = vunpack.c.l.b16 %v2280
      %v2362 = vunpack.c.l.b16 %v2283
      %v2363 = vunpack.c.l.b16 %v2287
      %v2364 = vunpack.c.l.b16 %v2290
      %v2365 = vunpack.c.l.b16 %v2294
      %v2366 = vunpack.c.l.b16 %v2297
      %v2367 = vunpack.c.l.b16 %v2301
      %v2368 = vunpack.c.l.b16 %v2304
      %v2369 = vunpack.c.l.b16 %v2308
      %v2370 = vunpack.c.l.b16 %v2311
      %v2371 = vunpack.c.l.b16 %v2315
      %v2372 = vunpack.c.l.b16 %v2318
      %v2373 = vunpack.c.l.b16 %v2322
      %v2374 = vunpack.c.l.b16 %v2325
      %v2375 = vpack.c.b16 %v2344, %v2343
      %v2376 = vpack.c.b16 %v2346, %v2345
      %v2377 = vpack.c.b16 %v2348, %v2347
      %v2378 = vpack.c.b16 %v2350, %v2349
      %v2379 = vpack.c.b16 %v2352, %v2351
      %v2380 = vpack.c.b16 %v2354, %v2353
      %v2381 = vpack.c.b16 %v2356, %v2355
      %v2382 = vpack.c.b16 %v2358, %v2357
      %v2383 = vpack.c.b16 %v2360, %v2359
      %v2384 = vpack.c.b16 %v2362, %v2361
      %v2385 = vpack.c.b16 %v2364, %v2363
      %v2386 = vpack.c.b16 %v2366, %v2365
      %v2387 = vpack.c.b16 %v2368, %v2367
      %v2388 = vpack.c.b16 %v2370, %v2369
      %v2389 = vpack.c.b16 %v2372, %v2371
      %v2390 = vpack.c.b16 %v2374, %v2373
      %v2423 = vunpack.c.l.b16 %v2327
      %v2424 = vunpack.c.l.b16 %v2328
      %v2425 = vunpack.c.l.b16 %v2329
      %v2426 = vunpack.c.l.b16 %v2330
      %v2427 = vunpack.c.l.b16 %v2331
      %v2428 = vunpack.c.l.b16 %v2332
      %v2429 = vunpack.c.l.b16 %v2333
      %v2430 = vunpack.c.l.b16 %v2334
      %v2431 = vunpack.c.l.b16 %v2335
      %v2432 = vunpack.c.l.b16 %v2336
      %v2433 = vunpack.c.l.b16 %v2337
      %v2434 = vunpack.c.l.b16 %v2338
      %v2435 = vunpack.c.l.b16 %v2339
      %v2436 = vunpack.c.l.b16 %v2340
      %v2437 = vunpack.c.l.b16 %v2341
      %v2438 = vunpack.c.l.b16 %v2342
      %v2439 = vpack.c.b16 %v2424, %v2423
      %v2440 = vpack.c.b16 %v2426, %v2425
      %v2441 = vpack.c.b16 %v2428, %v2427
      %v2442 = vpack.c.b16 %v2430, %v2429
      %v2443 = vpack.c.b16 %v2432, %v2431
      %v2444 = vpack.c.b16 %v2434, %v2433
      %v2445 = vpack.c.b16 %v2436, %v2435
      %v2446 = vpack.c.b16 %v2438, %v2437
      %2455 = vmatprep.subr.bf16.mxu0 0
      %2456 = vmatpush1.bf16.msra.mxu0 %v2446
      %2457 = vmatprep.subr.bf16.mxu0 0
      %2458 = vmatpush1.bf16.msra.mxu0 %v2445
      %2459 = vmatprep.subr.bf16.mxu0 0
      %2460 = vmatpush1.bf16.msra.mxu0 %v2444
      %2461 = vmatprep.subr.bf16.mxu0 0
      %2462 = vmatpush1.bf16.msra.mxu0 %v2443
      %2463 = vmatprep.subr.bf16.mxu0 0
      %2464 = vmatpush1.bf16.msra.mxu0 %v2442
      %2465 = vmatprep.subr.bf16.mxu0 0
      %2466 = vmatpush1.bf16.msra.mxu0 %v2441
      %2467 = vmatprep.subr.bf16.mxu0 0
      %2468 = vmatpush1.bf16.msra.mxu0 %v2440
      %2469 = vmatprep.subr.bf16.mxu0 0
      %2470 = vmatpush1.bf16.msra.mxu0 %v2439
      %2471 = vmatprep.subr.bf16.mxu0 0
      %2472 = vmatpush2.bf16.msra.mxu0 0
      %2473 = vmatprep.subr.bf16.mxu0 0
      %2474 = vmatpush2.bf16.msra.mxu0 0
      %2475 = vmatprep.subr.bf16.mxu0 0
      %2476 = vmatpush2.bf16.msra.mxu0 0
      %2477 = vmatprep.subr.bf16.mxu0 0
      %2478 = vmatpush2.bf16.msra.mxu0 0
      %2479 = vmatprep.subr.bf16.mxu0 0
      %2480 = vmatpush2.bf16.msra.mxu0 0
      %2481 = vmatprep.subr.bf16.mxu0 0
      %2482 = vmatpush2.bf16.msra.mxu0 0
      %2483 = vmatprep.subr.bf16.mxu0 0
      %2484 = vmatpush2.bf16.msra.mxu0 0
      %2485 = vmatprep.subr.bf16.mxu0 0
      %2486 = vmatpush2.bf16.msra.mxu0 0
      %2487 = vmatprep.mubr.bf16.mxu0 0
      %2488 = vmatmul.mubr.bf16.gmra.mxu0 %v2375
      %v2489 = vpop.f32.mrf.mxu0
      %v2490 = vadd.f32 0.0, %v2489
      %v2491 = vpop.f32.mrf.mxu0
      %v2492 = vpop.f32.mrf.mxu0
      %v2493 = vadd.f32 0.0, %v2492
      %v2494 = vpop.f32.mrf.mxu0
      %2495 = vmatprep.mubr.bf16.mxu0 0
      %2496 = vmatmul.mubr.bf16.gmra.mxu0 %v2376
      %v2497 = vpop.f32.mrf.mxu0
      %v2498 = vadd.f32 0.0, %v2497
      %v2499 = vpop.f32.mrf.mxu0
      %v2500 = vpop.f32.mrf.mxu0
      %v2501 = vadd.f32 0.0, %v2500
      %v2502 = vpop.f32.mrf.mxu0
      %2503 = vmatprep.mubr.bf16.mxu0 0
      %2504 = vmatmul.mubr.bf16.gmra.mxu0 %v2377
      %v2505 = vpop.f32.mrf.mxu0
      %v2506 = vadd.f32 0.0, %v2505
      %v2507 = vpop.f32.mrf.mxu0
      %v2508 = vpop.f32.mrf.mxu0
      %v2509 = vadd.f32 0.0, %v2508
      %v2510 = vpop.f32.mrf.mxu0
      %2511 = vmatprep.mubr.bf16.mxu0 0
      %2512 = vmatmul.mubr.bf16.gmra.mxu0 %v2378
      %v2513 = vpop.f32.mrf.mxu0
      %v2514 = vadd.f32 0.0, %v2513
      %v2515 = vpop.f32.mrf.mxu0
      %v2516 = vpop.f32.mrf.mxu0
      %v2517 = vadd.f32 0.0, %v2516
      %v2518 = vpop.f32.mrf.mxu0
      %2519 = vmatprep.mubr.bf16.mxu0 0
      %2520 = vmatmul.mubr.bf16.gmra.mxu0 %v2379
      %v2521 = vpop.f32.mrf.mxu0
      %v2522 = vadd.f32 0.0, %v2521
      %v2523 = vpop.f32.mrf.mxu0
      %v2524 = vpop.f32.mrf.mxu0
      %v2525 = vadd.f32 0.0, %v2524
      %v2526 = vpop.f32.mrf.mxu0
      %2527 = vmatprep.mubr.bf16.mxu0 0
      %2528 = vmatmul.mubr.bf16.gmra.mxu0 %v2380
      %v2529 = vpop.f32.mrf.mxu0
      %v2530 = vadd.f32 0.0, %v2529
      %v2531 = vpop.f32.mrf.mxu0
      %v2532 = vpop.f32.mrf.mxu0
      %v2533 = vadd.f32 0.0, %v2532
      %v2534 = vpop.f32.mrf.mxu0
      %2535 = vmatprep.mubr.bf16.mxu0 0
      %2536 = vmatmul.mubr.bf16.gmra.mxu0 %v2381
      %v2537 = vpop.f32.mrf.mxu0
      %v2538 = vadd.f32 0.0, %v2537
      %v2539 = vpop.f32.mrf.mxu0
      %v2540 = vpop.f32.mrf.mxu0
      %v2541 = vadd.f32 0.0, %v2540
      %v2542 = vpop.f32.mrf.mxu0
      %2543 = vmatprep.mubr.bf16.mxu0 0
      %2544 = vmatmul.mubr.bf16.gmra.mxu0 %v2382
      %v2545 = vpop.f32.mrf.mxu0
      %v2546 = vadd.f32 0.0, %v2545
      %v2547 = vpop.f32.mrf.mxu0
      %v2548 = vpop.f32.mrf.mxu0
      %v2549 = vadd.f32 0.0, %v2548
      %v2550 = vpop.f32.mrf.mxu0
      %2551 = vmatprep.mubr.bf16.mxu0 0
      %2552 = vmatmul.mubr.bf16.gmra.mxu0 %v2383
      %v2553 = vpop.f32.mrf.mxu0
      %v2554 = vadd.f32 0.0, %v2553
      %v2555 = vpop.f32.mrf.mxu0
      %v2556 = vpop.f32.mrf.mxu0
      %v2557 = vadd.f32 0.0, %v2556
      %v2558 = vpop.f32.mrf.mxu0
      %2559 = vmatprep.mubr.bf16.mxu0 0
      %2560 = vmatmul.mubr.bf16.gmra.mxu0 %v2384
      %v2561 = vpop.f32.mrf.mxu0
      %v2562 = vadd.f32 0.0, %v2561
      %v2563 = vpop.f32.mrf.mxu0
      %v2564 = vpop.f32.mrf.mxu0
      %v2565 = vadd.f32 0.0, %v2564
      %v2566 = vpop.f32.mrf.mxu0
      %2567 = vmatprep.mubr.bf16.mxu0 0
      %2568 = vmatmul.mubr.bf16.gmra.mxu0 %v2385
      %v2569 = vpop.f32.mrf.mxu0
      %v2570 = vadd.f32 0.0, %v2569
      %v2571 = vpop.f32.mrf.mxu0
      %v2572 = vpop.f32.mrf.mxu0
      %v2573 = vadd.f32 0.0, %v2572
      %v2574 = vpop.f32.mrf.mxu0
      %2575 = vmatprep.mubr.bf16.mxu0 0
      %2576 = vmatmul.mubr.bf16.gmra.mxu0 %v2386
      %v2577 = vpop.f32.mrf.mxu0
      %v2578 = vadd.f32 0.0, %v2577
      %v2579 = vpop.f32.mrf.mxu0
      %v2580 = vpop.f32.mrf.mxu0
      %v2581 = vadd.f32 0.0, %v2580
      %v2582 = vpop.f32.mrf.mxu0
      %2583 = vmatprep.mubr.bf16.mxu0 0
      %2584 = vmatmul.mubr.bf16.gmra.mxu0 %v2387
      %v2585 = vpop.f32.mrf.mxu0
      %v2586 = vadd.f32 0.0, %v2585
      %v2587 = vpop.f32.mrf.mxu0
      %v2588 = vpop.f32.mrf.mxu0
      %v2589 = vadd.f32 0.0, %v2588
      %v2590 = vpop.f32.mrf.mxu0
      %2591 = vmatprep.mubr.bf16.mxu0 0
      %2592 = vmatmul.mubr.bf16.gmra.mxu0 %v2388
      %v2593 = vpop.f32.mrf.mxu0
      %v2594 = vadd.f32 0.0, %v2593
      %v2595 = vpop.f32.mrf.mxu0
      %v2596 = vpop.f32.mrf.mxu0
      %v2597 = vadd.f32 0.0, %v2596
      %v2598 = vpop.f32.mrf.mxu0
      %2599 = vmatprep.mubr.bf16.mxu0 0
      %2600 = vmatmul.mubr.bf16.gmra.mxu0 %v2389
      %v2601 = vpop.f32.mrf.mxu0
      %v2602 = vadd.f32 0.0, %v2601
      %v2603 = vpop.f32.mrf.mxu0
      %v2604 = vpop.f32.mrf.mxu0
      %v2605 = vadd.f32 0.0, %v2604
      %v2606 = vpop.f32.mrf.mxu0
      %2607 = vmatprep.mubr.bf16.mxu0 0
      %2608 = vmatmul.mubr.bf16.gmra.mxu0 %v2390
      %v2609 = vpop.f32.mrf.mxu0
      %v2610 = vadd.f32 0.0, %v2609
      %v2611 = vpop.f32.mrf.mxu0
      %v2612 = vpop.f32.mrf.mxu0
      %v2613 = vadd.f32 0.0, %v2612
      %v2614 = vpop.f32.mrf.mxu0
      %2615 = vdwg.mxu0
      %v2616 = vadd.f32 %v2037, %v2490
      %v2617 = vadd.f32 %v2040, %v2493
      %v2618 = vadd.f32 %v2045, %v2498
      %v2619 = vadd.f32 %v2048, %v2501
      %v2620 = vadd.f32 %v2053, %v2506
      %v2621 = vadd.f32 %v2056, %v2509
      %v2622 = vadd.f32 %v2061, %v2514
      %v2623 = vadd.f32 %v2064, %v2517
      %v2624 = vadd.f32 %v2069, %v2522
      %v2625 = vadd.f32 %v2072, %v2525
      %v2626 = vadd.f32 %v2077, %v2530
      %v2627 = vadd.f32 %v2080, %v2533
      %v2628 = vadd.f32 %v2085, %v2538
      %v2629 = vadd.f32 %v2088, %v2541
      %v2630 = vadd.f32 %v2093, %v2546
      %v2631 = vadd.f32 %v2096, %v2549
      %v2632 = vadd.f32 %v2101, %v2554
      %v2633 = vadd.f32 %v2104, %v2557
      %v2634 = vadd.f32 %v2109, %v2562
      %v2635 = vadd.f32 %v2112, %v2565
      %v2636 = vadd.f32 %v2117, %v2570
      %v2637 = vadd.f32 %v2120, %v2573
      %v2638 = vadd.f32 %v2125, %v2578
      %v2639 = vadd.f32 %v2128, %v2581
      %v2640 = vadd.f32 %v2133, %v2586
      %v2641 = vadd.f32 %v2136, %v2589
      %v2642 = vadd.f32 %v2141, %v2594
      %v2643 = vadd.f32 %v2144, %v2597
      %v2644 = vadd.f32 %v2149, %v2602
      %v2645 = vadd.f32 %v2152, %v2605
      %v2646 = vadd.f32 %v2157, %v2610
      %v2647 = vadd.f32 %v2160, %v2613
      %v2648 = vld [vmem:[%s891] sm:$0xf]
      %v2649 = vld [vmem:[%s891 + $0x4] sm:$0xf]
      %v2650 = vld [vmem:[%s891 + $0xc] sm:$0xf]
      %v2651 = vld [vmem:[%s891 + $0x10] sm:$0xf]
      %v2652 = vld [vmem:[%s891 + $0x18] sm:$0xf]
      %v2653 = vld [vmem:[%s891 + $0x1c] sm:$0xf]
      %v2654 = vld [vmem:[%s891 + $0x24] sm:$0xf]
      %v2655 = vld [vmem:[%s891 + $0x28] sm:$0xf]
      %v2656 = vld [vmem:[%s891 + $0x30] sm:$0xf]
      %v2657 = vld [vmem:[%s891 + $0x34] sm:$0xf]
      %v2658 = vld [vmem:[%s891 + $0x3c] sm:$0xf]
      %v2659 = vld [vmem:[%s891 + $0x40] sm:$0xf]
      %v2660 = vld [vmem:[%s891 + $0x48] sm:$0xf]
      %v2661 = vld [vmem:[%s891 + $0x4c] sm:$0xf]
      %v2662 = vld [vmem:[%s891 + $0x54] sm:$0xf]
      %v2663 = vld [vmem:[%s891 + $0x58] sm:$0xf]
      %v2664 = vld [vmem:[%s891 + $0x60] sm:$0xf]
      %v2665 = vld [vmem:[%s891 + $0x64] sm:$0xf]
      %v2666 = vld [vmem:[%s891 + $0x6c] sm:$0xf]
      %v2667 = vld [vmem:[%s891 + $0x70] sm:$0xf]
      %v2668 = vld [vmem:[%s891 + $0x78] sm:$0xf]
      %v2669 = vld [vmem:[%s891 + $0x7c] sm:$0xf]
      %v2670 = vld [vmem:[%s891 + $0x84] sm:$0xf]
      %v2671 = vld [vmem:[%s891 + $0x88] sm:$0xf]
      %v2672 = vld [vmem:[%s891 + $0x90] sm:$0xf]
      %v2673 = vld [vmem:[%s891 + $0x94] sm:$0xf]
      %v2674 = vld [vmem:[%s891 + $0x9c] sm:$0xf]
      %v2675 = vld [vmem:[%s891 + $0xa0] sm:$0xf]
      %v2676 = vld [vmem:[%s891 + $0xa8] sm:$0xf]
      %v2677 = vld [vmem:[%s891 + $0xac] sm:$0xf]
      %v2678 = vld [vmem:[%s891 + $0xb4] sm:$0xf]
      %v2679 = vld [vmem:[%s891 + $0xb8] sm:$0xf]
      %s2680 = scalar_lea.vmem %s2, 192
      %v2681 = vld [vmem:[%s2680] sm:$0xf]
      %v2682 = vld [vmem:[%s2680 + $0x4] sm:$0xf]
      %v2683 = vld [vmem:[%s2680 + $0x8] sm:$0xf]
      %v2684 = vld [vmem:[%s2680 + $0xc] sm:$0xf]
      %v2685 = vld [vmem:[%s2680 + $0x10] sm:$0xf]
      %v2686 = vld [vmem:[%s2680 + $0x14] sm:$0xf]
      %v2687 = vld [vmem:[%s2680 + $0x18] sm:$0xf]
      %v2688 = vld [vmem:[%s2680 + $0x1c] sm:$0xf]
      %v2689 = vld [vmem:[%s2680 + $0x20] sm:$0xf]
      %v2690 = vld [vmem:[%s2680 + $0x24] sm:$0xf]
      %v2691 = vld [vmem:[%s2680 + $0x28] sm:$0xf]
      %v2692 = vld [vmem:[%s2680 + $0x2c] sm:$0xf]
      %v2693 = vld [vmem:[%s2680 + $0x30] sm:$0xf]
      %v2694 = vld [vmem:[%s2680 + $0x34] sm:$0xf]
      %v2695 = vld [vmem:[%s2680 + $0x38] sm:$0xf]
      %v2696 = vld [vmem:[%s2680 + $0x3c] sm:$0xf]
      %v2729 = vunpack.c.l.b16 %v2648
      %v2730 = vunpack.c.l.b16 %v2649
      %v2731 = vunpack.c.l.b16 %v2650
      %v2732 = vunpack.c.l.b16 %v2651
      %v2733 = vunpack.c.l.b16 %v2652
      %v2734 = vunpack.c.l.b16 %v2653
      %v2735 = vunpack.c.l.b16 %v2654
      %v2736 = vunpack.c.l.b16 %v2655
      %v2737 = vunpack.c.l.b16 %v2656
      %v2738 = vunpack.c.l.b16 %v2657
      %v2739 = vunpack.c.l.b16 %v2658
      %v2740 = vunpack.c.l.b16 %v2659
      %v2741 = vunpack.c.l.b16 %v2660
      %v2742 = vunpack.c.l.b16 %v2661
      %v2743 = vunpack.c.l.b16 %v2662
      %v2744 = vunpack.c.l.b16 %v2663
      %v2745 = vunpack.c.l.b16 %v2664
      %v2746 = vunpack.c.l.b16 %v2665
      %v2747 = vunpack.c.l.b16 %v2666
      %v2748 = vunpack.c.l.b16 %v2667
      %v2749 = vunpack.c.l.b16 %v2668
      %v2750 = vunpack.c.l.b16 %v2669
      %v2751 = vunpack.c.l.b16 %v2670
      %v2752 = vunpack.c.l.b16 %v2671
      %v2753 = vunpack.c.l.b16 %v2672
      %v2754 = vunpack.c.l.b16 %v2673
      %v2755 = vunpack.c.l.b16 %v2674
      %v2756 = vunpack.c.l.b16 %v2675
      %v2757 = vunpack.c.l.b16 %v2676
      %v2758 = vunpack.c.l.b16 %v2677
      %v2759 = vunpack.c.l.b16 %v2678
      %v2760 = vunpack.c.l.b16 %v2679
      %v2761 = vpack.c.b16 %v2730, %v2729
      %v2762 = vpack.c.b16 %v2732, %v2731
      %v2763 = vpack.c.b16 %v2734, %v2733
      %v2764 = vpack.c.b16 %v2736, %v2735
      %v2765 = vpack.c.b16 %v2738, %v2737
      %v2766 = vpack.c.b16 %v2740, %v2739
      %v2767 = vpack.c.b16 %v2742, %v2741
      %v2768 = vpack.c.b16 %v2744, %v2743
      %v2769 = vpack.c.b16 %v2746, %v2745
      %v2770 = vpack.c.b16 %v2748, %v2747
      %v2771 = vpack.c.b16 %v2750, %v2749
      %v2772 = vpack.c.b16 %v2752, %v2751
      %v2773 = vpack.c.b16 %v2754, %v2753
      %v2774 = vpack.c.b16 %v2756, %v2755
      %v2775 = vpack.c.b16 %v2758, %v2757
      %v2776 = vpack.c.b16 %v2760, %v2759
      %v2809 = vunpack.c.l.b16 %v2681
      %v2810 = vunpack.c.l.b16 %v2682
      %v2811 = vunpack.c.l.b16 %v2683
      %v2812 = vunpack.c.l.b16 %v2684
      %v2813 = vunpack.c.l.b16 %v2685
      %v2814 = vunpack.c.l.b16 %v2686
      %v2815 = vunpack.c.l.b16 %v2687
      %v2816 = vunpack.c.l.b16 %v2688
      %v2817 = vunpack.c.l.b16 %v2689
      %v2818 = vunpack.c.l.b16 %v2690
      %v2819 = vunpack.c.l.b16 %v2691
      %v2820 = vunpack.c.l.b16 %v2692
      %v2821 = vunpack.c.l.b16 %v2693
      %v2822 = vunpack.c.l.b16 %v2694
      %v2823 = vunpack.c.l.b16 %v2695
      %v2824 = vunpack.c.l.b16 %v2696
      %v2825 = vpack.c.b16 %v2810, %v2809
      %v2826 = vpack.c.b16 %v2812, %v2811
      %v2827 = vpack.c.b16 %v2814, %v2813
      %v2828 = vpack.c.b16 %v2816, %v2815
      %v2829 = vpack.c.b16 %v2818, %v2817
      %v2830 = vpack.c.b16 %v2820, %v2819
      %v2831 = vpack.c.b16 %v2822, %v2821
      %v2832 = vpack.c.b16 %v2824, %v2823
      %2841 = vmatprep.subr.bf16.mxu0 0
      %2842 = vmatpush1.bf16.msra.mxu0 %v2832
      %2843 = vmatprep.subr.bf16.mxu0 0
      %2844 = vmatpush1.bf16.msra.mxu0 %v2831
      %2845 = vmatprep.subr.bf16.mxu0 0
      %2846 = vmatpush1.bf16.msra.mxu0 %v2830
      %2847 = vmatprep.subr.bf16.mxu0 0
      %2848 = vmatpush1.bf16.msra.mxu0 %v2829
      %2849 = vmatprep.subr.bf16.mxu0 0
      %2850 = vmatpush1.bf16.msra.mxu0 %v2828
      %2851 = vmatprep.subr.bf16.mxu0 0
      %2852 = vmatpush1.bf16.msra.mxu0 %v2827
      %2853 = vmatprep.subr.bf16.mxu0 0
      %2854 = vmatpush1.bf16.msra.mxu0 %v2826
      %2855 = vmatprep.subr.bf16.mxu0 0
      %2856 = vmatpush1.bf16.msra.mxu0 %v2825
      %2857 = vmatprep.subr.bf16.mxu0 0
      %2858 = vmatpush2.bf16.msra.mxu0 0
      %2859 = vmatprep.subr.bf16.mxu0 0
      %2860 = vmatpush2.bf16.msra.mxu0 0
      %2861 = vmatprep.subr.bf16.mxu0 0
      %2862 = vmatpush2.bf16.msra.mxu0 0
      %2863 = vmatprep.subr.bf16.mxu0 0
      %2864 = vmatpush2.bf16.msra.mxu0 0
      %2865 = vmatprep.subr.bf16.mxu0 0
      %2866 = vmatpush2.bf16.msra.mxu0 0
      %2867 = vmatprep.subr.bf16.mxu0 0
      %2868 = vmatpush2.bf16.msra.mxu0 0
      %2869 = vmatprep.subr.bf16.mxu0 0
      %2870 = vmatpush2.bf16.msra.mxu0 0
      %2871 = vmatprep.subr.bf16.mxu0 0
      %2872 = vmatpush2.bf16.msra.mxu0 0
      %2873 = vmatprep.mubr.bf16.mxu0 0
      %2874 = vmatmul.mubr.bf16.gmra.mxu0 %v2761
      %v2875 = vpop.f32.mrf.mxu0
      %v2876 = vadd.f32 0.0, %v2875
      %v2877 = vpop.f32.mrf.mxu0
      %v2878 = vpop.f32.mrf.mxu0
      %v2879 = vadd.f32 0.0, %v2878
      %v2880 = vpop.f32.mrf.mxu0
      %2881 = vmatprep.mubr.bf16.mxu0 0
      %2882 = vmatmul.mubr.bf16.gmra.mxu0 %v2762
      %v2883 = vpop.f32.mrf.mxu0
      %v2884 = vadd.f32 0.0, %v2883
      %v2885 = vpop.f32.mrf.mxu0
      %v2886 = vpop.f32.mrf.mxu0
      %v2887 = vadd.f32 0.0, %v2886
      %v2888 = vpop.f32.mrf.mxu0
      %2889 = vmatprep.mubr.bf16.mxu0 0
      %2890 = vmatmul.mubr.bf16.gmra.mxu0 %v2763
      %v2891 = vpop.f32.mrf.mxu0
      %v2892 = vadd.f32 0.0, %v2891
      %v2893 = vpop.f32.mrf.mxu0
      %v2894 = vpop.f32.mrf.mxu0
      %v2895 = vadd.f32 0.0, %v2894
      %v2896 = vpop.f32.mrf.mxu0
      %2897 = vmatprep.mubr.bf16.mxu0 0
      %2898 = vmatmul.mubr.bf16.gmra.mxu0 %v2764
      %v2899 = vpop.f32.mrf.mxu0
      %v2900 = vadd.f32 0.0, %v2899
      %v2901 = vpop.f32.mrf.mxu0
      %v2902 = vpop.f32.mrf.mxu0
      %v2903 = vadd.f32 0.0, %v2902
      %v2904 = vpop.f32.mrf.mxu0
      %2905 = vmatprep.mubr.bf16.mxu0 0
      %2906 = vmatmul.mubr.bf16.gmra.mxu0 %v2765
      %v2907 = vpop.f32.mrf.mxu0
      %v2908 = vadd.f32 0.0, %v2907
      %v2909 = vpop.f32.mrf.mxu0
      %v2910 = vpop.f32.mrf.mxu0
      %v2911 = vadd.f32 0.0, %v2910
      %v2912 = vpop.f32.mrf.mxu0
      %2913 = vmatprep.mubr.bf16.mxu0 0
      %2914 = vmatmul.mubr.bf16.gmra.mxu0 %v2766
      %v2915 = vpop.f32.mrf.mxu0
      %v2916 = vadd.f32 0.0, %v2915
      %v2917 = vpop.f32.mrf.mxu0
      %v2918 = vpop.f32.mrf.mxu0
      %v2919 = vadd.f32 0.0, %v2918
      %v2920 = vpop.f32.mrf.mxu0
      %2921 = vmatprep.mubr.bf16.mxu0 0
      %2922 = vmatmul.mubr.bf16.gmra.mxu0 %v2767
      %v2923 = vpop.f32.mrf.mxu0
      %v2924 = vadd.f32 0.0, %v2923
      %v2925 = vpop.f32.mrf.mxu0
      %v2926 = vpop.f32.mrf.mxu0
      %v2927 = vadd.f32 0.0, %v2926
      %v2928 = vpop.f32.mrf.mxu0
      %2929 = vmatprep.mubr.bf16.mxu0 0
      %2930 = vmatmul.mubr.bf16.gmra.mxu0 %v2768
      %v2931 = vpop.f32.mrf.mxu0
      %v2932 = vadd.f32 0.0, %v2931
      %v2933 = vpop.f32.mrf.mxu0
      %v2934 = vpop.f32.mrf.mxu0
      %v2935 = vadd.f32 0.0, %v2934
      %v2936 = vpop.f32.mrf.mxu0
      %2937 = vmatprep.mubr.bf16.mxu0 0
      %2938 = vmatmul.mubr.bf16.gmra.mxu0 %v2769
      %v2939 = vpop.f32.mrf.mxu0
      %v2940 = vadd.f32 0.0, %v2939
      %v2941 = vpop.f32.mrf.mxu0
      %v2942 = vpop.f32.mrf.mxu0
      %v2943 = vadd.f32 0.0, %v2942
      %v2944 = vpop.f32.mrf.mxu0
      %2945 = vmatprep.mubr.bf16.mxu0 0
      %2946 = vmatmul.mubr.bf16.gmra.mxu0 %v2770
      %v2947 = vpop.f32.mrf.mxu0
      %v2948 = vadd.f32 0.0, %v2947
      %v2949 = vpop.f32.mrf.mxu0
      %v2950 = vpop.f32.mrf.mxu0
      %v2951 = vadd.f32 0.0, %v2950
      %v2952 = vpop.f32.mrf.mxu0
      %2953 = vmatprep.mubr.bf16.mxu0 0
      %2954 = vmatmul.mubr.bf16.gmra.mxu0 %v2771
      %v2955 = vpop.f32.mrf.mxu0
      %v2956 = vadd.f32 0.0, %v2955
      %v2957 = vpop.f32.mrf.mxu0
      %v2958 = vpop.f32.mrf.mxu0
      %v2959 = vadd.f32 0.0, %v2958
      %v2960 = vpop.f32.mrf.mxu0
      %2961 = vmatprep.mubr.bf16.mxu0 0
      %2962 = vmatmul.mubr.bf16.gmra.mxu0 %v2772
      %v2963 = vpop.f32.mrf.mxu0
      %v2964 = vadd.f32 0.0, %v2963
      %v2965 = vpop.f32.mrf.mxu0
      %v2966 = vpop.f32.mrf.mxu0
      %v2967 = vadd.f32 0.0, %v2966
      %v2968 = vpop.f32.mrf.mxu0
      %2969 = vmatprep.mubr.bf16.mxu0 0
      %2970 = vmatmul.mubr.bf16.gmra.mxu0 %v2773
      %v2971 = vpop.f32.mrf.mxu0
      %v2972 = vadd.f32 0.0, %v2971
      %v2973 = vpop.f32.mrf.mxu0
      %v2974 = vpop.f32.mrf.mxu0
      %v2975 = vadd.f32 0.0, %v2974
      %v2976 = vpop.f32.mrf.mxu0
      %2977 = vmatprep.mubr.bf16.mxu0 0
      %2978 = vmatmul.mubr.bf16.gmra.mxu0 %v2774
      %v2979 = vpop.f32.mrf.mxu0
      %v2980 = vadd.f32 0.0, %v2979
      %v2981 = vpop.f32.mrf.mxu0
      %v2982 = vpop.f32.mrf.mxu0
      %v2983 = vadd.f32 0.0, %v2982
      %v2984 = vpop.f32.mrf.mxu0
      %2985 = vmatprep.mubr.bf16.mxu0 0
      %2986 = vmatmul.mubr.bf16.gmra.mxu0 %v2775
      %v2987 = vpop.f32.mrf.mxu0
      %v2988 = vadd.f32 0.0, %v2987
      %v2989 = vpop.f32.mrf.mxu0
      %v2990 = vpop.f32.mrf.mxu0
      %v2991 = vadd.f32 0.0, %v2990
      %v2992 = vpop.f32.mrf.mxu0
      %2993 = vmatprep.mubr.bf16.mxu0 0
      %2994 = vmatmul.mubr.bf16.gmra.mxu0 %v2776
      %v2995 = vpop.f32.mrf.mxu0
      %v2996 = vadd.f32 0.0, %v2995
      %v2997 = vpop.f32.mrf.mxu0
      %v2998 = vpop.f32.mrf.mxu0
      %v2999 = vadd.f32 0.0, %v2998
      %v3000 = vpop.f32.mrf.mxu0
      %3001 = vdwg.mxu0
      %v3002 = vadd.f32 %v2616, %v2876
      %v3003 = vadd.f32 %v2617, %v2879
      %v3004 = vadd.f32 %v2618, %v2884
      %v3005 = vadd.f32 %v2619, %v2887
      %v3006 = vadd.f32 %v2620, %v2892
      %v3007 = vadd.f32 %v2621, %v2895
      %v3008 = vadd.f32 %v2622, %v2900
      %v3009 = vadd.f32 %v2623, %v2903
      %v3010 = vadd.f32 %v2624, %v2908
      %v3011 = vadd.f32 %v2625, %v2911
      %v3012 = vadd.f32 %v2626, %v2916
      %v3013 = vadd.f32 %v2627, %v2919
      %v3014 = vadd.f32 %v2628, %v2924
      %v3015 = vadd.f32 %v2629, %v2927
      %v3016 = vadd.f32 %v2630, %v2932
      %v3017 = vadd.f32 %v2631, %v2935
      %v3018 = vadd.f32 %v2632, %v2940
      %v3019 = vadd.f32 %v2633, %v2943
      %v3020 = vadd.f32 %v2634, %v2948
      %v3021 = vadd.f32 %v2635, %v2951
      %v3022 = vadd.f32 %v2636, %v2956
      %v3023 = vadd.f32 %v2637, %v2959
      %v3024 = vadd.f32 %v2638, %v2964
      %v3025 = vadd.f32 %v2639, %v2967
      %v3026 = vadd.f32 %v2640, %v2972
      %v3027 = vadd.f32 %v2641, %v2975
      %v3028 = vadd.f32 %v2642, %v2980
      %v3029 = vadd.f32 %v2643, %v2983
      %v3030 = vadd.f32 %v2644, %v2988
      %v3031 = vadd.f32 %v2645, %v2991
      %v3032 = vadd.f32 %v2646, %v2996
      %v3033 = vadd.f32 %v2647, %v2999
      %v3034 = vld [vmem:[%s891] sm:$0xf]
      %v3035 = vld [vmem:[%s891 + $0x4] sm:$0xf]
      %v3036 = vld [vmem:[%s891 + $0x8] sm:$0x1]
      %v3037 = vld [vmem:[%s891 + $0xc] sm:$0xf]
      %v3038 = vld [vmem:[%s891 + $0x10] sm:$0xf]
      %v3039 = vld [vmem:[%s891 + $0x14] sm:$0x1]
      %v3040 = vld [vmem:[%s891 + $0x18] sm:$0xf]
      %v3041 = vld [vmem:[%s891 + $0x1c] sm:$0xf]
      %v3042 = vld [vmem:[%s891 + $0x20] sm:$0x1]
      %v3043 = vld [vmem:[%s891 + $0x24] sm:$0xf]
      %v3044 = vld [vmem:[%s891 + $0x28] sm:$0xf]
      %v3045 = vld [vmem:[%s891 + $0x2c] sm:$0x1]
      %v3046 = vld [vmem:[%s891 + $0x30] sm:$0xf]
      %v3047 = vld [vmem:[%s891 + $0x34] sm:$0xf]
      %v3048 = vld [vmem:[%s891 + $0x38] sm:$0x1]
      %v3049 = vld [vmem:[%s891 + $0x3c] sm:$0xf]
      %v3050 = vld [vmem:[%s891 + $0x40] sm:$0xf]
      %v3051 = vld [vmem:[%s891 + $0x44] sm:$0x1]
      %v3052 = vld [vmem:[%s891 + $0x48] sm:$0xf]
      %v3053 = vld [vmem:[%s891 + $0x4c] sm:$0xf]
      %v3054 = vld [vmem:[%s891 + $0x50] sm:$0x1]
      %v3055 = vld [vmem:[%s891 + $0x54] sm:$0xf]
      %v3056 = vld [vmem:[%s891 + $0x58] sm:$0xf]
      %v3057 = vld [vmem:[%s891 + $0x5c] sm:$0x1]
      %v3058 = vld [vmem:[%s891 + $0x60] sm:$0xf]
      %v3059 = vld [vmem:[%s891 + $0x64] sm:$0xf]
      %v3060 = vld [vmem:[%s891 + $0x68] sm:$0x1]
      %v3061 = vld [vmem:[%s891 + $0x6c] sm:$0xf]
      %v3062 = vld [vmem:[%s891 + $0x70] sm:$0xf]
      %v3063 = vld [vmem:[%s891 + $0x74] sm:$0x1]
      %v3064 = vld [vmem:[%s891 + $0x78] sm:$0xf]
      %v3065 = vld [vmem:[%s891 + $0x7c] sm:$0xf]
      %v3066 = vld [vmem:[%s891 + $0x80] sm:$0x1]
      %v3067 = vld [vmem:[%s891 + $0x84] sm:$0xf]
      %v3068 = vld [vmem:[%s891 + $0x88] sm:$0xf]
      %v3069 = vld [vmem:[%s891 + $0x8c] sm:$0x1]
      %v3070 = vld [vmem:[%s891 + $0x90] sm:$0xf]
      %v3071 = vld [vmem:[%s891 + $0x94] sm:$0xf]
      %v3072 = vld [vmem:[%s891 + $0x98] sm:$0x1]
      %v3073 = vld [vmem:[%s891 + $0x9c] sm:$0xf]
      %v3074 = vld [vmem:[%s891 + $0xa0] sm:$0xf]
      %v3075 = vld [vmem:[%s891 + $0xa4] sm:$0x1]
      %v3076 = vld [vmem:[%s891 + $0xa8] sm:$0xf]
      %v3077 = vld [vmem:[%s891 + $0xac] sm:$0xf]
      %v3078 = vld [vmem:[%s891 + $0xb0] sm:$0x1]
      %v3079 = vld [vmem:[%s891 + $0xb4] sm:$0xf]
      %v3080 = vld [vmem:[%s891 + $0xb8] sm:$0xf]
      %v3081 = vld [vmem:[%s891 + $0xbc] sm:$0x1]
      %v3083 = vshrl.u32 %v3034, 16
      %v3085 = vrot.slane %v3083, 4
      %v3086 = vshll.u32 %v3034, 16
      %v3088 = vrot.slane %v3086, 5
      %v3089 = vor.u32 %v3085, %v3088
      %v3090 = vrot.slane %v3089, 4
      %v3092 = vshll.u32 %v3035, 16
      %v3094 = vrot.slane %v3092, 5
      %v3095 = vsel %vm1183, %v3090, %v3094
      %v3096 = vshrl.u32 %v3035, 16
      %v3098 = vrot.slane %v3096, 4
      %v3099 = vor.u32 %v3098, %v3094
      %v3100 = vrot.slane %v3099, 4
      %v3102 = vshll.u32 %v3036, 16
      %v3104 = vrot.slane %v3102, 5
      %v3105 = vsel %vm1183, %v3100, %v3104
      %v3107 = vshrl.u32 %v3037, 16
      %v3109 = vrot.slane %v3107, 4
      %v3110 = vshll.u32 %v3037, 16
      %v3112 = vrot.slane %v3110, 5
      %v3113 = vor.u32 %v3109, %v3112
      %v3114 = vrot.slane %v3113, 4
      %v3116 = vshll.u32 %v3038, 16
      %v3118 = vrot.slane %v3116, 5
      %v3119 = vsel %vm1183, %v3114, %v3118
      %v3120 = vshrl.u32 %v3038, 16
      %v3122 = vrot.slane %v3120, 4
      %v3123 = vor.u32 %v3122, %v3118
      %v3124 = vrot.slane %v3123, 4
      %v3126 = vshll.u32 %v3039, 16
      %v3128 = vrot.slane %v3126, 5
      %v3129 = vsel %vm1183, %v3124, %v3128
      %v3131 = vshrl.u32 %v3040, 16
      %v3133 = vrot.slane %v3131, 4
      %v3134 = vshll.u32 %v3040, 16
      %v3136 = vrot.slane %v3134, 5
      %v3137 = vor.u32 %v3133, %v3136
      %v3138 = vrot.slane %v3137, 4
      %v3140 = vshll.u32 %v3041, 16
      %v3142 = vrot.slane %v3140, 5
      %v3143 = vsel %vm1183, %v3138, %v3142
      %v3144 = vshrl.u32 %v3041, 16
      %v3146 = vrot.slane %v3144, 4
      %v3147 = vor.u32 %v3146, %v3142
      %v3148 = vrot.slane %v3147, 4
      %v3150 = vshll.u32 %v3042, 16
      %v3152 = vrot.slane %v3150, 5
      %v3153 = vsel %vm1183, %v3148, %v3152
      %v3155 = vshrl.u32 %v3043, 16
      %v3157 = vrot.slane %v3155, 4
      %v3158 = vshll.u32 %v3043, 16
      %v3160 = vrot.slane %v3158, 5
      %v3161 = vor.u32 %v3157, %v3160
      %v3162 = vrot.slane %v3161, 4
      %v3164 = vshll.u32 %v3044, 16
      %v3166 = vrot.slane %v3164, 5
      %v3167 = vsel %vm1183, %v3162, %v3166
      %v3168 = vshrl.u32 %v3044, 16
      %v3170 = vrot.slane %v3168, 4
      %v3171 = vor.u32 %v3170, %v3166
      %v3172 = vrot.slane %v3171, 4
      %v3174 = vshll.u32 %v3045, 16
      %v3176 = vrot.slane %v3174, 5
      %v3177 = vsel %vm1183, %v3172, %v3176
      %v3179 = vshrl.u32 %v3046, 16
      %v3181 = vrot.slane %v3179, 4
      %v3182 = vshll.u32 %v3046, 16
      %v3184 = vrot.slane %v3182, 5
      %v3185 = vor.u32 %v3181, %v3184
      %v3186 = vrot.slane %v3185, 4
      %v3188 = vshll.u32 %v3047, 16
      %v3190 = vrot.slane %v3188, 5
      %v3191 = vsel %vm1183, %v3186, %v3190
      %v3192 = vshrl.u32 %v3047, 16
      %v3194 = vrot.slane %v3192, 4
      %v3195 = vor.u32 %v3194, %v3190
      %v3196 = vrot.slane %v3195, 4
      %v3198 = vshll.u32 %v3048, 16
      %v3200 = vrot.slane %v3198, 5
      %v3201 = vsel %vm1183, %v3196, %v3200
      %v3203 = vshrl.u32 %v3049, 16
      %v3205 = vrot.slane %v3203, 4
      %v3206 = vshll.u32 %v3049, 16
      %v3208 = vrot.slane %v3206, 5
      %v3209 = vor.u32 %v3205, %v3208
      %v3210 = vrot.slane %v3209, 4
      %v3212 = vshll.u32 %v3050, 16
      %v3214 = vrot.slane %v3212, 5
      %v3215 = vsel %vm1183, %v3210, %v3214
      %v3216 = vshrl.u32 %v3050, 16
      %v3218 = vrot.slane %v3216, 4
      %v3219 = vor.u32 %v3218, %v3214
      %v3220 = vrot.slane %v3219, 4
      %v3222 = vshll.u32 %v3051, 16
      %v3224 = vrot.slane %v3222, 5
      %v3225 = vsel %vm1183, %v3220, %v3224
      %v3227 = vshrl.u32 %v3052, 16
      %v3229 = vrot.slane %v3227, 4
      %v3230 = vshll.u32 %v3052, 16
      %v3232 = vrot.slane %v3230, 5
      %v3233 = vor.u32 %v3229, %v3232
      %v3234 = vrot.slane %v3233, 4
      %v3236 = vshll.u32 %v3053, 16
      %v3238 = vrot.slane %v3236, 5
      %v3239 = vsel %vm1183, %v3234, %v3238
      %v3240 = vshrl.u32 %v3053, 16
      %v3242 = vrot.slane %v3240, 4
      %v3243 = vor.u32 %v3242, %v3238
      %v3244 = vrot.slane %v3243, 4
      %v3246 = vshll.u32 %v3054, 16
      %v3248 = vrot.slane %v3246, 5
      %v3249 = vsel %vm1183, %v3244, %v3248
      %v3251 = vshrl.u32 %v3055, 16
      %v3253 = vrot.slane %v3251, 4
      %v3254 = vshll.u32 %v3055, 16
      %v3256 = vrot.slane %v3254, 5
      %v3257 = vor.u32 %v3253, %v3256
      %v3258 = vrot.slane %v3257, 4
      %v3260 = vshll.u32 %v3056, 16
      %v3262 = vrot.slane %v3260, 5
      %v3263 = vsel %vm1183, %v3258, %v3262
      %v3264 = vshrl.u32 %v3056, 16
      %v3266 = vrot.slane %v3264, 4
      %v3267 = vor.u32 %v3266, %v3262
      %v3268 = vrot.slane %v3267, 4
      %v3270 = vshll.u32 %v3057, 16
      %v3272 = vrot.slane %v3270, 5
      %v3273 = vsel %vm1183, %v3268, %v3272
      %v3275 = vshrl.u32 %v3058, 16
      %v3277 = vrot.slane %v3275, 4
      %v3278 = vshll.u32 %v3058, 16
      %v3280 = vrot.slane %v3278, 5
      %v3281 = vor.u32 %v3277, %v3280
      %v3282 = vrot.slane %v3281, 4
      %v3284 = vshll.u32 %v3059, 16
      %v3286 = vrot.slane %v3284, 5
      %v3287 = vsel %vm1183, %v3282, %v3286
      %v3288 = vshrl.u32 %v3059, 16
      %v3290 = vrot.slane %v3288, 4
      %v3291 = vor.u32 %v3290, %v3286
      %v3292 = vrot.slane %v3291, 4
      %v3294 = vshll.u32 %v3060, 16
      %v3296 = vrot.slane %v3294, 5
      %v3297 = vsel %vm1183, %v3292, %v3296
      %v3299 = vshrl.u32 %v3061, 16
      %v3301 = vrot.slane %v3299, 4
      %v3302 = vshll.u32 %v3061, 16
      %v3304 = vrot.slane %v3302, 5
      %v3305 = vor.u32 %v3301, %v3304
      %v3306 = vrot.slane %v3305, 4
      %v3308 = vshll.u32 %v3062, 16
      %v3310 = vrot.slane %v3308, 5
      %v3311 = vsel %vm1183, %v3306, %v3310
      %v3312 = vshrl.u32 %v3062, 16
      %v3314 = vrot.slane %v3312, 4
      %v3315 = vor.u32 %v3314, %v3310
      %v3316 = vrot.slane %v3315, 4
      %v3318 = vshll.u32 %v3063, 16
      %v3320 = vrot.slane %v3318, 5
      %v3321 = vsel %vm1183, %v3316, %v3320
      %v3323 = vshrl.u32 %v3064, 16
      %v3325 = vrot.slane %v3323, 4
      %v3326 = vshll.u32 %v3064, 16
      %v3328 = vrot.slane %v3326, 5
      %v3329 = vor.u32 %v3325, %v3328
      %v3330 = vrot.slane %v3329, 4
      %v3332 = vshll.u32 %v3065, 16
      %v3334 = vrot.slane %v3332, 5
      %v3335 = vsel %vm1183, %v3330, %v3334
      %v3336 = vshrl.u32 %v3065, 16
      %v3338 = vrot.slane %v3336, 4
      %v3339 = vor.u32 %v3338, %v3334
      %v3340 = vrot.slane %v3339, 4
      %v3342 = vshll.u32 %v3066, 16
      %v3344 = vrot.slane %v3342, 5
      %v3345 = vsel %vm1183, %v3340, %v3344
      %v3347 = vshrl.u32 %v3067, 16
      %v3349 = vrot.slane %v3347, 4
      %v3350 = vshll.u32 %v3067, 16
      %v3352 = vrot.slane %v3350, 5
      %v3353 = vor.u32 %v3349, %v3352
      %v3354 = vrot.slane %v3353, 4
      %v3356 = vshll.u32 %v3068, 16
      %v3358 = vrot.slane %v3356, 5
      %v3359 = vsel %vm1183, %v3354, %v3358
      %v3360 = vshrl.u32 %v3068, 16
      %v3362 = vrot.slane %v3360, 4
      %v3363 = vor.u32 %v3362, %v3358
      %v3364 = vrot.slane %v3363, 4
      %v3366 = vshll.u32 %v3069, 16
      %v3368 = vrot.slane %v3366, 5
      %v3369 = vsel %vm1183, %v3364, %v3368
      %v3371 = vshrl.u32 %v3070, 16
      %v3373 = vrot.slane %v3371, 4
      %v3374 = vshll.u32 %v3070, 16
      %v3376 = vrot.slane %v3374, 5
      %v3377 = vor.u32 %v3373, %v3376
      %v3378 = vrot.slane %v3377, 4
      %v3380 = vshll.u32 %v3071, 16
      %v3382 = vrot.slane %v3380, 5
      %v3383 = vsel %vm1183, %v3378, %v3382
      %v3384 = vshrl.u32 %v3071, 16
      %v3386 = vrot.slane %v3384, 4
      %v3387 = vor.u32 %v3386, %v3382
      %v3388 = vrot.slane %v3387, 4
      %v3390 = vshll.u32 %v3072, 16
      %v3392 = vrot.slane %v3390, 5
      %v3393 = vsel %vm1183, %v3388, %v3392
      %v3395 = vshrl.u32 %v3073, 16
      %v3397 = vrot.slane %v3395, 4
      %v3398 = vshll.u32 %v3073, 16
      %v3400 = vrot.slane %v3398, 5
      %v3401 = vor.u32 %v3397, %v3400
      %v3402 = vrot.slane %v3401, 4
      %v3404 = vshll.u32 %v3074, 16
      %v3406 = vrot.slane %v3404, 5
      %v3407 = vsel %vm1183, %v3402, %v3406
      %v3408 = vshrl.u32 %v3074, 16
      %v3410 = vrot.slane %v3408, 4
      %v3411 = vor.u32 %v3410, %v3406
      %v3412 = vrot.slane %v3411, 4
      %v3414 = vshll.u32 %v3075, 16
      %v3416 = vrot.slane %v3414, 5
      %v3417 = vsel %vm1183, %v3412, %v3416
      %v3419 = vshrl.u32 %v3076, 16
      %v3421 = vrot.slane %v3419, 4
      %v3422 = vshll.u32 %v3076, 16
      %v3424 = vrot.slane %v3422, 5
      %v3425 = vor.u32 %v3421, %v3424
      %v3426 = vrot.slane %v3425, 4
      %v3428 = vshll.u32 %v3077, 16
      %v3430 = vrot.slane %v3428, 5
      %v3431 = vsel %vm1183, %v3426, %v3430
      %v3432 = vshrl.u32 %v3077, 16
      %v3434 = vrot.slane %v3432, 4
      %v3435 = vor.u32 %v3434, %v3430
      %v3436 = vrot.slane %v3435, 4
      %v3438 = vshll.u32 %v3078, 16
      %v3440 = vrot.slane %v3438, 5
      %v3441 = vsel %vm1183, %v3436, %v3440
      %v3443 = vshrl.u32 %v3079, 16
      %v3445 = vrot.slane %v3443, 4
      %v3446 = vshll.u32 %v3079, 16
      %v3448 = vrot.slane %v3446, 5
      %v3449 = vor.u32 %v3445, %v3448
      %v3450 = vrot.slane %v3449, 4
      %v3452 = vshll.u32 %v3080, 16
      %v3454 = vrot.slane %v3452, 5
      %v3455 = vsel %vm1183, %v3450, %v3454
      %v3456 = vshrl.u32 %v3080, 16
      %v3458 = vrot.slane %v3456, 4
      %v3459 = vor.u32 %v3458, %v3454
      %v3460 = vrot.slane %v3459, 4
      %v3462 = vshll.u32 %v3081, 16
      %v3464 = vrot.slane %v3462, 5
      %v3465 = vsel %vm1183, %v3460, %v3464
      %s3466 = scalar_lea.vmem %s2, 256
      %v3467 = vld [vmem:[%s3466] sm:$0xf]
      %v3468 = vld [vmem:[%s3466 + $0x4] sm:$0xf]
      %v3469 = vld [vmem:[%s3466 + $0x8] sm:$0xf]
      %v3470 = vld [vmem:[%s3466 + $0xc] sm:$0xf]
      %v3471 = vld [vmem:[%s3466 + $0x10] sm:$0xf]
      %v3472 = vld [vmem:[%s3466 + $0x14] sm:$0xf]
      %v3473 = vld [vmem:[%s3466 + $0x18] sm:$0xf]
      %v3474 = vld [vmem:[%s3466 + $0x1c] sm:$0xf]
      %v3475 = vld [vmem:[%s3466 + $0x20] sm:$0xf]
      %v3476 = vld [vmem:[%s3466 + $0x24] sm:$0xf]
      %v3477 = vld [vmem:[%s3466 + $0x28] sm:$0xf]
      %v3478 = vld [vmem:[%s3466 + $0x2c] sm:$0xf]
      %v3479 = vld [vmem:[%s3466 + $0x30] sm:$0xf]
      %v3480 = vld [vmem:[%s3466 + $0x34] sm:$0xf]
      %v3481 = vld [vmem:[%s3466 + $0x38] sm:$0xf]
      %v3482 = vld [vmem:[%s3466 + $0x3c] sm:$0xf]
      %v3483 = vunpack.c.l.b16 %v3095
      %v3484 = vunpack.c.l.b16 %v3105
      %v3485 = vunpack.c.l.b16 %v3119
      %v3486 = vunpack.c.l.b16 %v3129
      %v3487 = vunpack.c.l.b16 %v3143
      %v3488 = vunpack.c.l.b16 %v3153
      %v3489 = vunpack.c.l.b16 %v3167
      %v3490 = vunpack.c.l.b16 %v3177
      %v3491 = vunpack.c.l.b16 %v3191
      %v3492 = vunpack.c.l.b16 %v3201
      %v3493 = vunpack.c.l.b16 %v3215
      %v3494 = vunpack.c.l.b16 %v3225
      %v3495 = vunpack.c.l.b16 %v3239
      %v3496 = vunpack.c.l.b16 %v3249
      %v3497 = vunpack.c.l.b16 %v3263
      %v3498 = vunpack.c.l.b16 %v3273
      %v3499 = vunpack.c.l.b16 %v3287
      %v3500 = vunpack.c.l.b16 %v3297
      %v3501 = vunpack.c.l.b16 %v3311
      %v3502 = vunpack.c.l.b16 %v3321
      %v3503 = vunpack.c.l.b16 %v3335
      %v3504 = vunpack.c.l.b16 %v3345
      %v3505 = vunpack.c.l.b16 %v3359
      %v3506 = vunpack.c.l.b16 %v3369
      %v3507 = vunpack.c.l.b16 %v3383
      %v3508 = vunpack.c.l.b16 %v3393
      %v3509 = vunpack.c.l.b16 %v3407
      %v3510 = vunpack.c.l.b16 %v3417
      %v3511 = vunpack.c.l.b16 %v3431
      %v3512 = vunpack.c.l.b16 %v3441
      %v3513 = vunpack.c.l.b16 %v3455
      %v3514 = vunpack.c.l.b16 %v3465
      %v3515 = vpack.c.b16 %v3484, %v3483
      %v3516 = vpack.c.b16 %v3486, %v3485
      %v3517 = vpack.c.b16 %v3488, %v3487
      %v3518 = vpack.c.b16 %v3490, %v3489
      %v3519 = vpack.c.b16 %v3492, %v3491
      %v3520 = vpack.c.b16 %v3494, %v3493
      %v3521 = vpack.c.b16 %v3496, %v3495
      %v3522 = vpack.c.b16 %v3498, %v3497
      %v3523 = vpack.c.b16 %v3500, %v3499
      %v3524 = vpack.c.b16 %v3502, %v3501
      %v3525 = vpack.c.b16 %v3504, %v3503
      %v3526 = vpack.c.b16 %v3506, %v3505
      %v3527 = vpack.c.b16 %v3508, %v3507
      %v3528 = vpack.c.b16 %v3510, %v3509
      %v3529 = vpack.c.b16 %v3512, %v3511
      %v3530 = vpack.c.b16 %v3514, %v3513
      %v3563 = vunpack.c.l.b16 %v3467
      %v3564 = vunpack.c.l.b16 %v3468
      %v3565 = vunpack.c.l.b16 %v3469
      %v3566 = vunpack.c.l.b16 %v3470
      %v3567 = vunpack.c.l.b16 %v3471
      %v3568 = vunpack.c.l.b16 %v3472
      %v3569 = vunpack.c.l.b16 %v3473
      %v3570 = vunpack.c.l.b16 %v3474
      %v3571 = vunpack.c.l.b16 %v3475
      %v3572 = vunpack.c.l.b16 %v3476
      %v3573 = vunpack.c.l.b16 %v3477
      %v3574 = vunpack.c.l.b16 %v3478
      %v3575 = vunpack.c.l.b16 %v3479
      %v3576 = vunpack.c.l.b16 %v3480
      %v3577 = vunpack.c.l.b16 %v3481
      %v3578 = vunpack.c.l.b16 %v3482
      %v3579 = vpack.c.b16 %v3564, %v3563
      %v3580 = vpack.c.b16 %v3566, %v3565
      %v3581 = vpack.c.b16 %v3568, %v3567
      %v3582 = vpack.c.b16 %v3570, %v3569
      %v3583 = vpack.c.b16 %v3572, %v3571
      %v3584 = vpack.c.b16 %v3574, %v3573
      %v3585 = vpack.c.b16 %v3576, %v3575
      %v3586 = vpack.c.b16 %v3578, %v3577
      %3595 = vmatprep.subr.bf16.mxu0 0
      %3596 = vmatpush1.bf16.msra.mxu0 %v3586
      %3597 = vmatprep.subr.bf16.mxu0 0
      %3598 = vmatpush1.bf16.msra.mxu0 %v3585
      %3599 = vmatprep.subr.bf16.mxu0 0
      %3600 = vmatpush1.bf16.msra.mxu0 %v3584
      %3601 = vmatprep.subr.bf16.mxu0 0
      %3602 = vmatpush1.bf16.msra.mxu0 %v3583
      %3603 = vmatprep.subr.bf16.mxu0 0
      %3604 = vmatpush1.bf16.msra.mxu0 %v3582
      %3605 = vmatprep.subr.bf16.mxu0 0
      %3606 = vmatpush1.bf16.msra.mxu0 %v3581
      %3607 = vmatprep.subr.bf16.mxu0 0
      %3608 = vmatpush1.bf16.msra.mxu0 %v3580
      %3609 = vmatprep.subr.bf16.mxu0 0
      %3610 = vmatpush1.bf16.msra.mxu0 %v3579
      %3611 = vmatprep.subr.bf16.mxu0 0
      %3612 = vmatpush2.bf16.msra.mxu0 0
      %3613 = vmatprep.subr.bf16.mxu0 0
      %3614 = vmatpush2.bf16.msra.mxu0 0
      %3615 = vmatprep.subr.bf16.mxu0 0
      %3616 = vmatpush2.bf16.msra.mxu0 0
      %3617 = vmatprep.subr.bf16.mxu0 0
      %3618 = vmatpush2.bf16.msra.mxu0 0
      %3619 = vmatprep.subr.bf16.mxu0 0
      %3620 = vmatpush2.bf16.msra.mxu0 0
      %3621 = vmatprep.subr.bf16.mxu0 0
      %3622 = vmatpush2.bf16.msra.mxu0 0
      %3623 = vmatprep.subr.bf16.mxu0 0
      %3624 = vmatpush2.bf16.msra.mxu0 0
      %3625 = vmatprep.subr.bf16.mxu0 0
      %3626 = vmatpush2.bf16.msra.mxu0 0
      %3627 = vmatprep.mubr.bf16.mxu0 0
      %3628 = vmatmul.mubr.bf16.gmra.mxu0 %v3515
      %v3629 = vpop.f32.mrf.mxu0
      %v3630 = vadd.f32 0.0, %v3629
      %v3631 = vpop.f32.mrf.mxu0
      %v3632 = vpop.f32.mrf.mxu0
      %v3633 = vadd.f32 0.0, %v3632
      %v3634 = vpop.f32.mrf.mxu0
      %3635 = vmatprep.mubr.bf16.mxu0 0
      %3636 = vmatmul.mubr.bf16.gmra.mxu0 %v3516
      %v3637 = vpop.f32.mrf.mxu0
      %v3638 = vadd.f32 0.0, %v3637
      %v3639 = vpop.f32.mrf.mxu0
      %v3640 = vpop.f32.mrf.mxu0
      %v3641 = vadd.f32 0.0, %v3640
      %v3642 = vpop.f32.mrf.mxu0
      %3643 = vmatprep.mubr.bf16.mxu0 0
      %3644 = vmatmul.mubr.bf16.gmra.mxu0 %v3517
      %v3645 = vpop.f32.mrf.mxu0
      %v3646 = vadd.f32 0.0, %v3645
      %v3647 = vpop.f32.mrf.mxu0
      %v3648 = vpop.f32.mrf.mxu0
      %v3649 = vadd.f32 0.0, %v3648
      %v3650 = vpop.f32.mrf.mxu0
      %3651 = vmatprep.mubr.bf16.mxu0 0
      %3652 = vmatmul.mubr.bf16.gmra.mxu0 %v3518
      %v3653 = vpop.f32.mrf.mxu0
      %v3654 = vadd.f32 0.0, %v3653
      %v3655 = vpop.f32.mrf.mxu0
      %v3656 = vpop.f32.mrf.mxu0
      %v3657 = vadd.f32 0.0, %v3656
      %v3658 = vpop.f32.mrf.mxu0
      %3659 = vmatprep.mubr.bf16.mxu0 0
      %3660 = vmatmul.mubr.bf16.gmra.mxu0 %v3519
      %v3661 = vpop.f32.mrf.mxu0
      %v3662 = vadd.f32 0.0, %v3661
      %v3663 = vpop.f32.mrf.mxu0
      %v3664 = vpop.f32.mrf.mxu0
      %v3665 = vadd.f32 0.0, %v3664
      %v3666 = vpop.f32.mrf.mxu0
      %3667 = vmatprep.mubr.bf16.mxu0 0
      %3668 = vmatmul.mubr.bf16.gmra.mxu0 %v3520
      %v3669 = vpop.f32.mrf.mxu0
      %v3670 = vadd.f32 0.0, %v3669
      %v3671 = vpop.f32.mrf.mxu0
      %v3672 = vpop.f32.mrf.mxu0
      %v3673 = vadd.f32 0.0, %v3672
      %v3674 = vpop.f32.mrf.mxu0
      %3675 = vmatprep.mubr.bf16.mxu0 0
      %3676 = vmatmul.mubr.bf16.gmra.mxu0 %v3521
      %v3677 = vpop.f32.mrf.mxu0
      %v3678 = vadd.f32 0.0, %v3677
      %v3679 = vpop.f32.mrf.mxu0
      %v3680 = vpop.f32.mrf.mxu0
      %v3681 = vadd.f32 0.0, %v3680
      %v3682 = vpop.f32.mrf.mxu0
      %3683 = vmatprep.mubr.bf16.mxu0 0
      %3684 = vmatmul.mubr.bf16.gmra.mxu0 %v3522
      %v3685 = vpop.f32.mrf.mxu0
      %v3686 = vadd.f32 0.0, %v3685
      %v3687 = vpop.f32.mrf.mxu0
      %v3688 = vpop.f32.mrf.mxu0
      %v3689 = vadd.f32 0.0, %v3688
      %v3690 = vpop.f32.mrf.mxu0
      %3691 = vmatprep.mubr.bf16.mxu0 0
      %3692 = vmatmul.mubr.bf16.gmra.mxu0 %v3523
      %v3693 = vpop.f32.mrf.mxu0
      %v3694 = vadd.f32 0.0, %v3693
      %v3695 = vpop.f32.mrf.mxu0
      %v3696 = vpop.f32.mrf.mxu0
      %v3697 = vadd.f32 0.0, %v3696
      %v3698 = vpop.f32.mrf.mxu0
      %3699 = vmatprep.mubr.bf16.mxu0 0
      %3700 = vmatmul.mubr.bf16.gmra.mxu0 %v3524
      %v3701 = vpop.f32.mrf.mxu0
      %v3702 = vadd.f32 0.0, %v3701
      %v3703 = vpop.f32.mrf.mxu0
      %v3704 = vpop.f32.mrf.mxu0
      %v3705 = vadd.f32 0.0, %v3704
      %v3706 = vpop.f32.mrf.mxu0
      %3707 = vmatprep.mubr.bf16.mxu0 0
      %3708 = vmatmul.mubr.bf16.gmra.mxu0 %v3525
      %v3709 = vpop.f32.mrf.mxu0
      %v3710 = vadd.f32 0.0, %v3709
      %v3711 = vpop.f32.mrf.mxu0
      %v3712 = vpop.f32.mrf.mxu0
      %v3713 = vadd.f32 0.0, %v3712
      %v3714 = vpop.f32.mrf.mxu0
      %3715 = vmatprep.mubr.bf16.mxu0 0
      %3716 = vmatmul.mubr.bf16.gmra.mxu0 %v3526
      %v3717 = vpop.f32.mrf.mxu0
      %v3718 = vadd.f32 0.0, %v3717
      %v3719 = vpop.f32.mrf.mxu0
      %v3720 = vpop.f32.mrf.mxu0
      %v3721 = vadd.f32 0.0, %v3720
      %v3722 = vpop.f32.mrf.mxu0
      %3723 = vmatprep.mubr.bf16.mxu0 0
      %3724 = vmatmul.mubr.bf16.gmra.mxu0 %v3527
      %v3725 = vpop.f32.mrf.mxu0
      %v3726 = vadd.f32 0.0, %v3725
      %v3727 = vpop.f32.mrf.mxu0
      %v3728 = vpop.f32.mrf.mxu0
      %v3729 = vadd.f32 0.0, %v3728
      %v3730 = vpop.f32.mrf.mxu0
      %3731 = vmatprep.mubr.bf16.mxu0 0
      %3732 = vmatmul.mubr.bf16.gmra.mxu0 %v3528
      %v3733 = vpop.f32.mrf.mxu0
      %v3734 = vadd.f32 0.0, %v3733
      %v3735 = vpop.f32.mrf.mxu0
      %v3736 = vpop.f32.mrf.mxu0
      %v3737 = vadd.f32 0.0, %v3736
      %v3738 = vpop.f32.mrf.mxu0
      %3739 = vmatprep.mubr.bf16.mxu0 0
      %3740 = vmatmul.mubr.bf16.gmra.mxu0 %v3529
      %v3741 = vpop.f32.mrf.mxu0
      %v3742 = vadd.f32 0.0, %v3741
      %v3743 = vpop.f32.mrf.mxu0
      %v3744 = vpop.f32.mrf.mxu0
      %v3745 = vadd.f32 0.0, %v3744
      %v3746 = vpop.f32.mrf.mxu0
      %3747 = vmatprep.mubr.bf16.mxu0 0
      %3748 = vmatmul.mubr.bf16.gmra.mxu0 %v3530
      %v3749 = vpop.f32.mrf.mxu0
      %v3750 = vadd.f32 0.0, %v3749
      %v3751 = vpop.f32.mrf.mxu0
      %v3752 = vpop.f32.mrf.mxu0
      %v3753 = vadd.f32 0.0, %v3752
      %v3754 = vpop.f32.mrf.mxu0
      %3755 = vdwg.mxu0
      %v3756 = vadd.f32 %v3002, %v3630
      %v3757 = vadd.f32 %v3003, %v3633
      %v3758 = vadd.f32 %v3004, %v3638
      %v3759 = vadd.f32 %v3005, %v3641
      %v3760 = vadd.f32 %v3006, %v3646
      %v3761 = vadd.f32 %v3007, %v3649
      %v3762 = vadd.f32 %v3008, %v3654
      %v3763 = vadd.f32 %v3009, %v3657
      %v3764 = vadd.f32 %v3010, %v3662
      %v3765 = vadd.f32 %v3011, %v3665
      %v3766 = vadd.f32 %v3012, %v3670
      %v3767 = vadd.f32 %v3013, %v3673
      %v3768 = vadd.f32 %v3014, %v3678
      %v3769 = vadd.f32 %v3015, %v3681
      %v3770 = vadd.f32 %v3016, %v3686
      %v3771 = vadd.f32 %v3017, %v3689
      %v3772 = vadd.f32 %v3018, %v3694
      %v3773 = vadd.f32 %v3019, %v3697
      %v3774 = vadd.f32 %v3020, %v3702
      %v3775 = vadd.f32 %v3021, %v3705
      %v3776 = vadd.f32 %v3022, %v3710
      %v3777 = vadd.f32 %v3023, %v3713
      %v3778 = vadd.f32 %v3024, %v3718
      %v3779 = vadd.f32 %v3025, %v3721
      %v3780 = vadd.f32 %v3026, %v3726
      %v3781 = vadd.f32 %v3027, %v3729
      %v3782 = vadd.f32 %v3028, %v3734
      %v3783 = vadd.f32 %v3029, %v3737
      %v3784 = vadd.f32 %v3030, %v3742
      %v3785 = vadd.f32 %v3031, %v3745
      %v3786 = vadd.f32 %v3032, %v3750
      %v3787 = vadd.f32 %v3033, %v3753
      %v3788 = vld [vmem:[%s891] sm:$0xe]
      %v3789 = vld [vmem:[%s891 + $0xc] sm:$0xe]
      %v3790 = vld [vmem:[%s891 + $0x18] sm:$0xe]
      %v3791 = vld [vmem:[%s891 + $0x24] sm:$0xe]
      %v3792 = vld [vmem:[%s891 + $0x30] sm:$0xe]
      %v3793 = vld [vmem:[%s891 + $0x3c] sm:$0xe]
      %v3794 = vld [vmem:[%s891 + $0x48] sm:$0xe]
      %v3795 = vld [vmem:[%s891 + $0x54] sm:$0xe]
      %v3796 = vld [vmem:[%s891 + $0x60] sm:$0xe]
      %v3797 = vld [vmem:[%s891 + $0x6c] sm:$0xe]
      %v3798 = vld [vmem:[%s891 + $0x78] sm:$0xe]
      %v3799 = vld [vmem:[%s891 + $0x84] sm:$0xe]
      %v3800 = vld [vmem:[%s891 + $0x90] sm:$0xe]
      %v3801 = vld [vmem:[%s891 + $0x9c] sm:$0xe]
      %v3802 = vld [vmem:[%s891 + $0xa8] sm:$0xe]
      %v3803 = vld [vmem:[%s891 + $0xb4] sm:$0xe]
      %v3852 = vrot.slane %v3788, 5
      %v3853 = vrot.slane %v3852, 4
      %v3854 = vrot.slane %v3035, 5
      %v3855 = vsel %vm2213, %v3853, %v3854
      %v3856 = vrot.slane %v3854, 4
      %v3857 = vrot.slane %v3036, 5
      %v3858 = vsel %vm2213, %v3856, %v3857
      %v3859 = vrot.slane %v3789, 5
      %v3860 = vrot.slane %v3859, 4
      %v3861 = vrot.slane %v3038, 5
      %v3862 = vsel %vm2213, %v3860, %v3861
      %v3863 = vrot.slane %v3861, 4
      %v3864 = vrot.slane %v3039, 5
      %v3865 = vsel %vm2213, %v3863, %v3864
      %v3866 = vrot.slane %v3790, 5
      %v3867 = vrot.slane %v3866, 4
      %v3868 = vrot.slane %v3041, 5
      %v3869 = vsel %vm2213, %v3867, %v3868
      %v3870 = vrot.slane %v3868, 4
      %v3871 = vrot.slane %v3042, 5
      %v3872 = vsel %vm2213, %v3870, %v3871
      %v3873 = vrot.slane %v3791, 5
      %v3874 = vrot.slane %v3873, 4
      %v3875 = vrot.slane %v3044, 5
      %v3876 = vsel %vm2213, %v3874, %v3875
      %v3877 = vrot.slane %v3875, 4
      %v3878 = vrot.slane %v3045, 5
      %v3879 = vsel %vm2213, %v3877, %v3878
      %v3880 = vrot.slane %v3792, 5
      %v3881 = vrot.slane %v3880, 4
      %v3882 = vrot.slane %v3047, 5
      %v3883 = vsel %vm2213, %v3881, %v3882
      %v3884 = vrot.slane %v3882, 4
      %v3885 = vrot.slane %v3048, 5
      %v3886 = vsel %vm2213, %v3884, %v3885
      %v3887 = vrot.slane %v3793, 5
      %v3888 = vrot.slane %v3887, 4
      %v3889 = vrot.slane %v3050, 5
      %v3890 = vsel %vm2213, %v3888, %v3889
      %v3891 = vrot.slane %v3889, 4
      %v3892 = vrot.slane %v3051, 5
      %v3893 = vsel %vm2213, %v3891, %v3892
      %v3894 = vrot.slane %v3794, 5
      %v3895 = vrot.slane %v3894, 4
      %v3896 = vrot.slane %v3053, 5
      %v3897 = vsel %vm2213, %v3895, %v3896
      %v3898 = vrot.slane %v3896, 4
      %v3899 = vrot.slane %v3054, 5
      %v3900 = vsel %vm2213, %v3898, %v3899
      %v3901 = vrot.slane %v3795, 5
      %v3902 = vrot.slane %v3901, 4
      %v3903 = vrot.slane %v3056, 5
      %v3904 = vsel %vm2213, %v3902, %v3903
      %v3905 = vrot.slane %v3903, 4
      %v3906 = vrot.slane %v3057, 5
      %v3907 = vsel %vm2213, %v3905, %v3906
      %v3908 = vrot.slane %v3796, 5
      %v3909 = vrot.slane %v3908, 4
      %v3910 = vrot.slane %v3059, 5
      %v3911 = vsel %vm2213, %v3909, %v3910
      %v3912 = vrot.slane %v3910, 4
      %v3913 = vrot.slane %v3060, 5
      %v3914 = vsel %vm2213, %v3912, %v3913
      %v3915 = vrot.slane %v3797, 5
      %v3916 = vrot.slane %v3915, 4
      %v3917 = vrot.slane %v3062, 5
      %v3918 = vsel %vm2213, %v3916, %v3917
      %v3919 = vrot.slane %v3917, 4
      %v3920 = vrot.slane %v3063, 5
      %v3921 = vsel %vm2213, %v3919, %v3920
      %v3922 = vrot.slane %v3798, 5
      %v3923 = vrot.slane %v3922, 4
      %v3924 = vrot.slane %v3065, 5
      %v3925 = vsel %vm2213, %v3923, %v3924
      %v3926 = vrot.slane %v3924, 4
      %v3927 = vrot.slane %v3066, 5
      %v3928 = vsel %vm2213, %v3926, %v3927
      %v3929 = vrot.slane %v3799, 5
      %v3930 = vrot.slane %v3929, 4
      %v3931 = vrot.slane %v3068, 5
      %v3932 = vsel %vm2213, %v3930, %v3931
      %v3933 = vrot.slane %v3931, 4
      %v3934 = vrot.slane %v3069, 5
      %v3935 = vsel %vm2213, %v3933, %v3934
      %v3936 = vrot.slane %v3800, 5
      %v3937 = vrot.slane %v3936, 4
      %v3938 = vrot.slane %v3071, 5
      %v3939 = vsel %vm2213, %v3937, %v3938
      %v3940 = vrot.slane %v3938, 4
      %v3941 = vrot.slane %v3072, 5
      %v3942 = vsel %vm2213, %v3940, %v3941
      %v3943 = vrot.slane %v3801, 5
      %v3944 = vrot.slane %v3943, 4
      %v3945 = vrot.slane %v3074, 5
      %v3946 = vsel %vm2213, %v3944, %v3945
      %v3947 = vrot.slane %v3945, 4
      %v3948 = vrot.slane %v3075, 5
      %v3949 = vsel %vm2213, %v3947, %v3948
      %v3950 = vrot.slane %v3802, 5
      %v3951 = vrot.slane %v3950, 4
      %v3952 = vrot.slane %v3077, 5
      %v3953 = vsel %vm2213, %v3951, %v3952
      %v3954 = vrot.slane %v3952, 4
      %v3955 = vrot.slane %v3078, 5
      %v3956 = vsel %vm2213, %v3954, %v3955
      %v3957 = vrot.slane %v3803, 5
      %v3958 = vrot.slane %v3957, 4
      %v3959 = vrot.slane %v3080, 5
      %v3960 = vsel %vm2213, %v3958, %v3959
      %v3961 = vrot.slane %v3959, 4
      %v3962 = vrot.slane %v3081, 5
      %v3963 = vsel %vm2213, %v3961, %v3962
      %s3964 = scalar_lea.vmem %s2, 320
      %v3965 = vld [vmem:[%s3964] sm:$0xf]
      %v3966 = vld [vmem:[%s3964 + $0x4] sm:$0xf]
      %v3967 = vld [vmem:[%s3964 + $0x8] sm:$0xf]
      %v3968 = vld [vmem:[%s3964 + $0xc] sm:$0xf]
      %v3969 = vld [vmem:[%s3964 + $0x10] sm:$0xf]
      %v3970 = vld [vmem:[%s3964 + $0x14] sm:$0xf]
      %v3971 = vld [vmem:[%s3964 + $0x18] sm:$0xf]
      %v3972 = vld [vmem:[%s3964 + $0x1c] sm:$0xf]
      %v3973 = vld [vmem:[%s3964 + $0x20] sm:$0xf]
      %v3974 = vld [vmem:[%s3964 + $0x24] sm:$0xf]
      %v3975 = vld [vmem:[%s3964 + $0x28] sm:$0xf]
      %v3976 = vld [vmem:[%s3964 + $0x2c] sm:$0xf]
      %v3977 = vld [vmem:[%s3964 + $0x30] sm:$0xf]
      %v3978 = vld [vmem:[%s3964 + $0x34] sm:$0xf]
      %v3979 = vld [vmem:[%s3964 + $0x38] sm:$0xf]
      %v3980 = vld [vmem:[%s3964 + $0x3c] sm:$0xf]
      %v3981 = vunpack.c.l.b16 %v3855
      %v3982 = vunpack.c.l.b16 %v3858
      %v3983 = vunpack.c.l.b16 %v3862
      %v3984 = vunpack.c.l.b16 %v3865
      %v3985 = vunpack.c.l.b16 %v3869
      %v3986 = vunpack.c.l.b16 %v3872
      %v3987 = vunpack.c.l.b16 %v3876
      %v3988 = vunpack.c.l.b16 %v3879
      %v3989 = vunpack.c.l.b16 %v3883
      %v3990 = vunpack.c.l.b16 %v3886
      %v3991 = vunpack.c.l.b16 %v3890
      %v3992 = vunpack.c.l.b16 %v3893
      %v3993 = vunpack.c.l.b16 %v3897
      %v3994 = vunpack.c.l.b16 %v3900
      %v3995 = vunpack.c.l.b16 %v3904
      %v3996 = vunpack.c.l.b16 %v3907
      %v3997 = vunpack.c.l.b16 %v3911
      %v3998 = vunpack.c.l.b16 %v3914
      %v3999 = vunpack.c.l.b16 %v3918
      %v4000 = vunpack.c.l.b16 %v3921
      %v4001 = vunpack.c.l.b16 %v3925
      %v4002 = vunpack.c.l.b16 %v3928
      %v4003 = vunpack.c.l.b16 %v3932
      %v4004 = vunpack.c.l.b16 %v3935
      %v4005 = vunpack.c.l.b16 %v3939
      %v4006 = vunpack.c.l.b16 %v3942
      %v4007 = vunpack.c.l.b16 %v3946
      %v4008 = vunpack.c.l.b16 %v3949
      %v4009 = vunpack.c.l.b16 %v3953
      %v4010 = vunpack.c.l.b16 %v3956
      %v4011 = vunpack.c.l.b16 %v3960
      %v4012 = vunpack.c.l.b16 %v3963
      %v4013 = vpack.c.b16 %v3982, %v3981
      %v4014 = vpack.c.b16 %v3984, %v3983
      %v4015 = vpack.c.b16 %v3986, %v3985
      %v4016 = vpack.c.b16 %v3988, %v3987
      %v4017 = vpack.c.b16 %v3990, %v3989
      %v4018 = vpack.c.b16 %v3992, %v3991
      %v4019 = vpack.c.b16 %v3994, %v3993
      %v4020 = vpack.c.b16 %v3996, %v3995
      %v4021 = vpack.c.b16 %v3998, %v3997
      %v4022 = vpack.c.b16 %v4000, %v3999
      %v4023 = vpack.c.b16 %v4002, %v4001
      %v4024 = vpack.c.b16 %v4004, %v4003
      %v4025 = vpack.c.b16 %v4006, %v4005
      %v4026 = vpack.c.b16 %v4008, %v4007
      %v4027 = vpack.c.b16 %v4010, %v4009
      %v4028 = vpack.c.b16 %v4012, %v4011
      %v4061 = vunpack.c.l.b16 %v3965
      %v4062 = vunpack.c.l.b16 %v3966
      %v4063 = vunpack.c.l.b16 %v3967
      %v4064 = vunpack.c.l.b16 %v3968
      %v4065 = vunpack.c.l.b16 %v3969
      %v4066 = vunpack.c.l.b16 %v3970
      %v4067 = vunpack.c.l.b16 %v3971
      %v4068 = vunpack.c.l.b16 %v3972
      %v4069 = vunpack.c.l.b16 %v3973
      %v4070 = vunpack.c.l.b16 %v3974
      %v4071 = vunpack.c.l.b16 %v3975
      %v4072 = vunpack.c.l.b16 %v3976
      %v4073 = vunpack.c.l.b16 %v3977
      %v4074 = vunpack.c.l.b16 %v3978
      %v4075 = vunpack.c.l.b16 %v3979
      %v4076 = vunpack.c.l.b16 %v3980
      %v4077 = vpack.c.b16 %v4062, %v4061
      %v4078 = vpack.c.b16 %v4064, %v4063
      %v4079 = vpack.c.b16 %v4066, %v4065
      %v4080 = vpack.c.b16 %v4068, %v4067
      %v4081 = vpack.c.b16 %v4070, %v4069
      %v4082 = vpack.c.b16 %v4072, %v4071
      %v4083 = vpack.c.b16 %v4074, %v4073
      %v4084 = vpack.c.b16 %v4076, %v4075
      %4093 = vmatprep.subr.bf16.mxu0 0
      %4094 = vmatpush1.bf16.msra.mxu0 %v4084
      %4095 = vmatprep.subr.bf16.mxu0 0
      %4096 = vmatpush1.bf16.msra.mxu0 %v4083
      %4097 = vmatprep.subr.bf16.mxu0 0
      %4098 = vmatpush1.bf16.msra.mxu0 %v4082
      %4099 = vmatprep.subr.bf16.mxu0 0
      %4100 = vmatpush1.bf16.msra.mxu0 %v4081
      %4101 = vmatprep.subr.bf16.mxu0 0
      %4102 = vmatpush1.bf16.msra.mxu0 %v4080
      %4103 = vmatprep.subr.bf16.mxu0 0
      %4104 = vmatpush1.bf16.msra.mxu0 %v4079
      %4105 = vmatprep.subr.bf16.mxu0 0
      %4106 = vmatpush1.bf16.msra.mxu0 %v4078
      %4107 = vmatprep.subr.bf16.mxu0 0
      %4108 = vmatpush1.bf16.msra.mxu0 %v4077
      %4109 = vmatprep.subr.bf16.mxu0 0
      %4110 = vmatpush2.bf16.msra.mxu0 0
      %4111 = vmatprep.subr.bf16.mxu0 0
      %4112 = vmatpush2.bf16.msra.mxu0 0
      %4113 = vmatprep.subr.bf16.mxu0 0
      %4114 = vmatpush2.bf16.msra.mxu0 0
      %4115 = vmatprep.subr.bf16.mxu0 0
      %4116 = vmatpush2.bf16.msra.mxu0 0
      %4117 = vmatprep.subr.bf16.mxu0 0
      %4118 = vmatpush2.bf16.msra.mxu0 0
      %4119 = vmatprep.subr.bf16.mxu0 0
      %4120 = vmatpush2.bf16.msra.mxu0 0
      %4121 = vmatprep.subr.bf16.mxu0 0
      %4122 = vmatpush2.bf16.msra.mxu0 0
      %4123 = vmatprep.subr.bf16.mxu0 0
      %4124 = vmatpush2.bf16.msra.mxu0 0
      %4125 = vmatprep.mubr.bf16.mxu0 0
      %4126 = vmatmul.mubr.bf16.gmra.mxu0 %v4013
      %v4127 = vpop.f32.mrf.mxu0
      %v4128 = vadd.f32 0.0, %v4127
      %v4129 = vpop.f32.mrf.mxu0
      %v4130 = vpop.f32.mrf.mxu0
      %v4131 = vadd.f32 0.0, %v4130
      %v4132 = vpop.f32.mrf.mxu0
      %4133 = vmatprep.mubr.bf16.mxu0 0
      %4134 = vmatmul.mubr.bf16.gmra.mxu0 %v4014
      %v4135 = vpop.f32.mrf.mxu0
      %v4136 = vadd.f32 0.0, %v4135
      %v4137 = vpop.f32.mrf.mxu0
      %v4138 = vpop.f32.mrf.mxu0
      %v4139 = vadd.f32 0.0, %v4138
      %v4140 = vpop.f32.mrf.mxu0
      %4141 = vmatprep.mubr.bf16.mxu0 0
      %4142 = vmatmul.mubr.bf16.gmra.mxu0 %v4015
      %v4143 = vpop.f32.mrf.mxu0
      %v4144 = vadd.f32 0.0, %v4143
      %v4145 = vpop.f32.mrf.mxu0
      %v4146 = vpop.f32.mrf.mxu0
      %v4147 = vadd.f32 0.0, %v4146
      %v4148 = vpop.f32.mrf.mxu0
      %4149 = vmatprep.mubr.bf16.mxu0 0
      %4150 = vmatmul.mubr.bf16.gmra.mxu0 %v4016
      %v4151 = vpop.f32.mrf.mxu0
      %v4152 = vadd.f32 0.0, %v4151
      %v4153 = vpop.f32.mrf.mxu0
      %v4154 = vpop.f32.mrf.mxu0
      %v4155 = vadd.f32 0.0, %v4154
      %v4156 = vpop.f32.mrf.mxu0
      %4157 = vmatprep.mubr.bf16.mxu0 0
      %4158 = vmatmul.mubr.bf16.gmra.mxu0 %v4017
      %v4159 = vpop.f32.mrf.mxu0
      %v4160 = vadd.f32 0.0, %v4159
      %v4161 = vpop.f32.mrf.mxu0
      %v4162 = vpop.f32.mrf.mxu0
      %v4163 = vadd.f32 0.0, %v4162
      %v4164 = vpop.f32.mrf.mxu0
      %4165 = vmatprep.mubr.bf16.mxu0 0
      %4166 = vmatmul.mubr.bf16.gmra.mxu0 %v4018
      %v4167 = vpop.f32.mrf.mxu0
      %v4168 = vadd.f32 0.0, %v4167
      %v4169 = vpop.f32.mrf.mxu0
      %v4170 = vpop.f32.mrf.mxu0
      %v4171 = vadd.f32 0.0, %v4170
      %v4172 = vpop.f32.mrf.mxu0
      %4173 = vmatprep.mubr.bf16.mxu0 0
      %4174 = vmatmul.mubr.bf16.gmra.mxu0 %v4019
      %v4175 = vpop.f32.mrf.mxu0
      %v4176 = vadd.f32 0.0, %v4175
      %v4177 = vpop.f32.mrf.mxu0
      %v4178 = vpop.f32.mrf.mxu0
      %v4179 = vadd.f32 0.0, %v4178
      %v4180 = vpop.f32.mrf.mxu0
      %4181 = vmatprep.mubr.bf16.mxu0 0
      %4182 = vmatmul.mubr.bf16.gmra.mxu0 %v4020
      %v4183 = vpop.f32.mrf.mxu0
      %v4184 = vadd.f32 0.0, %v4183
      %v4185 = vpop.f32.mrf.mxu0
      %v4186 = vpop.f32.mrf.mxu0
      %v4187 = vadd.f32 0.0, %v4186
      %v4188 = vpop.f32.mrf.mxu0
      %4189 = vmatprep.mubr.bf16.mxu0 0
      %4190 = vmatmul.mubr.bf16.gmra.mxu0 %v4021
      %v4191 = vpop.f32.mrf.mxu0
      %v4192 = vadd.f32 0.0, %v4191
      %v4193 = vpop.f32.mrf.mxu0
      %v4194 = vpop.f32.mrf.mxu0
      %v4195 = vadd.f32 0.0, %v4194
      %v4196 = vpop.f32.mrf.mxu0
      %4197 = vmatprep.mubr.bf16.mxu0 0
      %4198 = vmatmul.mubr.bf16.gmra.mxu0 %v4022
      %v4199 = vpop.f32.mrf.mxu0
      %v4200 = vadd.f32 0.0, %v4199
      %v4201 = vpop.f32.mrf.mxu0
      %v4202 = vpop.f32.mrf.mxu0
      %v4203 = vadd.f32 0.0, %v4202
      %v4204 = vpop.f32.mrf.mxu0
      %4205 = vmatprep.mubr.bf16.mxu0 0
      %4206 = vmatmul.mubr.bf16.gmra.mxu0 %v4023
      %v4207 = vpop.f32.mrf.mxu0
      %v4208 = vadd.f32 0.0, %v4207
      %v4209 = vpop.f32.mrf.mxu0
      %v4210 = vpop.f32.mrf.mxu0
      %v4211 = vadd.f32 0.0, %v4210
      %v4212 = vpop.f32.mrf.mxu0
      %4213 = vmatprep.mubr.bf16.mxu0 0
      %4214 = vmatmul.mubr.bf16.gmra.mxu0 %v4024
      %v4215 = vpop.f32.mrf.mxu0
      %v4216 = vadd.f32 0.0, %v4215
      %v4217 = vpop.f32.mrf.mxu0
      %v4218 = vpop.f32.mrf.mxu0
      %v4219 = vadd.f32 0.0, %v4218
      %v4220 = vpop.f32.mrf.mxu0
      %4221 = vmatprep.mubr.bf16.mxu0 0
      %4222 = vmatmul.mubr.bf16.gmra.mxu0 %v4025
      %v4223 = vpop.f32.mrf.mxu0
      %v4224 = vadd.f32 0.0, %v4223
      %v4225 = vpop.f32.mrf.mxu0
      %v4226 = vpop.f32.mrf.mxu0
      %v4227 = vadd.f32 0.0, %v4226
      %v4228 = vpop.f32.mrf.mxu0
      %4229 = vmatprep.mubr.bf16.mxu0 0
      %4230 = vmatmul.mubr.bf16.gmra.mxu0 %v4026
      %v4231 = vpop.f32.mrf.mxu0
      %v4232 = vadd.f32 0.0, %v4231
      %v4233 = vpop.f32.mrf.mxu0
      %v4234 = vpop.f32.mrf.mxu0
      %v4235 = vadd.f32 0.0, %v4234
      %v4236 = vpop.f32.mrf.mxu0
      %4237 = vmatprep.mubr.bf16.mxu0 0
      %4238 = vmatmul.mubr.bf16.gmra.mxu0 %v4027
      %v4239 = vpop.f32.mrf.mxu0
      %v4240 = vadd.f32 0.0, %v4239
      %v4241 = vpop.f32.mrf.mxu0
      %v4242 = vpop.f32.mrf.mxu0
      %v4243 = vadd.f32 0.0, %v4242
      %v4244 = vpop.f32.mrf.mxu0
      %4245 = vmatprep.mubr.bf16.mxu0 0
      %4246 = vmatmul.mubr.bf16.gmra.mxu0 %v4028
      %v4247 = vpop.f32.mrf.mxu0
      %v4248 = vadd.f32 0.0, %v4247
      %v4249 = vpop.f32.mrf.mxu0
      %v4250 = vpop.f32.mrf.mxu0
      %v4251 = vadd.f32 0.0, %v4250
      %v4252 = vpop.f32.mrf.mxu0
      %4253 = vdwg.mxu0
      %v4254 = vadd.f32 %v3756, %v4128
      %v4255 = vadd.f32 %v3757, %v4131
      %v4256 = vadd.f32 %v3758, %v4136
      %v4257 = vadd.f32 %v3759, %v4139
      %v4258 = vadd.f32 %v3760, %v4144
      %v4259 = vadd.f32 %v3761, %v4147
      %v4260 = vadd.f32 %v3762, %v4152
      %v4261 = vadd.f32 %v3763, %v4155
      %v4262 = vadd.f32 %v3764, %v4160
      %v4263 = vadd.f32 %v3765, %v4163
      %v4264 = vadd.f32 %v3766, %v4168
      %v4265 = vadd.f32 %v3767, %v4171
      %v4266 = vadd.f32 %v3768, %v4176
      %v4267 = vadd.f32 %v3769, %v4179
      %v4268 = vadd.f32 %v3770, %v4184
      %v4269 = vadd.f32 %v3771, %v4187
      %v4270 = vadd.f32 %v3772, %v4192
      %v4271 = vadd.f32 %v3773, %v4195
      %v4272 = vadd.f32 %v3774, %v4200
      %v4273 = vadd.f32 %v3775, %v4203
      %v4274 = vadd.f32 %v3776, %v4208
      %v4275 = vadd.f32 %v3777, %v4211
      %v4276 = vadd.f32 %v3778, %v4216
      %v4277 = vadd.f32 %v3779, %v4219
      %v4278 = vadd.f32 %v3780, %v4224
      %v4279 = vadd.f32 %v3781, %v4227
      %v4280 = vadd.f32 %v3782, %v4232
      %v4281 = vadd.f32 %v3783, %v4235
      %v4282 = vadd.f32 %v3784, %v4240
      %v4283 = vadd.f32 %v3785, %v4243
      %v4284 = vadd.f32 %v3786, %v4248
      %v4285 = vadd.f32 %v3787, %v4251
      %s4286 = scalar_lea.vmem [#allocation2], 24
      %v4287 = vld [vmem:[%s4286] sm:$0xf]
      %v4288 = vld [vmem:[%s4286 + $0x4] sm:$0xf]
      %v4289 = vld [vmem:[%s4286 + $0xc] sm:$0xf]
      %v4290 = vld [vmem:[%s4286 + $0x10] sm:$0xf]
      %v4291 = vld [vmem:[%s4286 + $0x18] sm:$0xf]
      %v4292 = vld [vmem:[%s4286 + $0x1c] sm:$0xf]
      %v4293 = vld [vmem:[%s4286 + $0x24] sm:$0xf]
      %v4294 = vld [vmem:[%s4286 + $0x28] sm:$0xf]
      %v4295 = vld [vmem:[%s4286 + $0x30] sm:$0xf]
      %v4296 = vld [vmem:[%s4286 + $0x34] sm:$0xf]
      %v4297 = vld [vmem:[%s4286 + $0x3c] sm:$0xf]
      %v4298 = vld [vmem:[%s4286 + $0x40] sm:$0xf]
      %v4299 = vld [vmem:[%s4286 + $0x48] sm:$0xf]
      %v4300 = vld [vmem:[%s4286 + $0x4c] sm:$0xf]
      %v4301 = vld [vmem:[%s4286 + $0x54] sm:$0xf]
      %v4302 = vld [vmem:[%s4286 + $0x58] sm:$0xf]
      %v4303 = vld [vmem:[%s4286 + $0x60] sm:$0xf]
      %v4304 = vld [vmem:[%s4286 + $0x64] sm:$0xf]
      %v4305 = vld [vmem:[%s4286 + $0x6c] sm:$0xf]
      %v4306 = vld [vmem:[%s4286 + $0x70] sm:$0xf]
      %v4307 = vld [vmem:[%s4286 + $0x78] sm:$0xf]
      %v4308 = vld [vmem:[%s4286 + $0x7c] sm:$0xf]
      %v4309 = vld [vmem:[%s4286 + $0x84] sm:$0xf]
      %v4310 = vld [vmem:[%s4286 + $0x88] sm:$0xf]
      %v4311 = vld [vmem:[%s4286 + $0x90] sm:$0xf]
      %v4312 = vld [vmem:[%s4286 + $0x94] sm:$0xf]
      %v4313 = vld [vmem:[%s4286 + $0x9c] sm:$0xf]
      %v4314 = vld [vmem:[%s4286 + $0xa0] sm:$0xf]
      %v4315 = vld [vmem:[%s4286 + $0xa8] sm:$0xf]
      %v4316 = vld [vmem:[%s4286 + $0xac] sm:$0xf]
      %v4317 = vld [vmem:[%s4286 + $0xb4] sm:$0xf]
      %v4318 = vld [vmem:[%s4286 + $0xb8] sm:$0xf]
      %s4319 = scalar_lea.vmem %s2, 384
      %v4320 = vld [vmem:[%s4319] sm:$0xf]
      %v4321 = vld [vmem:[%s4319 + $0x4] sm:$0xf]
      %v4322 = vld [vmem:[%s4319 + $0x8] sm:$0xf]
      %v4323 = vld [vmem:[%s4319 + $0xc] sm:$0xf]
      %v4324 = vld [vmem:[%s4319 + $0x10] sm:$0xf]
      %v4325 = vld [vmem:[%s4319 + $0x14] sm:$0xf]
      %v4326 = vld [vmem:[%s4319 + $0x18] sm:$0xf]
      %v4327 = vld [vmem:[%s4319 + $0x1c] sm:$0xf]
      %v4328 = vld [vmem:[%s4319 + $0x20] sm:$0xf]
      %v4329 = vld [vmem:[%s4319 + $0x24] sm:$0xf]
      %v4330 = vld [vmem:[%s4319 + $0x28] sm:$0xf]
      %v4331 = vld [vmem:[%s4319 + $0x2c] sm:$0xf]
      %v4332 = vld [vmem:[%s4319 + $0x30] sm:$0xf]
      %v4333 = vld [vmem:[%s4319 + $0x34] sm:$0xf]
      %v4334 = vld [vmem:[%s4319 + $0x38] sm:$0xf]
      %v4335 = vld [vmem:[%s4319 + $0x3c] sm:$0xf]
      %v4368 = vunpack.c.l.b16 %v4287
      %v4369 = vunpack.c.l.b16 %v4288
      %v4370 = vunpack.c.l.b16 %v4289
      %v4371 = vunpack.c.l.b16 %v4290
      %v4372 = vunpack.c.l.b16 %v4291
      %v4373 = vunpack.c.l.b16 %v4292
      %v4374 = vunpack.c.l.b16 %v4293
      %v4375 = vunpack.c.l.b16 %v4294
      %v4376 = vunpack.c.l.b16 %v4295
      %v4377 = vunpack.c.l.b16 %v4296
      %v4378 = vunpack.c.l.b16 %v4297
      %v4379 = vunpack.c.l.b16 %v4298
      %v4380 = vunpack.c.l.b16 %v4299
      %v4381 = vunpack.c.l.b16 %v4300
      %v4382 = vunpack.c.l.b16 %v4301
      %v4383 = vunpack.c.l.b16 %v4302
      %v4384 = vunpack.c.l.b16 %v4303
      %v4385 = vunpack.c.l.b16 %v4304
      %v4386 = vunpack.c.l.b16 %v4305
      %v4387 = vunpack.c.l.b16 %v4306
      %v4388 = vunpack.c.l.b16 %v4307
      %v4389 = vunpack.c.l.b16 %v4308
      %v4390 = vunpack.c.l.b16 %v4309
      %v4391 = vunpack.c.l.b16 %v4310
      %v4392 = vunpack.c.l.b16 %v4311
      %v4393 = vunpack.c.l.b16 %v4312
      %v4394 = vunpack.c.l.b16 %v4313
      %v4395 = vunpack.c.l.b16 %v4314
      %v4396 = vunpack.c.l.b16 %v4315
      %v4397 = vunpack.c.l.b16 %v4316
      %v4398 = vunpack.c.l.b16 %v4317
      %v4399 = vunpack.c.l.b16 %v4318
      %v4400 = vpack.c.b16 %v4369, %v4368
      %v4401 = vpack.c.b16 %v4371, %v4370
      %v4402 = vpack.c.b16 %v4373, %v4372
      %v4403 = vpack.c.b16 %v4375, %v4374
      %v4404 = vpack.c.b16 %v4377, %v4376
      %v4405 = vpack.c.b16 %v4379, %v4378
      %v4406 = vpack.c.b16 %v4381, %v4380
      %v4407 = vpack.c.b16 %v4383, %v4382
      %v4408 = vpack.c.b16 %v4385, %v4384
      %v4409 = vpack.c.b16 %v4387, %v4386
      %v4410 = vpack.c.b16 %v4389, %v4388
      %v4411 = vpack.c.b16 %v4391, %v4390
      %v4412 = vpack.c.b16 %v4393, %v4392
      %v4413 = vpack.c.b16 %v4395, %v4394
      %v4414 = vpack.c.b16 %v4397, %v4396
      %v4415 = vpack.c.b16 %v4399, %v4398
      %v4448 = vunpack.c.l.b16 %v4320
      %v4449 = vunpack.c.l.b16 %v4321
      %v4450 = vunpack.c.l.b16 %v4322
      %v4451 = vunpack.c.l.b16 %v4323
      %v4452 = vunpack.c.l.b16 %v4324
      %v4453 = vunpack.c.l.b16 %v4325
      %v4454 = vunpack.c.l.b16 %v4326
      %v4455 = vunpack.c.l.b16 %v4327
      %v4456 = vunpack.c.l.b16 %v4328
      %v4457 = vunpack.c.l.b16 %v4329
      %v4458 = vunpack.c.l.b16 %v4330
      %v4459 = vunpack.c.l.b16 %v4331
      %v4460 = vunpack.c.l.b16 %v4332
      %v4461 = vunpack.c.l.b16 %v4333
      %v4462 = vunpack.c.l.b16 %v4334
      %v4463 = vunpack.c.l.b16 %v4335
      %v4464 = vpack.c.b16 %v4449, %v4448
      %v4465 = vpack.c.b16 %v4451, %v4450
      %v4466 = vpack.c.b16 %v4453, %v4452
      %v4467 = vpack.c.b16 %v4455, %v4454
      %v4468 = vpack.c.b16 %v4457, %v4456
      %v4469 = vpack.c.b16 %v4459, %v4458
      %v4470 = vpack.c.b16 %v4461, %v4460
      %v4471 = vpack.c.b16 %v4463, %v4462
      %4480 = vmatprep.subr.bf16.mxu0 0
      %4481 = vmatpush1.bf16.msra.mxu0 %v4471
      %4482 = vmatprep.subr.bf16.mxu0 0
      %4483 = vmatpush1.bf16.msra.mxu0 %v4470
      %4484 = vmatprep.subr.bf16.mxu0 0
      %4485 = vmatpush1.bf16.msra.mxu0 %v4469
      %4486 = vmatprep.subr.bf16.mxu0 0
      %4487 = vmatpush1.bf16.msra.mxu0 %v4468
      %4488 = vmatprep.subr.bf16.mxu0 0
      %4489 = vmatpush1.bf16.msra.mxu0 %v4467
      %4490 = vmatprep.subr.bf16.mxu0 0
      %4491 = vmatpush1.bf16.msra.mxu0 %v4466
      %4492 = vmatprep.subr.bf16.mxu0 0
      %4493 = vmatpush1.bf16.msra.mxu0 %v4465
      %4494 = vmatprep.subr.bf16.mxu0 0
      %4495 = vmatpush1.bf16.msra.mxu0 %v4464
      %4496 = vmatprep.subr.bf16.mxu0 0
      %4497 = vmatpush2.bf16.msra.mxu0 0
      %4498 = vmatprep.subr.bf16.mxu0 0
      %4499 = vmatpush2.bf16.msra.mxu0 0
      %4500 = vmatprep.subr.bf16.mxu0 0
      %4501 = vmatpush2.bf16.msra.mxu0 0
      %4502 = vmatprep.subr.bf16.mxu0 0
      %4503 = vmatpush2.bf16.msra.mxu0 0
      %4504 = vmatprep.subr.bf16.mxu0 0
      %4505 = vmatpush2.bf16.msra.mxu0 0
      %4506 = vmatprep.subr.bf16.mxu0 0
      %4507 = vmatpush2.bf16.msra.mxu0 0
      %4508 = vmatprep.subr.bf16.mxu0 0
      %4509 = vmatpush2.bf16.msra.mxu0 0
      %4510 = vmatprep.subr.bf16.mxu0 0
      %4511 = vmatpush2.bf16.msra.mxu0 0
      %4512 = vmatprep.mubr.bf16.mxu0 0
      %4513 = vmatmul.mubr.bf16.gmra.mxu0 %v4400
      %v4514 = vpop.f32.mrf.mxu0
      %v4515 = vadd.f32 0.0, %v4514
      %v4516 = vpop.f32.mrf.mxu0
      %v4517 = vpop.f32.mrf.mxu0
      %v4518 = vadd.f32 0.0, %v4517
      %v4519 = vpop.f32.mrf.mxu0
      %4520 = vmatprep.mubr.bf16.mxu0 0
      %4521 = vmatmul.mubr.bf16.gmra.mxu0 %v4401
      %v4522 = vpop.f32.mrf.mxu0
      %v4523 = vadd.f32 0.0, %v4522
      %v4524 = vpop.f32.mrf.mxu0
      %v4525 = vpop.f32.mrf.mxu0
      %v4526 = vadd.f32 0.0, %v4525
      %v4527 = vpop.f32.mrf.mxu0
      %4528 = vmatprep.mubr.bf16.mxu0 0
      %4529 = vmatmul.mubr.bf16.gmra.mxu0 %v4402
      %v4530 = vpop.f32.mrf.mxu0
      %v4531 = vadd.f32 0.0, %v4530
      %v4532 = vpop.f32.mrf.mxu0
      %v4533 = vpop.f32.mrf.mxu0
      %v4534 = vadd.f32 0.0, %v4533
      %v4535 = vpop.f32.mrf.mxu0
      %4536 = vmatprep.mubr.bf16.mxu0 0
      %4537 = vmatmul.mubr.bf16.gmra.mxu0 %v4403
      %v4538 = vpop.f32.mrf.mxu0
      %v4539 = vadd.f32 0.0, %v4538
      %v4540 = vpop.f32.mrf.mxu0
      %v4541 = vpop.f32.mrf.mxu0
      %v4542 = vadd.f32 0.0, %v4541
      %v4543 = vpop.f32.mrf.mxu0
      %4544 = vmatprep.mubr.bf16.mxu0 0
      %4545 = vmatmul.mubr.bf16.gmra.mxu0 %v4404
      %v4546 = vpop.f32.mrf.mxu0
      %v4547 = vadd.f32 0.0, %v4546
      %v4548 = vpop.f32.mrf.mxu0
      %v4549 = vpop.f32.mrf.mxu0
      %v4550 = vadd.f32 0.0, %v4549
      %v4551 = vpop.f32.mrf.mxu0
      %4552 = vmatprep.mubr.bf16.mxu0 0
      %4553 = vmatmul.mubr.bf16.gmra.mxu0 %v4405
      %v4554 = vpop.f32.mrf.mxu0
      %v4555 = vadd.f32 0.0, %v4554
      %v4556 = vpop.f32.mrf.mxu0
      %v4557 = vpop.f32.mrf.mxu0
      %v4558 = vadd.f32 0.0, %v4557
      %v4559 = vpop.f32.mrf.mxu0
      %4560 = vmatprep.mubr.bf16.mxu0 0
      %4561 = vmatmul.mubr.bf16.gmra.mxu0 %v4406
      %v4562 = vpop.f32.mrf.mxu0
      %v4563 = vadd.f32 0.0, %v4562
      %v4564 = vpop.f32.mrf.mxu0
      %v4565 = vpop.f32.mrf.mxu0
      %v4566 = vadd.f32 0.0, %v4565
      %v4567 = vpop.f32.mrf.mxu0
      %4568 = vmatprep.mubr.bf16.mxu0 0
      %4569 = vmatmul.mubr.bf16.gmra.mxu0 %v4407
      %v4570 = vpop.f32.mrf.mxu0
      %v4571 = vadd.f32 0.0, %v4570
      %v4572 = vpop.f32.mrf.mxu0
      %v4573 = vpop.f32.mrf.mxu0
      %v4574 = vadd.f32 0.0, %v4573
      %v4575 = vpop.f32.mrf.mxu0
      %4576 = vmatprep.mubr.bf16.mxu0 0
      %4577 = vmatmul.mubr.bf16.gmra.mxu0 %v4408
      %v4578 = vpop.f32.mrf.mxu0
      %v4579 = vadd.f32 0.0, %v4578
      %v4580 = vpop.f32.mrf.mxu0
      %v4581 = vpop.f32.mrf.mxu0
      %v4582 = vadd.f32 0.0, %v4581
      %v4583 = vpop.f32.mrf.mxu0
      %4584 = vmatprep.mubr.bf16.mxu0 0
      %4585 = vmatmul.mubr.bf16.gmra.mxu0 %v4409
      %v4586 = vpop.f32.mrf.mxu0
      %v4587 = vadd.f32 0.0, %v4586
      %v4588 = vpop.f32.mrf.mxu0
      %v4589 = vpop.f32.mrf.mxu0
      %v4590 = vadd.f32 0.0, %v4589
      %v4591 = vpop.f32.mrf.mxu0
      %4592 = vmatprep.mubr.bf16.mxu0 0
      %4593 = vmatmul.mubr.bf16.gmra.mxu0 %v4410
      %v4594 = vpop.f32.mrf.mxu0
      %v4595 = vadd.f32 0.0, %v4594
      %v4596 = vpop.f32.mrf.mxu0
      %v4597 = vpop.f32.mrf.mxu0
      %v4598 = vadd.f32 0.0, %v4597
      %v4599 = vpop.f32.mrf.mxu0
      %4600 = vmatprep.mubr.bf16.mxu0 0
      %4601 = vmatmul.mubr.bf16.gmra.mxu0 %v4411
      %v4602 = vpop.f32.mrf.mxu0
      %v4603 = vadd.f32 0.0, %v4602
      %v4604 = vpop.f32.mrf.mxu0
      %v4605 = vpop.f32.mrf.mxu0
      %v4606 = vadd.f32 0.0, %v4605
      %v4607 = vpop.f32.mrf.mxu0
      %4608 = vmatprep.mubr.bf16.mxu0 0
      %4609 = vmatmul.mubr.bf16.gmra.mxu0 %v4412
      %v4610 = vpop.f32.mrf.mxu0
      %v4611 = vadd.f32 0.0, %v4610
      %v4612 = vpop.f32.mrf.mxu0
      %v4613 = vpop.f32.mrf.mxu0
      %v4614 = vadd.f32 0.0, %v4613
      %v4615 = vpop.f32.mrf.mxu0
      %4616 = vmatprep.mubr.bf16.mxu0 0
      %4617 = vmatmul.mubr.bf16.gmra.mxu0 %v4413
      %v4618 = vpop.f32.mrf.mxu0
      %v4619 = vadd.f32 0.0, %v4618
      %v4620 = vpop.f32.mrf.mxu0
      %v4621 = vpop.f32.mrf.mxu0
      %v4622 = vadd.f32 0.0, %v4621
      %v4623 = vpop.f32.mrf.mxu0
      %4624 = vmatprep.mubr.bf16.mxu0 0
      %4625 = vmatmul.mubr.bf16.gmra.mxu0 %v4414
      %v4626 = vpop.f32.mrf.mxu0
      %v4627 = vadd.f32 0.0, %v4626
      %v4628 = vpop.f32.mrf.mxu0
      %v4629 = vpop.f32.mrf.mxu0
      %v4630 = vadd.f32 0.0, %v4629
      %v4631 = vpop.f32.mrf.mxu0
      %4632 = vmatprep.mubr.bf16.mxu0 0
      %4633 = vmatmul.mubr.bf16.gmra.mxu0 %v4415
      %v4634 = vpop.f32.mrf.mxu0
      %v4635 = vadd.f32 0.0, %v4634
      %v4636 = vpop.f32.mrf.mxu0
      %v4637 = vpop.f32.mrf.mxu0
      %v4638 = vadd.f32 0.0, %v4637
      %v4639 = vpop.f32.mrf.mxu0
      %4640 = vdwg.mxu0
      %v4641 = vadd.f32 %v4254, %v4515
      %v4642 = vadd.f32 %v4255, %v4518
      %v4643 = vadd.f32 %v4256, %v4523
      %v4644 = vadd.f32 %v4257, %v4526
      %v4645 = vadd.f32 %v4258, %v4531
      %v4646 = vadd.f32 %v4259, %v4534
      %v4647 = vadd.f32 %v4260, %v4539
      %v4648 = vadd.f32 %v4261, %v4542
      %v4649 = vadd.f32 %v4262, %v4547
      %v4650 = vadd.f32 %v4263, %v4550
      %v4651 = vadd.f32 %v4264, %v4555
      %v4652 = vadd.f32 %v4265, %v4558
      %v4653 = vadd.f32 %v4266, %v4563
      %v4654 = vadd.f32 %v4267, %v4566
      %v4655 = vadd.f32 %v4268, %v4571
      %v4656 = vadd.f32 %v4269, %v4574
      %v4657 = vadd.f32 %v4270, %v4579
      %v4658 = vadd.f32 %v4271, %v4582
      %v4659 = vadd.f32 %v4272, %v4587
      %v4660 = vadd.f32 %v4273, %v4590
      %v4661 = vadd.f32 %v4274, %v4595
      %v4662 = vadd.f32 %v4275, %v4598
      %v4663 = vadd.f32 %v4276, %v4603
      %v4664 = vadd.f32 %v4277, %v4606
      %v4665 = vadd.f32 %v4278, %v4611
      %v4666 = vadd.f32 %v4279, %v4614
      %v4667 = vadd.f32 %v4280, %v4619
      %v4668 = vadd.f32 %v4281, %v4622
      %v4669 = vadd.f32 %v4282, %v4627
      %v4670 = vadd.f32 %v4283, %v4630
      %v4671 = vadd.f32 %v4284, %v4635
      %v4672 = vadd.f32 %v4285, %v4638
      %v4673 = vld [vmem:[%s4286] sm:$0xf]
      %v4674 = vld [vmem:[%s4286 + $0x4] sm:$0xf]
      %v4675 = vld [vmem:[%s4286 + $0x8] sm:$0x1]
      %v4676 = vld [vmem:[%s4286 + $0xc] sm:$0xf]
      %v4677 = vld [vmem:[%s4286 + $0x10] sm:$0xf]
      %v4678 = vld [vmem:[%s4286 + $0x14] sm:$0x1]
      %v4679 = vld [vmem:[%s4286 + $0x18] sm:$0xf]
      %v4680 = vld [vmem:[%s4286 + $0x1c] sm:$0xf]
      %v4681 = vld [vmem:[%s4286 + $0x20] sm:$0x1]
      %v4682 = vld [vmem:[%s4286 + $0x24] sm:$0xf]
      %v4683 = vld [vmem:[%s4286 + $0x28] sm:$0xf]
      %v4684 = vld [vmem:[%s4286 + $0x2c] sm:$0x1]
      %v4685 = vld [vmem:[%s4286 + $0x30] sm:$0xf]
      %v4686 = vld [vmem:[%s4286 + $0x34] sm:$0xf]
      %v4687 = vld [vmem:[%s4286 + $0x38] sm:$0x1]
      %v4688 = vld [vmem:[%s4286 + $0x3c] sm:$0xf]
      %v4689 = vld [vmem:[%s4286 + $0x40] sm:$0xf]
      %v4690 = vld [vmem:[%s4286 + $0x44] sm:$0x1]
      %v4691 = vld [vmem:[%s4286 + $0x48] sm:$0xf]
      %v4692 = vld [vmem:[%s4286 + $0x4c] sm:$0xf]
      %v4693 = vld [vmem:[%s4286 + $0x50] sm:$0x1]
      %v4694 = vld [vmem:[%s4286 + $0x54] sm:$0xf]
      %v4695 = vld [vmem:[%s4286 + $0x58] sm:$0xf]
      %v4696 = vld [vmem:[%s4286 + $0x5c] sm:$0x1]
      %v4697 = vld [vmem:[%s4286 + $0x60] sm:$0xf]
      %v4698 = vld [vmem:[%s4286 + $0x64] sm:$0xf]
      %v4699 = vld [vmem:[%s4286 + $0x68] sm:$0x1]
      %v4700 = vld [vmem:[%s4286 + $0x6c] sm:$0xf]
      %v4701 = vld [vmem:[%s4286 + $0x70] sm:$0xf]
      %v4702 = vld [vmem:[%s4286 + $0x74] sm:$0x1]
      %v4703 = vld [vmem:[%s4286 + $0x78] sm:$0xf]
      %v4704 = vld [vmem:[%s4286 + $0x7c] sm:$0xf]
      %v4705 = vld [vmem:[%s4286 + $0x80] sm:$0x1]
      %v4706 = vld [vmem:[%s4286 + $0x84] sm:$0xf]
      %v4707 = vld [vmem:[%s4286 + $0x88] sm:$0xf]
      %v4708 = vld [vmem:[%s4286 + $0x8c] sm:$0x1]
      %v4709 = vld [vmem:[%s4286 + $0x90] sm:$0xf]
      %v4710 = vld [vmem:[%s4286 + $0x94] sm:$0xf]
      %v4711 = vld [vmem:[%s4286 + $0x98] sm:$0x1]
      %v4712 = vld [vmem:[%s4286 + $0x9c] sm:$0xf]
      %v4713 = vld [vmem:[%s4286 + $0xa0] sm:$0xf]
      %v4714 = vld [vmem:[%s4286 + $0xa4] sm:$0x1]
      %v4715 = vld [vmem:[%s4286 + $0xa8] sm:$0xf]
      %v4716 = vld [vmem:[%s4286 + $0xac] sm:$0xf]
      %v4717 = vld [vmem:[%s4286 + $0xb0] sm:$0x1]
      %v4718 = vld [vmem:[%s4286 + $0xb4] sm:$0xf]
      %v4719 = vld [vmem:[%s4286 + $0xb8] sm:$0xf]
      %v4720 = vld [vmem:[%s4286 + $0xbc] sm:$0x1]
      %v4722 = vshrl.u32 %v4673, 16
      %v4724 = vrot.slane %v4722, 4
      %v4725 = vshll.u32 %v4673, 16
      %v4727 = vrot.slane %v4725, 5
      %v4728 = vor.u32 %v4724, %v4727
      %v4729 = vrot.slane %v4728, 4
      %v4731 = vshll.u32 %v4674, 16
      %v4733 = vrot.slane %v4731, 5
      %v4734 = vsel %vm1183, %v4729, %v4733
      %v4735 = vshrl.u32 %v4674, 16
      %v4737 = vrot.slane %v4735, 4
      %v4738 = vor.u32 %v4737, %v4733
      %v4739 = vrot.slane %v4738, 4
      %v4741 = vshll.u32 %v4675, 16
      %v4743 = vrot.slane %v4741, 5
      %v4744 = vsel %vm1183, %v4739, %v4743
      %v4746 = vshrl.u32 %v4676, 16
      %v4748 = vrot.slane %v4746, 4
      %v4749 = vshll.u32 %v4676, 16
      %v4751 = vrot.slane %v4749, 5
      %v4752 = vor.u32 %v4748, %v4751
      %v4753 = vrot.slane %v4752, 4
      %v4755 = vshll.u32 %v4677, 16
      %v4757 = vrot.slane %v4755, 5
      %v4758 = vsel %vm1183, %v4753, %v4757
      %v4759 = vshrl.u32 %v4677, 16
      %v4761 = vrot.slane %v4759, 4
      %v4762 = vor.u32 %v4761, %v4757
      %v4763 = vrot.slane %v4762, 4
      %v4765 = vshll.u32 %v4678, 16
      %v4767 = vrot.slane %v4765, 5
      %v4768 = vsel %vm1183, %v4763, %v4767
      %v4770 = vshrl.u32 %v4679, 16
      %v4772 = vrot.slane %v4770, 4
      %v4773 = vshll.u32 %v4679, 16
      %v4775 = vrot.slane %v4773, 5
      %v4776 = vor.u32 %v4772, %v4775
      %v4777 = vrot.slane %v4776, 4
      %v4779 = vshll.u32 %v4680, 16
      %v4781 = vrot.slane %v4779, 5
      %v4782 = vsel %vm1183, %v4777, %v4781
      %v4783 = vshrl.u32 %v4680, 16
      %v4785 = vrot.slane %v4783, 4
      %v4786 = vor.u32 %v4785, %v4781
      %v4787 = vrot.slane %v4786, 4
      %v4789 = vshll.u32 %v4681, 16
      %v4791 = vrot.slane %v4789, 5
      %v4792 = vsel %vm1183, %v4787, %v4791
      %v4794 = vshrl.u32 %v4682, 16
      %v4796 = vrot.slane %v4794, 4
      %v4797 = vshll.u32 %v4682, 16
      %v4799 = vrot.slane %v4797, 5
      %v4800 = vor.u32 %v4796, %v4799
      %v4801 = vrot.slane %v4800, 4
      %v4803 = vshll.u32 %v4683, 16
      %v4805 = vrot.slane %v4803, 5
      %v4806 = vsel %vm1183, %v4801, %v4805
      %v4807 = vshrl.u32 %v4683, 16
      %v4809 = vrot.slane %v4807, 4
      %v4810 = vor.u32 %v4809, %v4805
      %v4811 = vrot.slane %v4810, 4
      %v4813 = vshll.u32 %v4684, 16
      %v4815 = vrot.slane %v4813, 5
      %v4816 = vsel %vm1183, %v4811, %v4815
      %v4818 = vshrl.u32 %v4685, 16
      %v4820 = vrot.slane %v4818, 4
      %v4821 = vshll.u32 %v4685, 16
      %v4823 = vrot.slane %v4821, 5
      %v4824 = vor.u32 %v4820, %v4823
      %v4825 = vrot.slane %v4824, 4
      %v4827 = vshll.u32 %v4686, 16
      %v4829 = vrot.slane %v4827, 5
      %v4830 = vsel %vm1183, %v4825, %v4829
      %v4831 = vshrl.u32 %v4686, 16
      %v4833 = vrot.slane %v4831, 4
      %v4834 = vor.u32 %v4833, %v4829
      %v4835 = vrot.slane %v4834, 4
      %v4837 = vshll.u32 %v4687, 16
      %v4839 = vrot.slane %v4837, 5
      %v4840 = vsel %vm1183, %v4835, %v4839
      %v4842 = vshrl.u32 %v4688, 16
      %v4844 = vrot.slane %v4842, 4
      %v4845 = vshll.u32 %v4688, 16
      %v4847 = vrot.slane %v4845, 5
      %v4848 = vor.u32 %v4844, %v4847
      %v4849 = vrot.slane %v4848, 4
      %v4851 = vshll.u32 %v4689, 16
      %v4853 = vrot.slane %v4851, 5
      %v4854 = vsel %vm1183, %v4849, %v4853
      %v4855 = vshrl.u32 %v4689, 16
      %v4857 = vrot.slane %v4855, 4
      %v4858 = vor.u32 %v4857, %v4853
      %v4859 = vrot.slane %v4858, 4
      %v4861 = vshll.u32 %v4690, 16
      %v4863 = vrot.slane %v4861, 5
      %v4864 = vsel %vm1183, %v4859, %v4863
      %v4866 = vshrl.u32 %v4691, 16
      %v4868 = vrot.slane %v4866, 4
      %v4869 = vshll.u32 %v4691, 16
      %v4871 = vrot.slane %v4869, 5
      %v4872 = vor.u32 %v4868, %v4871
      %v4873 = vrot.slane %v4872, 4
      %v4875 = vshll.u32 %v4692, 16
      %v4877 = vrot.slane %v4875, 5
      %v4878 = vsel %vm1183, %v4873, %v4877
      %v4879 = vshrl.u32 %v4692, 16
      %v4881 = vrot.slane %v4879, 4
      %v4882 = vor.u32 %v4881, %v4877
      %v4883 = vrot.slane %v4882, 4
      %v4885 = vshll.u32 %v4693, 16
      %v4887 = vrot.slane %v4885, 5
      %v4888 = vsel %vm1183, %v4883, %v4887
      %v4890 = vshrl.u32 %v4694, 16
      %v4892 = vrot.slane %v4890, 4
      %v4893 = vshll.u32 %v4694, 16
      %v4895 = vrot.slane %v4893, 5
      %v4896 = vor.u32 %v4892, %v4895
      %v4897 = vrot.slane %v4896, 4
      %v4899 = vshll.u32 %v4695, 16
      %v4901 = vrot.slane %v4899, 5
      %v4902 = vsel %vm1183, %v4897, %v4901
      %v4903 = vshrl.u32 %v4695, 16
      %v4905 = vrot.slane %v4903, 4
      %v4906 = vor.u32 %v4905, %v4901
      %v4907 = vrot.slane %v4906, 4
      %v4909 = vshll.u32 %v4696, 16
      %v4911 = vrot.slane %v4909, 5
      %v4912 = vsel %vm1183, %v4907, %v4911
      %v4914 = vshrl.u32 %v4697, 16
      %v4916 = vrot.slane %v4914, 4
      %v4917 = vshll.u32 %v4697, 16
      %v4919 = vrot.slane %v4917, 5
      %v4920 = vor.u32 %v4916, %v4919
      %v4921 = vrot.slane %v4920, 4
      %v4923 = vshll.u32 %v4698, 16
      %v4925 = vrot.slane %v4923, 5
      %v4926 = vsel %vm1183, %v4921, %v4925
      %v4927 = vshrl.u32 %v4698, 16
      %v4929 = vrot.slane %v4927, 4
      %v4930 = vor.u32 %v4929, %v4925
      %v4931 = vrot.slane %v4930, 4
      %v4933 = vshll.u32 %v4699, 16
      %v4935 = vrot.slane %v4933, 5
      %v4936 = vsel %vm1183, %v4931, %v4935
      %v4938 = vshrl.u32 %v4700, 16
      %v4940 = vrot.slane %v4938, 4
      %v4941 = vshll.u32 %v4700, 16
      %v4943 = vrot.slane %v4941, 5
      %v4944 = vor.u32 %v4940, %v4943
      %v4945 = vrot.slane %v4944, 4
      %v4947 = vshll.u32 %v4701, 16
      %v4949 = vrot.slane %v4947, 5
      %v4950 = vsel %vm1183, %v4945, %v4949
      %v4951 = vshrl.u32 %v4701, 16
      %v4953 = vrot.slane %v4951, 4
      %v4954 = vor.u32 %v4953, %v4949
      %v4955 = vrot.slane %v4954, 4
      %v4957 = vshll.u32 %v4702, 16
      %v4959 = vrot.slane %v4957, 5
      %v4960 = vsel %vm1183, %v4955, %v4959
      %v4962 = vshrl.u32 %v4703, 16
      %v4964 = vrot.slane %v4962, 4
      %v4965 = vshll.u32 %v4703, 16
      %v4967 = vrot.slane %v4965, 5
      %v4968 = vor.u32 %v4964, %v4967
      %v4969 = vrot.slane %v4968, 4
      %v4971 = vshll.u32 %v4704, 16
      %v4973 = vrot.slane %v4971, 5
      %v4974 = vsel %vm1183, %v4969, %v4973
      %v4975 = vshrl.u32 %v4704, 16
      %v4977 = vrot.slane %v4975, 4
      %v4978 = vor.u32 %v4977, %v4973
      %v4979 = vrot.slane %v4978, 4
      %v4981 = vshll.u32 %v4705, 16
      %v4983 = vrot.slane %v4981, 5
      %v4984 = vsel %vm1183, %v4979, %v4983
      %v4986 = vshrl.u32 %v4706, 16
      %v4988 = vrot.slane %v4986, 4
      %v4989 = vshll.u32 %v4706, 16
      %v4991 = vrot.slane %v4989, 5
      %v4992 = vor.u32 %v4988, %v4991
      %v4993 = vrot.slane %v4992, 4
      %v4995 = vshll.u32 %v4707, 16
      %v4997 = vrot.slane %v4995, 5
      %v4998 = vsel %vm1183, %v4993, %v4997
      %v4999 = vshrl.u32 %v4707, 16
      %v5001 = vrot.slane %v4999, 4
      %v5002 = vor.u32 %v5001, %v4997
      %v5003 = vrot.slane %v5002, 4
      %v5005 = vshll.u32 %v4708, 16
      %v5007 = vrot.slane %v5005, 5
      %v5008 = vsel %vm1183, %v5003, %v5007
      %v5010 = vshrl.u32 %v4709, 16
      %v5012 = vrot.slane %v5010, 4
      %v5013 = vshll.u32 %v4709, 16
      %v5015 = vrot.slane %v5013, 5
      %v5016 = vor.u32 %v5012, %v5015
      %v5017 = vrot.slane %v5016, 4
      %v5019 = vshll.u32 %v4710, 16
      %v5021 = vrot.slane %v5019, 5
      %v5022 = vsel %vm1183, %v5017, %v5021
      %v5023 = vshrl.u32 %v4710, 16
      %v5025 = vrot.slane %v5023, 4
      %v5026 = vor.u32 %v5025, %v5021
      %v5027 = vrot.slane %v5026, 4
      %v5029 = vshll.u32 %v4711, 16
      %v5031 = vrot.slane %v5029, 5
      %v5032 = vsel %vm1183, %v5027, %v5031
      %v5034 = vshrl.u32 %v4712, 16
      %v5036 = vrot.slane %v5034, 4
      %v5037 = vshll.u32 %v4712, 16
      %v5039 = vrot.slane %v5037, 5
      %v5040 = vor.u32 %v5036, %v5039
      %v5041 = vrot.slane %v5040, 4
      %v5043 = vshll.u32 %v4713, 16
      %v5045 = vrot.slane %v5043, 5
      %v5046 = vsel %vm1183, %v5041, %v5045
      %v5047 = vshrl.u32 %v4713, 16
      %v5049 = vrot.slane %v5047, 4
      %v5050 = vor.u32 %v5049, %v5045
      %v5051 = vrot.slane %v5050, 4
      %v5053 = vshll.u32 %v4714, 16
      %v5055 = vrot.slane %v5053, 5
      %v5056 = vsel %vm1183, %v5051, %v5055
      %v5058 = vshrl.u32 %v4715, 16
      %v5060 = vrot.slane %v5058, 4
      %v5061 = vshll.u32 %v4715, 16
      %v5063 = vrot.slane %v5061, 5
      %v5064 = vor.u32 %v5060, %v5063
      %v5065 = vrot.slane %v5064, 4
      %v5067 = vshll.u32 %v4716, 16
      %v5069 = vrot.slane %v5067, 5
      %v5070 = vsel %vm1183, %v5065, %v5069
      %v5071 = vshrl.u32 %v4716, 16
      %v5073 = vrot.slane %v5071, 4
      %v5074 = vor.u32 %v5073, %v5069
      %v5075 = vrot.slane %v5074, 4
      %v5077 = vshll.u32 %v4717, 16
      %v5079 = vrot.slane %v5077, 5
      %v5080 = vsel %vm1183, %v5075, %v5079
      %v5082 = vshrl.u32 %v4718, 16
      %v5084 = vrot.slane %v5082, 4
      %v5085 = vshll.u32 %v4718, 16
      %v5087 = vrot.slane %v5085, 5
      %v5088 = vor.u32 %v5084, %v5087
      %v5089 = vrot.slane %v5088, 4
      %v5091 = vshll.u32 %v4719, 16
      %v5093 = vrot.slane %v5091, 5
      %v5094 = vsel %vm1183, %v5089, %v5093
      %v5095 = vshrl.u32 %v4719, 16
      %v5097 = vrot.slane %v5095, 4
      %v5098 = vor.u32 %v5097, %v5093
      %v5099 = vrot.slane %v5098, 4
      %v5101 = vshll.u32 %v4720, 16
      %v5103 = vrot.slane %v5101, 5
      %v5104 = vsel %vm1183, %v5099, %v5103
      %s5105 = scalar_lea.vmem %s2, 448
      %v5106 = vld [vmem:[%s5105] sm:$0xf]
      %v5107 = vld [vmem:[%s5105 + $0x4] sm:$0xf]
      %v5108 = vld [vmem:[%s5105 + $0x8] sm:$0xf]
      %v5109 = vld [vmem:[%s5105 + $0xc] sm:$0xf]
      %v5110 = vld [vmem:[%s5105 + $0x10] sm:$0xf]
      %v5111 = vld [vmem:[%s5105 + $0x14] sm:$0xf]
      %v5112 = vld [vmem:[%s5105 + $0x18] sm:$0xf]
      %v5113 = vld [vmem:[%s5105 + $0x1c] sm:$0xf]
      %v5114 = vld [vmem:[%s5105 + $0x20] sm:$0xf]
      %v5115 = vld [vmem:[%s5105 + $0x24] sm:$0xf]
      %v5116 = vld [vmem:[%s5105 + $0x28] sm:$0xf]
      %v5117 = vld [vmem:[%s5105 + $0x2c] sm:$0xf]
      %v5118 = vld [vmem:[%s5105 + $0x30] sm:$0xf]
      %v5119 = vld [vmem:[%s5105 + $0x34] sm:$0xf]
      %v5120 = vld [vmem:[%s5105 + $0x38] sm:$0xf]
      %v5121 = vld [vmem:[%s5105 + $0x3c] sm:$0xf]
      %v5122 = vunpack.c.l.b16 %v4734
      %v5123 = vunpack.c.l.b16 %v4744
      %v5124 = vunpack.c.l.b16 %v4758
      %v5125 = vunpack.c.l.b16 %v4768
      %v5126 = vunpack.c.l.b16 %v4782
      %v5127 = vunpack.c.l.b16 %v4792
      %v5128 = vunpack.c.l.b16 %v4806
      %v5129 = vunpack.c.l.b16 %v4816
      %v5130 = vunpack.c.l.b16 %v4830
      %v5131 = vunpack.c.l.b16 %v4840
      %v5132 = vunpack.c.l.b16 %v4854
      %v5133 = vunpack.c.l.b16 %v4864
      %v5134 = vunpack.c.l.b16 %v4878
      %v5135 = vunpack.c.l.b16 %v4888
      %v5136 = vunpack.c.l.b16 %v4902
      %v5137 = vunpack.c.l.b16 %v4912
      %v5138 = vunpack.c.l.b16 %v4926
      %v5139 = vunpack.c.l.b16 %v4936
      %v5140 = vunpack.c.l.b16 %v4950
      %v5141 = vunpack.c.l.b16 %v4960
      %v5142 = vunpack.c.l.b16 %v4974
      %v5143 = vunpack.c.l.b16 %v4984
      %v5144 = vunpack.c.l.b16 %v4998
      %v5145 = vunpack.c.l.b16 %v5008
      %v5146 = vunpack.c.l.b16 %v5022
      %v5147 = vunpack.c.l.b16 %v5032
      %v5148 = vunpack.c.l.b16 %v5046
      %v5149 = vunpack.c.l.b16 %v5056
      %v5150 = vunpack.c.l.b16 %v5070
      %v5151 = vunpack.c.l.b16 %v5080
      %v5152 = vunpack.c.l.b16 %v5094
      %v5153 = vunpack.c.l.b16 %v5104
      %v5154 = vpack.c.b16 %v5123, %v5122
      %v5155 = vpack.c.b16 %v5125, %v5124
      %v5156 = vpack.c.b16 %v5127, %v5126
      %v5157 = vpack.c.b16 %v5129, %v5128
      %v5158 = vpack.c.b16 %v5131, %v5130
      %v5159 = vpack.c.b16 %v5133, %v5132
      %v5160 = vpack.c.b16 %v5135, %v5134
      %v5161 = vpack.c.b16 %v5137, %v5136
      %v5162 = vpack.c.b16 %v5139, %v5138
      %v5163 = vpack.c.b16 %v5141, %v5140
      %v5164 = vpack.c.b16 %v5143, %v5142
      %v5165 = vpack.c.b16 %v5145, %v5144
      %v5166 = vpack.c.b16 %v5147, %v5146
      %v5167 = vpack.c.b16 %v5149, %v5148
      %v5168 = vpack.c.b16 %v5151, %v5150
      %v5169 = vpack.c.b16 %v5153, %v5152
      %v5202 = vunpack.c.l.b16 %v5106
      %v5203 = vunpack.c.l.b16 %v5107
      %v5204 = vunpack.c.l.b16 %v5108
      %v5205 = vunpack.c.l.b16 %v5109
      %v5206 = vunpack.c.l.b16 %v5110
      %v5207 = vunpack.c.l.b16 %v5111
      %v5208 = vunpack.c.l.b16 %v5112
      %v5209 = vunpack.c.l.b16 %v5113
      %v5210 = vunpack.c.l.b16 %v5114
      %v5211 = vunpack.c.l.b16 %v5115
      %v5212 = vunpack.c.l.b16 %v5116
      %v5213 = vunpack.c.l.b16 %v5117
      %v5214 = vunpack.c.l.b16 %v5118
      %v5215 = vunpack.c.l.b16 %v5119
      %v5216 = vunpack.c.l.b16 %v5120
      %v5217 = vunpack.c.l.b16 %v5121
      %v5218 = vpack.c.b16 %v5203, %v5202
      %v5219 = vpack.c.b16 %v5205, %v5204
      %v5220 = vpack.c.b16 %v5207, %v5206
      %v5221 = vpack.c.b16 %v5209, %v5208
      %v5222 = vpack.c.b16 %v5211, %v5210
      %v5223 = vpack.c.b16 %v5213, %v5212
      %v5224 = vpack.c.b16 %v5215, %v5214
      %v5225 = vpack.c.b16 %v5217, %v5216
      %5234 = vmatprep.subr.bf16.mxu0 0
      %5235 = vmatpush1.bf16.msra.mxu0 %v5225
      %5236 = vmatprep.subr.bf16.mxu0 0
      %5237 = vmatpush1.bf16.msra.mxu0 %v5224
      %5238 = vmatprep.subr.bf16.mxu0 0
      %5239 = vmatpush1.bf16.msra.mxu0 %v5223
      %5240 = vmatprep.subr.bf16.mxu0 0
      %5241 = vmatpush1.bf16.msra.mxu0 %v5222
      %5242 = vmatprep.subr.bf16.mxu0 0
      %5243 = vmatpush1.bf16.msra.mxu0 %v5221
      %5244 = vmatprep.subr.bf16.mxu0 0
      %5245 = vmatpush1.bf16.msra.mxu0 %v5220
      %5246 = vmatprep.subr.bf16.mxu0 0
      %5247 = vmatpush1.bf16.msra.mxu0 %v5219
      %5248 = vmatprep.subr.bf16.mxu0 0
      %5249 = vmatpush1.bf16.msra.mxu0 %v5218
      %5250 = vmatprep.subr.bf16.mxu0 0
      %5251 = vmatpush2.bf16.msra.mxu0 0
      %5252 = vmatprep.subr.bf16.mxu0 0
      %5253 = vmatpush2.bf16.msra.mxu0 0
      %5254 = vmatprep.subr.bf16.mxu0 0
      %5255 = vmatpush2.bf16.msra.mxu0 0
      %5256 = vmatprep.subr.bf16.mxu0 0
      %5257 = vmatpush2.bf16.msra.mxu0 0
      %5258 = vmatprep.subr.bf16.mxu0 0
      %5259 = vmatpush2.bf16.msra.mxu0 0
      %5260 = vmatprep.subr.bf16.mxu0 0
      %5261 = vmatpush2.bf16.msra.mxu0 0
      %5262 = vmatprep.subr.bf16.mxu0 0
      %5263 = vmatpush2.bf16.msra.mxu0 0
      %5264 = vmatprep.subr.bf16.mxu0 0
      %5265 = vmatpush2.bf16.msra.mxu0 0
      %5266 = vmatprep.mubr.bf16.mxu0 0
      %5267 = vmatmul.mubr.bf16.gmra.mxu0 %v5154
      %v5268 = vpop.f32.mrf.mxu0
      %v5269 = vadd.f32 0.0, %v5268
      %v5270 = vpop.f32.mrf.mxu0
      %v5271 = vpop.f32.mrf.mxu0
      %v5272 = vadd.f32 0.0, %v5271
      %v5273 = vpop.f32.mrf.mxu0
      %5274 = vmatprep.mubr.bf16.mxu0 0
      %5275 = vmatmul.mubr.bf16.gmra.mxu0 %v5155
      %v5276 = vpop.f32.mrf.mxu0
      %v5277 = vadd.f32 0.0, %v5276
      %v5278 = vpop.f32.mrf.mxu0
      %v5279 = vpop.f32.mrf.mxu0
      %v5280 = vadd.f32 0.0, %v5279
      %v5281 = vpop.f32.mrf.mxu0
      %5282 = vmatprep.mubr.bf16.mxu0 0
      %5283 = vmatmul.mubr.bf16.gmra.mxu0 %v5156
      %v5284 = vpop.f32.mrf.mxu0
      %v5285 = vadd.f32 0.0, %v5284
      %v5286 = vpop.f32.mrf.mxu0
      %v5287 = vpop.f32.mrf.mxu0
      %v5288 = vadd.f32 0.0, %v5287
      %v5289 = vpop.f32.mrf.mxu0
      %5290 = vmatprep.mubr.bf16.mxu0 0
      %5291 = vmatmul.mubr.bf16.gmra.mxu0 %v5157
      %v5292 = vpop.f32.mrf.mxu0
      %v5293 = vadd.f32 0.0, %v5292
      %v5294 = vpop.f32.mrf.mxu0
      %v5295 = vpop.f32.mrf.mxu0
      %v5296 = vadd.f32 0.0, %v5295
      %v5297 = vpop.f32.mrf.mxu0
      %5298 = vmatprep.mubr.bf16.mxu0 0
      %5299 = vmatmul.mubr.bf16.gmra.mxu0 %v5158
      %v5300 = vpop.f32.mrf.mxu0
      %v5301 = vadd.f32 0.0, %v5300
      %v5302 = vpop.f32.mrf.mxu0
      %v5303 = vpop.f32.mrf.mxu0
      %v5304 = vadd.f32 0.0, %v5303
      %v5305 = vpop.f32.mrf.mxu0
      %5306 = vmatprep.mubr.bf16.mxu0 0
      %5307 = vmatmul.mubr.bf16.gmra.mxu0 %v5159
      %v5308 = vpop.f32.mrf.mxu0
      %v5309 = vadd.f32 0.0, %v5308
      %v5310 = vpop.f32.mrf.mxu0
      %v5311 = vpop.f32.mrf.mxu0
      %v5312 = vadd.f32 0.0, %v5311
      %v5313 = vpop.f32.mrf.mxu0
      %5314 = vmatprep.mubr.bf16.mxu0 0
      %5315 = vmatmul.mubr.bf16.gmra.mxu0 %v5160
      %v5316 = vpop.f32.mrf.mxu0
      %v5317 = vadd.f32 0.0, %v5316
      %v5318 = vpop.f32.mrf.mxu0
      %v5319 = vpop.f32.mrf.mxu0
      %v5320 = vadd.f32 0.0, %v5319
      %v5321 = vpop.f32.mrf.mxu0
      %5322 = vmatprep.mubr.bf16.mxu0 0
      %5323 = vmatmul.mubr.bf16.gmra.mxu0 %v5161
      %v5324 = vpop.f32.mrf.mxu0
      %v5325 = vadd.f32 0.0, %v5324
      %v5326 = vpop.f32.mrf.mxu0
      %v5327 = vpop.f32.mrf.mxu0
      %v5328 = vadd.f32 0.0, %v5327
      %v5329 = vpop.f32.mrf.mxu0
      %5330 = vmatprep.mubr.bf16.mxu0 0
      %5331 = vmatmul.mubr.bf16.gmra.mxu0 %v5162
      %v5332 = vpop.f32.mrf.mxu0
      %v5333 = vadd.f32 0.0, %v5332
      %v5334 = vpop.f32.mrf.mxu0
      %v5335 = vpop.f32.mrf.mxu0
      %v5336 = vadd.f32 0.0, %v5335
      %v5337 = vpop.f32.mrf.mxu0
      %5338 = vmatprep.mubr.bf16.mxu0 0
      %5339 = vmatmul.mubr.bf16.gmra.mxu0 %v5163
      %v5340 = vpop.f32.mrf.mxu0
      %v5341 = vadd.f32 0.0, %v5340
      %v5342 = vpop.f32.mrf.mxu0
      %v5343 = vpop.f32.mrf.mxu0
      %v5344 = vadd.f32 0.0, %v5343
      %v5345 = vpop.f32.mrf.mxu0
      %5346 = vmatprep.mubr.bf16.mxu0 0
      %5347 = vmatmul.mubr.bf16.gmra.mxu0 %v5164
      %v5348 = vpop.f32.mrf.mxu0
      %v5349 = vadd.f32 0.0, %v5348
      %v5350 = vpop.f32.mrf.mxu0
      %v5351 = vpop.f32.mrf.mxu0
      %v5352 = vadd.f32 0.0, %v5351
      %v5353 = vpop.f32.mrf.mxu0
      %5354 = vmatprep.mubr.bf16.mxu0 0
      %5355 = vmatmul.mubr.bf16.gmra.mxu0 %v5165
      %v5356 = vpop.f32.mrf.mxu0
      %v5357 = vadd.f32 0.0, %v5356
      %v5358 = vpop.f32.mrf.mxu0
      %v5359 = vpop.f32.mrf.mxu0
      %v5360 = vadd.f32 0.0, %v5359
      %v5361 = vpop.f32.mrf.mxu0
      %5362 = vmatprep.mubr.bf16.mxu0 0
      %5363 = vmatmul.mubr.bf16.gmra.mxu0 %v5166
      %v5364 = vpop.f32.mrf.mxu0
      %v5365 = vadd.f32 0.0, %v5364
      %v5366 = vpop.f32.mrf.mxu0
      %v5367 = vpop.f32.mrf.mxu0
      %v5368 = vadd.f32 0.0, %v5367
      %v5369 = vpop.f32.mrf.mxu0
      %5370 = vmatprep.mubr.bf16.mxu0 0
      %5371 = vmatmul.mubr.bf16.gmra.mxu0 %v5167
      %v5372 = vpop.f32.mrf.mxu0
      %v5373 = vadd.f32 0.0, %v5372
      %v5374 = vpop.f32.mrf.mxu0
      %v5375 = vpop.f32.mrf.mxu0
      %v5376 = vadd.f32 0.0, %v5375
      %v5377 = vpop.f32.mrf.mxu0
      %5378 = vmatprep.mubr.bf16.mxu0 0
      %5379 = vmatmul.mubr.bf16.gmra.mxu0 %v5168
      %v5380 = vpop.f32.mrf.mxu0
      %v5381 = vadd.f32 0.0, %v5380
      %v5382 = vpop.f32.mrf.mxu0
      %v5383 = vpop.f32.mrf.mxu0
      %v5384 = vadd.f32 0.0, %v5383
      %v5385 = vpop.f32.mrf.mxu0
      %5386 = vmatprep.mubr.bf16.mxu0 0
      %5387 = vmatmul.mubr.bf16.gmra.mxu0 %v5169
      %v5388 = vpop.f32.mrf.mxu0
      %v5389 = vadd.f32 0.0, %v5388
      %v5390 = vpop.f32.mrf.mxu0
      %v5391 = vpop.f32.mrf.mxu0
      %v5392 = vadd.f32 0.0, %v5391
      %v5393 = vpop.f32.mrf.mxu0
      %5394 = vdwg.mxu0
      %v5395 = vadd.f32 %v4641, %v5269
      %v5396 = vadd.f32 %v4642, %v5272
      %v5397 = vadd.f32 %v4643, %v5277
      %v5398 = vadd.f32 %v4644, %v5280
      %v5399 = vadd.f32 %v4645, %v5285
      %v5400 = vadd.f32 %v4646, %v5288
      %v5401 = vadd.f32 %v4647, %v5293
      %v5402 = vadd.f32 %v4648, %v5296
      %v5403 = vadd.f32 %v4649, %v5301
      %v5404 = vadd.f32 %v4650, %v5304
      %v5405 = vadd.f32 %v4651, %v5309
      %v5406 = vadd.f32 %v4652, %v5312
      %v5407 = vadd.f32 %v4653, %v5317
      %v5408 = vadd.f32 %v4654, %v5320
      %v5409 = vadd.f32 %v4655, %v5325
      %v5410 = vadd.f32 %v4656, %v5328
      %v5411 = vadd.f32 %v4657, %v5333
      %v5412 = vadd.f32 %v4658, %v5336
      %v5413 = vadd.f32 %v4659, %v5341
      %v5414 = vadd.f32 %v4660, %v5344
      %v5415 = vadd.f32 %v4661, %v5349
      %v5416 = vadd.f32 %v4662, %v5352
      %v5417 = vadd.f32 %v4663, %v5357
      %v5418 = vadd.f32 %v4664, %v5360
      %v5419 = vadd.f32 %v4665, %v5365
      %v5420 = vadd.f32 %v4666, %v5368
      %v5421 = vadd.f32 %v4667, %v5373
      %v5422 = vadd.f32 %v4668, %v5376
      %v5423 = vadd.f32 %v4669, %v5381
      %v5424 = vadd.f32 %v4670, %v5384
      %v5425 = vadd.f32 %v4671, %v5389
      %v5426 = vadd.f32 %v4672, %v5392
      %v5427 = vld [vmem:[%s4286] sm:$0xe]
      %v5428 = vld [vmem:[%s4286 + $0xc] sm:$0xe]
      %v5429 = vld [vmem:[%s4286 + $0x18] sm:$0xe]
      %v5430 = vld [vmem:[%s4286 + $0x24] sm:$0xe]
      %v5431 = vld [vmem:[%s4286 + $0x30] sm:$0xe]
      %v5432 = vld [vmem:[%s4286 + $0x3c] sm:$0xe]
      %v5433 = vld [vmem:[%s4286 + $0x48] sm:$0xe]
      %v5434 = vld [vmem:[%s4286 + $0x54] sm:$0xe]
      %v5435 = vld [vmem:[%s4286 + $0x60] sm:$0xe]
      %v5436 = vld [vmem:[%s4286 + $0x6c] sm:$0xe]
      %v5437 = vld [vmem:[%s4286 + $0x78] sm:$0xe]
      %v5438 = vld [vmem:[%s4286 + $0x84] sm:$0xe]
      %v5439 = vld [vmem:[%s4286 + $0x90] sm:$0xe]
      %v5440 = vld [vmem:[%s4286 + $0x9c] sm:$0xe]
      %v5441 = vld [vmem:[%s4286 + $0xa8] sm:$0xe]
      %v5442 = vld [vmem:[%s4286 + $0xb4] sm:$0xe]
      %v5491 = vrot.slane %v5427, 5
      %v5492 = vrot.slane %v5491, 4
      %v5493 = vrot.slane %v4674, 5
      %v5494 = vsel %vm2213, %v5492, %v5493
      %v5495 = vrot.slane %v5493, 4
      %v5496 = vrot.slane %v4675, 5
      %v5497 = vsel %vm2213, %v5495, %v5496
      %v5498 = vrot.slane %v5428, 5
      %v5499 = vrot.slane %v5498, 4
      %v5500 = vrot.slane %v4677, 5
      %v5501 = vsel %vm2213, %v5499, %v5500
      %v5502 = vrot.slane %v5500, 4
      %v5503 = vrot.slane %v4678, 5
      %v5504 = vsel %vm2213, %v5502, %v5503
      %v5505 = vrot.slane %v5429, 5
      %v5506 = vrot.slane %v5505, 4
      %v5507 = vrot.slane %v4680, 5
      %v5508 = vsel %vm2213, %v5506, %v5507
      %v5509 = vrot.slane %v5507, 4
      %v5510 = vrot.slane %v4681, 5
      %v5511 = vsel %vm2213, %v5509, %v5510
      %v5512 = vrot.slane %v5430, 5
      %v5513 = vrot.slane %v5512, 4
      %v5514 = vrot.slane %v4683, 5
      %v5515 = vsel %vm2213, %v5513, %v5514
      %v5516 = vrot.slane %v5514, 4
      %v5517 = vrot.slane %v4684, 5
      %v5518 = vsel %vm2213, %v5516, %v5517
      %v5519 = vrot.slane %v5431, 5
      %v5520 = vrot.slane %v5519, 4
      %v5521 = vrot.slane %v4686, 5
      %v5522 = vsel %vm2213, %v5520, %v5521
      %v5523 = vrot.slane %v5521, 4
      %v5524 = vrot.slane %v4687, 5
      %v5525 = vsel %vm2213, %v5523, %v5524
      %v5526 = vrot.slane %v5432, 5
      %v5527 = vrot.slane %v5526, 4
      %v5528 = vrot.slane %v4689, 5
      %v5529 = vsel %vm2213, %v5527, %v5528
      %v5530 = vrot.slane %v5528, 4
      %v5531 = vrot.slane %v4690, 5
      %v5532 = vsel %vm2213, %v5530, %v5531
      %v5533 = vrot.slane %v5433, 5
      %v5534 = vrot.slane %v5533, 4
      %v5535 = vrot.slane %v4692, 5
      %v5536 = vsel %vm2213, %v5534, %v5535
      %v5537 = vrot.slane %v5535, 4
      %v5538 = vrot.slane %v4693, 5
      %v5539 = vsel %vm2213, %v5537, %v5538
      %v5540 = vrot.slane %v5434, 5
      %v5541 = vrot.slane %v5540, 4
      %v5542 = vrot.slane %v4695, 5
      %v5543 = vsel %vm2213, %v5541, %v5542
      %v5544 = vrot.slane %v5542, 4
      %v5545 = vrot.slane %v4696, 5
      %v5546 = vsel %vm2213, %v5544, %v5545
      %v5547 = vrot.slane %v5435, 5
      %v5548 = vrot.slane %v5547, 4
      %v5549 = vrot.slane %v4698, 5
      %v5550 = vsel %vm2213, %v5548, %v5549
      %v5551 = vrot.slane %v5549, 4
      %v5552 = vrot.slane %v4699, 5
      %v5553 = vsel %vm2213, %v5551, %v5552
      %v5554 = vrot.slane %v5436, 5
      %v5555 = vrot.slane %v5554, 4
      %v5556 = vrot.slane %v4701, 5
      %v5557 = vsel %vm2213, %v5555, %v5556
      %v5558 = vrot.slane %v5556, 4
      %v5559 = vrot.slane %v4702, 5
      %v5560 = vsel %vm2213, %v5558, %v5559
      %v5561 = vrot.slane %v5437, 5
      %v5562 = vrot.slane %v5561, 4
      %v5563 = vrot.slane %v4704, 5
      %v5564 = vsel %vm2213, %v5562, %v5563
      %v5565 = vrot.slane %v5563, 4
      %v5566 = vrot.slane %v4705, 5
      %v5567 = vsel %vm2213, %v5565, %v5566
      %v5568 = vrot.slane %v5438, 5
      %v5569 = vrot.slane %v5568, 4
      %v5570 = vrot.slane %v4707, 5
      %v5571 = vsel %vm2213, %v5569, %v5570
      %v5572 = vrot.slane %v5570, 4
      %v5573 = vrot.slane %v4708, 5
      %v5574 = vsel %vm2213, %v5572, %v5573
      %v5575 = vrot.slane %v5439, 5
      %v5576 = vrot.slane %v5575, 4
      %v5577 = vrot.slane %v4710, 5
      %v5578 = vsel %vm2213, %v5576, %v5577
      %v5579 = vrot.slane %v5577, 4
      %v5580 = vrot.slane %v4711, 5
      %v5581 = vsel %vm2213, %v5579, %v5580
      %v5582 = vrot.slane %v5440, 5
      %v5583 = vrot.slane %v5582, 4
      %v5584 = vrot.slane %v4713, 5
      %v5585 = vsel %vm2213, %v5583, %v5584
      %v5586 = vrot.slane %v5584, 4
      %v5587 = vrot.slane %v4714, 5
      %v5588 = vsel %vm2213, %v5586, %v5587
      %v5589 = vrot.slane %v5441, 5
      %v5590 = vrot.slane %v5589, 4
      %v5591 = vrot.slane %v4716, 5
      %v5592 = vsel %vm2213, %v5590, %v5591
      %v5593 = vrot.slane %v5591, 4
      %v5594 = vrot.slane %v4717, 5
      %v5595 = vsel %vm2213, %v5593, %v5594
      %v5596 = vrot.slane %v5442, 5
      %v5597 = vrot.slane %v5596, 4
      %v5598 = vrot.slane %v4719, 5
      %v5599 = vsel %vm2213, %v5597, %v5598
      %v5600 = vrot.slane %v5598, 4
      %v5601 = vrot.slane %v4720, 5
      %v5602 = vsel %vm2213, %v5600, %v5601
      %s5603 = scalar_lea.vmem %s2, 512
      %v5604 = vld [vmem:[%s5603] sm:$0xf]
      %v5605 = vld [vmem:[%s5603 + $0x4] sm:$0xf]
      %v5606 = vld [vmem:[%s5603 + $0x8] sm:$0xf]
      %v5607 = vld [vmem:[%s5603 + $0xc] sm:$0xf]
      %v5608 = vld [vmem:[%s5603 + $0x10] sm:$0xf]
      %v5609 = vld [vmem:[%s5603 + $0x14] sm:$0xf]
      %v5610 = vld [vmem:[%s5603 + $0x18] sm:$0xf]
      %v5611 = vld [vmem:[%s5603 + $0x1c] sm:$0xf]
      %v5612 = vld [vmem:[%s5603 + $0x20] sm:$0xf]
      %v5613 = vld [vmem:[%s5603 + $0x24] sm:$0xf]
      %v5614 = vld [vmem:[%s5603 + $0x28] sm:$0xf]
      %v5615 = vld [vmem:[%s5603 + $0x2c] sm:$0xf]
      %v5616 = vld [vmem:[%s5603 + $0x30] sm:$0xf]
      %v5617 = vld [vmem:[%s5603 + $0x34] sm:$0xf]
      %v5618 = vld [vmem:[%s5603 + $0x38] sm:$0xf]
      %v5619 = vld [vmem:[%s5603 + $0x3c] sm:$0xf]
      %v5620 = vunpack.c.l.b16 %v5494
      %v5621 = vunpack.c.l.b16 %v5497
      %v5622 = vunpack.c.l.b16 %v5501
      %v5623 = vunpack.c.l.b16 %v5504
      %v5624 = vunpack.c.l.b16 %v5508
      %v5625 = vunpack.c.l.b16 %v5511
      %v5626 = vunpack.c.l.b16 %v5515
      %v5627 = vunpack.c.l.b16 %v5518
      %v5628 = vunpack.c.l.b16 %v5522
      %v5629 = vunpack.c.l.b16 %v5525
      %v5630 = vunpack.c.l.b16 %v5529
      %v5631 = vunpack.c.l.b16 %v5532
      %v5632 = vunpack.c.l.b16 %v5536
      %v5633 = vunpack.c.l.b16 %v5539
      %v5634 = vunpack.c.l.b16 %v5543
      %v5635 = vunpack.c.l.b16 %v5546
      %v5636 = vunpack.c.l.b16 %v5550
      %v5637 = vunpack.c.l.b16 %v5553
      %v5638 = vunpack.c.l.b16 %v5557
      %v5639 = vunpack.c.l.b16 %v5560
      %v5640 = vunpack.c.l.b16 %v5564
      %v5641 = vunpack.c.l.b16 %v5567
      %v5642 = vunpack.c.l.b16 %v5571
      %v5643 = vunpack.c.l.b16 %v5574
      %v5644 = vunpack.c.l.b16 %v5578
      %v5645 = vunpack.c.l.b16 %v5581
      %v5646 = vunpack.c.l.b16 %v5585
      %v5647 = vunpack.c.l.b16 %v5588
      %v5648 = vunpack.c.l.b16 %v5592
      %v5649 = vunpack.c.l.b16 %v5595
      %v5650 = vunpack.c.l.b16 %v5599
      %v5651 = vunpack.c.l.b16 %v5602
      %v5652 = vpack.c.b16 %v5621, %v5620
      %v5653 = vpack.c.b16 %v5623, %v5622
      %v5654 = vpack.c.b16 %v5625, %v5624
      %v5655 = vpack.c.b16 %v5627, %v5626
      %v5656 = vpack.c.b16 %v5629, %v5628
      %v5657 = vpack.c.b16 %v5631, %v5630
      %v5658 = vpack.c.b16 %v5633, %v5632
      %v5659 = vpack.c.b16 %v5635, %v5634
      %v5660 = vpack.c.b16 %v5637, %v5636
      %v5661 = vpack.c.b16 %v5639, %v5638
      %v5662 = vpack.c.b16 %v5641, %v5640
      %v5663 = vpack.c.b16 %v5643, %v5642
      %v5664 = vpack.c.b16 %v5645, %v5644
      %v5665 = vpack.c.b16 %v5647, %v5646
      %v5666 = vpack.c.b16 %v5649, %v5648
      %v5667 = vpack.c.b16 %v5651, %v5650
      %v5700 = vunpack.c.l.b16 %v5604
      %v5701 = vunpack.c.l.b16 %v5605
      %v5702 = vunpack.c.l.b16 %v5606
      %v5703 = vunpack.c.l.b16 %v5607
      %v5704 = vunpack.c.l.b16 %v5608
      %v5705 = vunpack.c.l.b16 %v5609
      %v5706 = vunpack.c.l.b16 %v5610
      %v5707 = vunpack.c.l.b16 %v5611
      %v5708 = vunpack.c.l.b16 %v5612
      %v5709 = vunpack.c.l.b16 %v5613
      %v5710 = vunpack.c.l.b16 %v5614
      %v5711 = vunpack.c.l.b16 %v5615
      %v5712 = vunpack.c.l.b16 %v5616
      %v5713 = vunpack.c.l.b16 %v5617
      %v5714 = vunpack.c.l.b16 %v5618
      %v5715 = vunpack.c.l.b16 %v5619
      %v5716 = vpack.c.b16 %v5701, %v5700
      %v5717 = vpack.c.b16 %v5703, %v5702
      %v5718 = vpack.c.b16 %v5705, %v5704
      %v5719 = vpack.c.b16 %v5707, %v5706
      %v5720 = vpack.c.b16 %v5709, %v5708
      %v5721 = vpack.c.b16 %v5711, %v5710
      %v5722 = vpack.c.b16 %v5713, %v5712
      %v5723 = vpack.c.b16 %v5715, %v5714
      %5732 = vmatprep.subr.bf16.mxu0 0
      %5733 = vmatpush1.bf16.msra.mxu0 %v5723
      %5734 = vmatprep.subr.bf16.mxu0 0
      %5735 = vmatpush1.bf16.msra.mxu0 %v5722
      %5736 = vmatprep.subr.bf16.mxu0 0
      %5737 = vmatpush1.bf16.msra.mxu0 %v5721
      %5738 = vmatprep.subr.bf16.mxu0 0
      %5739 = vmatpush1.bf16.msra.mxu0 %v5720
      %5740 = vmatprep.subr.bf16.mxu0 0
      %5741 = vmatpush1.bf16.msra.mxu0 %v5719
      %5742 = vmatprep.subr.bf16.mxu0 0
      %5743 = vmatpush1.bf16.msra.mxu0 %v5718
      %5744 = vmatprep.subr.bf16.mxu0 0
      %5745 = vmatpush1.bf16.msra.mxu0 %v5717
      %5746 = vmatprep.subr.bf16.mxu0 0
      %5747 = vmatpush1.bf16.msra.mxu0 %v5716
      %5748 = vmatprep.subr.bf16.mxu0 0
      %5749 = vmatpush2.bf16.msra.mxu0 0
      %5750 = vmatprep.subr.bf16.mxu0 0
      %5751 = vmatpush2.bf16.msra.mxu0 0
      %5752 = vmatprep.subr.bf16.mxu0 0
      %5753 = vmatpush2.bf16.msra.mxu0 0
      %5754 = vmatprep.subr.bf16.mxu0 0
      %5755 = vmatpush2.bf16.msra.mxu0 0
      %5756 = vmatprep.subr.bf16.mxu0 0
      %5757 = vmatpush2.bf16.msra.mxu0 0
      %5758 = vmatprep.subr.bf16.mxu0 0
      %5759 = vmatpush2.bf16.msra.mxu0 0
      %5760 = vmatprep.subr.bf16.mxu0 0
      %5761 = vmatpush2.bf16.msra.mxu0 0
      %5762 = vmatprep.subr.bf16.mxu0 0
      %5763 = vmatpush2.bf16.msra.mxu0 0
      %5764 = vmatprep.mubr.bf16.mxu0 0
      %5765 = vmatmul.mubr.bf16.gmra.mxu0 %v5652
      %v5766 = vpop.f32.mrf.mxu0
      %v5767 = vadd.f32 0.0, %v5766
      %v5768 = vpop.f32.mrf.mxu0
      %v5769 = vpop.f32.mrf.mxu0
      %v5770 = vadd.f32 0.0, %v5769
      %v5771 = vpop.f32.mrf.mxu0
      %5772 = vmatprep.mubr.bf16.mxu0 0
      %5773 = vmatmul.mubr.bf16.gmra.mxu0 %v5653
      %v5774 = vpop.f32.mrf.mxu0
      %v5775 = vadd.f32 0.0, %v5774
      %v5776 = vpop.f32.mrf.mxu0
      %v5777 = vpop.f32.mrf.mxu0
      %v5778 = vadd.f32 0.0, %v5777
      %v5779 = vpop.f32.mrf.mxu0
      %5780 = vmatprep.mubr.bf16.mxu0 0
      %5781 = vmatmul.mubr.bf16.gmra.mxu0 %v5654
      %v5782 = vpop.f32.mrf.mxu0
      %v5783 = vadd.f32 0.0, %v5782
      %v5784 = vpop.f32.mrf.mxu0
      %v5785 = vpop.f32.mrf.mxu0
      %v5786 = vadd.f32 0.0, %v5785
      %v5787 = vpop.f32.mrf.mxu0
      %5788 = vmatprep.mubr.bf16.mxu0 0
      %5789 = vmatmul.mubr.bf16.gmra.mxu0 %v5655
      %v5790 = vpop.f32.mrf.mxu0
      %v5791 = vadd.f32 0.0, %v5790
      %v5792 = vpop.f32.mrf.mxu0
      %v5793 = vpop.f32.mrf.mxu0
      %v5794 = vadd.f32 0.0, %v5793
      %v5795 = vpop.f32.mrf.mxu0
      %5796 = vmatprep.mubr.bf16.mxu0 0
      %5797 = vmatmul.mubr.bf16.gmra.mxu0 %v5656
      %v5798 = vpop.f32.mrf.mxu0
      %v5799 = vadd.f32 0.0, %v5798
      %v5800 = vpop.f32.mrf.mxu0
      %v5801 = vpop.f32.mrf.mxu0
      %v5802 = vadd.f32 0.0, %v5801
      %v5803 = vpop.f32.mrf.mxu0
      %5804 = vmatprep.mubr.bf16.mxu0 0
      %5805 = vmatmul.mubr.bf16.gmra.mxu0 %v5657
      %v5806 = vpop.f32.mrf.mxu0
      %v5807 = vadd.f32 0.0, %v5806
      %v5808 = vpop.f32.mrf.mxu0
      %v5809 = vpop.f32.mrf.mxu0
      %v5810 = vadd.f32 0.0, %v5809
      %v5811 = vpop.f32.mrf.mxu0
      %5812 = vmatprep.mubr.bf16.mxu0 0
      %5813 = vmatmul.mubr.bf16.gmra.mxu0 %v5658
      %v5814 = vpop.f32.mrf.mxu0
      %v5815 = vadd.f32 0.0, %v5814
      %v5816 = vpop.f32.mrf.mxu0
      %v5817 = vpop.f32.mrf.mxu0
      %v5818 = vadd.f32 0.0, %v5817
      %v5819 = vpop.f32.mrf.mxu0
      %5820 = vmatprep.mubr.bf16.mxu0 0
      %5821 = vmatmul.mubr.bf16.gmra.mxu0 %v5659
      %v5822 = vpop.f32.mrf.mxu0
      %v5823 = vadd.f32 0.0, %v5822
      %v5824 = vpop.f32.mrf.mxu0
      %v5825 = vpop.f32.mrf.mxu0
      %v5826 = vadd.f32 0.0, %v5825
      %v5827 = vpop.f32.mrf.mxu0
      %5828 = vmatprep.mubr.bf16.mxu0 0
      %5829 = vmatmul.mubr.bf16.gmra.mxu0 %v5660
      %v5830 = vpop.f32.mrf.mxu0
      %v5831 = vadd.f32 0.0, %v5830
      %v5832 = vpop.f32.mrf.mxu0
      %v5833 = vpop.f32.mrf.mxu0
      %v5834 = vadd.f32 0.0, %v5833
      %v5835 = vpop.f32.mrf.mxu0
      %5836 = vmatprep.mubr.bf16.mxu0 0
      %5837 = vmatmul.mubr.bf16.gmra.mxu0 %v5661
      %v5838 = vpop.f32.mrf.mxu0
      %v5839 = vadd.f32 0.0, %v5838
      %v5840 = vpop.f32.mrf.mxu0
      %v5841 = vpop.f32.mrf.mxu0
      %v5842 = vadd.f32 0.0, %v5841
      %v5843 = vpop.f32.mrf.mxu0
      %5844 = vmatprep.mubr.bf16.mxu0 0
      %5845 = vmatmul.mubr.bf16.gmra.mxu0 %v5662
      %v5846 = vpop.f32.mrf.mxu0
      %v5847 = vadd.f32 0.0, %v5846
      %v5848 = vpop.f32.mrf.mxu0
      %v5849 = vpop.f32.mrf.mxu0
      %v5850 = vadd.f32 0.0, %v5849
      %v5851 = vpop.f32.mrf.mxu0
      %5852 = vmatprep.mubr.bf16.mxu0 0
      %5853 = vmatmul.mubr.bf16.gmra.mxu0 %v5663
      %v5854 = vpop.f32.mrf.mxu0
      %v5855 = vadd.f32 0.0, %v5854
      %v5856 = vpop.f32.mrf.mxu0
      %v5857 = vpop.f32.mrf.mxu0
      %v5858 = vadd.f32 0.0, %v5857
      %v5859 = vpop.f32.mrf.mxu0
      %5860 = vmatprep.mubr.bf16.mxu0 0
      %5861 = vmatmul.mubr.bf16.gmra.mxu0 %v5664
      %v5862 = vpop.f32.mrf.mxu0
      %v5863 = vadd.f32 0.0, %v5862
      %v5864 = vpop.f32.mrf.mxu0
      %v5865 = vpop.f32.mrf.mxu0
      %v5866 = vadd.f32 0.0, %v5865
      %v5867 = vpop.f32.mrf.mxu0
      %5868 = vmatprep.mubr.bf16.mxu0 0
      %5869 = vmatmul.mubr.bf16.gmra.mxu0 %v5665
      %v5870 = vpop.f32.mrf.mxu0
      %v5871 = vadd.f32 0.0, %v5870
      %v5872 = vpop.f32.mrf.mxu0
      %v5873 = vpop.f32.mrf.mxu0
      %v5874 = vadd.f32 0.0, %v5873
      %v5875 = vpop.f32.mrf.mxu0
      %5876 = vmatprep.mubr.bf16.mxu0 0
      %5877 = vmatmul.mubr.bf16.gmra.mxu0 %v5666
      %v5878 = vpop.f32.mrf.mxu0
      %v5879 = vadd.f32 0.0, %v5878
      %v5880 = vpop.f32.mrf.mxu0
      %v5881 = vpop.f32.mrf.mxu0
      %v5882 = vadd.f32 0.0, %v5881
      %v5883 = vpop.f32.mrf.mxu0
      %5884 = vmatprep.mubr.bf16.mxu0 0
      %5885 = vmatmul.mubr.bf16.gmra.mxu0 %v5667
      %v5886 = vpop.f32.mrf.mxu0
      %v5887 = vadd.f32 0.0, %v5886
      %v5888 = vpop.f32.mrf.mxu0
      %v5889 = vpop.f32.mrf.mxu0
      %v5890 = vadd.f32 0.0, %v5889
      %v5891 = vpop.f32.mrf.mxu0
      %5892 = vdwg.mxu0
      %v5893 = vadd.f32 %v5395, %v5767
      %v5894 = vadd.f32 %v5396, %v5770
      %v5895 = vadd.f32 %v5397, %v5775
      %v5896 = vadd.f32 %v5398, %v5778
      %v5897 = vadd.f32 %v5399, %v5783
      %v5898 = vadd.f32 %v5400, %v5786
      %v5899 = vadd.f32 %v5401, %v5791
      %v5900 = vadd.f32 %v5402, %v5794
      %v5901 = vadd.f32 %v5403, %v5799
      %v5902 = vadd.f32 %v5404, %v5802
      %v5903 = vadd.f32 %v5405, %v5807
      %v5904 = vadd.f32 %v5406, %v5810
      %v5905 = vadd.f32 %v5407, %v5815
      %v5906 = vadd.f32 %v5408, %v5818
      %v5907 = vadd.f32 %v5409, %v5823
      %v5908 = vadd.f32 %v5410, %v5826
      %v5909 = vadd.f32 %v5411, %v5831
      %v5910 = vadd.f32 %v5412, %v5834
      %v5911 = vadd.f32 %v5413, %v5839
      %v5912 = vadd.f32 %v5414, %v5842
      %v5913 = vadd.f32 %v5415, %v5847
      %v5914 = vadd.f32 %v5416, %v5850
      %v5915 = vadd.f32 %v5417, %v5855
      %v5916 = vadd.f32 %v5418, %v5858
      %v5917 = vadd.f32 %v5419, %v5863
      %v5918 = vadd.f32 %v5420, %v5866
      %v5919 = vadd.f32 %v5421, %v5871
      %v5920 = vadd.f32 %v5422, %v5874
      %v5921 = vadd.f32 %v5423, %v5879
      %v5922 = vadd.f32 %v5424, %v5882
      %v5923 = vadd.f32 %v5425, %v5887
      %v5924 = vadd.f32 %v5426, %v5890
      %v5925 = vadd.f32 %v336, %v5893
      %v5926 = vadd.f32 %v337, %v5894
      %v5927 = vadd.f32 %v338, %v5895
      %v5928 = vadd.f32 %v339, %v5896
      %v5929 = vadd.f32 %v340, %v5897
      %v5930 = vadd.f32 %v341, %v5898
      %v5931 = vadd.f32 %v342, %v5899
      %v5932 = vadd.f32 %v343, %v5900
      %v5933 = vadd.f32 %v344, %v5901
      %v5934 = vadd.f32 %v345, %v5902
      %v5935 = vadd.f32 %v346, %v5903
      %v5936 = vadd.f32 %v347, %v5904
      %v5937 = vadd.f32 %v348, %v5905
      %v5938 = vadd.f32 %v349, %v5906
      %v5939 = vadd.f32 %v350, %v5907
      %v5940 = vadd.f32 %v351, %v5908
      %v5941 = vadd.f32 %v352, %v5909
      %v5942 = vadd.f32 %v353, %v5910
      %v5943 = vadd.f32 %v354, %v5911
      %v5944 = vadd.f32 %v355, %v5912
      %v5945 = vadd.f32 %v356, %v5913
      %v5946 = vadd.f32 %v357, %v5914
      %v5947 = vadd.f32 %v358, %v5915
      %v5948 = vadd.f32 %v359, %v5916
      %v5949 = vadd.f32 %v360, %v5917
      %v5950 = vadd.f32 %v361, %v5918
      %v5951 = vadd.f32 %v362, %v5919
      %v5952 = vadd.f32 %v363, %v5920
      %v5953 = vadd.f32 %v364, %v5921
      %v5954 = vadd.f32 %v365, %v5922
      %v5955 = vadd.f32 %v366, %v5923
      %v5956 = vadd.f32 %v367, %v5924
      %v5957 = vlaneseq
      %v5958 = vshrl.u32 %v5957, 7
      %v5959 = vsub.s32 0, %v5958
      %v5960 = vrot.slane %v246, %v5959
      %v5961 = vadd.f32 %v5925, %v5960
      %v5962 = vadd.f32 %v5926, %v5960
      %v5963 = vadd.f32 %v5927, %v5960
      %v5964 = vadd.f32 %v5928, %v5960
      %v5965 = vadd.f32 %v5929, %v5960
      %v5966 = vadd.f32 %v5930, %v5960
      %v5967 = vadd.f32 %v5931, %v5960
      %v5968 = vadd.f32 %v5932, %v5960
      %v5969 = vadd.f32 %v5933, %v5960
      %v5970 = vadd.f32 %v5934, %v5960
      %v5971 = vadd.f32 %v5935, %v5960
      %v5972 = vadd.f32 %v5936, %v5960
      %v5973 = vadd.f32 %v5937, %v5960
      %v5974 = vadd.f32 %v5938, %v5960
      %v5975 = vadd.f32 %v5939, %v5960
      %v5976 = vadd.f32 %v5940, %v5960
      %v5977 = vadd.f32 %v5941, %v5960
      %v5978 = vadd.f32 %v5942, %v5960
      %v5979 = vadd.f32 %v5943, %v5960
      %v5980 = vadd.f32 %v5944, %v5960
      %v5981 = vadd.f32 %v5945, %v5960
      %v5982 = vadd.f32 %v5946, %v5960
      %v5983 = vadd.f32 %v5947, %v5960
      %v5984 = vadd.f32 %v5948, %v5960
      %v5985 = vadd.f32 %v5949, %v5960
      %v5986 = vadd.f32 %v5950, %v5960
      %v5987 = vadd.f32 %v5951, %v5960
      %v5988 = vadd.f32 %v5952, %v5960
      %v5989 = vadd.f32 %v5953, %v5960
      %v5990 = vadd.f32 %v5954, %v5960
      %v5991 = vadd.f32 %v5955, %v5960
      %v5992 = vadd.f32 %v5956, %v5960
      %v5993 = vpack.c.bf16 %v5962, %v5961
      %v5994 = vpack.c.bf16 %v5964, %v5963
      %v5995 = vpack.c.bf16 %v5966, %v5965
      %v5996 = vpack.c.bf16 %v5968, %v5967
      %v5997 = vpack.c.bf16 %v5970, %v5969
      %v5998 = vpack.c.bf16 %v5972, %v5971
      %v5999 = vpack.c.bf16 %v5974, %v5973
      %v6000 = vpack.c.bf16 %v5976, %v5975
      %v6001 = vpack.c.bf16 %v5978, %v5977
      %v6002 = vpack.c.bf16 %v5980, %v5979
      %v6003 = vpack.c.bf16 %v5982, %v5981
      %v6004 = vpack.c.bf16 %v5984, %v5983
      %v6005 = vpack.c.bf16 %v5986, %v5985
      %v6006 = vpack.c.bf16 %v5988, %v5987
      %v6007 = vpack.c.bf16 %v5990, %v5989
      %v6008 = vpack.c.bf16 %v5992, %v5991
      %v6025 = vunpack.c.l.b16 %v5993
      %v6026 = vunpack.c.h.b16 %v5993
      %v6027 = vunpack.c.l.b16 %v5994
      %v6028 = vunpack.c.h.b16 %v5994
      %v6029 = vunpack.c.l.b16 %v5995
      %v6030 = vunpack.c.h.b16 %v5995
      %v6031 = vunpack.c.l.b16 %v5996
      %v6032 = vunpack.c.h.b16 %v5996
      %v6033 = vunpack.c.l.b16 %v5997
      %v6034 = vunpack.c.h.b16 %v5997
      %v6035 = vunpack.c.l.b16 %v5998
      %v6036 = vunpack.c.h.b16 %v5998
      %v6037 = vunpack.c.l.b16 %v5999
      %v6038 = vunpack.c.h.b16 %v5999
      %v6039 = vunpack.c.l.b16 %v6000
      %v6040 = vunpack.c.h.b16 %v6000
      %v6041 = vunpack.c.l.b16 %v6001
      %v6042 = vunpack.c.h.b16 %v6001
      %v6043 = vunpack.c.l.b16 %v6002
      %v6044 = vunpack.c.h.b16 %v6002
      %v6045 = vunpack.c.l.b16 %v6003
      %v6046 = vunpack.c.h.b16 %v6003
      %v6047 = vunpack.c.l.b16 %v6004
      %v6048 = vunpack.c.h.b16 %v6004
      %v6049 = vunpack.c.l.b16 %v6005
      %v6050 = vunpack.c.h.b16 %v6005
      %v6051 = vunpack.c.l.b16 %v6006
      %v6052 = vunpack.c.h.b16 %v6006
      %v6053 = vunpack.c.l.b16 %v6007
      %v6054 = vunpack.c.h.b16 %v6007
      %v6055 = vunpack.c.l.b16 %v6008
      %v6056 = vunpack.c.h.b16 %v6008
      %v6057 = vpack.c.b16 %v6025, %v6025
      %v6058 = vpack.c.b16 %v6026, %v6026
      %v6059 = vpack.c.b16 %v6027, %v6027
      %v6060 = vpack.c.b16 %v6028, %v6028
      %v6061 = vpack.c.b16 %v6029, %v6029
      %v6062 = vpack.c.b16 %v6030, %v6030
      %v6063 = vpack.c.b16 %v6031, %v6031
      %v6064 = vpack.c.b16 %v6032, %v6032
      %v6065 = vpack.c.b16 %v6033, %v6033
      %v6066 = vpack.c.b16 %v6034, %v6034
      %v6067 = vpack.c.b16 %v6035, %v6035
      %v6068 = vpack.c.b16 %v6036, %v6036
      %v6069 = vpack.c.b16 %v6037, %v6037
      %v6070 = vpack.c.b16 %v6038, %v6038
      %v6071 = vpack.c.b16 %v6039, %v6039
      %v6072 = vpack.c.b16 %v6040, %v6040
      %v6073 = vpack.c.b16 %v6041, %v6041
      %v6074 = vpack.c.b16 %v6042, %v6042
      %v6075 = vpack.c.b16 %v6043, %v6043
      %v6076 = vpack.c.b16 %v6044, %v6044
      %v6077 = vpack.c.b16 %v6045, %v6045
      %v6078 = vpack.c.b16 %v6046, %v6046
      %v6079 = vpack.c.b16 %v6047, %v6047
      %v6080 = vpack.c.b16 %v6048, %v6048
      %v6081 = vpack.c.b16 %v6049, %v6049
      %v6082 = vpack.c.b16 %v6050, %v6050
      %v6083 = vpack.c.b16 %v6051, %v6051
      %v6084 = vpack.c.b16 %v6052, %v6052
      %v6085 = vpack.c.b16 %v6053, %v6053
      %v6086 = vpack.c.b16 %v6054, %v6054
      %v6087 = vpack.c.b16 %v6055, %v6055
      %v6088 = vpack.c.b16 %v6056, %v6056
      %6121 = vst [vmem:[%s233] sm:$0xf] %v6057
      %6122 = vst [vmem:[%s233 + $0x4] sm:$0xf] %v6058
      %6123 = vst [vmem:[%s233 + $0x8] sm:$0xf] %v6059
      %6124 = vst [vmem:[%s233 + $0xc] sm:$0xf] %v6060
      %6125 = vst [vmem:[%s233 + $0x10] sm:$0xf] %v6061
      %6126 = vst [vmem:[%s233 + $0x14] sm:$0xf] %v6062
      %6127 = vst [vmem:[%s233 + $0x18] sm:$0xf] %v6063
      %6128 = vst [vmem:[%s233 + $0x1c] sm:$0xf] %v6064
      %6129 = vst [vmem:[%s233 + $0x20] sm:$0xf] %v6065
      %6130 = vst [vmem:[%s233 + $0x24] sm:$0xf] %v6066
      %6131 = vst [vmem:[%s233 + $0x28] sm:$0xf] %v6067
      %6132 = vst [vmem:[%s233 + $0x2c] sm:$0xf] %v6068
      %6133 = vst [vmem:[%s233 + $0x30] sm:$0xf] %v6069
      %6134 = vst [vmem:[%s233 + $0x34] sm:$0xf] %v6070
      %6135 = vst [vmem:[%s233 + $0x38] sm:$0xf] %v6071
      %6136 = vst [vmem:[%s233 + $0x3c] sm:$0xf] %v6072
      %6137 = vst [vmem:[%s233 + $0x40] sm:$0xf] %v6073
      %6138 = vst [vmem:[%s233 + $0x44] sm:$0xf] %v6074
      %6139 = vst [vmem:[%s233 + $0x48] sm:$0xf] %v6075
      %6140 = vst [vmem:[%s233 + $0x4c] sm:$0xf] %v6076
      %6141 = vst [vmem:[%s233 + $0x50] sm:$0xf] %v6077
      %6142 = vst [vmem:[%s233 + $0x54] sm:$0xf] %v6078
      %6143 = vst [vmem:[%s233 + $0x58] sm:$0xf] %v6079
      %6144 = vst [vmem:[%s233 + $0x5c] sm:$0xf] %v6080
      %6145 = vst [vmem:[%s233 + $0x60] sm:$0xf] %v6081
      %6146 = vst [vmem:[%s233 + $0x64] sm:$0xf] %v6082
      %6147 = vst [vmem:[%s233 + $0x68] sm:$0xf] %v6083
      %6148 = vst [vmem:[%s233 + $0x6c] sm:$0xf] %v6084
      %6149 = vst [vmem:[%s233 + $0x70] sm:$0xf] %v6085
      %6150 = vst [vmem:[%s233 + $0x74] sm:$0xf] %v6086
      %6151 = vst [vmem:[%s233 + $0x78] sm:$0xf] %v6087
      %6152 = vst [vmem:[%s233 + $0x7c] sm:$0xf] %v6088
      %v6153 = vadd.f32 %v5961, %v5962
      %v6154 = vadd.f32 %v6153, %v5963
      %v6155 = vadd.f32 %v6154, %v5964
      %v6156 = vadd.f32 %v6155, %v5965
      %v6157 = vadd.f32 %v6156, %v5966
      %v6158 = vadd.f32 %v6157, %v5967
      %v6159 = vadd.f32 %v6158, %v5968
      %v6160 = vadd.f32 %v6159, %v5969
      %v6161 = vadd.f32 %v6160, %v5970
      %v6162 = vadd.f32 %v6161, %v5971
      %v6163 = vadd.f32 %v6162, %v5972
      %v6164 = vadd.f32 %v6163, %v5973
      %v6165 = vadd.f32 %v6164, %v5974
      %v6166 = vadd.f32 %v6165, %v5975
      %v6167 = vadd.f32 %v6166, %v5976
      %v6168 = vadd.f32 %v6167, %v5977
      %v6169 = vadd.f32 %v6168, %v5978
      %v6170 = vadd.f32 %v6169, %v5979
      %v6171 = vadd.f32 %v6170, %v5980
      %v6172 = vadd.f32 %v6171, %v5981
      %v6173 = vadd.f32 %v6172, %v5982
      %v6174 = vadd.f32 %v6173, %v5983
      %v6175 = vadd.f32 %v6174, %v5984
      %v6176 = vadd.f32 %v6175, %v5985
      %v6177 = vadd.f32 %v6176, %v5986
      %v6178 = vadd.f32 %v6177, %v5987
      %v6179 = vadd.f32 %v6178, %v5988
      %v6180 = vadd.f32 %v6179, %v5989
      %v6181 = vadd.f32 %v6180, %v5990
      %v6182 = vadd.f32 %v6181, %v5991
      %v6183 = vadd.f32 %v6182, %v5992
      %v6184 = vrot.slane %v6183, 4
      %v6185 = vadd.f32 %v6183, %v6184
      %v6186 = vrot.slane %v6185, 2
      %v6187 = vadd.f32 %v6185, %v6186
      %v6188 = vrot.slane %v6187, 1
      %v6189 = vadd.f32 %v6187, %v6188
      %v6190 = vmul.f32 %v6189, 0.00390625
      %v6191 = vsub.f32 %v5961, %v6190
      %v6192 = vsub.f32 %v5962, %v6190
      %v6193 = vsub.f32 %v5963, %v6190
      %v6194 = vsub.f32 %v5964, %v6190
      %v6195 = vsub.f32 %v5965, %v6190
      %v6196 = vsub.f32 %v5966, %v6190
      %v6197 = vsub.f32 %v5967, %v6190
      %v6198 = vsub.f32 %v5968, %v6190
      %v6199 = vsub.f32 %v5969, %v6190
      %v6200 = vsub.f32 %v5970, %v6190
      %v6201 = vsub.f32 %v5971, %v6190
      %v6202 = vsub.f32 %v5972, %v6190
      %v6203 = vsub.f32 %v5973, %v6190
      %v6204 = vsub.f32 %v5974, %v6190
      %v6205 = vsub.f32 %v5975, %v6190
      %v6206 = vsub.f32 %v5976, %v6190
      %v6207 = vsub.f32 %v5977, %v6190
      %v6208 = vsub.f32 %v5978, %v6190
      %v6209 = vsub.f32 %v5979, %v6190
      %v6210 = vsub.f32 %v5980, %v6190
      %v6211 = vsub.f32 %v5981, %v6190
      %v6212 = vsub.f32 %v5982, %v6190
      %v6213 = vsub.f32 %v5983, %v6190
      %v6214 = vsub.f32 %v5984, %v6190
      %v6215 = vsub.f32 %v5985, %v6190
      %v6216 = vsub.f32 %v5986, %v6190
      %v6217 = vsub.f32 %v5987, %v6190
      %v6218 = vsub.f32 %v5988, %v6190
      %v6219 = vsub.f32 %v5989, %v6190
      %v6220 = vsub.f32 %v5990, %v6190
      %v6221 = vsub.f32 %v5991, %v6190
      %v6222 = vsub.f32 %v5992, %v6190
      %v6223 = vmul.f32 %v6191, %v6191
      %v6224 = vmul.f32 %v6192, %v6192
      %v6225 = vmul.f32 %v6193, %v6193
      %v6226 = vmul.f32 %v6194, %v6194
      %v6227 = vmul.f32 %v6195, %v6195
      %v6228 = vmul.f32 %v6196, %v6196
      %v6229 = vmul.f32 %v6197, %v6197
      %v6230 = vmul.f32 %v6198, %v6198
      %v6231 = vmul.f32 %v6199, %v6199
      %v6232 = vmul.f32 %v6200, %v6200
      %v6233 = vmul.f32 %v6201, %v6201
      %v6234 = vmul.f32 %v6202, %v6202
      %v6235 = vmul.f32 %v6203, %v6203
      %v6236 = vmul.f32 %v6204, %v6204
      %v6237 = vmul.f32 %v6205, %v6205
      %v6238 = vmul.f32 %v6206, %v6206
      %v6239 = vmul.f32 %v6207, %v6207
      %v6240 = vmul.f32 %v6208, %v6208
      %v6241 = vmul.f32 %v6209, %v6209
      %v6242 = vmul.f32 %v6210, %v6210
      %v6243 = vmul.f32 %v6211, %v6211
      %v6244 = vmul.f32 %v6212, %v6212
      %v6245 = vmul.f32 %v6213, %v6213
      %v6246 = vmul.f32 %v6214, %v6214
      %v6247 = vmul.f32 %v6215, %v6215
      %v6248 = vmul.f32 %v6216, %v6216
      %v6249 = vmul.f32 %v6217, %v6217
      %v6250 = vmul.f32 %v6218, %v6218
      %v6251 = vmul.f32 %v6219, %v6219
      %v6252 = vmul.f32 %v6220, %v6220
      %v6253 = vmul.f32 %v6221, %v6221
      %v6254 = vmul.f32 %v6222, %v6222
      %v6255 = vadd.f32 %v6223, %v6224
      %v6256 = vadd.f32 %v6255, %v6225
      %v6257 = vadd.f32 %v6256, %v6226
      %v6258 = vadd.f32 %v6257, %v6227
      %v6259 = vadd.f32 %v6258, %v6228
      %v6260 = vadd.f32 %v6259, %v6229
      %v6261 = vadd.f32 %v6260, %v6230
      %v6262 = vadd.f32 %v6261, %v6231
      %v6263 = vadd.f32 %v6262, %v6232
      %v6264 = vadd.f32 %v6263, %v6233
      %v6265 = vadd.f32 %v6264, %v6234
      %v6266 = vadd.f32 %v6265, %v6235
      %v6267 = vadd.f32 %v6266, %v6236
      %v6268 = vadd.f32 %v6267, %v6237
      %v6269 = vadd.f32 %v6268, %v6238
      %v6270 = vadd.f32 %v6269, %v6239
      %v6271 = vadd.f32 %v6270, %v6240
      %v6272 = vadd.f32 %v6271, %v6241
      %v6273 = vadd.f32 %v6272, %v6242
      %v6274 = vadd.f32 %v6273, %v6243
      %v6275 = vadd.f32 %v6274, %v6244
      %v6276 = vadd.f32 %v6275, %v6245
      %v6277 = vadd.f32 %v6276, %v6246
      %v6278 = vadd.f32 %v6277, %v6247
      %v6279 = vadd.f32 %v6278, %v6248
      %v6280 = vadd.f32 %v6279, %v6249
      %v6281 = vadd.f32 %v6280, %v6250
      %v6282 = vadd.f32 %v6281, %v6251
      %v6283 = vadd.f32 %v6282, %v6252
      %v6284 = vadd.f32 %v6283, %v6253
      %v6285 = vadd.f32 %v6284, %v6254
      %v6286 = vrot.slane %v6285, 4
      %v6287 = vadd.f32 %v6285, %v6286
      %v6288 = vrot.slane %v6287, 2
      %v6289 = vadd.f32 %v6287, %v6288
      %v6290 = vrot.slane %v6289, 1
      %v6291 = vadd.f32 %v6289, %v6290
      %6292 = vst [vmem:[%s241] sm:$0x1] %v6189
      %6293 = vst [vmem:[%s241 + $0x1] sm:$0x1] %v6291
      %s6294 = smul.u32 16, %s21
      %p6295 = scmp.lt.s32.totalorder %s20, 1
      %s6296 = scalar_select %p6295, %s20, 1
      %p6297 = scmp.lt.s32.totalorder %s6294, 15
      %s6298 = scalar_select %p6297, %s6294, 15
      %s6299 = smul.addr %s6298, 2
      %s6300 = smul.addr %s6296, 32
      %s6301 = sadd.s32 %s6299, %s6300
      %s6302 = smul.addr %s6301, 4
      %s6303 = scalar_lea.vmem %s3, %s6302
      %p6304 = scmp.lt.s32.totalorder %s20, 1
      %s6305 = scalar_select %p6304, %s20, 1
      %p6306 = scmp.lt.s32.totalorder %s21, 0
      %s6307 = scalar_select %p6306, %s21, 0
      %s6308 = sadd.s32 %s6307, %s6305
      %s6309 = smul.addr %s6308, 2
      %s6310 = scalar_lea.vmem %s4, %s6309
      // Predicated region
      $region41: #{dense_block_forward.2} parent=31 // pred_check
        %p6311 = pneg %p116
      $region42: #{dense_block_forward.2} parent=31 // pred_check_branch
        %6313 = sbr.rel (%p6311) target = $region44
      $region43: #{dense_block_forward.2} parent=31 // pred_region
        %s6314 = smul.u32 16, %s21
      $region44: #{dense_block_forward.2} parent=31 // pred_fallthru
        _
      // Predicated region
      $region45: #{dense_block_forward.2} parent=31 // pred_check
        %p6315 = pneg %p144
      $region46: #{dense_block_forward.2} parent=31 // pred_check_branch
        %6317 = sbr.rel (%p6315) target = $region48
      $region47: #{dense_block_forward.2} parent=31 // pred_region
        _
      $region48: #{dense_block_forward.2} parent=31 // pred_fallthru
        _
    $region32: #{dense_block_forward.2} parent=5 // pred_fallthru
      _
    %p6318 = scmp.le.s32.totalorder 2, %s11
    // Predicated region
    $region49: #{dense_block_forward.2} parent=5 // pred_check
      %p6319 = pneg %p6318
    $region50: #{dense_block_forward.2} parent=5 // pred_check_branch
      %6321 = sbr.rel (%p6319) target = $region52
    $region51: #{dense_block_forward.2} parent=5 // pred_region
      %s6322 = ssub.s32 %s11, 2
      // Predicated region
      $region53: #{dense_block_forward.2} parent=51 // pred_check
        %p6323 = pneg %p122
      $region54: #{dense_block_forward.2} parent=51 // pred_check_branch
        %6325 = sbr.rel (%p6323) target = $region56
      $region55: #{dense_block_forward.2} parent=51 // pred_region
        %s6326 = smul.u32 16, %s23
        %p6327 = scmp.lt.s32.totalorder %s22, 1
        %s6328 = scalar_select %p6327, %s22, 1
        %p6329 = scmp.lt.s32.totalorder %s6326, 15
        %s6330 = scalar_select %p6329, %s6326, 15
        %s6331 = smul.addr %s6330, 2
        %s6332 = smul.addr %s6328, 32
        %s6333 = sadd.s32 %s6331, %s6332
        %s6334 = smul.addr %s6333, 4
        %s6335 = scalar_lea.vmem %s3, %s6334
      $region56: #{dense_block_forward.2} parent=51 // pred_fallthru
        _
      // Predicated region
      $region57: #{dense_block_forward.2} parent=51 // pred_check
        %p6336 = pneg %p150
      $region58: #{dense_block_forward.2} parent=51 // pred_check_branch
        %6338 = sbr.rel (%p6336) target = $region60
      $region59: #{dense_block_forward.2} parent=51 // pred_region
        %p6339 = scmp.lt.s32.totalorder %s22, 1
        %s6340 = scalar_select %p6339, %s22, 1
        %p6341 = scmp.lt.s32.totalorder %s23, 0
        %s6342 = scalar_select %p6341, %s23, 0
        %s6343 = sadd.s32 %s6342, %s6340
        %s6344 = smul.addr %s6343, 2
        %s6345 = scalar_lea.vmem %s4, %s6344
      $region60: #{dense_block_forward.2} parent=51 // pred_fallthru
        _
    $region52: #{dense_block_forward.2} parent=5 // pred_fallthru
      _
  $region6: #{dense_block_forward.2} parent=0 // loop_footer
    %s15 = sadd.s32 1, %s11
  $region7: #{dense_block_forward.2} parent=0 // loop_footer_branch
    %10 = sbr.rel target = $region3
  $region8: #{dense_block_forward.2} parent=0 // loop_exit
    _

</llo_original>
